<compile_context>
chip_gen: v7x
topology: tpu7x:2x2x1
jax: 0.10.0
libtpu: 0.0.40
codegen_flags: <defaults>
</compile_context>

<pallas_src>
from functools import partial

import jax
import jax.numpy as jnp
from jax.experimental import pallas as pl
from jax.experimental.pallas import tpu as pltpu


# ----------------------------------------------------------------------------
# helpers
# ----------------------------------------------------------------------------
def _round_up(x, m):
    return (x + m - 1) // m * m


def _row_plan(n):
    """Row tile for the N = B*H*W dimension: >=128, prefer 256/512."""
    tm = 512 if n >= 4096 else (256 if n >= 1024 else 128)
    return _round_up(n, tm), tm


def _pad_rows(a, n_pad):
    n = a.shape[0]
    return a if n == n_pad else jnp.pad(a, ((0, n_pad - n), (0, 0)))


# ----------------------------------------------------------------------------
# Fused LayerNorm -> {v, attn} projections (one read of x, one LN, bf16 MXU).
# ----------------------------------------------------------------------------
def _va_kernel(x_ref, g_ref, be_ref, wv_ref, wa_ref, ba_ref, v_ref, a_ref):
    x = x_ref[...].astype(jnp.float32)
    mu = jnp.mean(x, axis=-1, keepdims=True)
    var = jnp.mean(jnp.square(x - mu), axis=-1, keepdims=True)
    xn = (x - mu) * jax.lax.rsqrt(var + 1e-5) * g_ref[...] + be_ref[...]
    xb = xn.astype(jnp.bfloat16)
    v_ref[...] = jnp.dot(xb, wv_ref[...],
                         preferred_element_type=jnp.float32).astype(v_ref.dtype)
    a = jnp.dot(xb, wa_ref[...], preferred_element_type=jnp.float32) + ba_ref[...]
    a_ref[...] = a.astype(a_ref.dtype)


def fused_va_projection(xf, gamma, beta, v_w, attn_w, attn_b):
    n, c = xf.shape
    a_out = attn_w.shape[1]
    n_pad, tm = _row_plan(n)
    xp = _pad_rows(xf, n_pad)

    v_flat, a_flat = pl.pallas_call(
        _va_kernel,
        out_shape=(jax.ShapeDtypeStruct((n_pad, c), jnp.bfloat16),
                   jax.ShapeDtypeStruct((n_pad, a_out), jnp.bfloat16)),
        grid=(n_pad // tm,),
        in_specs=[
            pl.BlockSpec((tm, c), lambda i: (i, 0)),
            pl.BlockSpec((1, c), lambda i: (0, 0)),
            pl.BlockSpec((1, c), lambda i: (0, 0)),
            pl.BlockSpec((c, c), lambda i: (0, 0)),        # resident weight
            pl.BlockSpec((c, a_out), lambda i: (0, 0)),    # resident weight
            pl.BlockSpec((1, a_out), lambda i: (0, 0)),
        ],
        out_specs=(pl.BlockSpec((tm, c), lambda i: (i, 0)),
                   pl.BlockSpec((tm, a_out), lambda i: (i, 0))),
        compiler_params=pltpu.CompilerParams(dimension_semantics=("parallel",)),
    )(xp,
      gamma.reshape(1, c).astype(jnp.float32),
      beta.reshape(1, c).astype(jnp.float32),
      v_w.astype(jnp.bfloat16),
      attn_w.astype(jnp.bfloat16),
      attn_b.reshape(1, a_out).astype(jnp.float32))
    return v_flat[:n], a_flat[:n]


# ----------------------------------------------------------------------------
# Generic fused (LayerNorm?) -> Linear -> (GELU?) -> (+residual?) kernel.
# ----------------------------------------------------------------------------
def _linear_kernel(*refs, ln, act, res, bias):
    it = iter(refs)
    x_ref = next(it)
    g_ref = be_ref = None
    if ln:
        g_ref = next(it)
        be_ref = next(it)
    w_ref = next(it)
    b_ref = next(it) if bias else None
    r_ref = next(it) if res else None
    o_ref = next(it)

    if ln:
        x = x_ref[...].astype(jnp.float32)
        mu = jnp.mean(x, axis=-1, keepdims=True)
        var = jnp.mean(jnp.square(x - mu), axis=-1, keepdims=True)
        x = (x - mu) * jax.lax.rsqrt(var + 1e-5) * g_ref[...] + be_ref[...]
        xb = x.astype(jnp.bfloat16)
    else:
        xb = x_ref[...].astype(jnp.bfloat16)

    y = jnp.dot(xb, w_ref[...], preferred_element_type=jnp.float32)
    if bias:
        y = y + b_ref[...]
    if act == "gelu":
        # TODO(synk): PyTorch nn.GELU defaults to exact erf; tanh approximation
        # is used for guaranteed EUP lowering (reference below matches).
        y = jax.nn.gelu(y, approximate=True)
    if res:
        y = y + r_ref[...].astype(jnp.float32)
    o_ref[...] = y.astype(o_ref.dtype)


def fused_linear(x2d, w, b=None, *, ln=None, residual=None, activation=None,
                 out_dtype=jnp.float32):
    """y = [LN(x)] @ w (+ b) [-> gelu] (+ residual), row-tiled, bf16 MXU."""
    n, cin = x2d.shape
    cout = w.shape[1]
    n_pad, tm = _row_plan(n)

    in_specs = [pl.BlockSpec((tm, cin), lambda i: (i, 0))]
    args = [_pad_rows(x2d, n_pad)]
    if ln is not None:
        g, be = ln
        in_specs += [pl.BlockSpec((1, cin), lambda i: (0, 0)),
                     pl.BlockSpec((1, cin), lambda i: (0, 0))]
        args += [g.reshape(1, cin).astype(jnp.float32),
                 be.reshape(1, cin).astype(jnp.float32)]
    in_specs.append(pl.BlockSpec((cin, cout), lambda i: (0, 0)))   # resident weight
    args.append(w.astype(jnp.bfloat16))
    if b is not None:
        in_specs.append(pl.BlockSpec((1, cout), lambda i: (0, 0)))
        args.append(b.reshape(1, cout).astype(jnp.float32))
    if residual is not None:
        in_specs.append(pl.BlockSpec((tm, cout), lambda i: (i, 0)))
        args.append(_pad_rows(residual, n_pad))

    out = pl.pallas_call(
        partial(_linear_kernel, ln=ln is not None, act=activation,
                res=residual is not None, bias=b is not None),
        out_shape=jax.ShapeDtypeStruct((n_pad, cout), out_dtype),
        grid=(n_pad // tm,),
        in_specs=in_specs,
        out_specs=pl.BlockSpec((tm, cout), lambda i: (i, 0)),
        compiler_params=pltpu.CompilerParams(dimension_semantics=("parallel",)),
    )(*args)
    return out[:n]


# ----------------------------------------------------------------------------
# Fused outlook-attention core (unfold + softmax + weighted-sum + fold),
# pixels-in-lanes layout, one grid step per batch image.
#   a_t : (B, nh*K2, K2_src, H*W)   bf16   (logits, H*W in lanes)
#   v_t : (B, C, H*W)               bf16   (values, H*W in lanes)
#   out : (B, C, H*W)               bf16
# ----------------------------------------------------------------------------
def _outlook_core_kernel(a_ref, v_ref, o_ref, vpad_ref, outs_ref, *,
                         H, W, K, pad, nh, hd, OFS, TOT):
    K2 = K * K
    HW = H * W
    C = nh * hd
    rz0 = (OFS + HW) // 128 * 128      # aligned start that covers the right ring

    # Refresh the zero rings every step (cheap, megacore-safe); the interiors
    # below are '='-written before any read, so no full-buffer memsets.
    vpad_ref[:, 0:OFS] = jnp.zeros((C, OFS), jnp.float32)
    vpad_ref[:, rz0:TOT] = jnp.zeros((C, TOT - rz0), jnp.float32)
    outs_ref[:, :, 0:OFS] = jnp.zeros((K2, hd, OFS), jnp.float32)
    outs_ref[:, :, rz0:TOT] = jnp.zeros((K2, hd, TOT - rz0), jnp.float32)

    # This image's values, channels-first, flat pixels at lane offset OFS.
    vpad_ref[:, OFS:OFS + HW] = v_ref[0].astype(jnp.float32)

    # x-validity mask for the horizontal component of every kernel offset:
    # row j is valid where 0 <= x + (j % K - pad) < W.  (hoisted, reused)
    xpos = jax.lax.broadcasted_iota(jnp.int32, (K2, HW), 1) % W
    dxs = jax.lax.broadcasted_iota(jnp.int32, (K2, HW), 0) % K - pad
    xs = xpos + dxs
    mask9 = ((xs >= 0) & (xs < W)).astype(jnp.float32)         # (K2, HW)

    for h in range(nh):
        r0 = h * hd

        # ---- softmax + attention-weighted gather for every output offset ----
        for i in range(K2):
            g = h * K2 + i
            logits = a_ref[0, g].astype(jnp.float32)           # (K2, HW)
            m = jnp.max(logits, axis=0, keepdims=True)
            e = jnp.exp(logits - m)
            r = pl.reciprocal(jnp.sum(e, axis=0, keepdims=True), approx=True)
            p = e * r * mask9        # zero weights whose source pixel is padding

            accs = [None, None, None]                          # break FMA chain
            for j in range(K2):
                jy, jx = divmod(j, K)
                s = (jy - pad) * W + (jx - pad)
                vj = vpad_ref[r0:r0 + hd, OFS + s:OFS + s + HW]  # shifted view
                t = p[j:j + 1, :] * vj
                k = j % 3
                accs[k] = t if accs[k] is None else accs[k] + t
            out_i = (accs[0] + accs[1]) + accs[2]              # (hd, HW)

            # pre-mask destinations that would wrap across a row in the fold
            out_i = out_i * mask9[i:i + 1, :]
            outs_ref[i, :, OFS:OFS + HW] = out_i

        # ---- fold: sum shifted reads of every output-offset contribution ----
        faccs = [None, None, None]
        for i in range(K2):
            ky, kx = divmod(i, K)
            s = (ky - pad) * W + (kx - pad)
            c_i = outs_ref[i, :, OFS - s:OFS - s + HW]          # (hd, HW)
            k = i % 3
            faccs[k] = c_i if faccs[k] is None else faccs[k] + c_i
        folded_h = (faccs[0] + faccs[1]) + faccs[2]
        o_ref[0, r0:r0 + hd, :] = folded_h.astype(o_ref.dtype)  # per-head store


def outlook_core(a_t, v_t, *, num_heads, kernel_size, padding, H, W):
    B, C, HW = v_t.shape
    hd = C // num_heads
    K = kernel_size
    K2 = K * K
    G = num_heads * K2
    S = padding * W + padding
    OFS = _round_up(max(S, 1), 128)
    TOT = OFS + _round_up(HW + S, 128)

    # TODO(synk): for v7x (2 TCs) add a second parallel grid axis (spatial
    # split of H with a 1-row halo) so small/odd B keeps both cores busy.
    return pl.pallas_call(
        partial(_outlook_core_kernel, H=H, W=W, K=K, pad=padding,
                nh=num_heads, hd=hd, OFS=OFS, TOT=TOT),
        out_shape=jax.ShapeDtypeStruct((B, C, HW), jnp.bfloat16),
        grid=(B,),
        in_specs=[
            pl.BlockSpec((1, G, K2, HW), lambda b: (b, 0, 0, 0)),
            pl.BlockSpec((1, C, HW), lambda b: (b, 0, 0)),
        ],
        out_specs=pl.BlockSpec((1, C, HW), lambda b: (b, 0, 0)),
        scratch_shapes=[
            pltpu.VMEM((C, TOT), jnp.float32),        # zero-padded flat values
            pltpu.VMEM((K2, hd, TOT), jnp.float32),   # per-output-offset partials
        ],
        compiler_params=pltpu.CompilerParams(dimension_semantics=("parallel",)),
    )(a_t, v_t)


# ----------------------------------------------------------------------------
# Outlooker forward
# ----------------------------------------------------------------------------
def outlooker_forward(x, params, *, num_heads, kernel_size, padding):
    # TODO(synk): only stride=1 is implemented (VOLO default); stride>1 would
    # need the ceil-mode AvgPool2d and strided unfold/fold.
    B, H, W, C = x.shape
    hd = C // num_heads
    K = kernel_size
    K2 = K * K
    scale = hd ** (-0.5)
    N = B * H * W
    HW = H * W

    xf = x.reshape(N, C)

    # Fold the softmax scale into the attn projection; pad its width to a
    # multiple of 128 lanes (padded columns are zero and sliced off below).
    A = num_heads * K2 * K2
    A_pad = _round_up(A, 128)
    attn_w = params["attn_w"] * scale
    attn_b = params["attn_b"] * scale
    if A_pad > A:
        attn_w = jnp.pad(attn_w, ((0, 0), (0, A_pad - A)))
        attn_b = jnp.pad(attn_b, ((0, A_pad - A),))

    # ---- fused LN + v/attn projections (one read of xf, one LayerNorm) ----
    v_flat, a_flat = fused_va_projection(
        xf, params["norm1_g"], params["norm1_b"], params["v_w"], attn_w, attn_b)

    # wrapper relayout: put the H*W pixels in the lane axis for the core
    v_t = v_flat.reshape(B, HW, C).transpose(0, 2, 1)                       # (B,C,HW)
    a_t = a_flat[:, :A].reshape(B, HW, num_heads * K2, K2).transpose(0, 2, 3, 1)

    folded_t = outlook_core(a_t, v_t, num_heads=num_heads, kernel_size=K,
                            padding=padding, H=H, W=W)                      # (B,C,HW) bf16
    folded = folded_t.transpose(0, 2, 1).reshape(N, C)

    # proj with the residual add fused into the epilogue (f32 residual stream)
    x1 = fused_linear(folded, params["proj_w"], params["proj_b"],
                      residual=xf, out_dtype=jnp.float32)

    # ---- MLP(norm2(x)); hidden width padded to a 128 multiple, bf16 hidden ----
    hid = params["fc1_w"].shape[1]
    hid_pad = _round_up(hid, 128)
    fc1_w, fc1_b, fc2_w = params["fc1_w"], params["fc1_b"], params["fc2_w"]
    if hid_pad > hid:
        fc1_w = jnp.pad(fc1_w, ((0, 0), (0, hid_pad - hid)))
        fc1_b = jnp.pad(fc1_b, ((0, hid_pad - hid),))
        fc2_w = jnp.pad(fc2_w, ((0, hid_pad - hid), (0, 0)))

    hidden = fused_linear(x1, fc1_w, fc1_b,
                          ln=(params["norm2_g"], params["norm2_b"]),
                          activation="gelu", out_dtype=jnp.bfloat16)
    x2 = fused_linear(hidden, fc2_w, params["fc2_b"], residual=x1,
                      out_dtype=jnp.float32)

    return x2.reshape(B, H, W, C)


# ----------------------------------------------------------------------------
# Pure-JAX reference (same tanh-GELU convention) for a correctness check.
# ----------------------------------------------------------------------------
def outlooker_reference(x, params, *, num_heads, kernel_size, padding):
    B, H, W, C = x.shape
    hd = C // num_heads
    K = kernel_size
    K2 = K * K
    scale = hd ** (-0.5)

    def ln(z, g, b):
        mu = z.mean(-1, keepdims=True)
        var = ((z - mu) ** 2).mean(-1, keepdims=True)
        return (z - mu) / jnp.sqrt(var + 1e-5) * g + b

    xn = ln(x, params["norm1_g"], params["norm1_b"])
    v = xn @ params["v_w"]
    vp = jnp.pad(v, ((0, 0), (padding, padding), (padding, padding), (0, 0)))
    v_unf = jnp.stack([vp[:, jy:jy + H, jx:jx + W, :]
                       for jy in range(K) for jx in range(K)], axis=3)  # (B,H,W,K2,C)
    v_unf = v_unf.reshape(B, H * W, K2, num_heads, hd).transpose(0, 3, 1, 2, 4)

    a = xn.reshape(B, H * W, C) @ params["attn_w"] + params["attn_b"]
    a = a.reshape(B, H * W, num_heads, K2, K2).transpose(0, 2, 1, 3, 4) * scale
    p = jax.nn.softmax(a, axis=-1)
    out = jnp.einsum("bnpij,bnpjd->bnpid", p, v_unf)
    out = out.transpose(0, 2, 3, 1, 4).reshape(B, H, W, K2, C)

    acc = jnp.zeros((B, H + 2 * padding, W + 2 * padding, C), out.dtype)
    for ki in range(K):
        for kj in range(K):
            acc = acc.at[:, ki:ki + H, kj:kj + W, :].add(out[:, :, :, ki * K + kj, :])
    folded = acc[:, padding:padding + H, padding:padding + W, :]

    x1 = x + (folded @ params["proj_w"] + params["proj_b"])
    xn2 = ln(x1, params["norm2_g"], params["norm2_b"])
    h = jax.nn.gelu(xn2 @ params["fc1_w"] + params["fc1_b"], approximate=True)
    return x1 + h @ params["fc2_w"] + params["fc2_b"]


# ----------------------------------------------------------------------------
# Deterministic parameter initialization (shapes from Outlooker.__init__)
# ----------------------------------------------------------------------------
def init_params(key, dim, num_heads, kernel_size, mlp_ratio):
    hidden = int(dim * mlp_ratio)
    K2 = kernel_size * kernel_size
    ks = jax.random.split(key, 5)

    def w(k, shape):
        return 0.02 * jax.random.normal(k, shape, jnp.float32)

    return dict(
        norm1_g=jnp.ones((dim,), jnp.float32),
        norm1_b=jnp.zeros((dim,), jnp.float32),
        v_w=w(ks[0], (dim, dim)),                       # qkv_bias=False -> no bias
        attn_w=w(ks[1], (dim, K2 * K2 * num_heads)),
        attn_b=jnp.zeros((K2 * K2 * num_heads,), jnp.float32),
        proj_w=w(ks[2], (dim, dim)),
        proj_b=jnp.zeros((dim,), jnp.float32),
        norm2_g=jnp.ones((dim,), jnp.float32),
        norm2_b=jnp.zeros((dim,), jnp.float32),
        fc1_w=w(ks[3], (dim, hidden)),
        fc1_b=jnp.zeros((hidden,), jnp.float32),
        fc2_w=w(ks[4], (hidden, dim)),
        fc2_b=jnp.zeros((dim,), jnp.float32),
    )


if __name__ == "__main__":
    B, H, W, C = 2, 8, 8, 16
    num_heads, kernel_size, padding, mlp_ratio = 2, 3, 1, 3.0

    key = jax.random.PRNGKey(0)
    kx, kp = jax.random.split(key)
    x = jax.random.normal(kx, (B, H, W, C), jnp.float32)
    params = init_params(kp, C, num_heads, kernel_size, mlp_ratio)

    fwd = jax.jit(partial(outlooker_forward, num_heads=num_heads,
                          kernel_size=kernel_size, padding=padding))
    y = fwd(x, params)
    jax.block_until_ready(y)

    assert y.shape == (B, H, W, C) and y.dtype == jnp.float32
    assert bool(jnp.all(jnp.isfinite(y)))

    y_ref = outlooker_reference(x, params, num_heads=num_heads,
                                kernel_size=kernel_size, padding=padding)
    err = float(jnp.max(jnp.abs(y - y_ref)))
    assert bool(jnp.allclose(y, y_ref, rtol=2e-2, atol=2e-2)), f"max abs err {err}"

    print("KERNEL_OK")
</pallas_src>

<mosaic_0001>
module attributes {stable_mosaic.version = 11 : i64} {
  func.func @_va_kernel(%arg0: i32, %arg1: memref<128x16xf32, #tpu.memory_space<vmem>>, %arg2: memref<1x16xf32, #tpu.memory_space<vmem>>, %arg3: memref<1x16xf32, #tpu.memory_space<vmem>>, %arg4: memref<16x16xbf16, #tpu.memory_space<vmem>>, %arg5: memref<16x256xbf16, #tpu.memory_space<vmem>>, %arg6: memref<1x256xf32, #tpu.memory_space<vmem>>, %arg7: memref<128x16xbf16, #tpu.memory_space<vmem>>, %arg8: memref<128x256xbf16, #tpu.memory_space<vmem>>) attributes {dimension_semantics = [#tpu.dimension_semantics<parallel>], iteration_bounds = array<i64: 1>, scalar_prefetch = 0 : i64, scratch_operands = 0 : i64, tpu.core_type = #tpu.core_type<tc>, window_params = [{transform_indices = @transform_0, window_bounds = array<i64: 128, 16>}, {pipeline_mode = #tpu.pipeline_mode<synchronous>, transform_indices = @transform_1, window_bounds = array<i64: 1, 16>}, {pipeline_mode = #tpu.pipeline_mode<synchronous>, transform_indices = @transform_2, window_bounds = array<i64: 1, 16>}, {pipeline_mode = #tpu.pipeline_mode<synchronous>, transform_indices = @transform_3, window_bounds = array<i64: 16, 16>}, {pipeline_mode = #tpu.pipeline_mode<synchronous>, transform_indices = @transform_4, window_bounds = array<i64: 16, 256>}, {pipeline_mode = #tpu.pipeline_mode<synchronous>, transform_indices = @transform_5, window_bounds = array<i64: 1, 256>}, {transform_indices = @transform_6, window_bounds = array<i64: 128, 16>}, {transform_indices = @transform_7, window_bounds = array<i64: 128, 256>}]} {
    %c0 = arith.constant 0 : index
    %c0_0 = arith.constant 0 : index
    %0 = vector.load %arg1[%c0, %c0_0] : memref<128x16xf32, #tpu.memory_space<vmem>>, vector<128x16xf32>
    %cst = arith.constant dense<0.000000e+00> : vector<128xf32>
    %1 = vector.multi_reduction <add>, %0, %cst [1] : vector<128x16xf32> to vector<128xf32>
    %2 = vector.shape_cast %1 : vector<128xf32> to vector<128x1xf32>
    %cst_1 = arith.constant 1.600000e+01 : f32
    %3 = vector.broadcast %cst_1 : f32 to vector<128x1xf32>
    %4 = arith.divf %2, %3 : vector<128x1xf32>
    %5 = vector.broadcast %4 : vector<128x1xf32> to vector<128x16xf32>
    %6 = arith.subf %0, %5 : vector<128x16xf32>
    %7 = arith.mulf %6, %6 : vector<128x16xf32>
    %cst_2 = arith.constant dense<0.000000e+00> : vector<128xf32>
    %8 = vector.multi_reduction <add>, %7, %cst_2 [1] : vector<128x16xf32> to vector<128xf32>
    %9 = vector.shape_cast %8 : vector<128xf32> to vector<128x1xf32>
    %cst_3 = arith.constant 1.600000e+01 : f32
    %10 = vector.broadcast %cst_3 : f32 to vector<128x1xf32>
    %11 = arith.divf %9, %10 : vector<128x1xf32>
    %12 = vector.broadcast %4 : vector<128x1xf32> to vector<128x16xf32>
    %13 = arith.subf %0, %12 : vector<128x16xf32>
    %cst_4 = arith.constant 9.99999974E-6 : f32
    %14 = vector.broadcast %cst_4 : f32 to vector<128x1xf32>
    %15 = arith.addf %11, %14 : vector<128x1xf32>
    %16 = math.rsqrt %15 : vector<128x1xf32>
    %17 = vector.broadcast %16 : vector<128x1xf32> to vector<128x16xf32>
    %18 = arith.mulf %13, %17 : vector<128x16xf32>
    %c0_5 = arith.constant 0 : index
    %c0_6 = arith.constant 0 : index
    %19 = vector.load %arg2[%c0_5, %c0_6] : memref<1x16xf32, #tpu.memory_space<vmem>>, vector<1x16xf32>
    %20 = vector.broadcast %19 : vector<1x16xf32> to vector<128x16xf32>
    %21 = arith.mulf %18, %20 : vector<128x16xf32>
    %c0_7 = arith.constant 0 : index
    %c0_8 = arith.constant 0 : index
    %22 = vector.load %arg3[%c0_7, %c0_8] : memref<1x16xf32, #tpu.memory_space<vmem>>, vector<1x16xf32>
    %23 = vector.broadcast %22 : vector<1x16xf32> to vector<128x16xf32>
    %24 = arith.addf %21, %23 : vector<128x16xf32>
    %25 = arith.truncf %24 : vector<128x16xf32> to vector<128x16xbf16>
    %c0_9 = arith.constant 0 : index
    %c0_10 = arith.constant 0 : index
    %26 = vector.load %arg4[%c0_9, %c0_10] : memref<16x16xbf16, #tpu.memory_space<vmem>>, vector<16x16xbf16>
    %cst_11 = arith.constant dense<0.000000e+00> : vector<128x16xf32>
    %27 = tpu.matmul %25, %26, %cst_11 {dimension_numbers = #tpu.dot_dimension_numbers<[1], [0], [0], [1], [0, 0, 1, 1], [], []>} : vector<128x16xbf16>, vector<16x16xbf16>, vector<128x16xf32> -> vector<128x16xf32>
    %28 = arith.truncf %27 : vector<128x16xf32> to vector<128x16xbf16>
    %c0_12 = arith.constant 0 : index
    %c0_13 = arith.constant 0 : index
    %29 = vector.load %arg7[%c0_12, %c0_13] : memref<128x16xbf16, #tpu.memory_space<vmem>>, vector<128x16xbf16>
    tpu.vector_store %arg7[%c0_12, %c0_13], %28 {strides = array<i32>} : memref<128x16xbf16, #tpu.memory_space<vmem>>, vector<128x16xbf16>,
    %c0_14 = arith.constant 0 : index
    %c0_15 = arith.constant 0 : index
    %30 = vector.load %arg5[%c0_14, %c0_15] : memref<16x256xbf16, #tpu.memory_space<vmem>>, vector<16x256xbf16>
    %cst_16 = arith.constant dense<0.000000e+00> : vector<128x256xf32>
    %31 = tpu.matmul %25, %30, %cst_16 {dimension_numbers = #tpu.dot_dimension_numbers<[1], [0], [0], [1], [0, 0, 1, 1], [], []>} : vector<128x16xbf16>, vector<16x256xbf16>, vector<128x256xf32> -> vector<128x256xf32>
    %c0_17 = arith.constant 0 : index
    %c0_18 = arith.constant 0 : index
    %32 = vector.load %arg6[%c0_17, %c0_18] : memref<1x256xf32, #tpu.memory_space<vmem>>, vector<1x256xf32>
    %33 = vector.broadcast %32 : vector<1x256xf32> to vector<128x256xf32>
    %34 = arith.addf %31, %33 : vector<128x256xf32>
    %35 = arith.truncf %34 : vector<128x256xf32> to vector<128x256xbf16>
    %c0_19 = arith.constant 0 : index
    %c0_20 = arith.constant 0 : index
    %36 = vector.load %arg8[%c0_19, %c0_20] : memref<128x256xbf16, #tpu.memory_space<vmem>>, vector<128x256xbf16>
    tpu.vector_store %arg8[%c0_19, %c0_20], %35 {strides = array<i32>} : memref<128x256xbf16, #tpu.memory_space<vmem>>, vector<128x256xbf16>,
    return
  }
  func.func @transform_0(%arg0: i32) -> (i32, i32) {
    %c0_i32 = arith.constant 0 : i32
    %c0_i32_0 = arith.constant 0 : i32
    return %arg0, %c0_i32 : i32, i32
  }
  func.func @transform_1(%arg0: i32) -> (i32, i32) {
    %c0_i32 = arith.constant 0 : i32
    %c0_i32_0 = arith.constant 0 : i32
    %c0_i32_1 = arith.constant 0 : i32
    return %c0_i32, %c0_i32_0 : i32, i32
  }
  func.func @transform_2(%arg0: i32) -> (i32, i32) {
    %c0_i32 = arith.constant 0 : i32
    %c0_i32_0 = arith.constant 0 : i32
    %c0_i32_1 = arith.constant 0 : i32
    return %c0_i32, %c0_i32_0 : i32, i32
  }
  func.func @transform_3(%arg0: i32) -> (i32, i32) {
    %c0_i32 = arith.constant 0 : i32
    %c0_i32_0 = arith.constant 0 : i32
    %c0_i32_1 = arith.constant 0 : i32
    return %c0_i32, %c0_i32_0 : i32, i32
  }
  func.func @transform_4(%arg0: i32) -> (i32, i32) {
    %c0_i32 = arith.constant 0 : i32
    %c0_i32_0 = arith.constant 0 : i32
    %c0_i32_1 = arith.constant 0 : i32
    return %c0_i32, %c0_i32_0 : i32, i32
  }
  func.func @transform_5(%arg0: i32) -> (i32, i32) {
    %c0_i32 = arith.constant 0 : i32
    %c0_i32_0 = arith.constant 0 : i32
    %c0_i32_1 = arith.constant 0 : i32
    return %c0_i32, %c0_i32_0 : i32, i32
  }
  func.func @transform_6(%arg0: i32) -> (i32, i32) {
    %c0_i32 = arith.constant 0 : i32
    %c0_i32_0 = arith.constant 0 : i32
    return %arg0, %c0_i32 : i32, i32
  }
  func.func @transform_7(%arg0: i32) -> (i32, i32) {
    %c0_i32 = arith.constant 0 : i32
    %c0_i32_0 = arith.constant 0 : i32
    return %arg0, %c0_i32 : i32, i32
  }
}

module attributes {stable_mosaic.version = 11 : i64} {
  func.func @_linear_kernel(%arg0: i32, %arg1: memref<128x16xbf16, #tpu.memory_space<vmem>>, %arg2: memref<16x16xbf16, #tpu.memory_space<vmem>>, %arg3: memref<1x16xf32, #tpu.memory_space<vmem>>, %arg4: memref<128x16xf32, #tpu.memory_space<vmem>>, %arg5: memref<128x16xf32, #tpu.memory_space<vmem>>) attributes {dimension_semantics = [#tpu.dimension_semantics<parallel>], iteration_bounds = array<i64: 1>, scalar_prefetch = 0 : i64, scratch_operands = 0 : i64, tpu.core_type = #tpu.core_type<tc>, window_params = [{transform_indices = @transform_0, window_bounds = array<i64: 128, 16>}, {pipeline_mode = #tpu.pipeline_mode<synchronous>, transform_indices = @transform_1, window_bounds = array<i64: 16, 16>}, {pipeline_mode = #tpu.pipeline_mode<synchronous>, transform_indices = @transform_2, window_bounds = array<i64: 1, 16>}, {transform_indices = @transform_3, window_bounds = array<i64: 128, 16>}, {transform_indices = @transform_4, window_bounds = array<i64: 128, 16>}]} {
    %c0 = arith.constant 0 : index
    %c0_0 = arith.constant 0 : index
    %0 = vector.load %arg1[%c0, %c0_0] : memref<128x16xbf16, #tpu.memory_space<vmem>>, vector<128x16xbf16>
    %c0_1 = arith.constant 0 : index
    %c0_2 = arith.constant 0 : index
    %1 = vector.load %arg2[%c0_1, %c0_2] : memref<16x16xbf16, #tpu.memory_space<vmem>>, vector<16x16xbf16>
    %cst = arith.constant dense<0.000000e+00> : vector<128x16xf32>
    %2 = tpu.matmul %0, %1, %cst {dimension_numbers = #tpu.dot_dimension_numbers<[1], [0], [0], [1], [0, 0, 1, 1], [], []>} : vector<128x16xbf16>, vector<16x16xbf16>, vector<128x16xf32> -> vector<128x16xf32>
    %c0_3 = arith.constant 0 : index
    %c0_4 = arith.constant 0 : index
    %3 = vector.load %arg3[%c0_3, %c0_4] : memref<1x16xf32, #tpu.memory_space<vmem>>, vector<1x16xf32>
    %4 = vector.broadcast %3 : vector<1x16xf32> to vector<128x16xf32>
    %5 = arith.addf %2, %4 : vector<128x16xf32>
    %c0_5 = arith.constant 0 : index
    %c0_6 = arith.constant 0 : index
    %6 = vector.load %arg4[%c0_5, %c0_6] : memref<128x16xf32, #tpu.memory_space<vmem>>, vector<128x16xf32>
    %7 = arith.addf %5, %6 : vector<128x16xf32>
    %c0_7 = arith.constant 0 : index
    %c0_8 = arith.constant 0 : index
    %8 = vector.load %arg5[%c0_7, %c0_8] : memref<128x16xf32, #tpu.memory_space<vmem>>, vector<128x16xf32>
    tpu.vector_store %arg5[%c0_7, %c0_8], %7 {strides = array<i32>} : memref<128x16xf32, #tpu.memory_space<vmem>>, vector<128x16xf32>,
    return
  }
  func.func @transform_0(%arg0: i32) -> (i32, i32) {
    %c0_i32 = arith.constant 0 : i32
    %c0_i32_0 = arith.constant 0 : i32
    return %arg0, %c0_i32 : i32, i32
  }
  func.func @transform_1(%arg0: i32) -> (i32, i32) {
    %c0_i32 = arith.constant 0 : i32
    %c0_i32_0 = arith.constant 0 : i32
    %c0_i32_1 = arith.constant 0 : i32
    return %c0_i32, %c0_i32_0 : i32, i32
  }
  func.func @transform_2(%arg0: i32) -> (i32, i32) {
    %c0_i32 = arith.constant 0 : i32
    %c0_i32_0 = arith.constant 0 : i32
    %c0_i32_1 = arith.constant 0 : i32
    return %c0_i32, %c0_i32_0 : i32, i32
  }
  func.func @transform_3(%arg0: i32) -> (i32, i32) {
    %c0_i32 = arith.constant 0 : i32
    %c0_i32_0 = arith.constant 0 : i32
    return %arg0, %c0_i32 : i32, i32
  }
  func.func @transform_4(%arg0: i32) -> (i32, i32) {
    %c0_i32 = arith.constant 0 : i32
    %c0_i32_0 = arith.constant 0 : i32
    return %arg0, %c0_i32 : i32, i32
  }
}

module attributes {stable_mosaic.version = 11 : i64} {
  func.func @_outlook_core_kernel(%arg0: i32, %arg1: memref<1x18x9x64xbf16, #tpu.memory_space<vmem>>, %arg2: memref<1x16x64xbf16, #tpu.memory_space<vmem>>, %arg3: memref<1x16x64xbf16, #tpu.memory_space<vmem>>, %arg4: memref<16x256xf32, #tpu.memory_space<vmem>>, %arg5: memref<9x8x256xf32, #tpu.memory_space<vmem>>) attributes {dimension_semantics = [#tpu.dimension_semantics<parallel>], iteration_bounds = array<i64: 2>, scalar_prefetch = 0 : i64, scratch_operands = 2 : i64, tpu.core_type = #tpu.core_type<tc>, window_params = [{transform_indices = @transform_0, window_bounds = array<i64: 1, 18, 9, 64>}, {transform_indices = @transform_1, window_bounds = array<i64: 1, 16, 64>}, {transform_indices = @transform_2, window_bounds = array<i64: 1, 16, 64>}]} {
    %cst = arith.constant 0.000000e+00 : f32
    %0 = vector.broadcast %cst : f32 to vector<16x128xf32>
    %c0 = arith.constant 0 : index
    %c0_0 = arith.constant 0 : index
    %1 = vector.load %arg4[%c0, %c0_0] : memref<16x256xf32, #tpu.memory_space<vmem>>, vector<16x128xf32>
    tpu.vector_store %arg4[%c0, %c0_0], %0 {strides = array<i32>} : memref<16x256xf32, #tpu.memory_space<vmem>>, vector<16x128xf32>,
    %cst_1 = arith.constant 0.000000e+00 : f32
    %2 = vector.broadcast %cst_1 : f32 to vector<16x128xf32>
    %c0_2 = arith.constant 0 : index
    %c128 = arith.constant 128 : index
    %3 = vector.load %arg4[%c0_2, %c128] : memref<16x256xf32, #tpu.memory_space<vmem>>, vector<16x128xf32>
    tpu.vector_store %arg4[%c0_2, %c128], %2 {strides = array<i32>} : memref<16x256xf32, #tpu.memory_space<vmem>>, vector<16x128xf32>,
    %cst_3 = arith.constant 0.000000e+00 : f32
    %4 = vector.broadcast %cst_3 : f32 to vector<9x8x128xf32>
    %c0_4 = arith.constant 0 : index
    %c0_5 = arith.constant 0 : index
    %c0_6 = arith.constant 0 : index
    %5 = vector.load %arg5[%c0_4, %c0_5, %c0_6] : memref<9x8x256xf32, #tpu.memory_space<vmem>>, vector<9x8x128xf32>
    tpu.vector_store %arg5[%c0_4, %c0_5, %c0_6], %4 {strides = array<i32>} : memref<9x8x256xf32, #tpu.memory_space<vmem>>, vector<9x8x128xf32>,
    %cst_7 = arith.constant 0.000000e+00 : f32
    %6 = vector.broadcast %cst_7 : f32 to vector<9x8x128xf32>
    %c0_8 = arith.constant 0 : index
    %c0_9 = arith.constant 0 : index
    %c128_10 = arith.constant 128 : index
    %7 = vector.load %arg5[%c0_8, %c0_9, %c128_10] : memref<9x8x256xf32, #tpu.memory_space<vmem>>, vector<9x8x128xf32>
    tpu.vector_store %arg5[%c0_8, %c0_9, %c128_10], %6 {strides = array<i32>} : memref<9x8x256xf32, #tpu.memory_space<vmem>>, vector<9x8x128xf32>,
    %c0_11 = arith.constant 0 : index
    %c0_12 = arith.constant 0 : index
    %c0_13 = arith.constant 0 : index
    %8 = vector.load %arg2[%c0_11, %c0_12, %c0_13] : memref<1x16x64xbf16, #tpu.memory_space<vmem>>, vector<1x16x64xbf16>
    %9 = vector.shape_cast %8 : vector<1x16x64xbf16> to vector<16x64xbf16>
    %10 = arith.extf %9 : vector<16x64xbf16> to vector<16x64xf32>
    %c0_14 = arith.constant 0 : index
    %c128_15 = arith.constant 128 : index
    %11 = vector.load %arg4[%c0_14, %c128_15] : memref<16x256xf32, #tpu.memory_space<vmem>>, vector<16x64xf32>
    tpu.vector_store %arg4[%c0_14, %c128_15], %10 {strides = array<i32>} : memref<16x256xf32, #tpu.memory_space<vmem>>, vector<16x64xf32>,
    %12 = tpu.iota {dimensions = array<i32: 1>} : vector<9x64xi32>
    %c8_i32 = arith.constant 8 : i32
    %c0_i32 = arith.constant 0 : i32
    %13 = arith.cmpi eq, %c8_i32, %c0_i32 : i32
    %c1_i32 = arith.constant 1 : i32
    %14 = arith.select %13, %c1_i32, %c8_i32 : i32
    %15 = vector.broadcast %14 : i32 to vector<9x64xi32>
    %16 = arith.remsi %12, %15 : vector<9x64xi32>
    %c0_i32_16 = arith.constant 0 : i32
    %17 = vector.broadcast %c0_i32_16 : i32 to vector<9x64xi32>
    %18 = arith.cmpi ne, %16, %17 : vector<9x64xi32>
    %c0_i32_17 = arith.constant 0 : i32
    %19 = vector.broadcast %c0_i32_17 : i32 to vector<9x64xi32>
    %20 = arith.cmpi slt, %16, %19 : vector<9x64xi32>
    %c0_i32_18 = arith.constant 0 : i32
    %21 = arith.cmpi slt, %14, %c0_i32_18 : i32
    %22 = vector.broadcast %21 : i1 to vector<9x64xi1>
    %23 = vector.broadcast %22 : vector<9x64xi1> to vector<9x64xi1>
    %24 = arith.xori %20, %23 : vector<9x64xi1>
    %25 = arith.andi %24, %18 : vector<9x64xi1>
    %26 = vector.broadcast %14 : i32 to vector<9x64xi32>
    %27 = arith.addi %16, %26 : vector<9x64xi32>
    %28 = arith.select %25, %27, %16 : vector<9x64xi1>, vector<9x64xi32>
    %29 = tpu.iota {dimensions = array<i32: 0>} : vector<9x64xi32>
    %c3_i32 = arith.constant 3 : i32
    %c0_i32_19 = arith.constant 0 : i32
    %30 = arith.cmpi eq, %c3_i32, %c0_i32_19 : i32
    %c1_i32_20 = arith.constant 1 : i32
    %31 = arith.select %30, %c1_i32_20, %c3_i32 : i32
    %32 = vector.broadcast %31 : i32 to vector<9x64xi32>
    %33 = arith.remsi %29, %32 : vector<9x64xi32>
    %c0_i32_21 = arith.constant 0 : i32
    %34 = vector.broadcast %c0_i32_21 : i32 to vector<9x64xi32>
    %35 = arith.cmpi ne, %33, %34 : vector<9x64xi32>
    %c0_i32_22 = arith.constant 0 : i32
    %36 = vector.broadcast %c0_i32_22 : i32 to vector<9x64xi32>
    %37 = arith.cmpi slt, %33, %36 : vector<9x64xi32>
    %c0_i32_23 = arith.constant 0 : i32
    %38 = arith.cmpi slt, %31, %c0_i32_23 : i32
    %39 = vector.broadcast %38 : i1 to vector<9x64xi1>
    %40 = vector.broadcast %39 : vector<9x64xi1> to vector<9x64xi1>
    %41 = arith.xori %37, %40 : vector<9x64xi1>
    %42 = arith.andi %41, %35 : vector<9x64xi1>
    %43 = vector.broadcast %31 : i32 to vector<9x64xi32>
    %44 = arith.addi %33, %43 : vector<9x64xi32>
    %45 = arith.select %42, %44, %33 : vector<9x64xi1>, vector<9x64xi32>
    %c1_i32_24 = arith.constant 1 : i32
    %46 = vector.broadcast %c1_i32_24 : i32 to vector<9x64xi32>
    %47 = arith.subi %45, %46 : vector<9x64xi32>
    %48 = arith.addi %28, %47 : vector<9x64xi32>
    %c0_i32_25 = arith.constant 0 : i32
    %49 = vector.broadcast %c0_i32_25 : i32 to vector<9x64xi32>
    %50 = arith.cmpi sge, %48, %49 : vector<9x64xi32>
    %c8_i32_26 = arith.constant 8 : i32
    %51 = vector.broadcast %c8_i32_26 : i32 to vector<9x64xi32>
    %52 = arith.cmpi slt, %48, %51 : vector<9x64xi32>
    %53 = arith.andi %50, %52 : vector<9x64xi1>
    %54 = arith.extui %53 : vector<9x64xi1> to vector<9x64xi32>
    %55 = arith.sitofp %54 : vector<9x64xi32> to vector<9x64xf32>
    %c0_27 = arith.constant 0 : index
    %c0_28 = arith.constant 0 : index
    %c0_29 = arith.constant 0 : index
    %c0_30 = arith.constant 0 : index
    %56 = vector.load %arg1[%c0_27, %c0_28, %c0_29, %c0_30] : memref<1x18x9x64xbf16, #tpu.memory_space<vmem>>, vector<1x1x9x64xbf16>
    %57 = vector.shape_cast %56 : vector<1x1x9x64xbf16> to vector<9x64xbf16>
    %58 = arith.extf %57 : vector<9x64xbf16> to vector<9x64xf32>
    %cst_31 = arith.constant dense<0xFF800000> : vector<64xf32>
    %59 = vector.multi_reduction <maximumf>, %58, %cst_31 [0] : vector<9x64xf32> to vector<64xf32>
    %60 = vector.shape_cast %59 : vector<64xf32> to vector<1x64xf32>
    %61 = vector.broadcast %60 : vector<1x64xf32> to vector<9x64xf32>
    %62 = arith.subf %58, %61 : vector<9x64xf32>
    %63 = math.exp %62 : vector<9x64xf32>
    %cst_32 = arith.constant dense<0.000000e+00> : vector<64xf32>
    %64 = vector.multi_reduction <add>, %63, %cst_32 [0] : vector<9x64xf32> to vector<64xf32>
    %65 = vector.shape_cast %64 : vector<64xf32> to vector<1x64xf32>
    %66 = tpu.reciprocal %65 {approx = true} : vector<1x64xf32> -> vector<1x64xf32>
    %67 = vector.broadcast %66 : vector<1x64xf32> to vector<9x64xf32>
    %68 = arith.mulf %63, %67 : vector<9x64xf32>
    %69 = arith.mulf %68, %55 : vector<9x64xf32>
    %c0_33 = arith.constant 0 : index
    %c119 = arith.constant 119 : index
    %70 = vector.load %arg4[%c0_33, %c119] : memref<16x256xf32, #tpu.memory_space<vmem>>, vector<8x64xf32>
    %71 = vector.extract_strided_slice %69 {offsets = [0, 0], sizes = [1, 64], strides = [1, 1]} : vector<9x64xf32> to vector<1x64xf32>
    %72 = vector.broadcast %71 : vector<1x64xf32> to vector<8x64xf32>
    %73 = arith.mulf %72, %70 : vector<8x64xf32>
    %c0_34 = arith.constant 0 : index
    %c120 = arith.constant 120 : index
    %74 = vector.load %arg4[%c0_34, %c120] : memref<16x256xf32, #tpu.memory_space<vmem>>, vector<8x64xf32>
    %75 = vector.extract_strided_slice %69 {offsets = [1, 0], sizes = [1, 64], strides = [1, 1]} : vector<9x64xf32> to vector<1x64xf32>
    %76 = vector.broadcast %75 : vector<1x64xf32> to vector<8x64xf32>
    %77 = arith.mulf %76, %74 : vector<8x64xf32>
    %c0_35 = arith.constant 0 : index
    %c121 = arith.constant 121 : index
    %78 = vector.load %arg4[%c0_35, %c121] : memref<16x256xf32, #tpu.memory_space<vmem>>, vector<8x64xf32>
    %79 = vector.extract_strided_slice %69 {offsets = [2, 0], sizes = [1, 64], strides = [1, 1]} : vector<9x64xf32> to vector<1x64xf32>
    %80 = vector.broadcast %79 : vector<1x64xf32> to vector<8x64xf32>
    %81 = arith.mulf %80, %78 : vector<8x64xf32>
    %c0_36 = arith.constant 0 : index
    %c127 = arith.constant 127 : index
    %82 = vector.load %arg4[%c0_36, %c127] : memref<16x256xf32, #tpu.memory_space<vmem>>, vector<8x64xf32>
    %83 = vector.extract_strided_slice %69 {offsets = [3, 0], sizes = [1, 64], strides = [1, 1]} : vector<9x64xf32> to vector<1x64xf32>
    %84 = vector.broadcast %83 : vector<1x64xf32> to vector<8x64xf32>
    %85 = arith.mulf %84, %82 : vector<8x64xf32>
    %86 = arith.addf %73, %85 : vector<8x64xf32>
    %c0_37 = arith.constant 0 : index
    %c128_38 = arith.constant 128 : index
    %87 = vector.load %arg4[%c0_37, %c128_38] : memref<16x256xf32, #tpu.memory_space<vmem>>, vector<8x64xf32>
    %88 = vector.extract_strided_slice %69 {offsets = [4, 0], sizes = [1, 64], strides = [1, 1]} : vector<9x64xf32> to vector<1x64xf32>
    %89 = vector.broadcast %88 : vector<1x64xf32> to vector<8x64xf32>
    %90 = arith.mulf %89, %87 : vector<8x64xf32>
    %91 = arith.addf %77, %90 : vector<8x64xf32>
    %c0_39 = arith.constant 0 : index
    %c129 = arith.constant 129 : index
    %92 = vector.load %arg4[%c0_39, %c129] : memref<16x256xf32, #tpu.memory_space<vmem>>, vector<8x64xf32>
    %93 = vector.extract_strided_slice %69 {offsets = [5, 0], sizes = [1, 64], strides = [1, 1]} : vector<9x64xf32> to vector<1x64xf32>
    %94 = vector.broadcast %93 : vector<1x64xf32> to vector<8x64xf32>
    %95 = arith.mulf %94, %92 : vector<8x64xf32>
    %96 = arith.addf %81, %95 : vector<8x64xf32>
    %c0_40 = arith.constant 0 : index
    %c135 = arith.constant 135 : index
    %97 = vector.load %arg4[%c0_40, %c135] : memref<16x256xf32, #tpu.memory_space<vmem>>, vector<8x64xf32>
    %98 = vector.extract_strided_slice %69 {offsets = [6, 0], sizes = [1, 64], strides = [1, 1]} : vector<9x64xf32> to vector<1x64xf32>
    %99 = vector.broadcast %98 : vector<1x64xf32> to vector<8x64xf32>
    %100 = arith.mulf %99, %97 : vector<8x64xf32>
    %101 = arith.addf %86, %100 : vector<8x64xf32>
    %c0_41 = arith.constant 0 : index
    %c136 = arith.constant 136 : index
    %102 = vector.load %arg4[%c0_41, %c136] : memref<16x256xf32, #tpu.memory_space<vmem>>, vector<8x64xf32>
    %103 = vector.extract_strided_slice %69 {offsets = [7, 0], sizes = [1, 64], strides = [1, 1]} : vector<9x64xf32> to vector<1x64xf32>
    %104 = vector.broadcast %103 : vector<1x64xf32> to vector<8x64xf32>
    %105 = arith.mulf %104, %102 : vector<8x64xf32>
    %106 = arith.addf %91, %105 : vector<8x64xf32>
    %c0_42 = arith.constant 0 : index
    %c137 = arith.constant 137 : index
    %107 = vector.load %arg4[%c0_42, %c137] : memref<16x256xf32, #tpu.memory_space<vmem>>, vector<8x64xf32>
    %108 = vector.extract_strided_slice %69 {offsets = [8, 0], sizes = [1, 64], strides = [1, 1]} : vector<9x64xf32> to vector<1x64xf32>
    %109 = vector.broadcast %108 : vector<1x64xf32> to vector<8x64xf32>
    %110 = arith.mulf %109, %107 : vector<8x64xf32>
    %111 = arith.addf %96, %110 : vector<8x64xf32>
    %112 = arith.addf %101, %106 : vector<8x64xf32>
    %113 = arith.addf %112, %111 : vector<8x64xf32>
    %114 = vector.extract_strided_slice %55 {offsets = [0, 0], sizes = [1, 64], strides = [1, 1]} : vector<9x64xf32> to vector<1x64xf32>
    %115 = vector.broadcast %114 : vector<1x64xf32> to vector<8x64xf32>
    %116 = arith.mulf %113, %115 : vector<8x64xf32>
    %c0_43 = arith.constant 0 : index
    %c0_44 = arith.constant 0 : index
    %c128_45 = arith.constant 128 : index
    %117 = vector.load %arg5[%c0_43, %c0_44, %c128_45] : memref<9x8x256xf32, #tpu.memory_space<vmem>>, vector<1x8x64xf32>
    %118 = vector.shape_cast %117 : vector<1x8x64xf32> to vector<8x64xf32>
    %119 = vector.shape_cast %116 : vector<8x64xf32> to vector<1x8x64xf32>
    tpu.vector_store %arg5[%c0_43, %c0_44, %c128_45], %119 {strides = array<i32>} : memref<9x8x256xf32, #tpu.memory_space<vmem>>, vector<1x8x64xf32>,
    %c0_46 = arith.constant 0 : index
    %c1 = arith.constant 1 : index
    %c0_47 = arith.constant 0 : index
    %c0_48 = arith.constant 0 : index
    %120 = vector.load %arg1[%c0_46, %c1, %c0_47, %c0_48] : memref<1x18x9x64xbf16, #tpu.memory_space<vmem>>, vector<1x1x9x64xbf16>
    %121 = vector.shape_cast %120 : vector<1x1x9x64xbf16> to vector<9x64xbf16>
    %122 = arith.extf %121 : vector<9x64xbf16> to vector<9x64xf32>
    %cst_49 = arith.constant dense<0xFF800000> : vector<64xf32>
    %123 = vector.multi_reduction <maximumf>, %122, %cst_49 [0] : vector<9x64xf32> to vector<64xf32>
    %124 = vector.shape_cast %123 : vector<64xf32> to vector<1x64xf32>
    %125 = vector.broadcast %124 : vector<1x64xf32> to vector<9x64xf32>
    %126 = arith.subf %122, %125 : vector<9x64xf32>
    %127 = math.exp %126 : vector<9x64xf32>
    %cst_50 = arith.constant dense<0.000000e+00> : vector<64xf32>
    %128 = vector.multi_reduction <add>, %127, %cst_50 [0] : vector<9x64xf32> to vector<64xf32>
    %129 = vector.shape_cast %128 : vector<64xf32> to vector<1x64xf32>
    %130 = tpu.reciprocal %129 {approx = true} : vector<1x64xf32> -> vector<1x64xf32>
    %131 = vector.broadcast %130 : vector<1x64xf32> to vector<9x64xf32>
    %132 = arith.mulf %127, %131 : vector<9x64xf32>
    %133 = arith.mulf %132, %55 : vector<9x64xf32>
    %c0_51 = arith.constant 0 : index
    %c119_52 = arith.constant 119 : index
    %134 = vector.load %arg4[%c0_51, %c119_52] : memref<16x256xf32, #tpu.memory_space<vmem>>, vector<8x64xf32>
    %135 = vector.extract_strided_slice %133 {offsets = [0, 0], sizes = [1, 64], strides = [1, 1]} : vector<9x64xf32> to vector<1x64xf32>
    %136 = vector.broadcast %135 : vector<1x64xf32> to vector<8x64xf32>
    %137 = arith.mulf %136, %134 : vector<8x64xf32>
    %c0_53 = arith.constant 0 : index
    %c120_54 = arith.constant 120 : index
    %138 = vector.load %arg4[%c0_53, %c120_54] : memref<16x256xf32, #tpu.memory_space<vmem>>, vector<8x64xf32>
    %139 = vector.extract_strided_slice %133 {offsets = [1, 0], sizes = [1, 64], strides = [1, 1]} : vector<9x64xf32> to vector<1x64xf32>
    %140 = vector.broadcast %139 : vector<1x64xf32> to vector<8x64xf32>
    %141 = arith.mulf %140, %138 : vector<8x64xf32>
    %c0_55 = arith.constant 0 : index
    %c121_56 = arith.constant 121 : index
    %142 = vector.load %arg4[%c0_55, %c121_56] : memref<16x256xf32, #tpu.memory_space<vmem>>, vector<8x64xf32>
    %143 = vector.extract_strided_slice %133 {offsets = [2, 0], sizes = [1, 64], strides = [1, 1]} : vector<9x64xf32> to vector<1x64xf32>
    %144 = vector.broadcast %143 : vector<1x64xf32> to vector<8x64xf32>
    %145 = arith.mulf %144, %142 : vector<8x64xf32>
    %c0_57 = arith.constant 0 : index
    %c127_58 = arith.constant 127 : index
    %146 = vector.load %arg4[%c0_57, %c127_58] : memref<16x256xf32, #tpu.memory_space<vmem>>, vector<8x64xf32>
    %147 = vector.extract_strided_slice %133 {offsets = [3, 0], sizes = [1, 64], strides = [1, 1]} : vector<9x64xf32> to vector<1x64xf32>
    %148 = vector.broadcast %147 : vector<1x64xf32> to vector<8x64xf32>
    %149 = arith.mulf %148, %146 : vector<8x64xf32>
    %150 = arith.addf %137, %149 : vector<8x64xf32>
    %c0_59 = arith.constant 0 : index
    %c128_60 = arith.constant 128 : index
    %151 = vector.load %arg4[%c0_59, %c128_60] : memref<16x256xf32, #tpu.memory_space<vmem>>, vector<8x64xf32>
    %152 = vector.extract_strided_slice %133 {offsets = [4, 0], sizes = [1, 64], strides = [1, 1]} : vector<9x64xf32> to vector<1x64xf32>
    %153 = vector.broadcast %152 : vector<1x64xf32> to vector<8x64xf32>
    %154 = arith.mulf %153, %151 : vector<8x64xf32>
    %155 = arith.addf %141, %154 : vector<8x64xf32>
    %c0_61 = arith.constant 0 : index
    %c129_62 = arith.constant 129 : index
    %156 = vector.load %arg4[%c0_61, %c129_62] : memref<16x256xf32, #tpu.memory_space<vmem>>, vector<8x64xf32>
    %157 = vector.extract_strided_slice %133 {offsets = [5, 0], sizes = [1, 64], strides = [1, 1]} : vector<9x64xf32> to vector<1x64xf32>
    %158 = vector.broadcast %157 : vector<1x64xf32> to vector<8x64xf32>
    %159 = arith.mulf %158, %156 : vector<8x64xf32>
    %160 = arith.addf %145, %159 : vector<8x64xf32>
    %c0_63 = arith.constant 0 : index
    %c135_64 = arith.constant 135 : index
    %161 = vector.load %arg4[%c0_63, %c135_64] : memref<16x256xf32, #tpu.memory_space<vmem>>, vector<8x64xf32>
    %162 = vector.extract_strided_slice %133 {offsets = [6, 0], sizes = [1, 64], strides = [1, 1]} : vector<9x64xf32> to vector<1x64xf32>
    %163 = vector.broadcast %162 : vector<1x64xf32> to vector<8x64xf32>
    %164 = arith.mulf %163, %161 : vector<8x64xf32>
    %165 = arith.addf %150, %164 : vector<8x64xf32>
    %c0_65 = arith.constant 0 : index
    %c136_66 = arith.constant 136 : index
    %166 = vector.load %arg4[%c0_65, %c136_66] : memref<16x256xf32, #tpu.memory_space<vmem>>, vector<8x64xf32>
    %167 = vector.extract_strided_slice %133 {offsets = [7, 0], sizes = [1, 64], strides = [1, 1]} : vector<9x64xf32> to vector<1x64xf32>
    %168 = vector.broadcast %167 : vector<1x64xf32> to vector<8x64xf32>
    %169 = arith.mulf %168, %166 : vector<8x64xf32>
    %170 = arith.addf %155, %169 : vector<8x64xf32>
    %c0_67 = arith.constant 0 : index
    %c137_68 = arith.constant 137 : index
    %171 = vector.load %arg4[%c0_67, %c137_68] : memref<16x256xf32, #tpu.memory_space<vmem>>, vector<8x64xf32>
    %172 = vector.extract_strided_slice %133 {offsets = [8, 0], sizes = [1, 64], strides = [1, 1]} : vector<9x64xf32> to vector<1x64xf32>
    %173 = vector.broadcast %172 : vector<1x64xf32> to vector<8x64xf32>
    %174 = arith.mulf %173, %171 : vector<8x64xf32>
    %175 = arith.addf %160, %174 : vector<8x64xf32>
    %176 = arith.addf %165, %170 : vector<8x64xf32>
    %177 = arith.addf %176, %175 : vector<8x64xf32>
    %178 = vector.extract_strided_slice %55 {offsets = [1, 0], sizes = [1, 64], strides = [1, 1]} : vector<9x64xf32> to vector<1x64xf32>
    %179 = vector.broadcast %178 : vector<1x64xf32> to vector<8x64xf32>
    %180 = arith.mulf %177, %179 : vector<8x64xf32>
    %c1_69 = arith.constant 1 : index
    %c0_70 = arith.constant 0 : index
    %c128_71 = arith.constant 128 : index
    %181 = vector.load %arg5[%c1_69, %c0_70, %c128_71] : memref<9x8x256xf32, #tpu.memory_space<vmem>>, vector<1x8x64xf32>
    %182 = vector.shape_cast %181 : vector<1x8x64xf32> to vector<8x64xf32>
    %183 = vector.shape_cast %180 : vector<8x64xf32> to vector<1x8x64xf32>
    tpu.vector_store %arg5[%c1_69, %c0_70, %c128_71], %183 {strides = array<i32>} : memref<9x8x256xf32, #tpu.memory_space<vmem>>, vector<1x8x64xf32>,
    %c0_72 = arith.constant 0 : index
    %c2 = arith.constant 2 : index
    %c0_73 = arith.constant 0 : index
    %c0_74 = arith.constant 0 : index
    %184 = vector.load %arg1[%c0_72, %c2, %c0_73, %c0_74] : memref<1x18x9x64xbf16, #tpu.memory_space<vmem>>, vector<1x1x9x64xbf16>
    %185 = vector.shape_cast %184 : vector<1x1x9x64xbf16> to vector<9x64xbf16>
    %186 = arith.extf %185 : vector<9x64xbf16> to vector<9x64xf32>
    %cst_75 = arith.constant dense<0xFF800000> : vector<64xf32>
    %187 = vector.multi_reduction <maximumf>, %186, %cst_75 [0] : vector<9x64xf32> to vector<64xf32>
    %188 = vector.shape_cast %187 : vector<64xf32> to vector<1x64xf32>
    %189 = vector.broadcast %188 : vector<1x64xf32> to vector<9x64xf32>
    %190 = arith.subf %186, %189 : vector<9x64xf32>
    %191 = math.exp %190 : vector<9x64xf32>
    %cst_76 = arith.constant dense<0.000000e+00> : vector<64xf32>
    %192 = vector.multi_reduction <add>, %191, %cst_76 [0] : vector<9x64xf32> to vector<64xf32>
    %193 = vector.shape_cast %192 : vector<64xf32> to vector<1x64xf32>
    %194 = tpu.reciprocal %193 {approx = true} : vector<1x64xf32> -> vector<1x64xf32>
    %195 = vector.broadcast %194 : vector<1x64xf32> to vector<9x64xf32>
    %196 = arith.mulf %191, %195 : vector<9x64xf32>
    %197 = arith.mulf %196, %55 : vector<9x64xf32>
    %c0_77 = arith.constant 0 : index
    %c119_78 = arith.constant 119 : index
    %198 = vector.load %arg4[%c0_77, %c119_78] : memref<16x256xf32, #tpu.memory_space<vmem>>, vector<8x64xf32>
    %199 = vector.extract_strided_slice %197 {offsets = [0, 0], sizes = [1, 64], strides = [1, 1]} : vector<9x64xf32> to vector<1x64xf32>
    %200 = vector.broadcast %199 : vector<1x64xf32> to vector<8x64xf32>
    %201 = arith.mulf %200, %198 : vector<8x64xf32>
    %c0_79 = arith.constant 0 : index
    %c120_80 = arith.constant 120 : index
    %202 = vector.load %arg4[%c0_79, %c120_80] : memref<16x256xf32, #tpu.memory_space<vmem>>, vector<8x64xf32>
    %203 = vector.extract_strided_slice %197 {offsets = [1, 0], sizes = [1, 64], strides = [1, 1]} : vector<9x64xf32> to vector<1x64xf32>
    %204 = vector.broadcast %203 : vector<1x64xf32> to vector<8x64xf32>
    %205 = arith.mulf %204, %202 : vector<8x64xf32>
    %c0_81 = arith.constant 0 : index
    %c121_82 = arith.constant 121 : index
    %206 = vector.load %arg4[%c0_81, %c121_82] : memref<16x256xf32, #tpu.memory_space<vmem>>, vector<8x64xf32>
    %207 = vector.extract_strided_slice %197 {offsets = [2, 0], sizes = [1, 64], strides = [1, 1]} : vector<9x64xf32> to vector<1x64xf32>
    %208 = vector.broadcast %207 : vector<1x64xf32> to vector<8x64xf32>
    %209 = arith.mulf %208, %206 : vector<8x64xf32>
    %c0_83 = arith.constant 0 : index
    %c127_84 = arith.constant 127 : index
    %210 = vector.load %arg4[%c0_83, %c127_84] : memref<16x256xf32, #tpu.memory_space<vmem>>, vector<8x64xf32>
    %211 = vector.extract_strided_slice %197 {offsets = [3, 0], sizes = [1, 64], strides = [1, 1]} : vector<9x64xf32> to vector<1x64xf32>
    %212 = vector.broadcast %211 : vector<1x64xf32> to vector<8x64xf32>
    %213 = arith.mulf %212, %210 : vector<8x64xf32>
    %214 = arith.addf %201, %213 : vector<8x64xf32>
    %c0_85 = arith.constant 0 : index
    %c128_86 = arith.constant 128 : index
    %215 = vector.load %arg4[%c0_85, %c128_86] : memref<16x256xf32, #tpu.memory_space<vmem>>, vector<8x64xf32>
    %216 = vector.extract_strided_slice %197 {offsets = [4, 0], sizes = [1, 64], strides = [1, 1]} : vector<9x64xf32> to vector<1x64xf32>
    %217 = vector.broadcast %216 : vector<1x64xf32> to vector<8x64xf32>
    %218 = arith.mulf %217, %215 : vector<8x64xf32>
    %219 = arith.addf %205, %218 : vector<8x64xf32>
    %c0_87 = arith.constant 0 : index
    %c129_88 = arith.constant 129 : index
    %220 = vector.load %arg4[%c0_87, %c129_88] : memref<16x256xf32, #tpu.memory_space<vmem>>, vector<8x64xf32>
    %221 = vector.extract_strided_slice %197 {offsets = [5, 0], sizes = [1, 64], strides = [1, 1]} : vector<9x64xf32> to vector<1x64xf32>
    %222 = vector.broadcast %221 : vector<1x64xf32> to vector<8x64xf32>
    %223 = arith.mulf %222, %220 : vector<8x64xf32>
    %224 = arith.addf %209, %223 : vector<8x64xf32>
    %c0_89 = arith.constant 0 : index
    %c135_90 = arith.constant 135 : index
    %225 = vector.load %arg4[%c0_89, %c135_90] : memref<16x256xf32, #tpu.memory_space<vmem>>, vector<8x64xf32>
    %226 = vector.extract_strided_slice %197 {offsets = [6, 0], sizes = [1, 64], strides = [1, 1]} : vector<9x64xf32> to vector<1x64xf32>
    %227 = vector.broadcast %226 : vector<1x64xf32> to vector<8x64xf32>
    %228 = arith.mulf %227, %225 : vector<8x64xf32>
    %229 = arith.addf %214, %228 : vector<8x64xf32>
    %c0_91 = arith.constant 0 : index
    %c136_92 = arith.constant 136 : index
    %230 = vector.load %arg4[%c0_91, %c136_92] : memref<16x256xf32, #tpu.memory_space<vmem>>, vector<8x64xf32>
    %231 = vector.extract_strided_slice %197 {offsets = [7, 0], sizes = [1, 64], strides = [1, 1]} : vector<9x64xf32> to vector<1x64xf32>
    %232 = vector.broadcast %231 : vector<1x64xf32> to vector<8x64xf32>
    %233 = arith.mulf %232, %230 : vector<8x64xf32>
    %234 = arith.addf %219, %233 : vector<8x64xf32>
    %c0_93 = arith.constant 0 : index
    %c137_94 = arith.constant 137 : index
    %235 = vector.load %arg4[%c0_93, %c137_94] : memref<16x256xf32, #tpu.memory_space<vmem>>, vector<8x64xf32>
    %236 = vector.extract_strided_slice %197 {offsets = [8, 0], sizes = [1, 64], strides = [1, 1]} : vector<9x64xf32> to vector<1x64xf32>
    %237 = vector.broadcast %236 : vector<1x64xf32> to vector<8x64xf32>
    %238 = arith.mulf %237, %235 : vector<8x64xf32>
    %239 = arith.addf %224, %238 : vector<8x64xf32>
    %240 = arith.addf %229, %234 : vector<8x64xf32>
    %241 = arith.addf %240, %239 : vector<8x64xf32>
    %242 = vector.extract_strided_slice %55 {offsets = [2, 0], sizes = [1, 64], strides = [1, 1]} : vector<9x64xf32> to vector<1x64xf32>
    %243 = vector.broadcast %242 : vector<1x64xf32> to vector<8x64xf32>
    %244 = arith.mulf %241, %243 : vector<8x64xf32>
    %c2_95 = arith.constant 2 : index
    %c0_96 = arith.constant 0 : index
    %c128_97 = arith.constant 128 : index
    %245 = vector.load %arg5[%c2_95, %c0_96, %c128_97] : memref<9x8x256xf32, #tpu.memory_space<vmem>>, vector<1x8x64xf32>
    %246 = vector.shape_cast %245 : vector<1x8x64xf32> to vector<8x64xf32>
    %247 = vector.shape_cast %244 : vector<8x64xf32> to vector<1x8x64xf32>
    tpu.vector_store %arg5[%c2_95, %c0_96, %c128_97], %247 {strides = array<i32>} : memref<9x8x256xf32, #tpu.memory_space<vmem>>, vector<1x8x64xf32>,
    %c0_98 = arith.constant 0 : index
    %c3 = arith.constant 3 : index
    %c0_99 = arith.constant 0 : index
    %c0_100 = arith.constant 0 : index
    %248 = vector.load %arg1[%c0_98, %c3, %c0_99, %c0_100] : memref<1x18x9x64xbf16, #tpu.memory_space<vmem>>, vector<1x1x9x64xbf16>
    %249 = vector.shape_cast %248 : vector<1x1x9x64xbf16> to vector<9x64xbf16>
    %250 = arith.extf %249 : vector<9x64xbf16> to vector<9x64xf32>
    %cst_101 = arith.constant dense<0xFF800000> : vector<64xf32>
    %251 = vector.multi_reduction <maximumf>, %250, %cst_101 [0] : vector<9x64xf32> to vector<64xf32>
    %252 = vector.shape_cast %251 : vector<64xf32> to vector<1x64xf32>
    %253 = vector.broadcast %252 : vector<1x64xf32> to vector<9x64xf32>
    %254 = arith.subf %250, %253 : vector<9x64xf32>
    %255 = math.exp %254 : vector<9x64xf32>
    %cst_102 = arith.constant dense<0.000000e+00> : vector<64xf32>
    %256 = vector.multi_reduction <add>, %255, %cst_102 [0] : vector<9x64xf32> to vector<64xf32>
    %257 = vector.shape_cast %256 : vector<64xf32> to vector<1x64xf32>
    %258 = tpu.reciprocal %257 {approx = true} : vector<1x64xf32> -> vector<1x64xf32>
    %259 = vector.broadcast %258 : vector<1x64xf32> to vector<9x64xf32>
    %260 = arith.mulf %255, %259 : vector<9x64xf32>
    %261 = arith.mulf %260, %55 : vector<9x64xf32>
    %c0_103 = arith.constant 0 : index
    %c119_104 = arith.constant 119 : index
    %262 = vector.load %arg4[%c0_103, %c119_104] : memref<16x256xf32, #tpu.memory_space<vmem>>, vector<8x64xf32>
    %263 = vector.extract_strided_slice %261 {offsets = [0, 0], sizes = [1, 64], strides = [1, 1]} : vector<9x64xf32> to vector<1x64xf32>
    %264 = vector.broadcast %263 : vector<1x64xf32> to vector<8x64xf32>
    %265 = arith.mulf %264, %262 : vector<8x64xf32>
    %c0_105 = arith.constant 0 : index
    %c120_106 = arith.constant 120 : index
    %266 = vector.load %arg4[%c0_105, %c120_106] : memref<16x256xf32, #tpu.memory_space<vmem>>, vector<8x64xf32>
    %267 = vector.extract_strided_slice %261 {offsets = [1, 0], sizes = [1, 64], strides = [1, 1]} : vector<9x64xf32> to vector<1x64xf32>
    %268 = vector.broadcast %267 : vector<1x64xf32> to vector<8x64xf32>
    %269 = arith.mulf %268, %266 : vector<8x64xf32>
    %c0_107 = arith.constant 0 : index
    %c121_108 = arith.constant 121 : index
    %270 = vector.load %arg4[%c0_107, %c121_108] : memref<16x256xf32, #tpu.memory_space<vmem>>, vector<8x64xf32>
    %271 = vector.extract_strided_slice %261 {offsets = [2, 0], sizes = [1, 64], strides = [1, 1]} : vector<9x64xf32> to vector<1x64xf32>
    %272 = vector.broadcast %271 : vector<1x64xf32> to vector<8x64xf32>
    %273 = arith.mulf %272, %270 : vector<8x64xf32>
    %c0_109 = arith.constant 0 : index
    %c127_110 = arith.constant 127 : index
    %274 = vector.load %arg4[%c0_109, %c127_110] : memref<16x256xf32, #tpu.memory_space<vmem>>, vector<8x64xf32>
    %275 = vector.extract_strided_slice %261 {offsets = [3, 0], sizes = [1, 64], strides = [1, 1]} : vector<9x64xf32> to vector<1x64xf32>
    %276 = vector.broadcast %275 : vector<1x64xf32> to vector<8x64xf32>
    %277 = arith.mulf %276, %274 : vector<8x64xf32>
    %278 = arith.addf %265, %277 : vector<8x64xf32>
    %c0_111 = arith.constant 0 : index
    %c128_112 = arith.constant 128 : index
    %279 = vector.load %arg4[%c0_111, %c128_112] : memref<16x256xf32, #tpu.memory_space<vmem>>, vector<8x64xf32>
    %280 = vector.extract_strided_slice %261 {offsets = [4, 0], sizes = [1, 64], strides = [1, 1]} : vector<9x64xf32> to vector<1x64xf32>
    %281 = vector.broadcast %280 : vector<1x64xf32> to vector<8x64xf32>
    %282 = arith.mulf %281, %279 : vector<8x64xf32>
    %283 = arith.addf %269, %282 : vector<8x64xf32>
    %c0_113 = arith.constant 0 : index
    %c129_114 = arith.constant 129 : index
    %284 = vector.load %arg4[%c0_113, %c129_114] : memref<16x256xf32, #tpu.memory_space<vmem>>, vector<8x64xf32>
    %285 = vector.extract_strided_slice %261 {offsets = [5, 0], sizes = [1, 64], strides = [1, 1]} : vector<9x64xf32> to vector<1x64xf32>
    %286 = vector.broadcast %285 : vector<1x64xf32> to vector<8x64xf32>
    %287 = arith.mulf %286, %284 : vector<8x64xf32>
    %288 = arith.addf %273, %287 : vector<8x64xf32>
    %c0_115 = arith.constant 0 : index
    %c135_116 = arith.constant 135 : index
    %289 = vector.load %arg4[%c0_115, %c135_116] : memref<16x256xf32, #tpu.memory_space<vmem>>, vector<8x64xf32>
    %290 = vector.extract_strided_slice %261 {offsets = [6, 0], sizes = [1, 64], strides = [1, 1]} : vector<9x64xf32> to vector<1x64xf32>
    %291 = vector.broadcast %290 : vector<1x64xf32> to vector<8x64xf32>
    %292 = arith.mulf %291, %289 : vector<8x64xf32>
    %293 = arith.addf %278, %292 : vector<8x64xf32>
    %c0_117 = arith.constant 0 : index
    %c136_118 = arith.constant 136 : index
    %294 = vector.load %arg4[%c0_117, %c136_118] : memref<16x256xf32, #tpu.memory_space<vmem>>, vector<8x64xf32>
    %295 = vector.extract_strided_slice %261 {offsets = [7, 0], sizes = [1, 64], strides = [1, 1]} : vector<9x64xf32> to vector<1x64xf32>
    %296 = vector.broadcast %295 : vector<1x64xf32> to vector<8x64xf32>
    %297 = arith.mulf %296, %294 : vector<8x64xf32>
    %298 = arith.addf %283, %297 : vector<8x64xf32>
    %c0_119 = arith.constant 0 : index
    %c137_120 = arith.constant 137 : index
    %299 = vector.load %arg4[%c0_119, %c137_120] : memref<16x256xf32, #tpu.memory_space<vmem>>, vector<8x64xf32>
    %300 = vector.extract_strided_slice %261 {offsets = [8, 0], sizes = [1, 64], strides = [1, 1]} : vector<9x64xf32> to vector<1x64xf32>
    %301 = vector.broadcast %300 : vector<1x64xf32> to vector<8x64xf32>
    %302 = arith.mulf %301, %299 : vector<8x64xf32>
    %303 = arith.addf %288, %302 : vector<8x64xf32>
    %304 = arith.addf %293, %298 : vector<8x64xf32>
    %305 = arith.addf %304, %303 : vector<8x64xf32>
    %306 = vector.extract_strided_slice %55 {offsets = [3, 0], sizes = [1, 64], strides = [1, 1]} : vector<9x64xf32> to vector<1x64xf32>
    %307 = vector.broadcast %306 : vector<1x64xf32> to vector<8x64xf32>
    %308 = arith.mulf %305, %307 : vector<8x64xf32>
    %c3_121 = arith.constant 3 : index
    %c0_122 = arith.constant 0 : index
    %c128_123 = arith.constant 128 : index
    %309 = vector.load %arg5[%c3_121, %c0_122, %c128_123] : memref<9x8x256xf32, #tpu.memory_space<vmem>>, vector<1x8x64xf32>
    %310 = vector.shape_cast %309 : vector<1x8x64xf32> to vector<8x64xf32>
    %311 = vector.shape_cast %308 : vector<8x64xf32> to vector<1x8x64xf32>
    tpu.vector_store %arg5[%c3_121, %c0_122, %c128_123], %311 {strides = array<i32>} : memref<9x8x256xf32, #tpu.memory_space<vmem>>, vector<1x8x64xf32>,
    %c0_124 = arith.constant 0 : index
    %c4 = arith.constant 4 : index
    %c0_125 = arith.constant 0 : index
    %c0_126 = arith.constant 0 : index
    %312 = vector.load %arg1[%c0_124, %c4, %c0_125, %c0_126] : memref<1x18x9x64xbf16, #tpu.memory_space<vmem>>, vector<1x1x9x64xbf16>
    %313 = vector.shape_cast %312 : vector<1x1x9x64xbf16> to vector<9x64xbf16>
    %314 = arith.extf %313 : vector<9x64xbf16> to vector<9x64xf32>
    %cst_127 = arith.constant dense<0xFF800000> : vector<64xf32>
    %315 = vector.multi_reduction <maximumf>, %314, %cst_127 [0] : vector<9x64xf32> to vector<64xf32>
    %316 = vector.shape_cast %315 : vector<64xf32> to vector<1x64xf32>
    %317 = vector.broadcast %316 : vector<1x64xf32> to vector<9x64xf32>
    %318 = arith.subf %314, %317 : vector<9x64xf32>
    %319 = math.exp %318 : vector<9x64xf32>
    %cst_128 = arith.constant dense<0.000000e+00> : vector<64xf32>
    %320 = vector.multi_reduction <add>, %319, %cst_128 [0] : vector<9x64xf32> to vector<64xf32>
    %321 = vector.shape_cast %320 : vector<64xf32> to vector<1x64xf32>
    %322 = tpu.reciprocal %321 {approx = true} : vector<1x64xf32> -> vector<1x64xf32>
    %323 = vector.broadcast %322 : vector<1x64xf32> to vector<9x64xf32>
    %324 = arith.mulf %319, %323 : vector<9x64xf32>
    %325 = arith.mulf %324, %55 : vector<9x64xf32>
    %c0_129 = arith.constant 0 : index
    %c119_130 = arith.constant 119 : index
    %326 = vector.load %arg4[%c0_129, %c119_130] : memref<16x256xf32, #tpu.memory_space<vmem>>, vector<8x64xf32>
    %327 = vector.extract_strided_slice %325 {offsets = [0, 0], sizes = [1, 64], strides = [1, 1]} : vector<9x64xf32> to vector<1x64xf32>
    %328 = vector.broadcast %327 : vector<1x64xf32> to vector<8x64xf32>
    %329 = arith.mulf %328, %326 : vector<8x64xf32>
    %c0_131 = arith.constant 0 : index
    %c120_132 = arith.constant 120 : index
    %330 = vector.load %arg4[%c0_131, %c120_132] : memref<16x256xf32, #tpu.memory_space<vmem>>, vector<8x64xf32>
    %331 = vector.extract_strided_slice %325 {offsets = [1, 0], sizes = [1, 64], strides = [1, 1]} : vector<9x64xf32> to vector<1x64xf32>
    %332 = vector.broadcast %331 : vector<1x64xf32> to vector<8x64xf32>
    %333 = arith.mulf %332, %330 : vector<8x64xf32>
    %c0_133 = arith.constant 0 : index
    %c121_134 = arith.constant 121 : index
    %334 = vector.load %arg4[%c0_133, %c121_134] : memref<16x256xf32, #tpu.memory_space<vmem>>, vector<8x64xf32>
    %335 = vector.extract_strided_slice %325 {offsets = [2, 0], sizes = [1, 64], strides = [1, 1]} : vector<9x64xf32> to vector<1x64xf32>
    %336 = vector.broadcast %335 : vector<1x64xf32> to vector<8x64xf32>
    %337 = arith.mulf %336, %334 : vector<8x64xf32>
    %c0_135 = arith.constant 0 : index
    %c127_136 = arith.constant 127 : index
    %338 = vector.load %arg4[%c0_135, %c127_136] : memref<16x256xf32, #tpu.memory_space<vmem>>, vector<8x64xf32>
    %339 = vector.extract_strided_slice %325 {offsets = [3, 0], sizes = [1, 64], strides = [1, 1]} : vector<9x64xf32> to vector<1x64xf32>
    %340 = vector.broadcast %339 : vector<1x64xf32> to vector<8x64xf32>
    %341 = arith.mulf %340, %338 : vector<8x64xf32>
    %342 = arith.addf %329, %341 : vector<8x64xf32>
    %c0_137 = arith.constant 0 : index
    %c128_138 = arith.constant 128 : index
    %343 = vector.load %arg4[%c0_137, %c128_138] : memref<16x256xf32, #tpu.memory_space<vmem>>, vector<8x64xf32>
    %344 = vector.extract_strided_slice %325 {offsets = [4, 0], sizes = [1, 64], strides = [1, 1]} : vector<9x64xf32> to vector<1x64xf32>
    %345 = vector.broadcast %344 : vector<1x64xf32> to vector<8x64xf32>
    %346 = arith.mulf %345, %343 : vector<8x64xf32>
    %347 = arith.addf %333, %346 : vector<8x64xf32>
    %c0_139 = arith.constant 0 : index
    %c129_140 = arith.constant 129 : index
    %348 = vector.load %arg4[%c0_139, %c129_140] : memref<16x256xf32, #tpu.memory_space<vmem>>, vector<8x64xf32>
    %349 = vector.extract_strided_slice %325 {offsets = [5, 0], sizes = [1, 64], strides = [1, 1]} : vector<9x64xf32> to vector<1x64xf32>
    %350 = vector.broadcast %349 : vector<1x64xf32> to vector<8x64xf32>
    %351 = arith.mulf %350, %348 : vector<8x64xf32>
    %352 = arith.addf %337, %351 : vector<8x64xf32>
    %c0_141 = arith.constant 0 : index
    %c135_142 = arith.constant 135 : index
    %353 = vector.load %arg4[%c0_141, %c135_142] : memref<16x256xf32, #tpu.memory_space<vmem>>, vector<8x64xf32>
    %354 = vector.extract_strided_slice %325 {offsets = [6, 0], sizes = [1, 64], strides = [1, 1]} : vector<9x64xf32> to vector<1x64xf32>
    %355 = vector.broadcast %354 : vector<1x64xf32> to vector<8x64xf32>
    %356 = arith.mulf %355, %353 : vector<8x64xf32>
    %357 = arith.addf %342, %356 : vector<8x64xf32>
    %c0_143 = arith.constant 0 : index
    %c136_144 = arith.constant 136 : index
    %358 = vector.load %arg4[%c0_143, %c136_144] : memref<16x256xf32, #tpu.memory_space<vmem>>, vector<8x64xf32>
    %359 = vector.extract_strided_slice %325 {offsets = [7, 0], sizes = [1, 64], strides = [1, 1]} : vector<9x64xf32> to vector<1x64xf32>
    %360 = vector.broadcast %359 : vector<1x64xf32> to vector<8x64xf32>
    %361 = arith.mulf %360, %358 : vector<8x64xf32>
    %362 = arith.addf %347, %361 : vector<8x64xf32>
    %c0_145 = arith.constant 0 : index
    %c137_146 = arith.constant 137 : index
    %363 = vector.load %arg4[%c0_145, %c137_146] : memref<16x256xf32, #tpu.memory_space<vmem>>, vector<8x64xf32>
    %364 = vector.extract_strided_slice %325 {offsets = [8, 0], sizes = [1, 64], strides = [1, 1]} : vector<9x64xf32> to vector<1x64xf32>
    %365 = vector.broadcast %364 : vector<1x64xf32> to vector<8x64xf32>
    %366 = arith.mulf %365, %363 : vector<8x64xf32>
    %367 = arith.addf %352, %366 : vector<8x64xf32>
    %368 = arith.addf %357, %362 : vector<8x64xf32>
    %369 = arith.addf %368, %367 : vector<8x64xf32>
    %370 = vector.extract_strided_slice %55 {offsets = [4, 0], sizes = [1, 64], strides = [1, 1]} : vector<9x64xf32> to vector<1x64xf32>
    %371 = vector.broadcast %370 : vector<1x64xf32> to vector<8x64xf32>
    %372 = arith.mulf %369, %371 : vector<8x64xf32>
    %c4_147 = arith.constant 4 : index
    %c0_148 = arith.constant 0 : index
    %c128_149 = arith.constant 128 : index
    %373 = vector.load %arg5[%c4_147, %c0_148, %c128_149] : memref<9x8x256xf32, #tpu.memory_space<vmem>>, vector<1x8x64xf32>
    %374 = vector.shape_cast %373 : vector<1x8x64xf32> to vector<8x64xf32>
    %375 = vector.shape_cast %372 : vector<8x64xf32> to vector<1x8x64xf32>
    tpu.vector_store %arg5[%c4_147, %c0_148, %c128_149], %375 {strides = array<i32>} : memref<9x8x256xf32, #tpu.memory_space<vmem>>, vector<1x8x64xf32>,
    %c0_150 = arith.constant 0 : index
    %c5 = arith.constant 5 : index
    %c0_151 = arith.constant 0 : index
    %c0_152 = arith.constant 0 : index
    %376 = vector.load %arg1[%c0_150, %c5, %c0_151, %c0_152] : memref<1x18x9x64xbf16, #tpu.memory_space<vmem>>, vector<1x1x9x64xbf16>
    %377 = vector.shape_cast %376 : vector<1x1x9x64xbf16> to vector<9x64xbf16>
    %378 = arith.extf %377 : vector<9x64xbf16> to vector<9x64xf32>
    %cst_153 = arith.constant dense<0xFF800000> : vector<64xf32>
    %379 = vector.multi_reduction <maximumf>, %378, %cst_153 [0] : vector<9x64xf32> to vector<64xf32>
    %380 = vector.shape_cast %379 : vector<64xf32> to vector<1x64xf32>
    %381 = vector.broadcast %380 : vector<1x64xf32> to vector<9x64xf32>
    %382 = arith.subf %378, %381 : vector<9x64xf32>
    %383 = math.exp %382 : vector<9x64xf32>
    %cst_154 = arith.constant dense<0.000000e+00> : vector<64xf32>
    %384 = vector.multi_reduction <add>, %383, %cst_154 [0] : vector<9x64xf32> to vector<64xf32>
    %385 = vector.shape_cast %384 : vector<64xf32> to vector<1x64xf32>
    %386 = tpu.reciprocal %385 {approx = true} : vector<1x64xf32> -> vector<1x64xf32>
    %387 = vector.broadcast %386 : vector<1x64xf32> to vector<9x64xf32>
    %388 = arith.mulf %383, %387 : vector<9x64xf32>
    %389 = arith.mulf %388, %55 : vector<9x64xf32>
    %c0_155 = arith.constant 0 : index
    %c119_156 = arith.constant 119 : index
    %390 = vector.load %arg4[%c0_155, %c119_156] : memref<16x256xf32, #tpu.memory_space<vmem>>, vector<8x64xf32>
    %391 = vector.extract_strided_slice %389 {offsets = [0, 0], sizes = [1, 64], strides = [1, 1]} : vector<9x64xf32> to vector<1x64xf32>
    %392 = vector.broadcast %391 : vector<1x64xf32> to vector<8x64xf32>
    %393 = arith.mulf %392, %390 : vector<8x64xf32>
    %c0_157 = arith.constant 0 : index
    %c120_158 = arith.constant 120 : index
    %394 = vector.load %arg4[%c0_157, %c120_158] : memref<16x256xf32, #tpu.memory_space<vmem>>, vector<8x64xf32>
    %395 = vector.extract_strided_slice %389 {offsets = [1, 0], sizes = [1, 64], strides = [1, 1]} : vector<9x64xf32> to vector<1x64xf32>
    %396 = vector.broadcast %395 : vector<1x64xf32> to vector<8x64xf32>
    %397 = arith.mulf %396, %394 : vector<8x64xf32>
    %c0_159 = arith.constant 0 : index
    %c121_160 = arith.constant 121 : index
    %398 = vector.load %arg4[%c0_159, %c121_160] : memref<16x256xf32, #tpu.memory_space<vmem>>, vector<8x64xf32>
    %399 = vector.extract_strided_slice %389 {offsets = [2, 0], sizes = [1, 64], strides = [1, 1]} : vector<9x64xf32> to vector<1x64xf32>
    %400 = vector.broadcast %399 : vector<1x64xf32> to vector<8x64xf32>
    %401 = arith.mulf %400, %398 : vector<8x64xf32>
    %c0_161 = arith.constant 0 : index
    %c127_162 = arith.constant 127 : index
    %402 = vector.load %arg4[%c0_161, %c127_162] : memref<16x256xf32, #tpu.memory_space<vmem>>, vector<8x64xf32>
    %403 = vector.extract_strided_slice %389 {offsets = [3, 0], sizes = [1, 64], strides = [1, 1]} : vector<9x64xf32> to vector<1x64xf32>
    %404 = vector.broadcast %403 : vector<1x64xf32> to vector<8x64xf32>
    %405 = arith.mulf %404, %402 : vector<8x64xf32>
    %406 = arith.addf %393, %405 : vector<8x64xf32>
    %c0_163 = arith.constant 0 : index
    %c128_164 = arith.constant 128 : index
    %407 = vector.load %arg4[%c0_163, %c128_164] : memref<16x256xf32, #tpu.memory_space<vmem>>, vector<8x64xf32>
    %408 = vector.extract_strided_slice %389 {offsets = [4, 0], sizes = [1, 64], strides = [1, 1]} : vector<9x64xf32> to vector<1x64xf32>
    %409 = vector.broadcast %408 : vector<1x64xf32> to vector<8x64xf32>
    %410 = arith.mulf %409, %407 : vector<8x64xf32>
    %411 = arith.addf %397, %410 : vector<8x64xf32>
    %c0_165 = arith.constant 0 : index
    %c129_166 = arith.constant 129 : index
    %412 = vector.load %arg4[%c0_165, %c129_166] : memref<16x256xf32, #tpu.memory_space<vmem>>, vector<8x64xf32>
    %413 = vector.extract_strided_slice %389 {offsets = [5, 0], sizes = [1, 64], strides = [1, 1]} : vector<9x64xf32> to vector<1x64xf32>
    %414 = vector.broadcast %413 : vector<1x64xf32> to vector<8x64xf32>
    %415 = arith.mulf %414, %412 : vector<8x64xf32>
    %416 = arith.addf %401, %415 : vector<8x64xf32>
    %c0_167 = arith.constant 0 : index
    %c135_168 = arith.constant 135 : index
    %417 = vector.load %arg4[%c0_167, %c135_168] : memref<16x256xf32, #tpu.memory_space<vmem>>, vector<8x64xf32>
    %418 = vector.extract_strided_slice %389 {offsets = [6, 0], sizes = [1, 64], strides = [1, 1]} : vector<9x64xf32> to vector<1x64xf32>
    %419 = vector.broadcast %418 : vector<1x64xf32> to vector<8x64xf32>
    %420 = arith.mulf %419, %417 : vector<8x64xf32>
    %421 = arith.addf %406, %420 : vector<8x64xf32>
    %c0_169 = arith.constant 0 : index
    %c136_170 = arith.constant 136 : index
    %422 = vector.load %arg4[%c0_169, %c136_170] : memref<16x256xf32, #tpu.memory_space<vmem>>, vector<8x64xf32>
    %423 = vector.extract_strided_slice %389 {offsets = [7, 0], sizes = [1, 64], strides = [1, 1]} : vector<9x64xf32> to vector<1x64xf32>
    %424 = vector.broadcast %423 : vector<1x64xf32> to vector<8x64xf32>
    %425 = arith.mulf %424, %422 : vector<8x64xf32>
    %426 = arith.addf %411, %425 : vector<8x64xf32>
    %c0_171 = arith.constant 0 : index
    %c137_172 = arith.constant 137 : index
    %427 = vector.load %arg4[%c0_171, %c137_172] : memref<16x256xf32, #tpu.memory_space<vmem>>, vector<8x64xf32>
    %428 = vector.extract_strided_slice %389 {offsets = [8, 0], sizes = [1, 64], strides = [1, 1]} : vector<9x64xf32> to vector<1x64xf32>
    %429 = vector.broadcast %428 : vector<1x64xf32> to vector<8x64xf32>
    %430 = arith.mulf %429, %427 : vector<8x64xf32>
    %431 = arith.addf %416, %430 : vector<8x64xf32>
    %432 = arith.addf %421, %426 : vector<8x64xf32>
    %433 = arith.addf %432, %431 : vector<8x64xf32>
    %434 = vector.extract_strided_slice %55 {offsets = [5, 0], sizes = [1, 64], strides = [1, 1]} : vector<9x64xf32> to vector<1x64xf32>
    %435 = vector.broadcast %434 : vector<1x64xf32> to vector<8x64xf32>
    %436 = arith.mulf %433, %435 : vector<8x64xf32>
    %c5_173 = arith.constant 5 : index
    %c0_174 = arith.constant 0 : index
    %c128_175 = arith.constant 128 : index
    %437 = vector.load %arg5[%c5_173, %c0_174, %c128_175] : memref<9x8x256xf32, #tpu.memory_space<vmem>>, vector<1x8x64xf32>
    %438 = vector.shape_cast %437 : vector<1x8x64xf32> to vector<8x64xf32>
    %439 = vector.shape_cast %436 : vector<8x64xf32> to vector<1x8x64xf32>
    tpu.vector_store %arg5[%c5_173, %c0_174, %c128_175], %439 {strides = array<i32>} : memref<9x8x256xf32, #tpu.memory_space<vmem>>, vector<1x8x64xf32>,
    %c0_176 = arith.constant 0 : index
    %c6 = arith.constant 6 : index
    %c0_177 = arith.constant 0 : index
    %c0_178 = arith.constant 0 : index
    %440 = vector.load %arg1[%c0_176, %c6, %c0_177, %c0_178] : memref<1x18x9x64xbf16, #tpu.memory_space<vmem>>, vector<1x1x9x64xbf16>
    %441 = vector.shape_cast %440 : vector<1x1x9x64xbf16> to vector<9x64xbf16>
    %442 = arith.extf %441 : vector<9x64xbf16> to vector<9x64xf32>
    %cst_179 = arith.constant dense<0xFF800000> : vector<64xf32>
    %443 = vector.multi_reduction <maximumf>, %442, %cst_179 [0] : vector<9x64xf32> to vector<64xf32>
    %444 = vector.shape_cast %443 : vector<64xf32> to vector<1x64xf32>
    %445 = vector.broadcast %444 : vector<1x64xf32> to vector<9x64xf32>
    %446 = arith.subf %442, %445 : vector<9x64xf32>
    %447 = math.exp %446 : vector<9x64xf32>
    %cst_180 = arith.constant dense<0.000000e+00> : vector<64xf32>
    %448 = vector.multi_reduction <add>, %447, %cst_180 [0] : vector<9x64xf32> to vector<64xf32>
    %449 = vector.shape_cast %448 : vector<64xf32> to vector<1x64xf32>
    %450 = tpu.reciprocal %449 {approx = true} : vector<1x64xf32> -> vector<1x64xf32>
    %451 = vector.broadcast %450 : vector<1x64xf32> to vector<9x64xf32>
    %452 = arith.mulf %447, %451 : vector<9x64xf32>
    %453 = arith.mulf %452, %55 : vector<9x64xf32>
    %c0_181 = arith.constant 0 : index
    %c119_182 = arith.constant 119 : index
    %454 = vector.load %arg4[%c0_181, %c119_182] : memref<16x256xf32, #tpu.memory_space<vmem>>, vector<8x64xf32>
    %455 = vector.extract_strided_slice %453 {offsets = [0, 0], sizes = [1, 64], strides = [1, 1]} : vector<9x64xf32> to vector<1x64xf32>
    %456 = vector.broadcast %455 : vector<1x64xf32> to vector<8x64xf32>
    %457 = arith.mulf %456, %454 : vector<8x64xf32>
    %c0_183 = arith.constant 0 : index
    %c120_184 = arith.constant 120 : index
    %458 = vector.load %arg4[%c0_183, %c120_184] : memref<16x256xf32, #tpu.memory_space<vmem>>, vector<8x64xf32>
    %459 = vector.extract_strided_slice %453 {offsets = [1, 0], sizes = [1, 64], strides = [1, 1]} : vector<9x64xf32> to vector<1x64xf32>
    %460 = vector.broadcast %459 : vector<1x64xf32> to vector<8x64xf32>
    %461 = arith.mulf %460, %458 : vector<8x64xf32>
    %c0_185 = arith.constant 0 : index
    %c121_186 = arith.constant 121 : index
    %462 = vector.load %arg4[%c0_185, %c121_186] : memref<16x256xf32, #tpu.memory_space<vmem>>, vector<8x64xf32>
    %463 = vector.extract_strided_slice %453 {offsets = [2, 0], sizes = [1, 64], strides = [1, 1]} : vector<9x64xf32> to vector<1x64xf32>
    %464 = vector.broadcast %463 : vector<1x64xf32> to vector<8x64xf32>
    %465 = arith.mulf %464, %462 : vector<8x64xf32>
    %c0_187 = arith.constant 0 : index
    %c127_188 = arith.constant 127 : index
    %466 = vector.load %arg4[%c0_187, %c127_188] : memref<16x256xf32, #tpu.memory_space<vmem>>, vector<8x64xf32>
    %467 = vector.extract_strided_slice %453 {offsets = [3, 0], sizes = [1, 64], strides = [1, 1]} : vector<9x64xf32> to vector<1x64xf32>
    %468 = vector.broadcast %467 : vector<1x64xf32> to vector<8x64xf32>
    %469 = arith.mulf %468, %466 : vector<8x64xf32>
    %470 = arith.addf %457, %469 : vector<8x64xf32>
    %c0_189 = arith.constant 0 : index
    %c128_190 = arith.constant 128 : index
    %471 = vector.load %arg4[%c0_189, %c128_190] : memref<16x256xf32, #tpu.memory_space<vmem>>, vector<8x64xf32>
    %472 = vector.extract_strided_slice %453 {offsets = [4, 0], sizes = [1, 64], strides = [1, 1]} : vector<9x64xf32> to vector<1x64xf32>
    %473 = vector.broadcast %472 : vector<1x64xf32> to vector<8x64xf32>
    %474 = arith.mulf %473, %471 : vector<8x64xf32>
    %475 = arith.addf %461, %474 : vector<8x64xf32>
    %c0_191 = arith.constant 0 : index
    %c129_192 = arith.constant 129 : index
    %476 = vector.load %arg4[%c0_191, %c129_192] : memref<16x256xf32, #tpu.memory_space<vmem>>, vector<8x64xf32>
    %477 = vector.extract_strided_slice %453 {offsets = [5, 0], sizes = [1, 64], strides = [1, 1]} : vector<9x64xf32> to vector<1x64xf32>
    %478 = vector.broadcast %477 : vector<1x64xf32> to vector<8x64xf32>
    %479 = arith.mulf %478, %476 : vector<8x64xf32>
    %480 = arith.addf %465, %479 : vector<8x64xf32>
    %c0_193 = arith.constant 0 : index
    %c135_194 = arith.constant 135 : index
    %481 = vector.load %arg4[%c0_193, %c135_194] : memref<16x256xf32, #tpu.memory_space<vmem>>, vector<8x64xf32>
    %482 = vector.extract_strided_slice %453 {offsets = [6, 0], sizes = [1, 64], strides = [1, 1]} : vector<9x64xf32> to vector<1x64xf32>
    %483 = vector.broadcast %482 : vector<1x64xf32> to vector<8x64xf32>
    %484 = arith.mulf %483, %481 : vector<8x64xf32>
    %485 = arith.addf %470, %484 : vector<8x64xf32>
    %c0_195 = arith.constant 0 : index
    %c136_196 = arith.constant 136 : index
    %486 = vector.load %arg4[%c0_195, %c136_196] : memref<16x256xf32, #tpu.memory_space<vmem>>, vector<8x64xf32>
    %487 = vector.extract_strided_slice %453 {offsets = [7, 0], sizes = [1, 64], strides = [1, 1]} : vector<9x64xf32> to vector<1x64xf32>
    %488 = vector.broadcast %487 : vector<1x64xf32> to vector<8x64xf32>
    %489 = arith.mulf %488, %486 : vector<8x64xf32>
    %490 = arith.addf %475, %489 : vector<8x64xf32>
    %c0_197 = arith.constant 0 : index
    %c137_198 = arith.constant 137 : index
    %491 = vector.load %arg4[%c0_197, %c137_198] : memref<16x256xf32, #tpu.memory_space<vmem>>, vector<8x64xf32>
    %492 = vector.extract_strided_slice %453 {offsets = [8, 0], sizes = [1, 64], strides = [1, 1]} : vector<9x64xf32> to vector<1x64xf32>
    %493 = vector.broadcast %492 : vector<1x64xf32> to vector<8x64xf32>
    %494 = arith.mulf %493, %491 : vector<8x64xf32>
    %495 = arith.addf %480, %494 : vector<8x64xf32>
    %496 = arith.addf %485, %490 : vector<8x64xf32>
    %497 = arith.addf %496, %495 : vector<8x64xf32>
    %498 = vector.extract_strided_slice %55 {offsets = [6, 0], sizes = [1, 64], strides = [1, 1]} : vector<9x64xf32> to vector<1x64xf32>
    %499 = vector.broadcast %498 : vector<1x64xf32> to vector<8x64xf32>
    %500 = arith.mulf %497, %499 : vector<8x64xf32>
    %c6_199 = arith.constant 6 : index
    %c0_200 = arith.constant 0 : index
    %c128_201 = arith.constant 128 : index
    %501 = vector.load %arg5[%c6_199, %c0_200, %c128_201] : memref<9x8x256xf32, #tpu.memory_space<vmem>>, vector<1x8x64xf32>
    %502 = vector.shape_cast %501 : vector<1x8x64xf32> to vector<8x64xf32>
    %503 = vector.shape_cast %500 : vector<8x64xf32> to vector<1x8x64xf32>
    tpu.vector_store %arg5[%c6_199, %c0_200, %c128_201], %503 {strides = array<i32>} : memref<9x8x256xf32, #tpu.memory_space<vmem>>, vector<1x8x64xf32>,
    %c0_202 = arith.constant 0 : index
    %c7 = arith.constant 7 : index
    %c0_203 = arith.constant 0 : index
    %c0_204 = arith.constant 0 : index
    %504 = vector.load %arg1[%c0_202, %c7, %c0_203, %c0_204] : memref<1x18x9x64xbf16, #tpu.memory_space<vmem>>, vector<1x1x9x64xbf16>
    %505 = vector.shape_cast %504 : vector<1x1x9x64xbf16> to vector<9x64xbf16>
    %506 = arith.extf %505 : vector<9x64xbf16> to vector<9x64xf32>
    %cst_205 = arith.constant dense<0xFF800000> : vector<64xf32>
    %507 = vector.multi_reduction <maximumf>, %506, %cst_205 [0] : vector<9x64xf32> to vector<64xf32>
    %508 = vector.shape_cast %507 : vector<64xf32> to vector<1x64xf32>
    %509 = vector.broadcast %508 : vector<1x64xf32> to vector<9x64xf32>
    %510 = arith.subf %506, %509 : vector<9x64xf32>
    %511 = math.exp %510 : vector<9x64xf32>
    %cst_206 = arith.constant dense<0.000000e+00> : vector<64xf32>
    %512 = vector.multi_reduction <add>, %511, %cst_206 [0] : vector<9x64xf32> to vector<64xf32>
    %513 = vector.shape_cast %512 : vector<64xf32> to vector<1x64xf32>
    %514 = tpu.reciprocal %513 {approx = true} : vector<1x64xf32> -> vector<1x64xf32>
    %515 = vector.broadcast %514 : vector<1x64xf32> to vector<9x64xf32>
    %516 = arith.mulf %511, %515 : vector<9x64xf32>
    %517 = arith.mulf %516, %55 : vector<9x64xf32>
    %c0_207 = arith.constant 0 : index
    %c119_208 = arith.constant 119 : index
    %518 = vector.load %arg4[%c0_207, %c119_208] : memref<16x256xf32, #tpu.memory_space<vmem>>, vector<8x64xf32>
    %519 = vector.extract_strided_slice %517 {offsets = [0, 0], sizes = [1, 64], strides = [1, 1]} : vector<9x64xf32> to vector<1x64xf32>
    %520 = vector.broadcast %519 : vector<1x64xf32> to vector<8x64xf32>
    %521 = arith.mulf %520, %518 : vector<8x64xf32>
    %c0_209 = arith.constant 0 : index
    %c120_210 = arith.constant 120 : index
    %522 = vector.load %arg4[%c0_209, %c120_210] : memref<16x256xf32, #tpu.memory_space<vmem>>, vector<8x64xf32>
    %523 = vector.extract_strided_slice %517 {offsets = [1, 0], sizes = [1, 64], strides = [1, 1]} : vector<9x64xf32> to vector<1x64xf32>
    %524 = vector.broadcast %523 : vector<1x64xf32> to vector<8x64xf32>
    %525 = arith.mulf %524, %522 : vector<8x64xf32>
    %c0_211 = arith.constant 0 : index
    %c121_212 = arith.constant 121 : index
    %526 = vector.load %arg4[%c0_211, %c121_212] : memref<16x256xf32, #tpu.memory_space<vmem>>, vector<8x64xf32>
    %527 = vector.extract_strided_slice %517 {offsets = [2, 0], sizes = [1, 64], strides = [1, 1]} : vector<9x64xf32> to vector<1x64xf32>
    %528 = vector.broadcast %527 : vector<1x64xf32> to vector<8x64xf32>
    %529 = arith.mulf %528, %526 : vector<8x64xf32>
    %c0_213 = arith.constant 0 : index
    %c127_214 = arith.constant 127 : index
    %530 = vector.load %arg4[%c0_213, %c127_214] : memref<16x256xf32, #tpu.memory_space<vmem>>, vector<8x64xf32>
    %531 = vector.extract_strided_slice %517 {offsets = [3, 0], sizes = [1, 64], strides = [1, 1]} : vector<9x64xf32> to vector<1x64xf32>
    %532 = vector.broadcast %531 : vector<1x64xf32> to vector<8x64xf32>
    %533 = arith.mulf %532, %530 : vector<8x64xf32>
    %534 = arith.addf %521, %533 : vector<8x64xf32>
    %c0_215 = arith.constant 0 : index
    %c128_216 = arith.constant 128 : index
    %535 = vector.load %arg4[%c0_215, %c128_216] : memref<16x256xf32, #tpu.memory_space<vmem>>, vector<8x64xf32>
    %536 = vector.extract_strided_slice %517 {offsets = [4, 0], sizes = [1, 64], strides = [1, 1]} : vector<9x64xf32> to vector<1x64xf32>
    %537 = vector.broadcast %536 : vector<1x64xf32> to vector<8x64xf32>
    %538 = arith.mulf %537, %535 : vector<8x64xf32>
    %539 = arith.addf %525, %538 : vector<8x64xf32>
    %c0_217 = arith.constant 0 : index
    %c129_218 = arith.constant 129 : index
    %540 = vector.load %arg4[%c0_217, %c129_218] : memref<16x256xf32, #tpu.memory_space<vmem>>, vector<8x64xf32>
    %541 = vector.extract_strided_slice %517 {offsets = [5, 0], sizes = [1, 64], strides = [1, 1]} : vector<9x64xf32> to vector<1x64xf32>
    %542 = vector.broadcast %541 : vector<1x64xf32> to vector<8x64xf32>
    %543 = arith.mulf %542, %540 : vector<8x64xf32>
    %544 = arith.addf %529, %543 : vector<8x64xf32>
    %c0_219 = arith.constant 0 : index
    %c135_220 = arith.constant 135 : index
    %545 = vector.load %arg4[%c0_219, %c135_220] : memref<16x256xf32, #tpu.memory_space<vmem>>, vector<8x64xf32>
    %546 = vector.extract_strided_slice %517 {offsets = [6, 0], sizes = [1, 64], strides = [1, 1]} : vector<9x64xf32> to vector<1x64xf32>
    %547 = vector.broadcast %546 : vector<1x64xf32> to vector<8x64xf32>
    %548 = arith.mulf %547, %545 : vector<8x64xf32>
    %549 = arith.addf %534, %548 : vector<8x64xf32>
    %c0_221 = arith.constant 0 : index
    %c136_222 = arith.constant 136 : index
    %550 = vector.load %arg4[%c0_221, %c136_222] : memref<16x256xf32, #tpu.memory_space<vmem>>, vector<8x64xf32>
    %551 = vector.extract_strided_slice %517 {offsets = [7, 0], sizes = [1, 64], strides = [1, 1]} : vector<9x64xf32> to vector<1x64xf32>
    %552 = vector.broadcast %551 : vector<1x64xf32> to vector<8x64xf32>
    %553 = arith.mulf %552, %550 : vector<8x64xf32>
    %554 = arith.addf %539, %553 : vector<8x64xf32>
    %c0_223 = arith.constant 0 : index
    %c137_224 = arith.constant 137 : index
    %555 = vector.load %arg4[%c0_223, %c137_224] : memref<16x256xf32, #tpu.memory_space<vmem>>, vector<8x64xf32>
    %556 = vector.extract_strided_slice %517 {offsets = [8, 0], sizes = [1, 64], strides = [1, 1]} : vector<9x64xf32> to vector<1x64xf32>
    %557 = vector.broadcast %556 : vector<1x64xf32> to vector<8x64xf32>
    %558 = arith.mulf %557, %555 : vector<8x64xf32>
    %559 = arith.addf %544, %558 : vector<8x64xf32>
    %560 = arith.addf %549, %554 : vector<8x64xf32>
    %561 = arith.addf %560, %559 : vector<8x64xf32>
    %562 = vector.extract_strided_slice %55 {offsets = [7, 0], sizes = [1, 64], strides = [1, 1]} : vector<9x64xf32> to vector<1x64xf32>
    %563 = vector.broadcast %562 : vector<1x64xf32> to vector<8x64xf32>
    %564 = arith.mulf %561, %563 : vector<8x64xf32>
    %c7_225 = arith.constant 7 : index
    %c0_226 = arith.constant 0 : index
    %c128_227 = arith.constant 128 : index
    %565 = vector.load %arg5[%c7_225, %c0_226, %c128_227] : memref<9x8x256xf32, #tpu.memory_space<vmem>>, vector<1x8x64xf32>
    %566 = vector.shape_cast %565 : vector<1x8x64xf32> to vector<8x64xf32>
    %567 = vector.shape_cast %564 : vector<8x64xf32> to vector<1x8x64xf32>
    tpu.vector_store %arg5[%c7_225, %c0_226, %c128_227], %567 {strides = array<i32>} : memref<9x8x256xf32, #tpu.memory_space<vmem>>, vector<1x8x64xf32>,
    %c0_228 = arith.constant 0 : index
    %c8 = arith.constant 8 : index
    %c0_229 = arith.constant 0 : index
    %c0_230 = arith.constant 0 : index
    %568 = vector.load %arg1[%c0_228, %c8, %c0_229, %c0_230] : memref<1x18x9x64xbf16, #tpu.memory_space<vmem>>, vector<1x1x9x64xbf16>
    %569 = vector.shape_cast %568 : vector<1x1x9x64xbf16> to vector<9x64xbf16>
    %570 = arith.extf %569 : vector<9x64xbf16> to vector<9x64xf32>
    %cst_231 = arith.constant dense<0xFF800000> : vector<64xf32>
    %571 = vector.multi_reduction <maximumf>, %570, %cst_231 [0] : vector<9x64xf32> to vector<64xf32>
    %572 = vector.shape_cast %571 : vector<64xf32> to vector<1x64xf32>
    %573 = vector.broadcast %572 : vector<1x64xf32> to vector<9x64xf32>
    %574 = arith.subf %570, %573 : vector<9x64xf32>
    %575 = math.exp %574 : vector<9x64xf32>
    %cst_232 = arith.constant dense<0.000000e+00> : vector<64xf32>
    %576 = vector.multi_reduction <add>, %575, %cst_232 [0] : vector<9x64xf32> to vector<64xf32>
    %577 = vector.shape_cast %576 : vector<64xf32> to vector<1x64xf32>
    %578 = tpu.reciprocal %577 {approx = true} : vector<1x64xf32> -> vector<1x64xf32>
    %579 = vector.broadcast %578 : vector<1x64xf32> to vector<9x64xf32>
    %580 = arith.mulf %575, %579 : vector<9x64xf32>
    %581 = arith.mulf %580, %55 : vector<9x64xf32>
    %c0_233 = arith.constant 0 : index
    %c119_234 = arith.constant 119 : index
    %582 = vector.load %arg4[%c0_233, %c119_234] : memref<16x256xf32, #tpu.memory_space<vmem>>, vector<8x64xf32>
    %583 = vector.extract_strided_slice %581 {offsets = [0, 0], sizes = [1, 64], strides = [1, 1]} : vector<9x64xf32> to vector<1x64xf32>
    %584 = vector.broadcast %583 : vector<1x64xf32> to vector<8x64xf32>
    %585 = arith.mulf %584, %582 : vector<8x64xf32>
    %c0_235 = arith.constant 0 : index
    %c120_236 = arith.constant 120 : index
    %586 = vector.load %arg4[%c0_235, %c120_236] : memref<16x256xf32, #tpu.memory_space<vmem>>, vector<8x64xf32>
    %587 = vector.extract_strided_slice %581 {offsets = [1, 0], sizes = [1, 64], strides = [1, 1]} : vector<9x64xf32> to vector<1x64xf32>
    %588 = vector.broadcast %587 : vector<1x64xf32> to vector<8x64xf32>
    %589 = arith.mulf %588, %586 : vector<8x64xf32>
    %c0_237 = arith.constant 0 : index
    %c121_238 = arith.constant 121 : index
    %590 = vector.load %arg4[%c0_237, %c121_238] : memref<16x256xf32, #tpu.memory_space<vmem>>, vector<8x64xf32>
    %591 = vector.extract_strided_slice %581 {offsets = [2, 0], sizes = [1, 64], strides = [1, 1]} : vector<9x64xf32> to vector<1x64xf32>
    %592 = vector.broadcast %591 : vector<1x64xf32> to vector<8x64xf32>
    %593 = arith.mulf %592, %590 : vector<8x64xf32>
    %c0_239 = arith.constant 0 : index
    %c127_240 = arith.constant 127 : index
    %594 = vector.load %arg4[%c0_239, %c127_240] : memref<16x256xf32, #tpu.memory_space<vmem>>, vector<8x64xf32>
    %595 = vector.extract_strided_slice %581 {offsets = [3, 0], sizes = [1, 64], strides = [1, 1]} : vector<9x64xf32> to vector<1x64xf32>
    %596 = vector.broadcast %595 : vector<1x64xf32> to vector<8x64xf32>
    %597 = arith.mulf %596, %594 : vector<8x64xf32>
    %598 = arith.addf %585, %597 : vector<8x64xf32>
    %c0_241 = arith.constant 0 : index
    %c128_242 = arith.constant 128 : index
    %599 = vector.load %arg4[%c0_241, %c128_242] : memref<16x256xf32, #tpu.memory_space<vmem>>, vector<8x64xf32>
    %600 = vector.extract_strided_slice %581 {offsets = [4, 0], sizes = [1, 64], strides = [1, 1]} : vector<9x64xf32> to vector<1x64xf32>
    %601 = vector.broadcast %600 : vector<1x64xf32> to vector<8x64xf32>
    %602 = arith.mulf %601, %599 : vector<8x64xf32>
    %603 = arith.addf %589, %602 : vector<8x64xf32>
    %c0_243 = arith.constant 0 : index
    %c129_244 = arith.constant 129 : index
    %604 = vector.load %arg4[%c0_243, %c129_244] : memref<16x256xf32, #tpu.memory_space<vmem>>, vector<8x64xf32>
    %605 = vector.extract_strided_slice %581 {offsets = [5, 0], sizes = [1, 64], strides = [1, 1]} : vector<9x64xf32> to vector<1x64xf32>
    %606 = vector.broadcast %605 : vector<1x64xf32> to vector<8x64xf32>
    %607 = arith.mulf %606, %604 : vector<8x64xf32>
    %608 = arith.addf %593, %607 : vector<8x64xf32>
    %c0_245 = arith.constant 0 : index
    %c135_246 = arith.constant 135 : index
    %609 = vector.load %arg4[%c0_245, %c135_246] : memref<16x256xf32, #tpu.memory_space<vmem>>, vector<8x64xf32>
    %610 = vector.extract_strided_slice %581 {offsets = [6, 0], sizes = [1, 64], strides = [1, 1]} : vector<9x64xf32> to vector<1x64xf32>
    %611 = vector.broadcast %610 : vector<1x64xf32> to vector<8x64xf32>
    %612 = arith.mulf %611, %609 : vector<8x64xf32>
    %613 = arith.addf %598, %612 : vector<8x64xf32>
    %c0_247 = arith.constant 0 : index
    %c136_248 = arith.constant 136 : index
    %614 = vector.load %arg4[%c0_247, %c136_248] : memref<16x256xf32, #tpu.memory_space<vmem>>, vector<8x64xf32>
    %615 = vector.extract_strided_slice %581 {offsets = [7, 0], sizes = [1, 64], strides = [1, 1]} : vector<9x64xf32> to vector<1x64xf32>
    %616 = vector.broadcast %615 : vector<1x64xf32> to vector<8x64xf32>
    %617 = arith.mulf %616, %614 : vector<8x64xf32>
    %618 = arith.addf %603, %617 : vector<8x64xf32>
    %c0_249 = arith.constant 0 : index
    %c137_250 = arith.constant 137 : index
    %619 = vector.load %arg4[%c0_249, %c137_250] : memref<16x256xf32, #tpu.memory_space<vmem>>, vector<8x64xf32>
    %620 = vector.extract_strided_slice %581 {offsets = [8, 0], sizes = [1, 64], strides = [1, 1]} : vector<9x64xf32> to vector<1x64xf32>
    %621 = vector.broadcast %620 : vector<1x64xf32> to vector<8x64xf32>
    %622 = arith.mulf %621, %619 : vector<8x64xf32>
    %623 = arith.addf %608, %622 : vector<8x64xf32>
    %624 = arith.addf %613, %618 : vector<8x64xf32>
    %625 = arith.addf %624, %623 : vector<8x64xf32>
    %626 = vector.extract_strided_slice %55 {offsets = [8, 0], sizes = [1, 64], strides = [1, 1]} : vector<9x64xf32> to vector<1x64xf32>
    %627 = vector.broadcast %626 : vector<1x64xf32> to vector<8x64xf32>
    %628 = arith.mulf %625, %627 : vector<8x64xf32>
    %c8_251 = arith.constant 8 : index
    %c0_252 = arith.constant 0 : index
    %c128_253 = arith.constant 128 : index
    %629 = vector.load %arg5[%c8_251, %c0_252, %c128_253] : memref<9x8x256xf32, #tpu.memory_space<vmem>>, vector<1x8x64xf32>
    %630 = vector.shape_cast %629 : vector<1x8x64xf32> to vector<8x64xf32>
    %631 = vector.shape_cast %628 : vector<8x64xf32> to vector<1x8x64xf32>
    tpu.vector_store %arg5[%c8_251, %c0_252, %c128_253], %631 {strides = array<i32>} : memref<9x8x256xf32, #tpu.memory_space<vmem>>, vector<1x8x64xf32>,
    %c0_254 = arith.constant 0 : index
    %c0_255 = arith.constant 0 : index
    %c137_256 = arith.constant 137 : index
    %632 = vector.load %arg5[%c0_254, %c0_255, %c137_256] : memref<9x8x256xf32, #tpu.memory_space<vmem>>, vector<1x8x64xf32>
    %633 = vector.shape_cast %632 : vector<1x8x64xf32> to vector<8x64xf32>
    %c1_257 = arith.constant 1 : index
    %c0_258 = arith.constant 0 : index
    %c136_259 = arith.constant 136 : index
    %634 = vector.load %arg5[%c1_257, %c0_258, %c136_259] : memref<9x8x256xf32, #tpu.memory_space<vmem>>, vector<1x8x64xf32>
    %635 = vector.shape_cast %634 : vector<1x8x64xf32> to vector<8x64xf32>
    %c2_260 = arith.constant 2 : index
    %c0_261 = arith.constant 0 : index
    %c135_262 = arith.constant 135 : index
    %636 = vector.load %arg5[%c2_260, %c0_261, %c135_262] : memref<9x8x256xf32, #tpu.memory_space<vmem>>, vector<1x8x64xf32>
    %637 = vector.shape_cast %636 : vector<1x8x64xf32> to vector<8x64xf32>
    %c3_263 = arith.constant 3 : index
    %c0_264 = arith.constant 0 : index
    %c129_265 = arith.constant 129 : index
    %638 = vector.load %arg5[%c3_263, %c0_264, %c129_265] : memref<9x8x256xf32, #tpu.memory_space<vmem>>, vector<1x8x64xf32>
    %639 = vector.shape_cast %638 : vector<1x8x64xf32> to vector<8x64xf32>
    %640 = arith.addf %633, %639 : vector<8x64xf32>
    %c4_266 = arith.constant 4 : index
    %c0_267 = arith.constant 0 : index
    %c128_268 = arith.constant 128 : index
    %641 = vector.load %arg5[%c4_266, %c0_267, %c128_268] : memref<9x8x256xf32, #tpu.memory_space<vmem>>, vector<1x8x64xf32>
    %642 = vector.shape_cast %641 : vector<1x8x64xf32> to vector<8x64xf32>
    %643 = arith.addf %635, %642 : vector<8x64xf32>
    %c5_269 = arith.constant 5 : index
    %c0_270 = arith.constant 0 : index
    %c127_271 = arith.constant 127 : index
    %644 = vector.load %arg5[%c5_269, %c0_270, %c127_271] : memref<9x8x256xf32, #tpu.memory_space<vmem>>, vector<1x8x64xf32>
    %645 = vector.shape_cast %644 : vector<1x8x64xf32> to vector<8x64xf32>
    %646 = arith.addf %637, %645 : vector<8x64xf32>
    %c6_272 = arith.constant 6 : index
    %c0_273 = arith.constant 0 : index
    %c121_274 = arith.constant 121 : index
    %647 = vector.load %arg5[%c6_272, %c0_273, %c121_274] : memref<9x8x256xf32, #tpu.memory_space<vmem>>, vector<1x8x64xf32>
    %648 = vector.shape_cast %647 : vector<1x8x64xf32> to vector<8x64xf32>
    %649 = arith.addf %640, %648 : vector<8x64xf32>
    %c7_275 = arith.constant 7 : index
    %c0_276 = arith.constant 0 : index
    %c120_277 = arith.constant 120 : index
    %650 = vector.load %arg5[%c7_275, %c0_276, %c120_277] : memref<9x8x256xf32, #tpu.memory_space<vmem>>, vector<1x8x64xf32>
    %651 = vector.shape_cast %650 : vector<1x8x64xf32> to vector<8x64xf32>
    %652 = arith.addf %643, %651 : vector<8x64xf32>
    %c8_278 = arith.constant 8 : index
    %c0_279 = arith.constant 0 : index
    %c119_280 = arith.constant 119 : index
    %653 = vector.load %arg5[%c8_278, %c0_279, %c119_280] : memref<9x8x256xf32, #tpu.memory_space<vmem>>, vector<1x8x64xf32>
    %654 = vector.shape_cast %653 : vector<1x8x64xf32> to vector<8x64xf32>
    %655 = arith.addf %646, %654 : vector<8x64xf32>
    %656 = arith.addf %649, %652 : vector<8x64xf32>
    %657 = arith.addf %656, %655 : vector<8x64xf32>
    %658 = arith.truncf %657 : vector<8x64xf32> to vector<8x64xbf16>
    %c0_281 = arith.constant 0 : index
    %c0_282 = arith.constant 0 : index
    %c0_283 = arith.constant 0 : index
    %659 = vector.load %arg3[%c0_281, %c0_282, %c0_283] : memref<1x16x64xbf16, #tpu.memory_space<vmem>>, vector<1x8x64xbf16>
    %660 = vector.shape_cast %659 : vector<1x8x64xbf16> to vector<8x64xbf16>
    %661 = vector.shape_cast %658 : vector<8x64xbf16> to vector<1x8x64xbf16>
    tpu.vector_store %arg3[%c0_281, %c0_282, %c0_283], %661 {strides = array<i32>} : memref<1x16x64xbf16, #tpu.memory_space<vmem>>, vector<1x8x64xbf16>,
    %c0_284 = arith.constant 0 : index
    %c9 = arith.constant 9 : index
    %c0_285 = arith.constant 0 : index
    %c0_286 = arith.constant 0 : index
    %662 = vector.load %arg1[%c0_284, %c9, %c0_285, %c0_286] : memref<1x18x9x64xbf16, #tpu.memory_space<vmem>>, vector<1x1x9x64xbf16>
    %663 = vector.shape_cast %662 : vector<1x1x9x64xbf16> to vector<9x64xbf16>
    %664 = arith.extf %663 : vector<9x64xbf16> to vector<9x64xf32>
    %cst_287 = arith.constant dense<0xFF800000> : vector<64xf32>
    %665 = vector.multi_reduction <maximumf>, %664, %cst_287 [0] : vector<9x64xf32> to vector<64xf32>
    %666 = vector.shape_cast %665 : vector<64xf32> to vector<1x64xf32>
    %667 = vector.broadcast %666 : vector<1x64xf32> to vector<9x64xf32>
    %668 = arith.subf %664, %667 : vector<9x64xf32>
    %669 = math.exp %668 : vector<9x64xf32>
    %cst_288 = arith.constant dense<0.000000e+00> : vector<64xf32>
    %670 = vector.multi_reduction <add>, %669, %cst_288 [0] : vector<9x64xf32> to vector<64xf32>
    %671 = vector.shape_cast %670 : vector<64xf32> to vector<1x64xf32>
    %672 = tpu.reciprocal %671 {approx = true} : vector<1x64xf32> -> vector<1x64xf32>
    %673 = vector.broadcast %672 : vector<1x64xf32> to vector<9x64xf32>
    %674 = arith.mulf %669, %673 : vector<9x64xf32>
    %675 = arith.mulf %674, %55 : vector<9x64xf32>
    %c8_289 = arith.constant 8 : index
    %c119_290 = arith.constant 119 : index
    %676 = vector.load %arg4[%c8_289, %c119_290] : memref<16x256xf32, #tpu.memory_space<vmem>>, vector<8x64xf32>
    %677 = vector.extract_strided_slice %675 {offsets = [0, 0], sizes = [1, 64], strides = [1, 1]} : vector<9x64xf32> to vector<1x64xf32>
    %678 = vector.broadcast %677 : vector<1x64xf32> to vector<8x64xf32>
    %679 = arith.mulf %678, %676 : vector<8x64xf32>
    %c8_291 = arith.constant 8 : index
    %c120_292 = arith.constant 120 : index
    %680 = vector.load %arg4[%c8_291, %c120_292] : memref<16x256xf32, #tpu.memory_space<vmem>>, vector<8x64xf32>
    %681 = vector.extract_strided_slice %675 {offsets = [1, 0], sizes = [1, 64], strides = [1, 1]} : vector<9x64xf32> to vector<1x64xf32>
    %682 = vector.broadcast %681 : vector<1x64xf32> to vector<8x64xf32>
    %683 = arith.mulf %682, %680 : vector<8x64xf32>
    %c8_293 = arith.constant 8 : index
    %c121_294 = arith.constant 121 : index
    %684 = vector.load %arg4[%c8_293, %c121_294] : memref<16x256xf32, #tpu.memory_space<vmem>>, vector<8x64xf32>
    %685 = vector.extract_strided_slice %675 {offsets = [2, 0], sizes = [1, 64], strides = [1, 1]} : vector<9x64xf32> to vector<1x64xf32>
    %686 = vector.broadcast %685 : vector<1x64xf32> to vector<8x64xf32>
    %687 = arith.mulf %686, %684 : vector<8x64xf32>
    %c8_295 = arith.constant 8 : index
    %c127_296 = arith.constant 127 : index
    %688 = vector.load %arg4[%c8_295, %c127_296] : memref<16x256xf32, #tpu.memory_space<vmem>>, vector<8x64xf32>
    %689 = vector.extract_strided_slice %675 {offsets = [3, 0], sizes = [1, 64], strides = [1, 1]} : vector<9x64xf32> to vector<1x64xf32>
    %690 = vector.broadcast %689 : vector<1x64xf32> to vector<8x64xf32>
    %691 = arith.mulf %690, %688 : vector<8x64xf32>
    %692 = arith.addf %679, %691 : vector<8x64xf32>
    %c8_297 = arith.constant 8 : index
    %c128_298 = arith.constant 128 : index
    %693 = vector.load %arg4[%c8_297, %c128_298] : memref<16x256xf32, #tpu.memory_space<vmem>>, vector<8x64xf32>
    %694 = vector.extract_strided_slice %675 {offsets = [4, 0], sizes = [1, 64], strides = [1, 1]} : vector<9x64xf32> to vector<1x64xf32>
    %695 = vector.broadcast %694 : vector<1x64xf32> to vector<8x64xf32>
    %696 = arith.mulf %695, %693 : vector<8x64xf32>
    %697 = arith.addf %683, %696 : vector<8x64xf32>
    %c8_299 = arith.constant 8 : index
    %c129_300 = arith.constant 129 : index
    %698 = vector.load %arg4[%c8_299, %c129_300] : memref<16x256xf32, #tpu.memory_space<vmem>>, vector<8x64xf32>
    %699 = vector.extract_strided_slice %675 {offsets = [5, 0], sizes = [1, 64], strides = [1, 1]} : vector<9x64xf32> to vector<1x64xf32>
    %700 = vector.broadcast %699 : vector<1x64xf32> to vector<8x64xf32>
    %701 = arith.mulf %700, %698 : vector<8x64xf32>
    %702 = arith.addf %687, %701 : vector<8x64xf32>
    %c8_301 = arith.constant 8 : index
    %c135_302 = arith.constant 135 : index
    %703 = vector.load %arg4[%c8_301, %c135_302] : memref<16x256xf32, #tpu.memory_space<vmem>>, vector<8x64xf32>
    %704 = vector.extract_strided_slice %675 {offsets = [6, 0], sizes = [1, 64], strides = [1, 1]} : vector<9x64xf32> to vector<1x64xf32>
    %705 = vector.broadcast %704 : vector<1x64xf32> to vector<8x64xf32>
    %706 = arith.mulf %705, %703 : vector<8x64xf32>
    %707 = arith.addf %692, %706 : vector<8x64xf32>
    %c8_303 = arith.constant 8 : index
    %c136_304 = arith.constant 136 : index
    %708 = vector.load %arg4[%c8_303, %c136_304] : memref<16x256xf32, #tpu.memory_space<vmem>>, vector<8x64xf32>
    %709 = vector.extract_strided_slice %675 {offsets = [7, 0], sizes = [1, 64], strides = [1, 1]} : vector<9x64xf32> to vector<1x64xf32>
    %710 = vector.broadcast %709 : vector<1x64xf32> to vector<8x64xf32>
    %711 = arith.mulf %710, %708 : vector<8x64xf32>
    %712 = arith.addf %697, %711 : vector<8x64xf32>
    %c8_305 = arith.constant 8 : index
    %c137_306 = arith.constant 137 : index
    %713 = vector.load %arg4[%c8_305, %c137_306] : memref<16x256xf32, #tpu.memory_space<vmem>>, vector<8x64xf32>
    %714 = vector.extract_strided_slice %675 {offsets = [8, 0], sizes = [1, 64], strides = [1, 1]} : vector<9x64xf32> to vector<1x64xf32>
    %715 = vector.broadcast %714 : vector<1x64xf32> to vector<8x64xf32>
    %716 = arith.mulf %715, %713 : vector<8x64xf32>
    %717 = arith.addf %702, %716 : vector<8x64xf32>
    %718 = arith.addf %707, %712 : vector<8x64xf32>
    %719 = arith.addf %718, %717 : vector<8x64xf32>
    %720 = vector.extract_strided_slice %55 {offsets = [0, 0], sizes = [1, 64], strides = [1, 1]} : vector<9x64xf32> to vector<1x64xf32>
    %721 = vector.broadcast %720 : vector<1x64xf32> to vector<8x64xf32>
    %722 = arith.mulf %719, %721 : vector<8x64xf32>
    %c0_307 = arith.constant 0 : index
    %c0_308 = arith.constant 0 : index
    %c128_309 = arith.constant 128 : index
    %723 = vector.load %arg5[%c0_307, %c0_308, %c128_309] : memref<9x8x256xf32, #tpu.memory_space<vmem>>, vector<1x8x64xf32>
    %724 = vector.shape_cast %723 : vector<1x8x64xf32> to vector<8x64xf32>
    %725 = vector.shape_cast %722 : vector<8x64xf32> to vector<1x8x64xf32>
    tpu.vector_store %arg5[%c0_307, %c0_308, %c128_309], %725 {strides = array<i32>} : memref<9x8x256xf32, #tpu.memory_space<vmem>>, vector<1x8x64xf32>,
    %c0_310 = arith.constant 0 : index
    %c10 = arith.constant 10 : index
    %c0_311 = arith.constant 0 : index
    %c0_312 = arith.constant 0 : index
    %726 = vector.load %arg1[%c0_310, %c10, %c0_311, %c0_312] : memref<1x18x9x64xbf16, #tpu.memory_space<vmem>>, vector<1x1x9x64xbf16>
    %727 = vector.shape_cast %726 : vector<1x1x9x64xbf16> to vector<9x64xbf16>
    %728 = arith.extf %727 : vector<9x64xbf16> to vector<9x64xf32>
    %cst_313 = arith.constant dense<0xFF800000> : vector<64xf32>
    %729 = vector.multi_reduction <maximumf>, %728, %cst_313 [0] : vector<9x64xf32> to vector<64xf32>
    %730 = vector.shape_cast %729 : vector<64xf32> to vector<1x64xf32>
    %731 = vector.broadcast %730 : vector<1x64xf32> to vector<9x64xf32>
    %732 = arith.subf %728, %731 : vector<9x64xf32>
    %733 = math.exp %732 : vector<9x64xf32>
    %cst_314 = arith.constant dense<0.000000e+00> : vector<64xf32>
    %734 = vector.multi_reduction <add>, %733, %cst_314 [0] : vector<9x64xf32> to vector<64xf32>
    %735 = vector.shape_cast %734 : vector<64xf32> to vector<1x64xf32>
    %736 = tpu.reciprocal %735 {approx = true} : vector<1x64xf32> -> vector<1x64xf32>
    %737 = vector.broadcast %736 : vector<1x64xf32> to vector<9x64xf32>
    %738 = arith.mulf %733, %737 : vector<9x64xf32>
    %739 = arith.mulf %738, %55 : vector<9x64xf32>
    %c8_315 = arith.constant 8 : index
    %c119_316 = arith.constant 119 : index
    %740 = vector.load %arg4[%c8_315, %c119_316] : memref<16x256xf32, #tpu.memory_space<vmem>>, vector<8x64xf32>
    %741 = vector.extract_strided_slice %739 {offsets = [0, 0], sizes = [1, 64], strides = [1, 1]} : vector<9x64xf32> to vector<1x64xf32>
    %742 = vector.broadcast %741 : vector<1x64xf32> to vector<8x64xf32>
    %743 = arith.mulf %742, %740 : vector<8x64xf32>
    %c8_317 = arith.constant 8 : index
    %c120_318 = arith.constant 120 : index
    %744 = vector.load %arg4[%c8_317, %c120_318] : memref<16x256xf32, #tpu.memory_space<vmem>>, vector<8x64xf32>
    %745 = vector.extract_strided_slice %739 {offsets = [1, 0], sizes = [1, 64], strides = [1, 1]} : vector<9x64xf32> to vector<1x64xf32>
    %746 = vector.broadcast %745 : vector<1x64xf32> to vector<8x64xf32>
    %747 = arith.mulf %746, %744 : vector<8x64xf32>
    %c8_319 = arith.constant 8 : index
    %c121_320 = arith.constant 121 : index
    %748 = vector.load %arg4[%c8_319, %c121_320] : memref<16x256xf32, #tpu.memory_space<vmem>>, vector<8x64xf32>
    %749 = vector.extract_strided_slice %739 {offsets = [2, 0], sizes = [1, 64], strides = [1, 1]} : vector<9x64xf32> to vector<1x64xf32>
    %750 = vector.broadcast %749 : vector<1x64xf32> to vector<8x64xf32>
    %751 = arith.mulf %750, %748 : vector<8x64xf32>
    %c8_321 = arith.constant 8 : index
    %c127_322 = arith.constant 127 : index
    %752 = vector.load %arg4[%c8_321, %c127_322] : memref<16x256xf32, #tpu.memory_space<vmem>>, vector<8x64xf32>
    %753 = vector.extract_strided_slice %739 {offsets = [3, 0], sizes = [1, 64], strides = [1, 1]} : vector<9x64xf32> to vector<1x64xf32>
    %754 = vector.broadcast %753 : vector<1x64xf32> to vector<8x64xf32>
    %755 = arith.mulf %754, %752 : vector<8x64xf32>
    %756 = arith.addf %743, %755 : vector<8x64xf32>
    %c8_323 = arith.constant 8 : index
    %c128_324 = arith.constant 128 : index
    %757 = vector.load %arg4[%c8_323, %c128_324] : memref<16x256xf32, #tpu.memory_space<vmem>>, vector<8x64xf32>
    %758 = vector.extract_strided_slice %739 {offsets = [4, 0], sizes = [1, 64], strides = [1, 1]} : vector<9x64xf32> to vector<1x64xf32>
    %759 = vector.broadcast %758 : vector<1x64xf32> to vector<8x64xf32>
    %760 = arith.mulf %759, %757 : vector<8x64xf32>
    %761 = arith.addf %747, %760 : vector<8x64xf32>
    %c8_325 = arith.constant 8 : index
    %c129_326 = arith.constant 129 : index
    %762 = vector.load %arg4[%c8_325, %c129_326] : memref<16x256xf32, #tpu.memory_space<vmem>>, vector<8x64xf32>
    %763 = vector.extract_strided_slice %739 {offsets = [5, 0], sizes = [1, 64], strides = [1, 1]} : vector<9x64xf32> to vector<1x64xf32>
    %764 = vector.broadcast %763 : vector<1x64xf32> to vector<8x64xf32>
    %765 = arith.mulf %764, %762 : vector<8x64xf32>
    %766 = arith.addf %751, %765 : vector<8x64xf32>
    %c8_327 = arith.constant 8 : index
    %c135_328 = arith.constant 135 : index
    %767 = vector.load %arg4[%c8_327, %c135_328] : memref<16x256xf32, #tpu.memory_space<vmem>>, vector<8x64xf32>
    %768 = vector.extract_strided_slice %739 {offsets = [6, 0], sizes = [1, 64], strides = [1, 1]} : vector<9x64xf32> to vector<1x64xf32>
    %769 = vector.broadcast %768 : vector<1x64xf32> to vector<8x64xf32>
    %770 = arith.mulf %769, %767 : vector<8x64xf32>
    %771 = arith.addf %756, %770 : vector<8x64xf32>
    %c8_329 = arith.constant 8 : index
    %c136_330 = arith.constant 136 : index
    %772 = vector.load %arg4[%c8_329, %c136_330] : memref<16x256xf32, #tpu.memory_space<vmem>>, vector<8x64xf32>
    %773 = vector.extract_strided_slice %739 {offsets = [7, 0], sizes = [1, 64], strides = [1, 1]} : vector<9x64xf32> to vector<1x64xf32>
    %774 = vector.broadcast %773 : vector<1x64xf32> to vector<8x64xf32>
    %775 = arith.mulf %774, %772 : vector<8x64xf32>
    %776 = arith.addf %761, %775 : vector<8x64xf32>
    %c8_331 = arith.constant 8 : index
    %c137_332 = arith.constant 137 : index
    %777 = vector.load %arg4[%c8_331, %c137_332] : memref<16x256xf32, #tpu.memory_space<vmem>>, vector<8x64xf32>
    %778 = vector.extract_strided_slice %739 {offsets = [8, 0], sizes = [1, 64], strides = [1, 1]} : vector<9x64xf32> to vector<1x64xf32>
    %779 = vector.broadcast %778 : vector<1x64xf32> to vector<8x64xf32>
    %780 = arith.mulf %779, %777 : vector<8x64xf32>
    %781 = arith.addf %766, %780 : vector<8x64xf32>
    %782 = arith.addf %771, %776 : vector<8x64xf32>
    %783 = arith.addf %782, %781 : vector<8x64xf32>
    %784 = vector.extract_strided_slice %55 {offsets = [1, 0], sizes = [1, 64], strides = [1, 1]} : vector<9x64xf32> to vector<1x64xf32>
    %785 = vector.broadcast %784 : vector<1x64xf32> to vector<8x64xf32>
    %786 = arith.mulf %783, %785 : vector<8x64xf32>
    %c1_333 = arith.constant 1 : index
    %c0_334 = arith.constant 0 : index
    %c128_335 = arith.constant 128 : index
    %787 = vector.load %arg5[%c1_333, %c0_334, %c128_335] : memref<9x8x256xf32, #tpu.memory_space<vmem>>, vector<1x8x64xf32>
    %788 = vector.shape_cast %787 : vector<1x8x64xf32> to vector<8x64xf32>
    %789 = vector.shape_cast %786 : vector<8x64xf32> to vector<1x8x64xf32>
    tpu.vector_store %arg5[%c1_333, %c0_334, %c128_335], %789 {strides = array<i32>} : memref<9x8x256xf32, #tpu.memory_space<vmem>>, vector<1x8x64xf32>,
    %c0_336 = arith.constant 0 : index
    %c11 = arith.constant 11 : index
    %c0_337 = arith.constant 0 : index
    %c0_338 = arith.constant 0 : index
    %790 = vector.load %arg1[%c0_336, %c11, %c0_337, %c0_338] : memref<1x18x9x64xbf16, #tpu.memory_space<vmem>>, vector<1x1x9x64xbf16>
    %791 = vector.shape_cast %790 : vector<1x1x9x64xbf16> to vector<9x64xbf16>
    %792 = arith.extf %791 : vector<9x64xbf16> to vector<9x64xf32>
    %cst_339 = arith.constant dense<0xFF800000> : vector<64xf32>
    %793 = vector.multi_reduction <maximumf>, %792, %cst_339 [0] : vector<9x64xf32> to vector<64xf32>
    %794 = vector.shape_cast %793 : vector<64xf32> to vector<1x64xf32>
    %795 = vector.broadcast %794 : vector<1x64xf32> to vector<9x64xf32>
    %796 = arith.subf %792, %795 : vector<9x64xf32>
    %797 = math.exp %796 : vector<9x64xf32>
    %cst_340 = arith.constant dense<0.000000e+00> : vector<64xf32>
    %798 = vector.multi_reduction <add>, %797, %cst_340 [0] : vector<9x64xf32> to vector<64xf32>
    %799 = vector.shape_cast %798 : vector<64xf32> to vector<1x64xf32>
    %800 = tpu.reciprocal %799 {approx = true} : vector<1x64xf32> -> vector<1x64xf32>
    %801 = vector.broadcast %800 : vector<1x64xf32> to vector<9x64xf32>
    %802 = arith.mulf %797, %801 : vector<9x64xf32>
    %803 = arith.mulf %802, %55 : vector<9x64xf32>
    %c8_341 = arith.constant 8 : index
    %c119_342 = arith.constant 119 : index
    %804 = vector.load %arg4[%c8_341, %c119_342] : memref<16x256xf32, #tpu.memory_space<vmem>>, vector<8x64xf32>
    %805 = vector.extract_strided_slice %803 {offsets = [0, 0], sizes = [1, 64], strides = [1, 1]} : vector<9x64xf32> to vector<1x64xf32>
    %806 = vector.broadcast %805 : vector<1x64xf32> to vector<8x64xf32>
    %807 = arith.mulf %806, %804 : vector<8x64xf32>
    %c8_343 = arith.constant 8 : index
    %c120_344 = arith.constant 120 : index
    %808 = vector.load %arg4[%c8_343, %c120_344] : memref<16x256xf32, #tpu.memory_space<vmem>>, vector<8x64xf32>
    %809 = vector.extract_strided_slice %803 {offsets = [1, 0], sizes = [1, 64], strides = [1, 1]} : vector<9x64xf32> to vector<1x64xf32>
    %810 = vector.broadcast %809 : vector<1x64xf32> to vector<8x64xf32>
    %811 = arith.mulf %810, %808 : vector<8x64xf32>
    %c8_345 = arith.constant 8 : index
    %c121_346 = arith.constant 121 : index
    %812 = vector.load %arg4[%c8_345, %c121_346] : memref<16x256xf32, #tpu.memory_space<vmem>>, vector<8x64xf32>
    %813 = vector.extract_strided_slice %803 {offsets = [2, 0], sizes = [1, 64], strides = [1, 1]} : vector<9x64xf32> to vector<1x64xf32>
    %814 = vector.broadcast %813 : vector<1x64xf32> to vector<8x64xf32>
    %815 = arith.mulf %814, %812 : vector<8x64xf32>
    %c8_347 = arith.constant 8 : index
    %c127_348 = arith.constant 127 : index
    %816 = vector.load %arg4[%c8_347, %c127_348] : memref<16x256xf32, #tpu.memory_space<vmem>>, vector<8x64xf32>
    %817 = vector.extract_strided_slice %803 {offsets = [3, 0], sizes = [1, 64], strides = [1, 1]} : vector<9x64xf32> to vector<1x64xf32>
    %818 = vector.broadcast %817 : vector<1x64xf32> to vector<8x64xf32>
    %819 = arith.mulf %818, %816 : vector<8x64xf32>
    %820 = arith.addf %807, %819 : vector<8x64xf32>
    %c8_349 = arith.constant 8 : index
    %c128_350 = arith.constant 128 : index
    %821 = vector.load %arg4[%c8_349, %c128_350] : memref<16x256xf32, #tpu.memory_space<vmem>>, vector<8x64xf32>
    %822 = vector.extract_strided_slice %803 {offsets = [4, 0], sizes = [1, 64], strides = [1, 1]} : vector<9x64xf32> to vector<1x64xf32>
    %823 = vector.broadcast %822 : vector<1x64xf32> to vector<8x64xf32>
    %824 = arith.mulf %823, %821 : vector<8x64xf32>
    %825 = arith.addf %811, %824 : vector<8x64xf32>
    %c8_351 = arith.constant 8 : index
    %c129_352 = arith.constant 129 : index
    %826 = vector.load %arg4[%c8_351, %c129_352] : memref<16x256xf32, #tpu.memory_space<vmem>>, vector<8x64xf32>
    %827 = vector.extract_strided_slice %803 {offsets = [5, 0], sizes = [1, 64], strides = [1, 1]} : vector<9x64xf32> to vector<1x64xf32>
    %828 = vector.broadcast %827 : vector<1x64xf32> to vector<8x64xf32>
    %829 = arith.mulf %828, %826 : vector<8x64xf32>
    %830 = arith.addf %815, %829 : vector<8x64xf32>
    %c8_353 = arith.constant 8 : index
    %c135_354 = arith.constant 135 : index
    %831 = vector.load %arg4[%c8_353, %c135_354] : memref<16x256xf32, #tpu.memory_space<vmem>>, vector<8x64xf32>
    %832 = vector.extract_strided_slice %803 {offsets = [6, 0], sizes = [1, 64], strides = [1, 1]} : vector<9x64xf32> to vector<1x64xf32>
    %833 = vector.broadcast %832 : vector<1x64xf32> to vector<8x64xf32>
    %834 = arith.mulf %833, %831 : vector<8x64xf32>
    %835 = arith.addf %820, %834 : vector<8x64xf32>
    %c8_355 = arith.constant 8 : index
    %c136_356 = arith.constant 136 : index
    %836 = vector.load %arg4[%c8_355, %c136_356] : memref<16x256xf32, #tpu.memory_space<vmem>>, vector<8x64xf32>
    %837 = vector.extract_strided_slice %803 {offsets = [7, 0], sizes = [1, 64], strides = [1, 1]} : vector<9x64xf32> to vector<1x64xf32>
    %838 = vector.broadcast %837 : vector<1x64xf32> to vector<8x64xf32>
    %839 = arith.mulf %838, %836 : vector<8x64xf32>
    %840 = arith.addf %825, %839 : vector<8x64xf32>
    %c8_357 = arith.constant 8 : index
    %c137_358 = arith.constant 137 : index
    %841 = vector.load %arg4[%c8_357, %c137_358] : memref<16x256xf32, #tpu.memory_space<vmem>>, vector<8x64xf32>
    %842 = vector.extract_strided_slice %803 {offsets = [8, 0], sizes = [1, 64], strides = [1, 1]} : vector<9x64xf32> to vector<1x64xf32>
    %843 = vector.broadcast %842 : vector<1x64xf32> to vector<8x64xf32>
    %844 = arith.mulf %843, %841 : vector<8x64xf32>
    %845 = arith.addf %830, %844 : vector<8x64xf32>
    %846 = arith.addf %835, %840 : vector<8x64xf32>
    %847 = arith.addf %846, %845 : vector<8x64xf32>
    %848 = vector.extract_strided_slice %55 {offsets = [2, 0], sizes = [1, 64], strides = [1, 1]} : vector<9x64xf32> to vector<1x64xf32>
    %849 = vector.broadcast %848 : vector<1x64xf32> to vector<8x64xf32>
    %850 = arith.mulf %847, %849 : vector<8x64xf32>
    %c2_359 = arith.constant 2 : index
    %c0_360 = arith.constant 0 : index
    %c128_361 = arith.constant 128 : index
    %851 = vector.load %arg5[%c2_359, %c0_360, %c128_361] : memref<9x8x256xf32, #tpu.memory_space<vmem>>, vector<1x8x64xf32>
    %852 = vector.shape_cast %851 : vector<1x8x64xf32> to vector<8x64xf32>
    %853 = vector.shape_cast %850 : vector<8x64xf32> to vector<1x8x64xf32>
    tpu.vector_store %arg5[%c2_359, %c0_360, %c128_361], %853 {strides = array<i32>} : memref<9x8x256xf32, #tpu.memory_space<vmem>>, vector<1x8x64xf32>,
    %c0_362 = arith.constant 0 : index
    %c12 = arith.constant 12 : index
    %c0_363 = arith.constant 0 : index
    %c0_364 = arith.constant 0 : index
    %854 = vector.load %arg1[%c0_362, %c12, %c0_363, %c0_364] : memref<1x18x9x64xbf16, #tpu.memory_space<vmem>>, vector<1x1x9x64xbf16>
    %855 = vector.shape_cast %854 : vector<1x1x9x64xbf16> to vector<9x64xbf16>
    %856 = arith.extf %855 : vector<9x64xbf16> to vector<9x64xf32>
    %cst_365 = arith.constant dense<0xFF800000> : vector<64xf32>
    %857 = vector.multi_reduction <maximumf>, %856, %cst_365 [0] : vector<9x64xf32> to vector<64xf32>
    %858 = vector.shape_cast %857 : vector<64xf32> to vector<1x64xf32>
    %859 = vector.broadcast %858 : vector<1x64xf32> to vector<9x64xf32>
    %860 = arith.subf %856, %859 : vector<9x64xf32>
    %861 = math.exp %860 : vector<9x64xf32>
    %cst_366 = arith.constant dense<0.000000e+00> : vector<64xf32>
    %862 = vector.multi_reduction <add>, %861, %cst_366 [0] : vector<9x64xf32> to vector<64xf32>
    %863 = vector.shape_cast %862 : vector<64xf32> to vector<1x64xf32>
    %864 = tpu.reciprocal %863 {approx = true} : vector<1x64xf32> -> vector<1x64xf32>
    %865 = vector.broadcast %864 : vector<1x64xf32> to vector<9x64xf32>
    %866 = arith.mulf %861, %865 : vector<9x64xf32>
    %867 = arith.mulf %866, %55 : vector<9x64xf32>
    %c8_367 = arith.constant 8 : index
    %c119_368 = arith.constant 119 : index
    %868 = vector.load %arg4[%c8_367, %c119_368] : memref<16x256xf32, #tpu.memory_space<vmem>>, vector<8x64xf32>
    %869 = vector.extract_strided_slice %867 {offsets = [0, 0], sizes = [1, 64], strides = [1, 1]} : vector<9x64xf32> to vector<1x64xf32>
    %870 = vector.broadcast %869 : vector<1x64xf32> to vector<8x64xf32>
    %871 = arith.mulf %870, %868 : vector<8x64xf32>
    %c8_369 = arith.constant 8 : index
    %c120_370 = arith.constant 120 : index
    %872 = vector.load %arg4[%c8_369, %c120_370] : memref<16x256xf32, #tpu.memory_space<vmem>>, vector<8x64xf32>
    %873 = vector.extract_strided_slice %867 {offsets = [1, 0], sizes = [1, 64], strides = [1, 1]} : vector<9x64xf32> to vector<1x64xf32>
    %874 = vector.broadcast %873 : vector<1x64xf32> to vector<8x64xf32>
    %875 = arith.mulf %874, %872 : vector<8x64xf32>
    %c8_371 = arith.constant 8 : index
    %c121_372 = arith.constant 121 : index
    %876 = vector.load %arg4[%c8_371, %c121_372] : memref<16x256xf32, #tpu.memory_space<vmem>>, vector<8x64xf32>
    %877 = vector.extract_strided_slice %867 {offsets = [2, 0], sizes = [1, 64], strides = [1, 1]} : vector<9x64xf32> to vector<1x64xf32>
    %878 = vector.broadcast %877 : vector<1x64xf32> to vector<8x64xf32>
    %879 = arith.mulf %878, %876 : vector<8x64xf32>
    %c8_373 = arith.constant 8 : index
    %c127_374 = arith.constant 127 : index
    %880 = vector.load %arg4[%c8_373, %c127_374] : memref<16x256xf32, #tpu.memory_space<vmem>>, vector<8x64xf32>
    %881 = vector.extract_strided_slice %867 {offsets = [3, 0], sizes = [1, 64], strides = [1, 1]} : vector<9x64xf32> to vector<1x64xf32>
    %882 = vector.broadcast %881 : vector<1x64xf32> to vector<8x64xf32>
    %883 = arith.mulf %882, %880 : vector<8x64xf32>
    %884 = arith.addf %871, %883 : vector<8x64xf32>
    %c8_375 = arith.constant 8 : index
    %c128_376 = arith.constant 128 : index
    %885 = vector.load %arg4[%c8_375, %c128_376] : memref<16x256xf32, #tpu.memory_space<vmem>>, vector<8x64xf32>
    %886 = vector.extract_strided_slice %867 {offsets = [4, 0], sizes = [1, 64], strides = [1, 1]} : vector<9x64xf32> to vector<1x64xf32>
    %887 = vector.broadcast %886 : vector<1x64xf32> to vector<8x64xf32>
    %888 = arith.mulf %887, %885 : vector<8x64xf32>
    %889 = arith.addf %875, %888 : vector<8x64xf32>
    %c8_377 = arith.constant 8 : index
    %c129_378 = arith.constant 129 : index
    %890 = vector.load %arg4[%c8_377, %c129_378] : memref<16x256xf32, #tpu.memory_space<vmem>>, vector<8x64xf32>
    %891 = vector.extract_strided_slice %867 {offsets = [5, 0], sizes = [1, 64], strides = [1, 1]} : vector<9x64xf32> to vector<1x64xf32>
    %892 = vector.broadcast %891 : vector<1x64xf32> to vector<8x64xf32>
    %893 = arith.mulf %892, %890 : vector<8x64xf32>
    %894 = arith.addf %879, %893 : vector<8x64xf32>
    %c8_379 = arith.constant 8 : index
    %c135_380 = arith.constant 135 : index
    %895 = vector.load %arg4[%c8_379, %c135_380] : memref<16x256xf32, #tpu.memory_space<vmem>>, vector<8x64xf32>
    %896 = vector.extract_strided_slice %867 {offsets = [6, 0], sizes = [1, 64], strides = [1, 1]} : vector<9x64xf32> to vector<1x64xf32>
    %897 = vector.broadcast %896 : vector<1x64xf32> to vector<8x64xf32>
    %898 = arith.mulf %897, %895 : vector<8x64xf32>
    %899 = arith.addf %884, %898 : vector<8x64xf32>
    %c8_381 = arith.constant 8 : index
    %c136_382 = arith.constant 136 : index
    %900 = vector.load %arg4[%c8_381, %c136_382] : memref<16x256xf32, #tpu.memory_space<vmem>>, vector<8x64xf32>
    %901 = vector.extract_strided_slice %867 {offsets = [7, 0], sizes = [1, 64], strides = [1, 1]} : vector<9x64xf32> to vector<1x64xf32>
    %902 = vector.broadcast %901 : vector<1x64xf32> to vector<8x64xf32>
    %903 = arith.mulf %902, %900 : vector<8x64xf32>
    %904 = arith.addf %889, %903 : vector<8x64xf32>
    %c8_383 = arith.constant 8 : index
    %c137_384 = arith.constant 137 : index
    %905 = vector.load %arg4[%c8_383, %c137_384] : memref<16x256xf32, #tpu.memory_space<vmem>>, vector<8x64xf32>
    %906 = vector.extract_strided_slice %867 {offsets = [8, 0], sizes = [1, 64], strides = [1, 1]} : vector<9x64xf32> to vector<1x64xf32>
    %907 = vector.broadcast %906 : vector<1x64xf32> to vector<8x64xf32>
    %908 = arith.mulf %907, %905 : vector<8x64xf32>
    %909 = arith.addf %894, %908 : vector<8x64xf32>
    %910 = arith.addf %899, %904 : vector<8x64xf32>
    %911 = arith.addf %910, %909 : vector<8x64xf32>
    %912 = vector.extract_strided_slice %55 {offsets = [3, 0], sizes = [1, 64], strides = [1, 1]} : vector<9x64xf32> to vector<1x64xf32>
    %913 = vector.broadcast %912 : vector<1x64xf32> to vector<8x64xf32>
    %914 = arith.mulf %911, %913 : vector<8x64xf32>
    %c3_385 = arith.constant 3 : index
    %c0_386 = arith.constant 0 : index
    %c128_387 = arith.constant 128 : index
    %915 = vector.load %arg5[%c3_385, %c0_386, %c128_387] : memref<9x8x256xf32, #tpu.memory_space<vmem>>, vector<1x8x64xf32>
    %916 = vector.shape_cast %915 : vector<1x8x64xf32> to vector<8x64xf32>
    %917 = vector.shape_cast %914 : vector<8x64xf32> to vector<1x8x64xf32>
    tpu.vector_store %arg5[%c3_385, %c0_386, %c128_387], %917 {strides = array<i32>} : memref<9x8x256xf32, #tpu.memory_space<vmem>>, vector<1x8x64xf32>,
    %c0_388 = arith.constant 0 : index
    %c13 = arith.constant 13 : index
    %c0_389 = arith.constant 0 : index
    %c0_390 = arith.constant 0 : index
    %918 = vector.load %arg1[%c0_388, %c13, %c0_389, %c0_390] : memref<1x18x9x64xbf16, #tpu.memory_space<vmem>>, vector<1x1x9x64xbf16>
    %919 = vector.shape_cast %918 : vector<1x1x9x64xbf16> to vector<9x64xbf16>
    %920 = arith.extf %919 : vector<9x64xbf16> to vector<9x64xf32>
    %cst_391 = arith.constant dense<0xFF800000> : vector<64xf32>
    %921 = vector.multi_reduction <maximumf>, %920, %cst_391 [0] : vector<9x64xf32> to vector<64xf32>
    %922 = vector.shape_cast %921 : vector<64xf32> to vector<1x64xf32>
    %923 = vector.broadcast %922 : vector<1x64xf32> to vector<9x64xf32>
    %924 = arith.subf %920, %923 : vector<9x64xf32>
    %925 = math.exp %924 : vector<9x64xf32>
    %cst_392 = arith.constant dense<0.000000e+00> : vector<64xf32>
    %926 = vector.multi_reduction <add>, %925, %cst_392 [0] : vector<9x64xf32> to vector<64xf32>
    %927 = vector.shape_cast %926 : vector<64xf32> to vector<1x64xf32>
    %928 = tpu.reciprocal %927 {approx = true} : vector<1x64xf32> -> vector<1x64xf32>
    %929 = vector.broadcast %928 : vector<1x64xf32> to vector<9x64xf32>
    %930 = arith.mulf %925, %929 : vector<9x64xf32>
    %931 = arith.mulf %930, %55 : vector<9x64xf32>
    %c8_393 = arith.constant 8 : index
    %c119_394 = arith.constant 119 : index
    %932 = vector.load %arg4[%c8_393, %c119_394] : memref<16x256xf32, #tpu.memory_space<vmem>>, vector<8x64xf32>
    %933 = vector.extract_strided_slice %931 {offsets = [0, 0], sizes = [1, 64], strides = [1, 1]} : vector<9x64xf32> to vector<1x64xf32>
    %934 = vector.broadcast %933 : vector<1x64xf32> to vector<8x64xf32>
    %935 = arith.mulf %934, %932 : vector<8x64xf32>
    %c8_395 = arith.constant 8 : index
    %c120_396 = arith.constant 120 : index
    %936 = vector.load %arg4[%c8_395, %c120_396] : memref<16x256xf32, #tpu.memory_space<vmem>>, vector<8x64xf32>
    %937 = vector.extract_strided_slice %931 {offsets = [1, 0], sizes = [1, 64], strides = [1, 1]} : vector<9x64xf32> to vector<1x64xf32>
    %938 = vector.broadcast %937 : vector<1x64xf32> to vector<8x64xf32>
    %939 = arith.mulf %938, %936 : vector<8x64xf32>
    %c8_397 = arith.constant 8 : index
    %c121_398 = arith.constant 121 : index
    %940 = vector.load %arg4[%c8_397, %c121_398] : memref<16x256xf32, #tpu.memory_space<vmem>>, vector<8x64xf32>
    %941 = vector.extract_strided_slice %931 {offsets = [2, 0], sizes = [1, 64], strides = [1, 1]} : vector<9x64xf32> to vector<1x64xf32>
    %942 = vector.broadcast %941 : vector<1x64xf32> to vector<8x64xf32>
    %943 = arith.mulf %942, %940 : vector<8x64xf32>
    %c8_399 = arith.constant 8 : index
    %c127_400 = arith.constant 127 : index
    %944 = vector.load %arg4[%c8_399, %c127_400] : memref<16x256xf32, #tpu.memory_space<vmem>>, vector<8x64xf32>
    %945 = vector.extract_strided_slice %931 {offsets = [3, 0], sizes = [1, 64], strides = [1, 1]} : vector<9x64xf32> to vector<1x64xf32>
    %946 = vector.broadcast %945 : vector<1x64xf32> to vector<8x64xf32>
    %947 = arith.mulf %946, %944 : vector<8x64xf32>
    %948 = arith.addf %935, %947 : vector<8x64xf32>
    %c8_401 = arith.constant 8 : index
    %c128_402 = arith.constant 128 : index
    %949 = vector.load %arg4[%c8_401, %c128_402] : memref<16x256xf32, #tpu.memory_space<vmem>>, vector<8x64xf32>
    %950 = vector.extract_strided_slice %931 {offsets = [4, 0], sizes = [1, 64], strides = [1, 1]} : vector<9x64xf32> to vector<1x64xf32>
    %951 = vector.broadcast %950 : vector<1x64xf32> to vector<8x64xf32>
    %952 = arith.mulf %951, %949 : vector<8x64xf32>
    %953 = arith.addf %939, %952 : vector<8x64xf32>
    %c8_403 = arith.constant 8 : index
    %c129_404 = arith.constant 129 : index
    %954 = vector.load %arg4[%c8_403, %c129_404] : memref<16x256xf32, #tpu.memory_space<vmem>>, vector<8x64xf32>
    %955 = vector.extract_strided_slice %931 {offsets = [5, 0], sizes = [1, 64], strides = [1, 1]} : vector<9x64xf32> to vector<1x64xf32>
    %956 = vector.broadcast %955 : vector<1x64xf32> to vector<8x64xf32>
    %957 = arith.mulf %956, %954 : vector<8x64xf32>
    %958 = arith.addf %943, %957 : vector<8x64xf32>
    %c8_405 = arith.constant 8 : index
    %c135_406 = arith.constant 135 : index
    %959 = vector.load %arg4[%c8_405, %c135_406] : memref<16x256xf32, #tpu.memory_space<vmem>>, vector<8x64xf32>
    %960 = vector.extract_strided_slice %931 {offsets = [6, 0], sizes = [1, 64], strides = [1, 1]} : vector<9x64xf32> to vector<1x64xf32>
    %961 = vector.broadcast %960 : vector<1x64xf32> to vector<8x64xf32>
    %962 = arith.mulf %961, %959 : vector<8x64xf32>
    %963 = arith.addf %948, %962 : vector<8x64xf32>
    %c8_407 = arith.constant 8 : index
    %c136_408 = arith.constant 136 : index
    %964 = vector.load %arg4[%c8_407, %c136_408] : memref<16x256xf32, #tpu.memory_space<vmem>>, vector<8x64xf32>
    %965 = vector.extract_strided_slice %931 {offsets = [7, 0], sizes = [1, 64], strides = [1, 1]} : vector<9x64xf32> to vector<1x64xf32>
    %966 = vector.broadcast %965 : vector<1x64xf32> to vector<8x64xf32>
    %967 = arith.mulf %966, %964 : vector<8x64xf32>
    %968 = arith.addf %953, %967 : vector<8x64xf32>
    %c8_409 = arith.constant 8 : index
    %c137_410 = arith.constant 137 : index
    %969 = vector.load %arg4[%c8_409, %c137_410] : memref<16x256xf32, #tpu.memory_space<vmem>>, vector<8x64xf32>
    %970 = vector.extract_strided_slice %931 {offsets = [8, 0], sizes = [1, 64], strides = [1, 1]} : vector<9x64xf32> to vector<1x64xf32>
    %971 = vector.broadcast %970 : vector<1x64xf32> to vector<8x64xf32>
    %972 = arith.mulf %971, %969 : vector<8x64xf32>
    %973 = arith.addf %958, %972 : vector<8x64xf32>
    %974 = arith.addf %963, %968 : vector<8x64xf32>
    %975 = arith.addf %974, %973 : vector<8x64xf32>
    %976 = vector.extract_strided_slice %55 {offsets = [4, 0], sizes = [1, 64], strides = [1, 1]} : vector<9x64xf32> to vector<1x64xf32>
    %977 = vector.broadcast %976 : vector<1x64xf32> to vector<8x64xf32>
    %978 = arith.mulf %975, %977 : vector<8x64xf32>
    %c4_411 = arith.constant 4 : index
    %c0_412 = arith.constant 0 : index
    %c128_413 = arith.constant 128 : index
    %979 = vector.load %arg5[%c4_411, %c0_412, %c128_413] : memref<9x8x256xf32, #tpu.memory_space<vmem>>, vector<1x8x64xf32>
    %980 = vector.shape_cast %979 : vector<1x8x64xf32> to vector<8x64xf32>
    %981 = vector.shape_cast %978 : vector<8x64xf32> to vector<1x8x64xf32>
    tpu.vector_store %arg5[%c4_411, %c0_412, %c128_413], %981 {strides = array<i32>} : memref<9x8x256xf32, #tpu.memory_space<vmem>>, vector<1x8x64xf32>,
    %c0_414 = arith.constant 0 : index
    %c14 = arith.constant 14 : index
    %c0_415 = arith.constant 0 : index
    %c0_416 = arith.constant 0 : index
    %982 = vector.load %arg1[%c0_414, %c14, %c0_415, %c0_416] : memref<1x18x9x64xbf16, #tpu.memory_space<vmem>>, vector<1x1x9x64xbf16>
    %983 = vector.shape_cast %982 : vector<1x1x9x64xbf16> to vector<9x64xbf16>
    %984 = arith.extf %983 : vector<9x64xbf16> to vector<9x64xf32>
    %cst_417 = arith.constant dense<0xFF800000> : vector<64xf32>
    %985 = vector.multi_reduction <maximumf>, %984, %cst_417 [0] : vector<9x64xf32> to vector<64xf32>
    %986 = vector.shape_cast %985 : vector<64xf32> to vector<1x64xf32>
    %987 = vector.broadcast %986 : vector<1x64xf32> to vector<9x64xf32>
    %988 = arith.subf %984, %987 : vector<9x64xf32>
    %989 = math.exp %988 : vector<9x64xf32>
    %cst_418 = arith.constant dense<0.000000e+00> : vector<64xf32>
    %990 = vector.multi_reduction <add>, %989, %cst_418 [0] : vector<9x64xf32> to vector<64xf32>
    %991 = vector.shape_cast %990 : vector<64xf32> to vector<1x64xf32>
    %992 = tpu.reciprocal %991 {approx = true} : vector<1x64xf32> -> vector<1x64xf32>
    %993 = vector.broadcast %992 : vector<1x64xf32> to vector<9x64xf32>
    %994 = arith.mulf %989, %993 : vector<9x64xf32>
    %995 = arith.mulf %994, %55 : vector<9x64xf32>
    %c8_419 = arith.constant 8 : index
    %c119_420 = arith.constant 119 : index
    %996 = vector.load %arg4[%c8_419, %c119_420] : memref<16x256xf32, #tpu.memory_space<vmem>>, vector<8x64xf32>
    %997 = vector.extract_strided_slice %995 {offsets = [0, 0], sizes = [1, 64], strides = [1, 1]} : vector<9x64xf32> to vector<1x64xf32>
    %998 = vector.broadcast %997 : vector<1x64xf32> to vector<8x64xf32>
    %999 = arith.mulf %998, %996 : vector<8x64xf32>
    %c8_421 = arith.constant 8 : index
    %c120_422 = arith.constant 120 : index
    %1000 = vector.load %arg4[%c8_421, %c120_422] : memref<16x256xf32, #tpu.memory_space<vmem>>, vector<8x64xf32>
    %1001 = vector.extract_strided_slice %995 {offsets = [1, 0], sizes = [1, 64], strides = [1, 1]} : vector<9x64xf32> to vector<1x64xf32>
    %1002 = vector.broadcast %1001 : vector<1x64xf32> to vector<8x64xf32>
    %1003 = arith.mulf %1002, %1000 : vector<8x64xf32>
    %c8_423 = arith.constant 8 : index
    %c121_424 = arith.constant 121 : index
    %1004 = vector.load %arg4[%c8_423, %c121_424] : memref<16x256xf32, #tpu.memory_space<vmem>>, vector<8x64xf32>
    %1005 = vector.extract_strided_slice %995 {offsets = [2, 0], sizes = [1, 64], strides = [1, 1]} : vector<9x64xf32> to vector<1x64xf32>
    %1006 = vector.broadcast %1005 : vector<1x64xf32> to vector<8x64xf32>
    %1007 = arith.mulf %1006, %1004 : vector<8x64xf32>
    %c8_425 = arith.constant 8 : index
    %c127_426 = arith.constant 127 : index
    %1008 = vector.load %arg4[%c8_425, %c127_426] : memref<16x256xf32, #tpu.memory_space<vmem>>, vector<8x64xf32>
    %1009 = vector.extract_strided_slice %995 {offsets = [3, 0], sizes = [1, 64], strides = [1, 1]} : vector<9x64xf32> to vector<1x64xf32>
    %1010 = vector.broadcast %1009 : vector<1x64xf32> to vector<8x64xf32>
    %1011 = arith.mulf %1010, %1008 : vector<8x64xf32>
    %1012 = arith.addf %999, %1011 : vector<8x64xf32>
    %c8_427 = arith.constant 8 : index
    %c128_428 = arith.constant 128 : index
    %1013 = vector.load %arg4[%c8_427, %c128_428] : memref<16x256xf32, #tpu.memory_space<vmem>>, vector<8x64xf32>
    %1014 = vector.extract_strided_slice %995 {offsets = [4, 0], sizes = [1, 64], strides = [1, 1]} : vector<9x64xf32> to vector<1x64xf32>
    %1015 = vector.broadcast %1014 : vector<1x64xf32> to vector<8x64xf32>
    %1016 = arith.mulf %1015, %1013 : vector<8x64xf32>
    %1017 = arith.addf %1003, %1016 : vector<8x64xf32>
    %c8_429 = arith.constant 8 : index
    %c129_430 = arith.constant 129 : index
    %1018 = vector.load %arg4[%c8_429, %c129_430] : memref<16x256xf32, #tpu.memory_space<vmem>>, vector<8x64xf32>
    %1019 = vector.extract_strided_slice %995 {offsets = [5, 0], sizes = [1, 64], strides = [1, 1]} : vector<9x64xf32> to vector<1x64xf32>
    %1020 = vector.broadcast %1019 : vector<1x64xf32> to vector<8x64xf32>
    %1021 = arith.mulf %1020, %1018 : vector<8x64xf32>
    %1022 = arith.addf %1007, %1021 : vector<8x64xf32>
    %c8_431 = arith.constant 8 : index
    %c135_432 = arith.constant 135 : index
    %1023 = vector.load %arg4[%c8_431, %c135_432] : memref<16x256xf32, #tpu.memory_space<vmem>>, vector<8x64xf32>
    %1024 = vector.extract_strided_slice %995 {offsets = [6, 0], sizes = [1, 64], strides = [1, 1]} : vector<9x64xf32> to vector<1x64xf32>
    %1025 = vector.broadcast %1024 : vector<1x64xf32> to vector<8x64xf32>
    %1026 = arith.mulf %1025, %1023 : vector<8x64xf32>
    %1027 = arith.addf %1012, %1026 : vector<8x64xf32>
    %c8_433 = arith.constant 8 : index
    %c136_434 = arith.constant 136 : index
    %1028 = vector.load %arg4[%c8_433, %c136_434] : memref<16x256xf32, #tpu.memory_space<vmem>>, vector<8x64xf32>
    %1029 = vector.extract_strided_slice %995 {offsets = [7, 0], sizes = [1, 64], strides = [1, 1]} : vector<9x64xf32> to vector<1x64xf32>
    %1030 = vector.broadcast %1029 : vector<1x64xf32> to vector<8x64xf32>
    %1031 = arith.mulf %1030, %1028 : vector<8x64xf32>
    %1032 = arith.addf %1017, %1031 : vector<8x64xf32>
    %c8_435 = arith.constant 8 : index
    %c137_436 = arith.constant 137 : index
    %1033 = vector.load %arg4[%c8_435, %c137_436] : memref<16x256xf32, #tpu.memory_space<vmem>>, vector<8x64xf32>
    %1034 = vector.extract_strided_slice %995 {offsets = [8, 0], sizes = [1, 64], strides = [1, 1]} : vector<9x64xf32> to vector<1x64xf32>
    %1035 = vector.broadcast %1034 : vector<1x64xf32> to vector<8x64xf32>
    %1036 = arith.mulf %1035, %1033 : vector<8x64xf32>
    %1037 = arith.addf %1022, %1036 : vector<8x64xf32>
    %1038 = arith.addf %1027, %1032 : vector<8x64xf32>
    %1039 = arith.addf %1038, %1037 : vector<8x64xf32>
    %1040 = vector.extract_strided_slice %55 {offsets = [5, 0], sizes = [1, 64], strides = [1, 1]} : vector<9x64xf32> to vector<1x64xf32>
    %1041 = vector.broadcast %1040 : vector<1x64xf32> to vector<8x64xf32>
    %1042 = arith.mulf %1039, %1041 : vector<8x64xf32>
    %c5_437 = arith.constant 5 : index
    %c0_438 = arith.constant 0 : index
    %c128_439 = arith.constant 128 : index
    %1043 = vector.load %arg5[%c5_437, %c0_438, %c128_439] : memref<9x8x256xf32, #tpu.memory_space<vmem>>, vector<1x8x64xf32>
    %1044 = vector.shape_cast %1043 : vector<1x8x64xf32> to vector<8x64xf32>
    %1045 = vector.shape_cast %1042 : vector<8x64xf32> to vector<1x8x64xf32>
    tpu.vector_store %arg5[%c5_437, %c0_438, %c128_439], %1045 {strides = array<i32>} : memref<9x8x256xf32, #tpu.memory_space<vmem>>, vector<1x8x64xf32>,
    %c0_440 = arith.constant 0 : index
    %c15 = arith.constant 15 : index
    %c0_441 = arith.constant 0 : index
    %c0_442 = arith.constant 0 : index
    %1046 = vector.load %arg1[%c0_440, %c15, %c0_441, %c0_442] : memref<1x18x9x64xbf16, #tpu.memory_space<vmem>>, vector<1x1x9x64xbf16>
    %1047 = vector.shape_cast %1046 : vector<1x1x9x64xbf16> to vector<9x64xbf16>
    %1048 = arith.extf %1047 : vector<9x64xbf16> to vector<9x64xf32>
    %cst_443 = arith.constant dense<0xFF800000> : vector<64xf32>
    %1049 = vector.multi_reduction <maximumf>, %1048, %cst_443 [0] : vector<9x64xf32> to vector<64xf32>
    %1050 = vector.shape_cast %1049 : vector<64xf32> to vector<1x64xf32>
    %1051 = vector.broadcast %1050 : vector<1x64xf32> to vector<9x64xf32>
    %1052 = arith.subf %1048, %1051 : vector<9x64xf32>
    %1053 = math.exp %1052 : vector<9x64xf32>
    %cst_444 = arith.constant dense<0.000000e+00> : vector<64xf32>
    %1054 = vector.multi_reduction <add>, %1053, %cst_444 [0] : vector<9x64xf32> to vector<64xf32>
    %1055 = vector.shape_cast %1054 : vector<64xf32> to vector<1x64xf32>
    %1056 = tpu.reciprocal %1055 {approx = true} : vector<1x64xf32> -> vector<1x64xf32>
    %1057 = vector.broadcast %1056 : vector<1x64xf32> to vector<9x64xf32>
    %1058 = arith.mulf %1053, %1057 : vector<9x64xf32>
    %1059 = arith.mulf %1058, %55 : vector<9x64xf32>
    %c8_445 = arith.constant 8 : index
    %c119_446 = arith.constant 119 : index
    %1060 = vector.load %arg4[%c8_445, %c119_446] : memref<16x256xf32, #tpu.memory_space<vmem>>, vector<8x64xf32>
    %1061 = vector.extract_strided_slice %1059 {offsets = [0, 0], sizes = [1, 64], strides = [1, 1]} : vector<9x64xf32> to vector<1x64xf32>
    %1062 = vector.broadcast %1061 : vector<1x64xf32> to vector<8x64xf32>
    %1063 = arith.mulf %1062, %1060 : vector<8x64xf32>
    %c8_447 = arith.constant 8 : index
    %c120_448 = arith.constant 120 : index
    %1064 = vector.load %arg4[%c8_447, %c120_448] : memref<16x256xf32, #tpu.memory_space<vmem>>, vector<8x64xf32>
    %1065 = vector.extract_strided_slice %1059 {offsets = [1, 0], sizes = [1, 64], strides = [1, 1]} : vector<9x64xf32> to vector<1x64xf32>
    %1066 = vector.broadcast %1065 : vector<1x64xf32> to vector<8x64xf32>
    %1067 = arith.mulf %1066, %1064 : vector<8x64xf32>
    %c8_449 = arith.constant 8 : index
    %c121_450 = arith.constant 121 : index
    %1068 = vector.load %arg4[%c8_449, %c121_450] : memref<16x256xf32, #tpu.memory_space<vmem>>, vector<8x64xf32>
    %1069 = vector.extract_strided_slice %1059 {offsets = [2, 0], sizes = [1, 64], strides = [1, 1]} : vector<9x64xf32> to vector<1x64xf32>
    %1070 = vector.broadcast %1069 : vector<1x64xf32> to vector<8x64xf32>
    %1071 = arith.mulf %1070, %1068 : vector<8x64xf32>
    %c8_451 = arith.constant 8 : index
    %c127_452 = arith.constant 127 : index
    %1072 = vector.load %arg4[%c8_451, %c127_452] : memref<16x256xf32, #tpu.memory_space<vmem>>, vector<8x64xf32>
    %1073 = vector.extract_strided_slice %1059 {offsets = [3, 0], sizes = [1, 64], strides = [1, 1]} : vector<9x64xf32> to vector<1x64xf32>
    %1074 = vector.broadcast %1073 : vector<1x64xf32> to vector<8x64xf32>
    %1075 = arith.mulf %1074, %1072 : vector<8x64xf32>
    %1076 = arith.addf %1063, %1075 : vector<8x64xf32>
    %c8_453 = arith.constant 8 : index
    %c128_454 = arith.constant 128 : index
    %1077 = vector.load %arg4[%c8_453, %c128_454] : memref<16x256xf32, #tpu.memory_space<vmem>>, vector<8x64xf32>
    %1078 = vector.extract_strided_slice %1059 {offsets = [4, 0], sizes = [1, 64], strides = [1, 1]} : vector<9x64xf32> to vector<1x64xf32>
    %1079 = vector.broadcast %1078 : vector<1x64xf32> to vector<8x64xf32>
    %1080 = arith.mulf %1079, %1077 : vector<8x64xf32>
    %1081 = arith.addf %1067, %1080 : vector<8x64xf32>
    %c8_455 = arith.constant 8 : index
    %c129_456 = arith.constant 129 : index
    %1082 = vector.load %arg4[%c8_455, %c129_456] : memref<16x256xf32, #tpu.memory_space<vmem>>, vector<8x64xf32>
    %1083 = vector.extract_strided_slice %1059 {offsets = [5, 0], sizes = [1, 64], strides = [1, 1]} : vector<9x64xf32> to vector<1x64xf32>
    %1084 = vector.broadcast %1083 : vector<1x64xf32> to vector<8x64xf32>
    %1085 = arith.mulf %1084, %1082 : vector<8x64xf32>
    %1086 = arith.addf %1071, %1085 : vector<8x64xf32>
    %c8_457 = arith.constant 8 : index
    %c135_458 = arith.constant 135 : index
    %1087 = vector.load %arg4[%c8_457, %c135_458] : memref<16x256xf32, #tpu.memory_space<vmem>>, vector<8x64xf32>
    %1088 = vector.extract_strided_slice %1059 {offsets = [6, 0], sizes = [1, 64], strides = [1, 1]} : vector<9x64xf32> to vector<1x64xf32>
    %1089 = vector.broadcast %1088 : vector<1x64xf32> to vector<8x64xf32>
    %1090 = arith.mulf %1089, %1087 : vector<8x64xf32>
    %1091 = arith.addf %1076, %1090 : vector<8x64xf32>
    %c8_459 = arith.constant 8 : index
    %c136_460 = arith.constant 136 : index
    %1092 = vector.load %arg4[%c8_459, %c136_460] : memref<16x256xf32, #tpu.memory_space<vmem>>, vector<8x64xf32>
    %1093 = vector.extract_strided_slice %1059 {offsets = [7, 0], sizes = [1, 64], strides = [1, 1]} : vector<9x64xf32> to vector<1x64xf32>
    %1094 = vector.broadcast %1093 : vector<1x64xf32> to vector<8x64xf32>
    %1095 = arith.mulf %1094, %1092 : vector<8x64xf32>
    %1096 = arith.addf %1081, %1095 : vector<8x64xf32>
    %c8_461 = arith.constant 8 : index
    %c137_462 = arith.constant 137 : index
    %1097 = vector.load %arg4[%c8_461, %c137_462] : memref<16x256xf32, #tpu.memory_space<vmem>>, vector<8x64xf32>
    %1098 = vector.extract_strided_slice %1059 {offsets = [8, 0], sizes = [1, 64], strides = [1, 1]} : vector<9x64xf32> to vector<1x64xf32>
    %1099 = vector.broadcast %1098 : vector<1x64xf32> to vector<8x64xf32>
    %1100 = arith.mulf %1099, %1097 : vector<8x64xf32>
    %1101 = arith.addf %1086, %1100 : vector<8x64xf32>
    %1102 = arith.addf %1091, %1096 : vector<8x64xf32>
    %1103 = arith.addf %1102, %1101 : vector<8x64xf32>
    %1104 = vector.extract_strided_slice %55 {offsets = [6, 0], sizes = [1, 64], strides = [1, 1]} : vector<9x64xf32> to vector<1x64xf32>
    %1105 = vector.broadcast %1104 : vector<1x64xf32> to vector<8x64xf32>
    %1106 = arith.mulf %1103, %1105 : vector<8x64xf32>
    %c6_463 = arith.constant 6 : index
    %c0_464 = arith.constant 0 : index
    %c128_465 = arith.constant 128 : index
    %1107 = vector.load %arg5[%c6_463, %c0_464, %c128_465] : memref<9x8x256xf32, #tpu.memory_space<vmem>>, vector<1x8x64xf32>
    %1108 = vector.shape_cast %1107 : vector<1x8x64xf32> to vector<8x64xf32>
    %1109 = vector.shape_cast %1106 : vector<8x64xf32> to vector<1x8x64xf32>
    tpu.vector_store %arg5[%c6_463, %c0_464, %c128_465], %1109 {strides = array<i32>} : memref<9x8x256xf32, #tpu.memory_space<vmem>>, vector<1x8x64xf32>,
    %c0_466 = arith.constant 0 : index
    %c16 = arith.constant 16 : index
    %c0_467 = arith.constant 0 : index
    %c0_468 = arith.constant 0 : index
    %1110 = vector.load %arg1[%c0_466, %c16, %c0_467, %c0_468] : memref<1x18x9x64xbf16, #tpu.memory_space<vmem>>, vector<1x1x9x64xbf16>
    %1111 = vector.shape_cast %1110 : vector<1x1x9x64xbf16> to vector<9x64xbf16>
    %1112 = arith.extf %1111 : vector<9x64xbf16> to vector<9x64xf32>
    %cst_469 = arith.constant dense<0xFF800000> : vector<64xf32>
    %1113 = vector.multi_reduction <maximumf>, %1112, %cst_469 [0] : vector<9x64xf32> to vector<64xf32>
    %1114 = vector.shape_cast %1113 : vector<64xf32> to vector<1x64xf32>
    %1115 = vector.broadcast %1114 : vector<1x64xf32> to vector<9x64xf32>
    %1116 = arith.subf %1112, %1115 : vector<9x64xf32>
    %1117 = math.exp %1116 : vector<9x64xf32>
    %cst_470 = arith.constant dense<0.000000e+00> : vector<64xf32>
    %1118 = vector.multi_reduction <add>, %1117, %cst_470 [0] : vector<9x64xf32> to vector<64xf32>
    %1119 = vector.shape_cast %1118 : vector<64xf32> to vector<1x64xf32>
    %1120 = tpu.reciprocal %1119 {approx = true} : vector<1x64xf32> -> vector<1x64xf32>
    %1121 = vector.broadcast %1120 : vector<1x64xf32> to vector<9x64xf32>
    %1122 = arith.mulf %1117, %1121 : vector<9x64xf32>
    %1123 = arith.mulf %1122, %55 : vector<9x64xf32>
    %c8_471 = arith.constant 8 : index
    %c119_472 = arith.constant 119 : index
    %1124 = vector.load %arg4[%c8_471, %c119_472] : memref<16x256xf32, #tpu.memory_space<vmem>>, vector<8x64xf32>
    %1125 = vector.extract_strided_slice %1123 {offsets = [0, 0], sizes = [1, 64], strides = [1, 1]} : vector<9x64xf32> to vector<1x64xf32>
    %1126 = vector.broadcast %1125 : vector<1x64xf32> to vector<8x64xf32>
    %1127 = arith.mulf %1126, %1124 : vector<8x64xf32>
    %c8_473 = arith.constant 8 : index
    %c120_474 = arith.constant 120 : index
    %1128 = vector.load %arg4[%c8_473, %c120_474] : memref<16x256xf32, #tpu.memory_space<vmem>>, vector<8x64xf32>
    %1129 = vector.extract_strided_slice %1123 {offsets = [1, 0], sizes = [1, 64], strides = [1, 1]} : vector<9x64xf32> to vector<1x64xf32>
    %1130 = vector.broadcast %1129 : vector<1x64xf32> to vector<8x64xf32>
    %1131 = arith.mulf %1130, %1128 : vector<8x64xf32>
    %c8_475 = arith.constant 8 : index
    %c121_476 = arith.constant 121 : index
    %1132 = vector.load %arg4[%c8_475, %c121_476] : memref<16x256xf32, #tpu.memory_space<vmem>>, vector<8x64xf32>
    %1133 = vector.extract_strided_slice %1123 {offsets = [2, 0], sizes = [1, 64], strides = [1, 1]} : vector<9x64xf32> to vector<1x64xf32>
    %1134 = vector.broadcast %1133 : vector<1x64xf32> to vector<8x64xf32>
    %1135 = arith.mulf %1134, %1132 : vector<8x64xf32>
    %c8_477 = arith.constant 8 : index
    %c127_478 = arith.constant 127 : index
    %1136 = vector.load %arg4[%c8_477, %c127_478] : memref<16x256xf32, #tpu.memory_space<vmem>>, vector<8x64xf32>
    %1137 = vector.extract_strided_slice %1123 {offsets = [3, 0], sizes = [1, 64], strides = [1, 1]} : vector<9x64xf32> to vector<1x64xf32>
    %1138 = vector.broadcast %1137 : vector<1x64xf32> to vector<8x64xf32>
    %1139 = arith.mulf %1138, %1136 : vector<8x64xf32>
    %1140 = arith.addf %1127, %1139 : vector<8x64xf32>
    %c8_479 = arith.constant 8 : index
    %c128_480 = arith.constant 128 : index
    %1141 = vector.load %arg4[%c8_479, %c128_480] : memref<16x256xf32, #tpu.memory_space<vmem>>, vector<8x64xf32>
    %1142 = vector.extract_strided_slice %1123 {offsets = [4, 0], sizes = [1, 64], strides = [1, 1]} : vector<9x64xf32> to vector<1x64xf32>
    %1143 = vector.broadcast %1142 : vector<1x64xf32> to vector<8x64xf32>
    %1144 = arith.mulf %1143, %1141 : vector<8x64xf32>
    %1145 = arith.addf %1131, %1144 : vector<8x64xf32>
    %c8_481 = arith.constant 8 : index
    %c129_482 = arith.constant 129 : index
    %1146 = vector.load %arg4[%c8_481, %c129_482] : memref<16x256xf32, #tpu.memory_space<vmem>>, vector<8x64xf32>
    %1147 = vector.extract_strided_slice %1123 {offsets = [5, 0], sizes = [1, 64], strides = [1, 1]} : vector<9x64xf32> to vector<1x64xf32>
    %1148 = vector.broadcast %1147 : vector<1x64xf32> to vector<8x64xf32>
    %1149 = arith.mulf %1148, %1146 : vector<8x64xf32>
    %1150 = arith.addf %1135, %1149 : vector<8x64xf32>
    %c8_483 = arith.constant 8 : index
    %c135_484 = arith.constant 135 : index
    %1151 = vector.load %arg4[%c8_483, %c135_484] : memref<16x256xf32, #tpu.memory_space<vmem>>, vector<8x64xf32>
    %1152 = vector.extract_strided_slice %1123 {offsets = [6, 0], sizes = [1, 64], strides = [1, 1]} : vector<9x64xf32> to vector<1x64xf32>
    %1153 = vector.broadcast %1152 : vector<1x64xf32> to vector<8x64xf32>
    %1154 = arith.mulf %1153, %1151 : vector<8x64xf32>
    %1155 = arith.addf %1140, %1154 : vector<8x64xf32>
    %c8_485 = arith.constant 8 : index
    %c136_486 = arith.constant 136 : index
    %1156 = vector.load %arg4[%c8_485, %c136_486] : memref<16x256xf32, #tpu.memory_space<vmem>>, vector<8x64xf32>
    %1157 = vector.extract_strided_slice %1123 {offsets = [7, 0], sizes = [1, 64], strides = [1, 1]} : vector<9x64xf32> to vector<1x64xf32>
    %1158 = vector.broadcast %1157 : vector<1x64xf32> to vector<8x64xf32>
    %1159 = arith.mulf %1158, %1156 : vector<8x64xf32>
    %1160 = arith.addf %1145, %1159 : vector<8x64xf32>
    %c8_487 = arith.constant 8 : index
    %c137_488 = arith.constant 137 : index
    %1161 = vector.load %arg4[%c8_487, %c137_488] : memref<16x256xf32, #tpu.memory_space<vmem>>, vector<8x64xf32>
    %1162 = vector.extract_strided_slice %1123 {offsets = [8, 0], sizes = [1, 64], strides = [1, 1]} : vector<9x64xf32> to vector<1x64xf32>
    %1163 = vector.broadcast %1162 : vector<1x64xf32> to vector<8x64xf32>
    %1164 = arith.mulf %1163, %1161 : vector<8x64xf32>
    %1165 = arith.addf %1150, %1164 : vector<8x64xf32>
    %1166 = arith.addf %1155, %1160 : vector<8x64xf32>
    %1167 = arith.addf %1166, %1165 : vector<8x64xf32>
    %1168 = vector.extract_strided_slice %55 {offsets = [7, 0], sizes = [1, 64], strides = [1, 1]} : vector<9x64xf32> to vector<1x64xf32>
    %1169 = vector.broadcast %1168 : vector<1x64xf32> to vector<8x64xf32>
    %1170 = arith.mulf %1167, %1169 : vector<8x64xf32>
    %c7_489 = arith.constant 7 : index
    %c0_490 = arith.constant 0 : index
    %c128_491 = arith.constant 128 : index
    %1171 = vector.load %arg5[%c7_489, %c0_490, %c128_491] : memref<9x8x256xf32, #tpu.memory_space<vmem>>, vector<1x8x64xf32>
    %1172 = vector.shape_cast %1171 : vector<1x8x64xf32> to vector<8x64xf32>
    %1173 = vector.shape_cast %1170 : vector<8x64xf32> to vector<1x8x64xf32>
    tpu.vector_store %arg5[%c7_489, %c0_490, %c128_491], %1173 {strides = array<i32>} : memref<9x8x256xf32, #tpu.memory_space<vmem>>, vector<1x8x64xf32>,
    %c0_492 = arith.constant 0 : index
    %c17 = arith.constant 17 : index
    %c0_493 = arith.constant 0 : index
    %c0_494 = arith.constant 0 : index
    %1174 = vector.load %arg1[%c0_492, %c17, %c0_493, %c0_494] : memref<1x18x9x64xbf16, #tpu.memory_space<vmem>>, vector<1x1x9x64xbf16>
    %1175 = vector.shape_cast %1174 : vector<1x1x9x64xbf16> to vector<9x64xbf16>
    %1176 = arith.extf %1175 : vector<9x64xbf16> to vector<9x64xf32>
    %cst_495 = arith.constant dense<0xFF800000> : vector<64xf32>
    %1177 = vector.multi_reduction <maximumf>, %1176, %cst_495 [0] : vector<9x64xf32> to vector<64xf32>
    %1178 = vector.shape_cast %1177 : vector<64xf32> to vector<1x64xf32>
    %1179 = vector.broadcast %1178 : vector<1x64xf32> to vector<9x64xf32>
    %1180 = arith.subf %1176, %1179 : vector<9x64xf32>
    %1181 = math.exp %1180 : vector<9x64xf32>
    %cst_496 = arith.constant dense<0.000000e+00> : vector<64xf32>
    %1182 = vector.multi_reduction <add>, %1181, %cst_496 [0] : vector<9x64xf32> to vector<64xf32>
    %1183 = vector.shape_cast %1182 : vector<64xf32> to vector<1x64xf32>
    %1184 = tpu.reciprocal %1183 {approx = true} : vector<1x64xf32> -> vector<1x64xf32>
    %1185 = vector.broadcast %1184 : vector<1x64xf32> to vector<9x64xf32>
    %1186 = arith.mulf %1181, %1185 : vector<9x64xf32>
    %1187 = arith.mulf %1186, %55 : vector<9x64xf32>
    %c8_497 = arith.constant 8 : index
    %c119_498 = arith.constant 119 : index
    %1188 = vector.load %arg4[%c8_497, %c119_498] : memref<16x256xf32, #tpu.memory_space<vmem>>, vector<8x64xf32>
    %1189 = vector.extract_strided_slice %1187 {offsets = [0, 0], sizes = [1, 64], strides = [1, 1]} : vector<9x64xf32> to vector<1x64xf32>
    %1190 = vector.broadcast %1189 : vector<1x64xf32> to vector<8x64xf32>
    %1191 = arith.mulf %1190, %1188 : vector<8x64xf32>
    %c8_499 = arith.constant 8 : index
    %c120_500 = arith.constant 120 : index
    %1192 = vector.load %arg4[%c8_499, %c120_500] : memref<16x256xf32, #tpu.memory_space<vmem>>, vector<8x64xf32>
    %1193 = vector.extract_strided_slice %1187 {offsets = [1, 0], sizes = [1, 64], strides = [1, 1]} : vector<9x64xf32> to vector<1x64xf32>
    %1194 = vector.broadcast %1193 : vector<1x64xf32> to vector<8x64xf32>
    %1195 = arith.mulf %1194, %1192 : vector<8x64xf32>
    %c8_501 = arith.constant 8 : index
    %c121_502 = arith.constant 121 : index
    %1196 = vector.load %arg4[%c8_501, %c121_502] : memref<16x256xf32, #tpu.memory_space<vmem>>, vector<8x64xf32>
    %1197 = vector.extract_strided_slice %1187 {offsets = [2, 0], sizes = [1, 64], strides = [1, 1]} : vector<9x64xf32> to vector<1x64xf32>
    %1198 = vector.broadcast %1197 : vector<1x64xf32> to vector<8x64xf32>
    %1199 = arith.mulf %1198, %1196 : vector<8x64xf32>
    %c8_503 = arith.constant 8 : index
    %c127_504 = arith.constant 127 : index
    %1200 = vector.load %arg4[%c8_503, %c127_504] : memref<16x256xf32, #tpu.memory_space<vmem>>, vector<8x64xf32>
    %1201 = vector.extract_strided_slice %1187 {offsets = [3, 0], sizes = [1, 64], strides = [1, 1]} : vector<9x64xf32> to vector<1x64xf32>
    %1202 = vector.broadcast %1201 : vector<1x64xf32> to vector<8x64xf32>
    %1203 = arith.mulf %1202, %1200 : vector<8x64xf32>
    %1204 = arith.addf %1191, %1203 : vector<8x64xf32>
    %c8_505 = arith.constant 8 : index
    %c128_506 = arith.constant 128 : index
    %1205 = vector.load %arg4[%c8_505, %c128_506] : memref<16x256xf32, #tpu.memory_space<vmem>>, vector<8x64xf32>
    %1206 = vector.extract_strided_slice %1187 {offsets = [4, 0], sizes = [1, 64], strides = [1, 1]} : vector<9x64xf32> to vector<1x64xf32>
    %1207 = vector.broadcast %1206 : vector<1x64xf32> to vector<8x64xf32>
    %1208 = arith.mulf %1207, %1205 : vector<8x64xf32>
    %1209 = arith.addf %1195, %1208 : vector<8x64xf32>
    %c8_507 = arith.constant 8 : index
    %c129_508 = arith.constant 129 : index
    %1210 = vector.load %arg4[%c8_507, %c129_508] : memref<16x256xf32, #tpu.memory_space<vmem>>, vector<8x64xf32>
    %1211 = vector.extract_strided_slice %1187 {offsets = [5, 0], sizes = [1, 64], strides = [1, 1]} : vector<9x64xf32> to vector<1x64xf32>
    %1212 = vector.broadcast %1211 : vector<1x64xf32> to vector<8x64xf32>
    %1213 = arith.mulf %1212, %1210 : vector<8x64xf32>
    %1214 = arith.addf %1199, %1213 : vector<8x64xf32>
    %c8_509 = arith.constant 8 : index
    %c135_510 = arith.constant 135 : index
    %1215 = vector.load %arg4[%c8_509, %c135_510] : memref<16x256xf32, #tpu.memory_space<vmem>>, vector<8x64xf32>
    %1216 = vector.extract_strided_slice %1187 {offsets = [6, 0], sizes = [1, 64], strides = [1, 1]} : vector<9x64xf32> to vector<1x64xf32>
    %1217 = vector.broadcast %1216 : vector<1x64xf32> to vector<8x64xf32>
    %1218 = arith.mulf %1217, %1215 : vector<8x64xf32>
    %1219 = arith.addf %1204, %1218 : vector<8x64xf32>
    %c8_511 = arith.constant 8 : index
    %c136_512 = arith.constant 136 : index
    %1220 = vector.load %arg4[%c8_511, %c136_512] : memref<16x256xf32, #tpu.memory_space<vmem>>, vector<8x64xf32>
    %1221 = vector.extract_strided_slice %1187 {offsets = [7, 0], sizes = [1, 64], strides = [1, 1]} : vector<9x64xf32> to vector<1x64xf32>
    %1222 = vector.broadcast %1221 : vector<1x64xf32> to vector<8x64xf32>
    %1223 = arith.mulf %1222, %1220 : vector<8x64xf32>
    %1224 = arith.addf %1209, %1223 : vector<8x64xf32>
    %c8_513 = arith.constant 8 : index
    %c137_514 = arith.constant 137 : index
    %1225 = vector.load %arg4[%c8_513, %c137_514] : memref<16x256xf32, #tpu.memory_space<vmem>>, vector<8x64xf32>
    %1226 = vector.extract_strided_slice %1187 {offsets = [8, 0], sizes = [1, 64], strides = [1, 1]} : vector<9x64xf32> to vector<1x64xf32>
    %1227 = vector.broadcast %1226 : vector<1x64xf32> to vector<8x64xf32>
    %1228 = arith.mulf %1227, %1225 : vector<8x64xf32>
    %1229 = arith.addf %1214, %1228 : vector<8x64xf32>
    %1230 = arith.addf %1219, %1224 : vector<8x64xf32>
    %1231 = arith.addf %1230, %1229 : vector<8x64xf32>
    %1232 = vector.extract_strided_slice %55 {offsets = [8, 0], sizes = [1, 64], strides = [1, 1]} : vector<9x64xf32> to vector<1x64xf32>
    %1233 = vector.broadcast %1232 : vector<1x64xf32> to vector<8x64xf32>
    %1234 = arith.mulf %1231, %1233 : vector<8x64xf32>
    %c8_515 = arith.constant 8 : index
    %c0_516 = arith.constant 0 : index
    %c128_517 = arith.constant 128 : index
    %1235 = vector.load %arg5[%c8_515, %c0_516, %c128_517] : memref<9x8x256xf32, #tpu.memory_space<vmem>>, vector<1x8x64xf32>
    %1236 = vector.shape_cast %1235 : vector<1x8x64xf32> to vector<8x64xf32>
    %1237 = vector.shape_cast %1234 : vector<8x64xf32> to vector<1x8x64xf32>
    tpu.vector_store %arg5[%c8_515, %c0_516, %c128_517], %1237 {strides = array<i32>} : memref<9x8x256xf32, #tpu.memory_space<vmem>>, vector<1x8x64xf32>,
    %c0_518 = arith.constant 0 : index
    %c0_519 = arith.constant 0 : index
    %c137_520 = arith.constant 137 : index
    %1238 = vector.load %arg5[%c0_518, %c0_519, %c137_520] : memref<9x8x256xf32, #tpu.memory_space<vmem>>, vector<1x8x64xf32>
    %1239 = vector.shape_cast %1238 : vector<1x8x64xf32> to vector<8x64xf32>
    %c1_521 = arith.constant 1 : index
    %c0_522 = arith.constant 0 : index
    %c136_523 = arith.constant 136 : index
    %1240 = vector.load %arg5[%c1_521, %c0_522, %c136_523] : memref<9x8x256xf32, #tpu.memory_space<vmem>>, vector<1x8x64xf32>
    %1241 = vector.shape_cast %1240 : vector<1x8x64xf32> to vector<8x64xf32>
    %c2_524 = arith.constant 2 : index
    %c0_525 = arith.constant 0 : index
    %c135_526 = arith.constant 135 : index
    %1242 = vector.load %arg5[%c2_524, %c0_525, %c135_526] : memref<9x8x256xf32, #tpu.memory_space<vmem>>, vector<1x8x64xf32>
    %1243 = vector.shape_cast %1242 : vector<1x8x64xf32> to vector<8x64xf32>
    %c3_527 = arith.constant 3 : index
    %c0_528 = arith.constant 0 : index
    %c129_529 = arith.constant 129 : index
    %1244 = vector.load %arg5[%c3_527, %c0_528, %c129_529] : memref<9x8x256xf32, #tpu.memory_space<vmem>>, vector<1x8x64xf32>
    %1245 = vector.shape_cast %1244 : vector<1x8x64xf32> to vector<8x64xf32>
    %1246 = arith.addf %1239, %1245 : vector<8x64xf32>
    %c4_530 = arith.constant 4 : index
    %c0_531 = arith.constant 0 : index
    %c128_532 = arith.constant 128 : index
    %1247 = vector.load %arg5[%c4_530, %c0_531, %c128_532] : memref<9x8x256xf32, #tpu.memory_space<vmem>>, vector<1x8x64xf32>
    %1248 = vector.shape_cast %1247 : vector<1x8x64xf32> to vector<8x64xf32>
    %1249 = arith.addf %1241, %1248 : vector<8x64xf32>
    %c5_533 = arith.constant 5 : index
    %c0_534 = arith.constant 0 : index
    %c127_535 = arith.constant 127 : index
    %1250 = vector.load %arg5[%c5_533, %c0_534, %c127_535] : memref<9x8x256xf32, #tpu.memory_space<vmem>>, vector<1x8x64xf32>
    %1251 = vector.shape_cast %1250 : vector<1x8x64xf32> to vector<8x64xf32>
    %1252 = arith.addf %1243, %1251 : vector<8x64xf32>
    %c6_536 = arith.constant 6 : index
    %c0_537 = arith.constant 0 : index
    %c121_538 = arith.constant 121 : index
    %1253 = vector.load %arg5[%c6_536, %c0_537, %c121_538] : memref<9x8x256xf32, #tpu.memory_space<vmem>>, vector<1x8x64xf32>
    %1254 = vector.shape_cast %1253 : vector<1x8x64xf32> to vector<8x64xf32>
    %1255 = arith.addf %1246, %1254 : vector<8x64xf32>
    %c7_539 = arith.constant 7 : index
    %c0_540 = arith.constant 0 : index
    %c120_541 = arith.constant 120 : index
    %1256 = vector.load %arg5[%c7_539, %c0_540, %c120_541] : memref<9x8x256xf32, #tpu.memory_space<vmem>>, vector<1x8x64xf32>
    %1257 = vector.shape_cast %1256 : vector<1x8x64xf32> to vector<8x64xf32>
    %1258 = arith.addf %1249, %1257 : vector<8x64xf32>
    %c8_542 = arith.constant 8 : index
    %c0_543 = arith.constant 0 : index
    %c119_544 = arith.constant 119 : index
    %1259 = vector.load %arg5[%c8_542, %c0_543, %c119_544] : memref<9x8x256xf32, #tpu.memory_space<vmem>>, vector<1x8x64xf32>
    %1260 = vector.shape_cast %1259 : vector<1x8x64xf32> to vector<8x64xf32>
    %1261 = arith.addf %1252, %1260 : vector<8x64xf32>
    %1262 = arith.addf %1255, %1258 : vector<8x64xf32>
    %1263 = arith.addf %1262, %1261 : vector<8x64xf32>
    %1264 = arith.truncf %1263 : vector<8x64xf32> to vector<8x64xbf16>
    %c0_545 = arith.constant 0 : index
    %c8_546 = arith.constant 8 : index
    %c0_547 = arith.constant 0 : index
    %1265 = vector.load %arg3[%c0_545, %c8_546, %c0_547] : memref<1x16x64xbf16, #tpu.memory_space<vmem>>, vector<1x8x64xbf16>
    %1266 = vector.shape_cast %1265 : vector<1x8x64xbf16> to vector<8x64xbf16>
    %1267 = vector.shape_cast %1264 : vector<8x64xbf16> to vector<1x8x64xbf16>
    tpu.vector_store %arg3[%c0_545, %c8_546, %c0_547], %1267 {strides = array<i32>} : memref<1x16x64xbf16, #tpu.memory_space<vmem>>, vector<1x8x64xbf16>,
    return
  }
  func.func @transform_0(%arg0: i32) -> (i32, i32, i32, i32) {
    %c0_i32 = arith.constant 0 : i32
    %c0_i32_0 = arith.constant 0 : i32
    %c0_i32_1 = arith.constant 0 : i32
    %c0_i32_2 = arith.constant 0 : i32
    return %arg0, %c0_i32, %c0_i32_0, %c0_i32_1 : i32, i32, i32, i32
  }
  func.func @transform_1(%arg0: i32) -> (i32, i32, i32) {
    %c0_i32 = arith.constant 0 : i32
    %c0_i32_0 = arith.constant 0 : i32
    %c0_i32_1 = arith.constant 0 : i32
    return %arg0, %c0_i32, %c0_i32_0 : i32, i32, i32
  }
  func.func @transform_2(%arg0: i32) -> (i32, i32, i32) {
    %c0_i32 = arith.constant 0 : i32
    %c0_i32_0 = arith.constant 0 : i32
    %c0_i32_1 = arith.constant 0 : i32
    return %arg0, %c0_i32, %c0_i32_0 : i32, i32, i32
  }
}

module attributes {stable_mosaic.version = 11 : i64} {
  func.func @_linear_kernel(%arg0: i32, %arg1: memref<128x16xf32, #tpu.memory_space<vmem>>, %arg2: memref<1x16xf32, #tpu.memory_space<vmem>>, %arg3: memref<1x16xf32, #tpu.memory_space<vmem>>, %arg4: memref<16x128xbf16, #tpu.memory_space<vmem>>, %arg5: memref<1x128xf32, #tpu.memory_space<vmem>>, %arg6: memref<128x128xbf16, #tpu.memory_space<vmem>>) attributes {dimension_semantics = [#tpu.dimension_semantics<parallel>], iteration_bounds = array<i64: 1>, scalar_prefetch = 0 : i64, scratch_operands = 0 : i64, tpu.core_type = #tpu.core_type<tc>, window_params = [{transform_indices = @transform_0, window_bounds = array<i64: 128, 16>}, {pipeline_mode = #tpu.pipeline_mode<synchronous>, transform_indices = @transform_1, window_bounds = array<i64: 1, 16>}, {pipeline_mode = #tpu.pipeline_mode<synchronous>, transform_indices = @transform_2, window_bounds = array<i64: 1, 16>}, {pipeline_mode = #tpu.pipeline_mode<synchronous>, transform_indices = @transform_3, window_bounds = array<i64: 16, 128>}, {pipeline_mode = #tpu.pipeline_mode<synchronous>, transform_indices = @transform_4, window_bounds = array<i64: 1, 128>}, {transform_indices = @transform_5, window_bounds = array<i64: 128, 128>}]} {
    %c0 = arith.constant 0 : index
    %c0_0 = arith.constant 0 : index
    %0 = vector.load %arg1[%c0, %c0_0] : memref<128x16xf32, #tpu.memory_space<vmem>>, vector<128x16xf32>
    %cst = arith.constant dense<0.000000e+00> : vector<128xf32>
    %1 = vector.multi_reduction <add>, %0, %cst [1] : vector<128x16xf32> to vector<128xf32>
    %2 = vector.shape_cast %1 : vector<128xf32> to vector<128x1xf32>
    %cst_1 = arith.constant 1.600000e+01 : f32
    %3 = vector.broadcast %cst_1 : f32 to vector<128x1xf32>
    %4 = arith.divf %2, %3 : vector<128x1xf32>
    %5 = vector.broadcast %4 : vector<128x1xf32> to vector<128x16xf32>
    %6 = arith.subf %0, %5 : vector<128x16xf32>
    %7 = arith.mulf %6, %6 : vector<128x16xf32>
    %cst_2 = arith.constant dense<0.000000e+00> : vector<128xf32>
    %8 = vector.multi_reduction <add>, %7, %cst_2 [1] : vector<128x16xf32> to vector<128xf32>
    %9 = vector.shape_cast %8 : vector<128xf32> to vector<128x1xf32>
    %cst_3 = arith.constant 1.600000e+01 : f32
    %10 = vector.broadcast %cst_3 : f32 to vector<128x1xf32>
    %11 = arith.divf %9, %10 : vector<128x1xf32>
    %12 = vector.broadcast %4 : vector<128x1xf32> to vector<128x16xf32>
    %13 = arith.subf %0, %12 : vector<128x16xf32>
    %cst_4 = arith.constant 9.99999974E-6 : f32
    %14 = vector.broadcast %cst_4 : f32 to vector<128x1xf32>
    %15 = arith.addf %11, %14 : vector<128x1xf32>
    %16 = math.rsqrt %15 : vector<128x1xf32>
    %17 = vector.broadcast %16 : vector<128x1xf32> to vector<128x16xf32>
    %18 = arith.mulf %13, %17 : vector<128x16xf32>
    %c0_5 = arith.constant 0 : index
    %c0_6 = arith.constant 0 : index
    %19 = vector.load %arg2[%c0_5, %c0_6] : memref<1x16xf32, #tpu.memory_space<vmem>>, vector<1x16xf32>
    %20 = vector.broadcast %19 : vector<1x16xf32> to vector<128x16xf32>
    %21 = arith.mulf %18, %20 : vector<128x16xf32>
    %c0_7 = arith.constant 0 : index
    %c0_8 = arith.constant 0 : index
    %22 = vector.load %arg3[%c0_7, %c0_8] : memref<1x16xf32, #tpu.memory_space<vmem>>, vector<1x16xf32>
    %23 = vector.broadcast %22 : vector<1x16xf32> to vector<128x16xf32>
    %24 = arith.addf %21, %23 : vector<128x16xf32>
    %25 = arith.truncf %24 : vector<128x16xf32> to vector<128x16xbf16>
    %c0_9 = arith.constant 0 : index
    %c0_10 = arith.constant 0 : index
    %26 = vector.load %arg4[%c0_9, %c0_10] : memref<16x128xbf16, #tpu.memory_space<vmem>>, vector<16x128xbf16>
    %cst_11 = arith.constant dense<0.000000e+00> : vector<128x128xf32>
    %27 = tpu.matmul %25, %26, %cst_11 {dimension_numbers = #tpu.dot_dimension_numbers<[1], [0], [0], [1], [0, 0, 1, 1], [], []>} : vector<128x16xbf16>, vector<16x128xbf16>, vector<128x128xf32> -> vector<128x128xf32>
    %c0_12 = arith.constant 0 : index
    %c0_13 = arith.constant 0 : index
    %28 = vector.load %arg5[%c0_12, %c0_13] : memref<1x128xf32, #tpu.memory_space<vmem>>, vector<1x128xf32>
    %29 = vector.broadcast %28 : vector<1x128xf32> to vector<128x128xf32>
    %30 = arith.addf %27, %29 : vector<128x128xf32>
    %31 = arith.mulf %30, %30 : vector<128x128xf32>
    %32 = arith.mulf %30, %31 : vector<128x128xf32>
    %cst_14 = arith.constant 4.471500e-02 : f32
    %33 = vector.broadcast %cst_14 : f32 to vector<128x128xf32>
    %34 = arith.mulf %33, %32 : vector<128x128xf32>
    %35 = arith.addf %30, %34 : vector<128x128xf32>
    %cst_15 = arith.constant 0.797884583 : f32
    %36 = vector.broadcast %cst_15 : f32 to vector<128x128xf32>
    %37 = arith.mulf %36, %35 : vector<128x128xf32>
    %38 = math.tanh %37 : vector<128x128xf32>
    %cst_16 = arith.constant 1.000000e+00 : f32
    %39 = vector.broadcast %cst_16 : f32 to vector<128x128xf32>
    %40 = arith.addf %39, %38 : vector<128x128xf32>
    %cst_17 = arith.constant 5.000000e-01 : f32
    %41 = vector.broadcast %cst_17 : f32 to vector<128x128xf32>
    %42 = arith.mulf %41, %40 : vector<128x128xf32>
    %43 = arith.mulf %30, %42 : vector<128x128xf32>
    %44 = arith.truncf %43 : vector<128x128xf32> to vector<128x128xbf16>
    %c0_18 = arith.constant 0 : index
    %c0_19 = arith.constant 0 : index
    %45 = vector.load %arg6[%c0_18, %c0_19] : memref<128x128xbf16, #tpu.memory_space<vmem>>, vector<128x128xbf16>
    tpu.vector_store %arg6[%c0_18, %c0_19], %44 {strides = array<i32>} : memref<128x128xbf16, #tpu.memory_space<vmem>>, vector<128x128xbf16>,
    return
  }
  func.func @transform_0(%arg0: i32) -> (i32, i32) {
    %c0_i32 = arith.constant 0 : i32
    %c0_i32_0 = arith.constant 0 : i32
    return %arg0, %c0_i32 : i32, i32
  }
  func.func @transform_1(%arg0: i32) -> (i32, i32) {
    %c0_i32 = arith.constant 0 : i32
    %c0_i32_0 = arith.constant 0 : i32
    %c0_i32_1 = arith.constant 0 : i32
    return %c0_i32, %c0_i32_0 : i32, i32
  }
  func.func @transform_2(%arg0: i32) -> (i32, i32) {
    %c0_i32 = arith.constant 0 : i32
    %c0_i32_0 = arith.constant 0 : i32
    %c0_i32_1 = arith.constant 0 : i32
    return %c0_i32, %c0_i32_0 : i32, i32
  }
  func.func @transform_3(%arg0: i32) -> (i32, i32) {
    %c0_i32 = arith.constant 0 : i32
    %c0_i32_0 = arith.constant 0 : i32
    %c0_i32_1 = arith.constant 0 : i32
    return %c0_i32, %c0_i32_0 : i32, i32
  }
  func.func @transform_4(%arg0: i32) -> (i32, i32) {
    %c0_i32 = arith.constant 0 : i32
    %c0_i32_0 = arith.constant 0 : i32
    %c0_i32_1 = arith.constant 0 : i32
    return %c0_i32, %c0_i32_0 : i32, i32
  }
  func.func @transform_5(%arg0: i32) -> (i32, i32) {
    %c0_i32 = arith.constant 0 : i32
    %c0_i32_0 = arith.constant 0 : i32
    return %arg0, %c0_i32 : i32, i32
  }
}

module attributes {stable_mosaic.version = 11 : i64} {
  func.func @_linear_kernel(%arg0: i32, %arg1: memref<128x128xbf16, #tpu.memory_space<vmem>>, %arg2: memref<128x16xbf16, #tpu.memory_space<vmem>>, %arg3: memref<1x16xf32, #tpu.memory_space<vmem>>, %arg4: memref<128x16xf32, #tpu.memory_space<vmem>>, %arg5: memref<128x16xf32, #tpu.memory_space<vmem>>) attributes {dimension_semantics = [#tpu.dimension_semantics<parallel>], iteration_bounds = array<i64: 1>, scalar_prefetch = 0 : i64, scratch_operands = 0 : i64, tpu.core_type = #tpu.core_type<tc>, window_params = [{transform_indices = @transform_0, window_bounds = array<i64: 128, 128>}, {pipeline_mode = #tpu.pipeline_mode<synchronous>, transform_indices = @transform_1, window_bounds = array<i64: 128, 16>}, {pipeline_mode = #tpu.pipeline_mode<synchronous>, transform_indices = @transform_2, window_bounds = array<i64: 1, 16>}, {transform_indices = @transform_3, window_bounds = array<i64: 128, 16>}, {transform_indices = @transform_4, window_bounds = array<i64: 128, 16>}]} {
    %c0 = arith.constant 0 : index
    %c0_0 = arith.constant 0 : index
    %0 = vector.load %arg1[%c0, %c0_0] : memref<128x128xbf16, #tpu.memory_space<vmem>>, vector<128x128xbf16>
    %c0_1 = arith.constant 0 : index
    %c0_2 = arith.constant 0 : index
    %1 = vector.load %arg2[%c0_1, %c0_2] : memref<128x16xbf16, #tpu.memory_space<vmem>>, vector<128x16xbf16>
    %cst = arith.constant dense<0.000000e+00> : vector<128x16xf32>
    %2 = tpu.matmul %0, %1, %cst {dimension_numbers = #tpu.dot_dimension_numbers<[1], [0], [0], [1], [0, 0, 1, 1], [], []>} : vector<128x128xbf16>, vector<128x16xbf16>, vector<128x16xf32> -> vector<128x16xf32>
    %c0_3 = arith.constant 0 : index
    %c0_4 = arith.constant 0 : index
    %3 = vector.load %arg3[%c0_3, %c0_4] : memref<1x16xf32, #tpu.memory_space<vmem>>, vector<1x16xf32>
    %4 = vector.broadcast %3 : vector<1x16xf32> to vector<128x16xf32>
    %5 = arith.addf %2, %4 : vector<128x16xf32>
    %c0_5 = arith.constant 0 : index
    %c0_6 = arith.constant 0 : index
    %6 = vector.load %arg4[%c0_5, %c0_6] : memref<128x16xf32, #tpu.memory_space<vmem>>, vector<128x16xf32>
    %7 = arith.addf %5, %6 : vector<128x16xf32>
    %c0_7 = arith.constant 0 : index
    %c0_8 = arith.constant 0 : index
    %8 = vector.load %arg5[%c0_7, %c0_8] : memref<128x16xf32, #tpu.memory_space<vmem>>, vector<128x16xf32>
    tpu.vector_store %arg5[%c0_7, %c0_8], %7 {strides = array<i32>} : memref<128x16xf32, #tpu.memory_space<vmem>>, vector<128x16xf32>,
    return
  }
  func.func @transform_0(%arg0: i32) -> (i32, i32) {
    %c0_i32 = arith.constant 0 : i32
    %c0_i32_0 = arith.constant 0 : i32
    return %arg0, %c0_i32 : i32, i32
  }
  func.func @transform_1(%arg0: i32) -> (i32, i32) {
    %c0_i32 = arith.constant 0 : i32
    %c0_i32_0 = arith.constant 0 : i32
    %c0_i32_1 = arith.constant 0 : i32
    return %c0_i32, %c0_i32_0 : i32, i32
  }
  func.func @transform_2(%arg0: i32) -> (i32, i32) {
    %c0_i32 = arith.constant 0 : i32
    %c0_i32_0 = arith.constant 0 : i32
    %c0_i32_1 = arith.constant 0 : i32
    return %c0_i32, %c0_i32_0 : i32, i32
  }
  func.func @transform_3(%arg0: i32) -> (i32, i32) {
    %c0_i32 = arith.constant 0 : i32
    %c0_i32_0 = arith.constant 0 : i32
    return %arg0, %c0_i32 : i32, i32
  }
  func.func @transform_4(%arg0: i32) -> (i32, i32) {
    %c0_i32 = arith.constant 0 : i32
    %c0_i32_0 = arith.constant 0 : i32
    return %arg0, %c0_i32 : i32, i32
  }
}

</mosaic_0001>

<llo_original>
// kernel: outlooker_forward.7
$region0: #{outlooker_forward.7}
  #allocation0 [shape = 'u32[]', space=smem, size = 0x4, offset = 0x4, fixed_abs, tag = 'smem constant byte address 0x4 - core index']
  #allocation1 [shape = 'u32[144,128]{1,0:T(1,128)}', space=vmem, size = 0x12000, scoped, tag = 'internal scratch']
  %s0 = inlined_call_operand.vmem [shape: bf16[128,16], index: 0, kind: input, shape index: {}]
  %s1 = inlined_call_operand.vmem [shape: bf16[16,16], index: 1, kind: input, shape index: {}]
  %s2 = inlined_call_operand.vmem [shape: f32[1,16], index: 2, kind: input, shape index: {}]
  %s3 = inlined_call_operand.vmem [shape: f32[128,16], index: 3, kind: input, shape index: {}]
  %s4 = inlined_call_operand.vmem [shape: f32[128,16], index: 4, kind: output, shape index: {}]
  %s5 = sld [smem:[#allocation0]]
  $region26: #{outlooker_forward.7} parent=0
    _
  %s7 = ssub.s32 1, %s5
  %s8 = scalar_select 0, %s7, %s5
  // Predicated region
  $region2: #{outlooker_forward.7} parent=0 // pred_check
    _
  $region3: #{outlooker_forward.7} parent=0 // pred_check_branch
    %10 = sbr.rel (0) target = $region5
  $region4: #{outlooker_forward.7} parent=0 // pred_region
    _
  $region5: #{outlooker_forward.7} parent=0 // pred_fallthru
    _
  // Predicated region
  $region6: #{outlooker_forward.7} parent=0 // pred_check
    _
  $region7: #{outlooker_forward.7} parent=0 // pred_check_branch
    %12 = sbr.rel (0) target = $region9
  $region8: #{outlooker_forward.7} parent=0 // pred_region
    _
  $region9: #{outlooker_forward.7} parent=0 // pred_fallthru
    _
  // Predicated region
  $region10: #{outlooker_forward.7} parent=0 // pred_check
    _
  $region11: #{outlooker_forward.7} parent=0 // pred_check_branch
    %14 = sbr.rel (0) target = $region13
  $region12: #{outlooker_forward.7} parent=0 // pred_region
    _
  $region13: #{outlooker_forward.7} parent=0 // pred_fallthru
    _
  // Predicated region
  $region14: #{outlooker_forward.7} parent=0 // pred_check
    _
  $region15: #{outlooker_forward.7} parent=0 // pred_check_branch
    %16 = sbr.rel (0) target = $region17
  $region16: #{outlooker_forward.7} parent=0 // pred_region
    _
  $region17: #{outlooker_forward.7} parent=0 // pred_fallthru
    _
  %v18 = vld [vmem:[%s0] sm:$0xf]
  %v19 = vld [vmem:[%s0 + $0x4] sm:$0xf]
  %v20 = vld [vmem:[%s0 + $0x8] sm:$0xf]
  %v21 = vld [vmem:[%s0 + $0xc] sm:$0xf]
  %v22 = vld [vmem:[%s0 + $0x10] sm:$0xf]
  %v23 = vld [vmem:[%s0 + $0x14] sm:$0xf]
  %v24 = vld [vmem:[%s0 + $0x18] sm:$0xf]
  %v25 = vld [vmem:[%s0 + $0x1c] sm:$0xf]
  %v26 = vld [vmem:[%s0 + $0x20] sm:$0xf]
  %v27 = vld [vmem:[%s0 + $0x24] sm:$0xf]
  %v28 = vld [vmem:[%s0 + $0x28] sm:$0xf]
  %v29 = vld [vmem:[%s0 + $0x2c] sm:$0xf]
  %v30 = vld [vmem:[%s0 + $0x30] sm:$0xf]
  %v31 = vld [vmem:[%s0 + $0x34] sm:$0xf]
  %v32 = vld [vmem:[%s0 + $0x38] sm:$0xf]
  %v33 = vld [vmem:[%s0 + $0x3c] sm:$0xf]
  %v34 = vld [vmem:[%s1] sm:$0xf]
  %v35 = vld [vmem:[%s1 + $0x4] sm:$0xf]
  %v36 = vld [vmem:[%s2] sm:$0x1]
  %v38 = vlaneseq
  %v39 = vshrl.u32 %v38, 7
  %v40 = vsub.s32 0, %v39
  %v41 = vrot.slane %v36, %v40
  %v59 = vunpack.c.l.b16 %v18
  %v60 = vunpack.c.l.b16 %v19
  %v61 = vunpack.c.l.b16 %v20
  %v62 = vunpack.c.l.b16 %v21
  %v63 = vunpack.c.l.b16 %v22
  %v64 = vunpack.c.l.b16 %v23
  %v65 = vunpack.c.l.b16 %v24
  %v66 = vunpack.c.l.b16 %v25
  %v67 = vunpack.c.l.b16 %v26
  %v68 = vunpack.c.l.b16 %v27
  %v69 = vunpack.c.l.b16 %v28
  %v70 = vunpack.c.l.b16 %v29
  %v71 = vunpack.c.l.b16 %v30
  %v72 = vunpack.c.l.b16 %v31
  %v73 = vunpack.c.l.b16 %v32
  %v74 = vunpack.c.l.b16 %v33
  %v75 = vpack.c.b16 %v60, %v59
  %v76 = vpack.c.b16 %v62, %v61
  %v77 = vpack.c.b16 %v64, %v63
  %v78 = vpack.c.b16 %v66, %v65
  %v79 = vpack.c.b16 %v68, %v67
  %v80 = vpack.c.b16 %v70, %v69
  %v81 = vpack.c.b16 %v72, %v71
  %v82 = vpack.c.b16 %v74, %v73
  %v85 = vunpack.c.l.b16 %v34
  %v86 = vunpack.c.l.b16 %v35
  %v87 = vpack.c.b16 %v86, %v85
  %vm89 = vcmask 130048
  %v91 = vsel %vm89, %v75, 0
  %v94 = vsel %vm89, %v76, 0
  %v97 = vsel %vm89, %v77, 0
  %v100 = vsel %vm89, %v78, 0
  %v103 = vsel %vm89, %v79, 0
  %v106 = vsel %vm89, %v80, 0
  %v109 = vsel %vm89, %v81, 0
  %v112 = vsel %vm89, %v82, 0
  %114 = vmatprep.subr.bf16.mxu0 0
  %115 = vmatpush1.bf16.msra.mxu0 %v87
  %116 = vmatprep.subr.bf16.mxu0 0
  %117 = vmatpush1.bf16.msra.mxu0 0
  %118 = vmatprep.subr.bf16.mxu0 0
  %119 = vmatpush1.bf16.msra.mxu0 0
  %120 = vmatprep.subr.bf16.mxu0 0
  %121 = vmatpush1.bf16.msra.mxu0 0
  %122 = vmatprep.subr.bf16.mxu0 0
  %123 = vmatpush1.bf16.msra.mxu0 0
  %124 = vmatprep.subr.bf16.mxu0 0
  %125 = vmatpush1.bf16.msra.mxu0 0
  %126 = vmatprep.subr.bf16.mxu0 0
  %127 = vmatpush1.bf16.msra.mxu0 0
  %128 = vmatprep.subr.bf16.mxu0 0
  %129 = vmatpush1.bf16.msra.mxu0 0
  %130 = vmatprep.subr.bf16.mxu0 0
  %131 = vmatpush1.bf16.msra.mxu0 0
  %132 = vmatprep.subr.bf16.mxu0 0
  %133 = vmatpush1.bf16.msra.mxu0 0
  %134 = vmatprep.subr.bf16.mxu0 0
  %135 = vmatpush1.bf16.msra.mxu0 0
  %136 = vmatprep.subr.bf16.mxu0 0
  %137 = vmatpush1.bf16.msra.mxu0 0
  %138 = vmatprep.subr.bf16.mxu0 0
  %139 = vmatpush1.bf16.msra.mxu0 0
  %140 = vmatprep.subr.bf16.mxu0 0
  %141 = vmatpush1.bf16.msra.mxu0 0
  %142 = vmatprep.subr.bf16.mxu0 0
  %143 = vmatpush1.bf16.msra.mxu0 0
  %144 = vmatprep.subr.bf16.mxu0 0
  %145 = vmatpush1.bf16.msra.mxu0 0
  %146 = vmatprep.mubr.bf16.mxu0 0
  %147 = vmatmul.mubr.bf16.gmra.mrb[0].mxu0 %v91
  %v148 = vpop.f32.mrb[0].mxu0
  %v149 = vadd.f32 %v41, %v148
  %v150 = vpop.f32.mrb[0].mxu0
  %v151 = vpop.f32.mrb[0].mxu0
  %v152 = vadd.f32 %v41, %v151
  %v153 = vpop.f32.mrb[0].mxu0
  %154 = vmatprep.mubr.bf16.mxu0 0
  %155 = vmatmul.mubr.bf16.gmra.mrb[0].mxu0 %v94
  %v156 = vpop.f32.mrb[0].mxu0
  %v157 = vadd.f32 %v41, %v156
  %v158 = vpop.f32.mrb[0].mxu0
  %v159 = vpop.f32.mrb[0].mxu0
  %v160 = vadd.f32 %v41, %v159
  %v161 = vpop.f32.mrb[0].mxu0
  %162 = vmatprep.mubr.bf16.mxu0 0
  %163 = vmatmul.mubr.bf16.gmra.mrb[0].mxu0 %v97
  %v164 = vpop.f32.mrb[0].mxu0
  %v165 = vadd.f32 %v41, %v164
  %v166 = vpop.f32.mrb[0].mxu0
  %v167 = vpop.f32.mrb[0].mxu0
  %v168 = vadd.f32 %v41, %v167
  %v169 = vpop.f32.mrb[0].mxu0
  %170 = vmatprep.mubr.bf16.mxu0 0
  %171 = vmatmul.mubr.bf16.gmra.mrb[0].mxu0 %v100
  %v172 = vpop.f32.mrb[0].mxu0
  %v173 = vadd.f32 %v41, %v172
  %v174 = vpop.f32.mrb[0].mxu0
  %v175 = vpop.f32.mrb[0].mxu0
  %v176 = vadd.f32 %v41, %v175
  %v177 = vpop.f32.mrb[0].mxu0
  %178 = vmatprep.mubr.bf16.mxu0 0
  %179 = vmatmul.mubr.bf16.gmra.mrb[0].mxu0 %v103
  %v180 = vpop.f32.mrb[0].mxu0
  %v181 = vadd.f32 %v41, %v180
  %v182 = vpop.f32.mrb[0].mxu0
  %v183 = vpop.f32.mrb[0].mxu0
  %v184 = vadd.f32 %v41, %v183
  %v185 = vpop.f32.mrb[0].mxu0
  %186 = vmatprep.mubr.bf16.mxu0 0
  %187 = vmatmul.mubr.bf16.gmra.mrb[0].mxu0 %v106
  %v188 = vpop.f32.mrb[0].mxu0
  %v189 = vadd.f32 %v41, %v188
  %v190 = vpop.f32.mrb[0].mxu0
  %v191 = vpop.f32.mrb[0].mxu0
  %v192 = vadd.f32 %v41, %v191
  %v193 = vpop.f32.mrb[0].mxu0
  %194 = vmatprep.mubr.bf16.mxu0 0
  %195 = vmatmul.mubr.bf16.gmra.mrb[0].mxu0 %v109
  %v196 = vpop.f32.mrb[0].mxu0
  %v197 = vadd.f32 %v41, %v196
  %v198 = vpop.f32.mrb[0].mxu0
  %v199 = vpop.f32.mrb[0].mxu0
  %v200 = vadd.f32 %v41, %v199
  %v201 = vpop.f32.mrb[0].mxu0
  %202 = vmatprep.mubr.bf16.mxu0 0
  %203 = vmatmul.mubr.bf16.gmra.mrb[0].mxu0 %v112
  %v204 = vpop.f32.mrb[0].mxu0
  %v205 = vadd.f32 %v41, %v204
  %v206 = vpop.f32.mrb[0].mxu0
  %v207 = vpop.f32.mrb[0].mxu0
  %v208 = vadd.f32 %v41, %v207
  %v209 = vpop.f32.mrb[0].mxu0
  %210 = vdwg.mxu0
  %v211 = vld [vmem:[%s3] sm:$0xff]
  %v212 = vld [vmem:[%s3 + $0x8] sm:$0xff]
  %v213 = vld [vmem:[%s3 + $0x10] sm:$0xff]
  %v214 = vld [vmem:[%s3 + $0x18] sm:$0xff]
  %v215 = vld [vmem:[%s3 + $0x20] sm:$0xff]
  %v216 = vld [vmem:[%s3 + $0x28] sm:$0xff]
  %v217 = vld [vmem:[%s3 + $0x30] sm:$0xff]
  %v218 = vld [vmem:[%s3 + $0x38] sm:$0xff]
  %v219 = vld [vmem:[%s3 + $0x40] sm:$0xff]
  %v220 = vld [vmem:[%s3 + $0x48] sm:$0xff]
  %v221 = vld [vmem:[%s3 + $0x50] sm:$0xff]
  %v222 = vld [vmem:[%s3 + $0x58] sm:$0xff]
  %v223 = vld [vmem:[%s3 + $0x60] sm:$0xff]
  %v224 = vld [vmem:[%s3 + $0x68] sm:$0xff]
  %v225 = vld [vmem:[%s3 + $0x70] sm:$0xff]
  %v226 = vld [vmem:[%s3 + $0x78] sm:$0xff]
  %v227 = vadd.f32 %v149, %v211
  %v228 = vadd.f32 %v152, %v212
  %v229 = vadd.f32 %v157, %v213
  %v230 = vadd.f32 %v160, %v214
  %v231 = vadd.f32 %v165, %v215
  %v232 = vadd.f32 %v168, %v216
  %v233 = vadd.f32 %v173, %v217
  %v234 = vadd.f32 %v176, %v218
  %v235 = vadd.f32 %v181, %v219
  %v236 = vadd.f32 %v184, %v220
  %v237 = vadd.f32 %v189, %v221
  %v238 = vadd.f32 %v192, %v222
  %v239 = vadd.f32 %v197, %v223
  %v240 = vadd.f32 %v200, %v224
  %v241 = vadd.f32 %v205, %v225
  %v242 = vadd.f32 %v208, %v226
  %243 = vst.msk [vmem:[%s4] sm:$0xff] %vm89, %v227
  %244 = vst.msk [vmem:[%s4 + $0x8] sm:$0xff] %vm89, %v228
  %245 = vst.msk [vmem:[%s4 + $0x10] sm:$0xff] %vm89, %v229
  %246 = vst.msk [vmem:[%s4 + $0x18] sm:$0xff] %vm89, %v230
  %247 = vst.msk [vmem:[%s4 + $0x20] sm:$0xff] %vm89, %v231
  %248 = vst.msk [vmem:[%s4 + $0x28] sm:$0xff] %vm89, %v232
  %249 = vst.msk [vmem:[%s4 + $0x30] sm:$0xff] %vm89, %v233
  %250 = vst.msk [vmem:[%s4 + $0x38] sm:$0xff] %vm89, %v234
  %251 = vst.msk [vmem:[%s4 + $0x40] sm:$0xff] %vm89, %v235
  %252 = vst.msk [vmem:[%s4 + $0x48] sm:$0xff] %vm89, %v236
  %253 = vst.msk [vmem:[%s4 + $0x50] sm:$0xff] %vm89, %v237
  %254 = vst.msk [vmem:[%s4 + $0x58] sm:$0xff] %vm89, %v238
  %255 = vst.msk [vmem:[%s4 + $0x60] sm:$0xff] %vm89, %v239
  %256 = vst.msk [vmem:[%s4 + $0x68] sm:$0xff] %vm89, %v240
  %257 = vst.msk [vmem:[%s4 + $0x70] sm:$0xff] %vm89, %v241
  %258 = vst.msk [vmem:[%s4 + $0x78] sm:$0xff] %vm89, %v242
  // Predicated region
  $region18: #{outlooker_forward.7} parent=0 // pred_check
    _
  $region19: #{outlooker_forward.7} parent=0 // pred_check_branch
    %260 = sbr.rel (0) target = $region21
  $region20: #{outlooker_forward.7} parent=0 // pred_region
    _
  $region21: #{outlooker_forward.7} parent=0 // pred_fallthru
    _
  // Predicated region
  $region22: #{outlooker_forward.7} parent=0 // pred_check
    _
  $region23: #{outlooker_forward.7} parent=0 // pred_check_branch
    %262 = sbr.rel (0) target = $region25
  $region24: #{outlooker_forward.7} parent=0 // pred_region
    _
  $region25: #{outlooker_forward.7} parent=0 // pred_fallthru
    _

// kernel: outlooker_forward.5
$region0: #{outlooker_forward.5}
  #allocation0 [shape = 'u32[]', space=smem, size = 0x4, offset = 0x4, fixed_abs, tag = 'smem constant byte address 0x4 - core index']
  #allocation1 [shape = 'u32[144,128]{1,0:T(1,128)}', space=vmem, size = 0x12000, scoped, tag = 'internal scratch']
  %s0 = inlined_call_operand.vmem [shape: f32[128,16], index: 0, kind: input, shape index: {}]
  %s1 = inlined_call_operand.vmem [shape: f32[1,16], index: 1, kind: input, shape index: {}]
  %s2 = inlined_call_operand.vmem [shape: f32[1,16], index: 2, kind: input, shape index: {}]
  %s3 = inlined_call_operand.vmem [shape: bf16[16,16], index: 3, kind: input, shape index: {}]
  %s4 = inlined_call_operand.vmem [shape: bf16[16,256], index: 4, kind: input, shape index: {}]
  %s5 = inlined_call_operand.vmem [shape: f32[1,256], index: 5, kind: input, shape index: {}]
  %s6 = inlined_call_operand.vmem [shape: bf16[128,16], index: 6, kind: output, shape index: {0}]
  %s7 = inlined_call_operand.vmem [shape: bf16[128,256], index: 7, kind: output, shape index: {1}]
  %8 = xla_tuple %s6, %s7
  %s9 = sld [smem:[#allocation0]]
  $region42: #{outlooker_forward.5} parent=0
    _
  %s11 = ssub.s32 1, %s9
  %s12 = scalar_select 0, %s11, %s9
  // Predicated region
  $region2: #{outlooker_forward.5} parent=0 // pred_check
    _
  $region3: #{outlooker_forward.5} parent=0 // pred_check_branch
    %14 = sbr.rel (0) target = $region5
  $region4: #{outlooker_forward.5} parent=0 // pred_region
    _
  $region5: #{outlooker_forward.5} parent=0 // pred_fallthru
    _
  // Predicated region
  $region6: #{outlooker_forward.5} parent=0 // pred_check
    _
  $region7: #{outlooker_forward.5} parent=0 // pred_check_branch
    %16 = sbr.rel (0) target = $region9
  $region8: #{outlooker_forward.5} parent=0 // pred_region
    _
  $region9: #{outlooker_forward.5} parent=0 // pred_fallthru
    _
  // Predicated region
  $region10: #{outlooker_forward.5} parent=0 // pred_check
    _
  $region11: #{outlooker_forward.5} parent=0 // pred_check_branch
    %18 = sbr.rel (0) target = $region13
  $region12: #{outlooker_forward.5} parent=0 // pred_region
    _
  $region13: #{outlooker_forward.5} parent=0 // pred_fallthru
    _
  // Predicated region
  $region14: #{outlooker_forward.5} parent=0 // pred_check
    _
  $region15: #{outlooker_forward.5} parent=0 // pred_check_branch
    %20 = sbr.rel (0) target = $region17
  $region16: #{outlooker_forward.5} parent=0 // pred_region
    _
  $region17: #{outlooker_forward.5} parent=0 // pred_fallthru
    _
  // Predicated region
  $region18: #{outlooker_forward.5} parent=0 // pred_check
    _
  $region19: #{outlooker_forward.5} parent=0 // pred_check_branch
    %22 = sbr.rel (0) target = $region21
  $region20: #{outlooker_forward.5} parent=0 // pred_region
    _
  $region21: #{outlooker_forward.5} parent=0 // pred_fallthru
    _
  // Predicated region
  $region22: #{outlooker_forward.5} parent=0 // pred_check
    _
  $region23: #{outlooker_forward.5} parent=0 // pred_check_branch
    %24 = sbr.rel (0) target = $region25
  $region24: #{outlooker_forward.5} parent=0 // pred_region
    _
  $region25: #{outlooker_forward.5} parent=0 // pred_fallthru
    _
  %v26 = vld [vmem:[%s0] sm:$0xff]
  %v27 = vld [vmem:[%s0 + $0x8] sm:$0xff]
  %v28 = vld [vmem:[%s0 + $0x10] sm:$0xff]
  %v29 = vld [vmem:[%s0 + $0x18] sm:$0xff]
  %v30 = vld [vmem:[%s0 + $0x20] sm:$0xff]
  %v31 = vld [vmem:[%s0 + $0x28] sm:$0xff]
  %v32 = vld [vmem:[%s0 + $0x30] sm:$0xff]
  %v33 = vld [vmem:[%s0 + $0x38] sm:$0xff]
  %v34 = vld [vmem:[%s0 + $0x40] sm:$0xff]
  %v35 = vld [vmem:[%s0 + $0x48] sm:$0xff]
  %v36 = vld [vmem:[%s0 + $0x50] sm:$0xff]
  %v37 = vld [vmem:[%s0 + $0x58] sm:$0xff]
  %v38 = vld [vmem:[%s0 + $0x60] sm:$0xff]
  %v39 = vld [vmem:[%s0 + $0x68] sm:$0xff]
  %v40 = vld [vmem:[%s0 + $0x70] sm:$0xff]
  %v41 = vld [vmem:[%s0 + $0x78] sm:$0xff]
  %vm42 = vcmask 130048
  %v43 = vsel %vm42, %v26, 0.0
  %44 = vadd.xlane.f32.xlu0 %v43
  %v45 = vpop.xlane.xlu0 %44
  %v46 = vsel %vm42, %v27, 0.0
  %47 = vadd.xlane.f32.xlu0 %v46
  %v48 = vpop.xlane.xlu0 %47
  %v49 = vsel %vm42, %v28, 0.0
  %50 = vadd.xlane.f32.xlu0 %v49
  %v51 = vpop.xlane.xlu0 %50
  %v52 = vsel %vm42, %v29, 0.0
  %53 = vadd.xlane.f32.xlu0 %v52
  %v54 = vpop.xlane.xlu0 %53
  %v55 = vsel %vm42, %v30, 0.0
  %56 = vadd.xlane.f32.xlu0 %v55
  %v57 = vpop.xlane.xlu0 %56
  %v58 = vsel %vm42, %v31, 0.0
  %59 = vadd.xlane.f32.xlu0 %v58
  %v60 = vpop.xlane.xlu0 %59
  %v61 = vsel %vm42, %v32, 0.0
  %62 = vadd.xlane.f32.xlu0 %v61
  %v63 = vpop.xlane.xlu0 %62
  %v64 = vsel %vm42, %v33, 0.0
  %65 = vadd.xlane.f32.xlu0 %v64
  %v66 = vpop.xlane.xlu0 %65
  %v67 = vsel %vm42, %v34, 0.0
  %68 = vadd.xlane.f32.xlu0 %v67
  %v69 = vpop.xlane.xlu0 %68
  %v70 = vsel %vm42, %v35, 0.0
  %71 = vadd.xlane.f32.xlu0 %v70
  %v72 = vpop.xlane.xlu0 %71
  %v73 = vsel %vm42, %v36, 0.0
  %74 = vadd.xlane.f32.xlu0 %v73
  %v75 = vpop.xlane.xlu0 %74
  %v76 = vsel %vm42, %v37, 0.0
  %77 = vadd.xlane.f32.xlu0 %v76
  %v78 = vpop.xlane.xlu0 %77
  %v79 = vsel %vm42, %v38, 0.0
  %80 = vadd.xlane.f32.xlu0 %v79
  %v81 = vpop.xlane.xlu0 %80
  %v82 = vsel %vm42, %v39, 0.0
  %83 = vadd.xlane.f32.xlu0 %v82
  %v84 = vpop.xlane.xlu0 %83
  %v85 = vsel %vm42, %v40, 0.0
  %86 = vadd.xlane.f32.xlu0 %v85
  %v87 = vpop.xlane.xlu0 %86
  %v88 = vsel %vm42, %v41, 0.0
  %89 = vadd.xlane.f32.xlu0 %v88
  %v90 = vpop.xlane.xlu0 %89
  %v91 = vrcp.pop 16.0
  %v92 = vmul.f32 %v45, %v91
  %v93 = vmul.f32 %v48, %v91
  %v94 = vmul.f32 %v51, %v91
  %v95 = vmul.f32 %v54, %v91
  %v96 = vmul.f32 %v57, %v91
  %v97 = vmul.f32 %v60, %v91
  %v98 = vmul.f32 %v63, %v91
  %v99 = vmul.f32 %v66, %v91
  %v100 = vmul.f32 %v69, %v91
  %v101 = vmul.f32 %v72, %v91
  %v102 = vmul.f32 %v75, %v91
  %v103 = vmul.f32 %v78, %v91
  %v104 = vmul.f32 %v81, %v91
  %v105 = vmul.f32 %v84, %v91
  %v106 = vmul.f32 %v87, %v91
  %v107 = vmul.f32 %v90, %v91
  %v108 = vsub.f32 %v26, %v92
  %v109 = vsub.f32 %v27, %v93
  %v110 = vsub.f32 %v28, %v94
  %v111 = vsub.f32 %v29, %v95
  %v112 = vsub.f32 %v30, %v96
  %v113 = vsub.f32 %v31, %v97
  %v114 = vsub.f32 %v32, %v98
  %v115 = vsub.f32 %v33, %v99
  %v116 = vsub.f32 %v34, %v100
  %v117 = vsub.f32 %v35, %v101
  %v118 = vsub.f32 %v36, %v102
  %v119 = vsub.f32 %v37, %v103
  %v120 = vsub.f32 %v38, %v104
  %v121 = vsub.f32 %v39, %v105
  %v122 = vsub.f32 %v40, %v106
  %v123 = vsub.f32 %v41, %v107
  %v124 = vmul.f32 %v108, %v108
  %v125 = vmul.f32 %v109, %v109
  %v126 = vmul.f32 %v110, %v110
  %v127 = vmul.f32 %v111, %v111
  %v128 = vmul.f32 %v112, %v112
  %v129 = vmul.f32 %v113, %v113
  %v130 = vmul.f32 %v114, %v114
  %v131 = vmul.f32 %v115, %v115
  %v132 = vmul.f32 %v116, %v116
  %v133 = vmul.f32 %v117, %v117
  %v134 = vmul.f32 %v118, %v118
  %v135 = vmul.f32 %v119, %v119
  %v136 = vmul.f32 %v120, %v120
  %v137 = vmul.f32 %v121, %v121
  %v138 = vmul.f32 %v122, %v122
  %v139 = vmul.f32 %v123, %v123
  %v140 = vsel %vm42, %v124, 0.0
  %141 = vadd.xlane.f32.xlu0 %v140
  %v142 = vpop.xlane.xlu0 %141
  %v143 = vsel %vm42, %v125, 0.0
  %144 = vadd.xlane.f32.xlu0 %v143
  %v145 = vpop.xlane.xlu0 %144
  %v146 = vsel %vm42, %v126, 0.0
  %147 = vadd.xlane.f32.xlu0 %v146
  %v148 = vpop.xlane.xlu0 %147
  %v149 = vsel %vm42, %v127, 0.0
  %150 = vadd.xlane.f32.xlu0 %v149
  %v151 = vpop.xlane.xlu0 %150
  %v152 = vsel %vm42, %v128, 0.0
  %153 = vadd.xlane.f32.xlu0 %v152
  %v154 = vpop.xlane.xlu0 %153
  %v155 = vsel %vm42, %v129, 0.0
  %156 = vadd.xlane.f32.xlu0 %v155
  %v157 = vpop.xlane.xlu0 %156
  %v158 = vsel %vm42, %v130, 0.0
  %159 = vadd.xlane.f32.xlu0 %v158
  %v160 = vpop.xlane.xlu0 %159
  %v161 = vsel %vm42, %v131, 0.0
  %162 = vadd.xlane.f32.xlu0 %v161
  %v163 = vpop.xlane.xlu0 %162
  %v164 = vsel %vm42, %v132, 0.0
  %165 = vadd.xlane.f32.xlu0 %v164
  %v166 = vpop.xlane.xlu0 %165
  %v167 = vsel %vm42, %v133, 0.0
  %168 = vadd.xlane.f32.xlu0 %v167
  %v169 = vpop.xlane.xlu0 %168
  %v170 = vsel %vm42, %v134, 0.0
  %171 = vadd.xlane.f32.xlu0 %v170
  %v172 = vpop.xlane.xlu0 %171
  %v173 = vsel %vm42, %v135, 0.0
  %174 = vadd.xlane.f32.xlu0 %v173
  %v175 = vpop.xlane.xlu0 %174
  %v176 = vsel %vm42, %v136, 0.0
  %177 = vadd.xlane.f32.xlu0 %v176
  %v178 = vpop.xlane.xlu0 %177
  %v179 = vsel %vm42, %v137, 0.0
  %180 = vadd.xlane.f32.xlu0 %v179
  %v181 = vpop.xlane.xlu0 %180
  %v182 = vsel %vm42, %v138, 0.0
  %183 = vadd.xlane.f32.xlu0 %v182
  %v184 = vpop.xlane.xlu0 %183
  %v185 = vsel %vm42, %v139, 0.0
  %186 = vadd.xlane.f32.xlu0 %v185
  %v187 = vpop.xlane.xlu0 %186
  %v188 = vmul.f32 %v142, %v91
  %v189 = vmul.f32 %v145, %v91
  %v190 = vmul.f32 %v148, %v91
  %v191 = vmul.f32 %v151, %v91
  %v192 = vmul.f32 %v154, %v91
  %v193 = vmul.f32 %v157, %v91
  %v194 = vmul.f32 %v160, %v91
  %v195 = vmul.f32 %v163, %v91
  %v196 = vmul.f32 %v166, %v91
  %v197 = vmul.f32 %v169, %v91
  %v198 = vmul.f32 %v172, %v91
  %v199 = vmul.f32 %v175, %v91
  %v200 = vmul.f32 %v178, %v91
  %v201 = vmul.f32 %v181, %v91
  %v202 = vmul.f32 %v184, %v91
  %v203 = vmul.f32 %v187, %v91
  %v204 = vadd.f32 %v188, 1e-05
  %v205 = vadd.f32 %v189, 1e-05
  %v206 = vadd.f32 %v190, 1e-05
  %v207 = vadd.f32 %v191, 1e-05
  %v208 = vadd.f32 %v192, 1e-05
  %v209 = vadd.f32 %v193, 1e-05
  %v210 = vadd.f32 %v194, 1e-05
  %v211 = vadd.f32 %v195, 1e-05
  %v212 = vadd.f32 %v196, 1e-05
  %v213 = vadd.f32 %v197, 1e-05
  %v214 = vadd.f32 %v198, 1e-05
  %v215 = vadd.f32 %v199, 1e-05
  %v216 = vadd.f32 %v200, 1e-05
  %v217 = vadd.f32 %v201, 1e-05
  %v218 = vadd.f32 %v202, 1e-05
  %v219 = vadd.f32 %v203, 1e-05
  %v220 = vrsqrt.pop %v204
  %v221 = vrsqrt.pop %v205
  %v222 = vrsqrt.pop %v206
  %v223 = vrsqrt.pop %v207
  %v224 = vrsqrt.pop %v208
  %v225 = vrsqrt.pop %v209
  %v226 = vrsqrt.pop %v210
  %v227 = vrsqrt.pop %v211
  %v228 = vrsqrt.pop %v212
  %v229 = vrsqrt.pop %v213
  %v230 = vrsqrt.pop %v214
  %v231 = vrsqrt.pop %v215
  %v232 = vrsqrt.pop %v216
  %v233 = vrsqrt.pop %v217
  %v234 = vrsqrt.pop %v218
  %v235 = vrsqrt.pop %v219
  %v236 = vmul.f32 %v108, %v220
  %v237 = vmul.f32 %v109, %v221
  %v238 = vmul.f32 %v110, %v222
  %v239 = vmul.f32 %v111, %v223
  %v240 = vmul.f32 %v112, %v224
  %v241 = vmul.f32 %v113, %v225
  %v242 = vmul.f32 %v114, %v226
  %v243 = vmul.f32 %v115, %v227
  %v244 = vmul.f32 %v116, %v228
  %v245 = vmul.f32 %v117, %v229
  %v246 = vmul.f32 %v118, %v230
  %v247 = vmul.f32 %v119, %v231
  %v248 = vmul.f32 %v120, %v232
  %v249 = vmul.f32 %v121, %v233
  %v250 = vmul.f32 %v122, %v234
  %v251 = vmul.f32 %v123, %v235
  %v252 = vld [vmem:[%s1] sm:$0x1]
  %v254 = vlaneseq
  %v255 = vshrl.u32 %v254, 7
  %v256 = vsub.s32 0, %v255
  %v257 = vrot.slane %v252, %v256
  %v259 = vmul.f32 %v236, %v257
  %v260 = vmul.f32 %v237, %v257
  %v261 = vmul.f32 %v238, %v257
  %v262 = vmul.f32 %v239, %v257
  %v263 = vmul.f32 %v240, %v257
  %v264 = vmul.f32 %v241, %v257
  %v265 = vmul.f32 %v242, %v257
  %v266 = vmul.f32 %v243, %v257
  %v267 = vmul.f32 %v244, %v257
  %v268 = vmul.f32 %v245, %v257
  %v269 = vmul.f32 %v246, %v257
  %v270 = vmul.f32 %v247, %v257
  %v271 = vmul.f32 %v248, %v257
  %v272 = vmul.f32 %v249, %v257
  %v273 = vmul.f32 %v250, %v257
  %v274 = vmul.f32 %v251, %v257
  %v275 = vld [vmem:[%s2] sm:$0x1]
  %v277 = vlaneseq
  %v278 = vshrl.u32 %v277, 7
  %v279 = vsub.s32 0, %v278
  %v280 = vrot.slane %v275, %v279
  %v282 = vadd.f32 %v259, %v280
  %v283 = vadd.f32 %v260, %v280
  %v284 = vadd.f32 %v261, %v280
  %v285 = vadd.f32 %v262, %v280
  %v286 = vadd.f32 %v263, %v280
  %v287 = vadd.f32 %v264, %v280
  %v288 = vadd.f32 %v265, %v280
  %v289 = vadd.f32 %v266, %v280
  %v290 = vadd.f32 %v267, %v280
  %v291 = vadd.f32 %v268, %v280
  %v292 = vadd.f32 %v269, %v280
  %v293 = vadd.f32 %v270, %v280
  %v294 = vadd.f32 %v271, %v280
  %v295 = vadd.f32 %v272, %v280
  %v296 = vadd.f32 %v273, %v280
  %v297 = vadd.f32 %v274, %v280
  %v298 = vpack.c.bf16 %v283, %v282
  %v299 = vpack.c.bf16 %v285, %v284
  %v300 = vpack.c.bf16 %v287, %v286
  %v301 = vpack.c.bf16 %v289, %v288
  %v302 = vpack.c.bf16 %v291, %v290
  %v303 = vpack.c.bf16 %v293, %v292
  %v304 = vpack.c.bf16 %v295, %v294
  %v305 = vpack.c.bf16 %v297, %v296
  %v306 = vld [vmem:[%s3] sm:$0xf]
  %v307 = vld [vmem:[%s3 + $0x4] sm:$0xf]
  %v310 = vunpack.c.l.b16 %v306
  %v311 = vunpack.c.l.b16 %v307
  %v312 = vpack.c.b16 %v311, %v310
  %v315 = vsel %vm42, %v298, 0
  %v318 = vsel %vm42, %v299, 0
  %v321 = vsel %vm42, %v300, 0
  %v324 = vsel %vm42, %v301, 0
  %v327 = vsel %vm42, %v302, 0
  %v330 = vsel %vm42, %v303, 0
  %v333 = vsel %vm42, %v304, 0
  %v336 = vsel %vm42, %v305, 0
  %338 = vmatprep.subr.bf16.mxu0 0
  %339 = vmatpush1.bf16.msra.mxu0 %v312
  %340 = vmatprep.subr.bf16.mxu0 0
  %341 = vmatpush1.bf16.msra.mxu0 0
  %342 = vmatprep.subr.bf16.mxu0 0
  %343 = vmatpush1.bf16.msra.mxu0 0
  %344 = vmatprep.subr.bf16.mxu0 0
  %345 = vmatpush1.bf16.msra.mxu0 0
  %346 = vmatprep.subr.bf16.mxu0 0
  %347 = vmatpush1.bf16.msra.mxu0 0
  %348 = vmatprep.subr.bf16.mxu0 0
  %349 = vmatpush1.bf16.msra.mxu0 0
  %350 = vmatprep.subr.bf16.mxu0 0
  %351 = vmatpush1.bf16.msra.mxu0 0
  %352 = vmatprep.subr.bf16.mxu0 0
  %353 = vmatpush1.bf16.msra.mxu0 0
  %354 = vmatprep.subr.bf16.mxu0 0
  %355 = vmatpush1.bf16.msra.mxu0 0
  %356 = vmatprep.subr.bf16.mxu0 0
  %357 = vmatpush1.bf16.msra.mxu0 0
  %358 = vmatprep.subr.bf16.mxu0 0
  %359 = vmatpush1.bf16.msra.mxu0 0
  %360 = vmatprep.subr.bf16.mxu0 0
  %361 = vmatpush1.bf16.msra.mxu0 0
  %362 = vmatprep.subr.bf16.mxu0 0
  %363 = vmatpush1.bf16.msra.mxu0 0
  %364 = vmatprep.subr.bf16.mxu0 0
  %365 = vmatpush1.bf16.msra.mxu0 0
  %366 = vmatprep.subr.bf16.mxu0 0
  %367 = vmatpush1.bf16.msra.mxu0 0
  %368 = vmatprep.subr.bf16.mxu0 0
  %369 = vmatpush1.bf16.msra.mxu0 0
  %370 = vmatprep.mubr.bf16.mxu0 0
  %371 = vmatmul.mubr.bf16.gmra.mrb[0].mxu0 %v315
  %v372 = vpop.f32.mrb[0].mxu0
  %v373 = vadd.f32 0.0, %v372
  %v374 = vpop.f32.mrb[0].mxu0
  %v375 = vpop.f32.mrb[0].mxu0
  %v376 = vadd.f32 0.0, %v375
  %v377 = vpop.f32.mrb[0].mxu0
  %378 = vmatprep.mubr.bf16.mxu0 0
  %379 = vmatmul.mubr.bf16.gmra.mrb[0].mxu0 %v318
  %v380 = vpop.f32.mrb[0].mxu0
  %v381 = vadd.f32 0.0, %v380
  %v382 = vpop.f32.mrb[0].mxu0
  %v383 = vpop.f32.mrb[0].mxu0
  %v384 = vadd.f32 0.0, %v383
  %v385 = vpop.f32.mrb[0].mxu0
  %386 = vmatprep.mubr.bf16.mxu0 0
  %387 = vmatmul.mubr.bf16.gmra.mrb[0].mxu0 %v321
  %v388 = vpop.f32.mrb[0].mxu0
  %v389 = vadd.f32 0.0, %v388
  %v390 = vpop.f32.mrb[0].mxu0
  %v391 = vpop.f32.mrb[0].mxu0
  %v392 = vadd.f32 0.0, %v391
  %v393 = vpop.f32.mrb[0].mxu0
  %394 = vmatprep.mubr.bf16.mxu0 0
  %395 = vmatmul.mubr.bf16.gmra.mrb[0].mxu0 %v324
  %v396 = vpop.f32.mrb[0].mxu0
  %v397 = vadd.f32 0.0, %v396
  %v398 = vpop.f32.mrb[0].mxu0
  %v399 = vpop.f32.mrb[0].mxu0
  %v400 = vadd.f32 0.0, %v399
  %v401 = vpop.f32.mrb[0].mxu0
  %402 = vmatprep.mubr.bf16.mxu0 0
  %403 = vmatmul.mubr.bf16.gmra.mrb[0].mxu0 %v327
  %v404 = vpop.f32.mrb[0].mxu0
  %v405 = vadd.f32 0.0, %v404
  %v406 = vpop.f32.mrb[0].mxu0
  %v407 = vpop.f32.mrb[0].mxu0
  %v408 = vadd.f32 0.0, %v407
  %v409 = vpop.f32.mrb[0].mxu0
  %410 = vmatprep.mubr.bf16.mxu0 0
  %411 = vmatmul.mubr.bf16.gmra.mrb[0].mxu0 %v330
  %v412 = vpop.f32.mrb[0].mxu0
  %v413 = vadd.f32 0.0, %v412
  %v414 = vpop.f32.mrb[0].mxu0
  %v415 = vpop.f32.mrb[0].mxu0
  %v416 = vadd.f32 0.0, %v415
  %v417 = vpop.f32.mrb[0].mxu0
  %418 = vmatprep.mubr.bf16.mxu0 0
  %419 = vmatmul.mubr.bf16.gmra.mrb[0].mxu0 %v333
  %v420 = vpop.f32.mrb[0].mxu0
  %v421 = vadd.f32 0.0, %v420
  %v422 = vpop.f32.mrb[0].mxu0
  %v423 = vpop.f32.mrb[0].mxu0
  %v424 = vadd.f32 0.0, %v423
  %v425 = vpop.f32.mrb[0].mxu0
  %426 = vmatprep.mubr.bf16.mxu0 0
  %427 = vmatmul.mubr.bf16.gmra.mrb[0].mxu0 %v336
  %v428 = vpop.f32.mrb[0].mxu0
  %v429 = vadd.f32 0.0, %v428
  %v430 = vpop.f32.mrb[0].mxu0
  %v431 = vpop.f32.mrb[0].mxu0
  %v432 = vadd.f32 0.0, %v431
  %v433 = vpop.f32.mrb[0].mxu0
  %434 = vdwg.mxu0
  %v435 = vpack.c.bf16 %v376, %v373
  %v436 = vpack.c.bf16 %v384, %v381
  %v437 = vpack.c.bf16 %v392, %v389
  %v438 = vpack.c.bf16 %v400, %v397
  %v439 = vpack.c.bf16 %v408, %v405
  %v440 = vpack.c.bf16 %v416, %v413
  %v441 = vpack.c.bf16 %v424, %v421
  %v442 = vpack.c.bf16 %v432, %v429
  %v451 = vunpack.c.l.b16 %v435
  %v452 = vunpack.c.h.b16 %v435
  %v453 = vunpack.c.l.b16 %v436
  %v454 = vunpack.c.h.b16 %v436
  %v455 = vunpack.c.l.b16 %v437
  %v456 = vunpack.c.h.b16 %v437
  %v457 = vunpack.c.l.b16 %v438
  %v458 = vunpack.c.h.b16 %v438
  %v459 = vunpack.c.l.b16 %v439
  %v460 = vunpack.c.h.b16 %v439
  %v461 = vunpack.c.l.b16 %v440
  %v462 = vunpack.c.h.b16 %v440
  %v463 = vunpack.c.l.b16 %v441
  %v464 = vunpack.c.h.b16 %v441
  %v465 = vunpack.c.l.b16 %v442
  %v466 = vunpack.c.h.b16 %v442
  %v467 = vpack.c.b16 %v451, %v451
  %v468 = vpack.c.b16 %v452, %v452
  %v469 = vpack.c.b16 %v453, %v453
  %v470 = vpack.c.b16 %v454, %v454
  %v471 = vpack.c.b16 %v455, %v455
  %v472 = vpack.c.b16 %v456, %v456
  %v473 = vpack.c.b16 %v457, %v457
  %v474 = vpack.c.b16 %v458, %v458
  %v475 = vpack.c.b16 %v459, %v459
  %v476 = vpack.c.b16 %v460, %v460
  %v477 = vpack.c.b16 %v461, %v461
  %v478 = vpack.c.b16 %v462, %v462
  %v479 = vpack.c.b16 %v463, %v463
  %v480 = vpack.c.b16 %v464, %v464
  %v481 = vpack.c.b16 %v465, %v465
  %v482 = vpack.c.b16 %v466, %v466
  %vm499 = vcmask 125952
  %500 = vst.msk [vmem:[%s6] sm:$0xf] %vm499, %v467
  %501 = vst.msk [vmem:[%s6 + $0x4] sm:$0xf] %vm499, %v468
  %502 = vst.msk [vmem:[%s6 + $0x8] sm:$0xf] %vm499, %v469
  %503 = vst.msk [vmem:[%s6 + $0xc] sm:$0xf] %vm499, %v470
  %504 = vst.msk [vmem:[%s6 + $0x10] sm:$0xf] %vm499, %v471
  %505 = vst.msk [vmem:[%s6 + $0x14] sm:$0xf] %vm499, %v472
  %506 = vst.msk [vmem:[%s6 + $0x18] sm:$0xf] %vm499, %v473
  %507 = vst.msk [vmem:[%s6 + $0x1c] sm:$0xf] %vm499, %v474
  %508 = vst.msk [vmem:[%s6 + $0x20] sm:$0xf] %vm499, %v475
  %509 = vst.msk [vmem:[%s6 + $0x24] sm:$0xf] %vm499, %v476
  %510 = vst.msk [vmem:[%s6 + $0x28] sm:$0xf] %vm499, %v477
  %511 = vst.msk [vmem:[%s6 + $0x2c] sm:$0xf] %vm499, %v478
  %512 = vst.msk [vmem:[%s6 + $0x30] sm:$0xf] %vm499, %v479
  %513 = vst.msk [vmem:[%s6 + $0x34] sm:$0xf] %vm499, %v480
  %514 = vst.msk [vmem:[%s6 + $0x38] sm:$0xf] %vm499, %v481
  %515 = vst.msk [vmem:[%s6 + $0x3c] sm:$0xf] %vm499, %v482
  %v516 = vld [vmem:[%s4] sm:$0xff]
  %v517 = vld [vmem:[%s4 + $0x8] sm:$0xff]
  %v518 = vld [vmem:[%s5] sm:$0x3]
  %v520 = vlaneseq
  %v521 = vshrl.u32 %v520, 7
  %v522 = vsub.s32 0, %v521
  %v523 = vrot.slane %v518, %v522
  %v524 = vlaneseq
  %v525 = vshrl.u32 %v524, 7
  %v526 = vsub.s32 1, %v525
  %v527 = vrot.slane %v518, %v526
  %v532 = vunpack.c.l.b16 %v516
  %v533 = vunpack.c.h.b16 %v516
  %v534 = vunpack.c.l.b16 %v517
  %v535 = vunpack.c.h.b16 %v517
  %v536 = vpack.c.b16 %v534, %v532
  %v537 = vpack.c.b16 %v535, %v533
  %540 = vmatprep.subr.bf16.mxu0 %v537
  %541 = vmatpush1.bf16.msra.mxu0 %v536
  %542 = vmatprep.subr.bf16.mxu0 0
  %543 = vmatpush1.bf16.msra.mxu0 0
  %544 = vmatprep.subr.bf16.mxu0 0
  %545 = vmatpush1.bf16.msra.mxu0 0
  %546 = vmatprep.subr.bf16.mxu0 0
  %547 = vmatpush1.bf16.msra.mxu0 0
  %548 = vmatprep.subr.bf16.mxu0 0
  %549 = vmatpush1.bf16.msra.mxu0 0
  %550 = vmatprep.subr.bf16.mxu0 0
  %551 = vmatpush1.bf16.msra.mxu0 0
  %552 = vmatprep.subr.bf16.mxu0 0
  %553 = vmatpush1.bf16.msra.mxu0 0
  %554 = vmatprep.subr.bf16.mxu0 0
  %555 = vmatpush1.bf16.msra.mxu0 0
  %556 = vmatprep.subr.bf16.mxu0 0
  %557 = vmatpush1.bf16.msra.mxu0 0
  %558 = vmatprep.subr.bf16.mxu0 0
  %559 = vmatpush1.bf16.msra.mxu0 0
  %560 = vmatprep.subr.bf16.mxu0 0
  %561 = vmatpush1.bf16.msra.mxu0 0
  %562 = vmatprep.subr.bf16.mxu0 0
  %563 = vmatpush1.bf16.msra.mxu0 0
  %564 = vmatprep.subr.bf16.mxu0 0
  %565 = vmatpush1.bf16.msra.mxu0 0
  %566 = vmatprep.subr.bf16.mxu0 0
  %567 = vmatpush1.bf16.msra.mxu0 0
  %568 = vmatprep.subr.bf16.mxu0 0
  %569 = vmatpush1.bf16.msra.mxu0 0
  %570 = vmatprep.subr.bf16.mxu0 0
  %571 = vmatpush1.bf16.msra.mxu0 0
  %572 = vmatprep.mubr.bf16.mxu0 0
  %573 = vmatmul.mubr.bf16.gmra.mrb[0].mxu0 %v315
  %v574 = vpop.f32.mrb[0].mxu0
  %v575 = vadd.f32 %v523, %v574
  %v576 = vpop.f32.mrb[0].mxu0
  %v577 = vadd.f32 %v527, %v576
  %v578 = vpop.f32.mrb[0].mxu0
  %v579 = vadd.f32 %v523, %v578
  %v580 = vpop.f32.mrb[0].mxu0
  %v581 = vadd.f32 %v527, %v580
  %582 = vmatprep.mubr.bf16.mxu0 0
  %583 = vmatmul.mubr.bf16.gmra.mrb[0].mxu0 %v318
  %v584 = vpop.f32.mrb[0].mxu0
  %v585 = vadd.f32 %v523, %v584
  %v586 = vpop.f32.mrb[0].mxu0
  %v587 = vadd.f32 %v527, %v586
  %v588 = vpop.f32.mrb[0].mxu0
  %v589 = vadd.f32 %v523, %v588
  %v590 = vpop.f32.mrb[0].mxu0
  %v591 = vadd.f32 %v527, %v590
  %592 = vmatprep.mubr.bf16.mxu0 0
  %593 = vmatmul.mubr.bf16.gmra.mrb[0].mxu0 %v321
  %v594 = vpop.f32.mrb[0].mxu0
  %v595 = vadd.f32 %v523, %v594
  %v596 = vpop.f32.mrb[0].mxu0
  %v597 = vadd.f32 %v527, %v596
  %v598 = vpop.f32.mrb[0].mxu0
  %v599 = vadd.f32 %v523, %v598
  %v600 = vpop.f32.mrb[0].mxu0
  %v601 = vadd.f32 %v527, %v600
  %602 = vmatprep.mubr.bf16.mxu0 0
  %603 = vmatmul.mubr.bf16.gmra.mrb[0].mxu0 %v324
  %v604 = vpop.f32.mrb[0].mxu0
  %v605 = vadd.f32 %v523, %v604
  %v606 = vpop.f32.mrb[0].mxu0
  %v607 = vadd.f32 %v527, %v606
  %v608 = vpop.f32.mrb[0].mxu0
  %v609 = vadd.f32 %v523, %v608
  %v610 = vpop.f32.mrb[0].mxu0
  %v611 = vadd.f32 %v527, %v610
  %612 = vmatprep.mubr.bf16.mxu0 0
  %613 = vmatmul.mubr.bf16.gmra.mrb[0].mxu0 %v327
  %v614 = vpop.f32.mrb[0].mxu0
  %v615 = vadd.f32 %v523, %v614
  %v616 = vpop.f32.mrb[0].mxu0
  %v617 = vadd.f32 %v527, %v616
  %v618 = vpop.f32.mrb[0].mxu0
  %v619 = vadd.f32 %v523, %v618
  %v620 = vpop.f32.mrb[0].mxu0
  %v621 = vadd.f32 %v527, %v620
  %622 = vmatprep.mubr.bf16.mxu0 0
  %623 = vmatmul.mubr.bf16.gmra.mrb[0].mxu0 %v330
  %v624 = vpop.f32.mrb[0].mxu0
  %v625 = vadd.f32 %v523, %v624
  %v626 = vpop.f32.mrb[0].mxu0
  %v627 = vadd.f32 %v527, %v626
  %v628 = vpop.f32.mrb[0].mxu0
  %v629 = vadd.f32 %v523, %v628
  %v630 = vpop.f32.mrb[0].mxu0
  %v631 = vadd.f32 %v527, %v630
  %632 = vmatprep.mubr.bf16.mxu0 0
  %633 = vmatmul.mubr.bf16.gmra.mrb[0].mxu0 %v333
  %v634 = vpop.f32.mrb[0].mxu0
  %v635 = vadd.f32 %v523, %v634
  %v636 = vpop.f32.mrb[0].mxu0
  %v637 = vadd.f32 %v527, %v636
  %v638 = vpop.f32.mrb[0].mxu0
  %v639 = vadd.f32 %v523, %v638
  %v640 = vpop.f32.mrb[0].mxu0
  %v641 = vadd.f32 %v527, %v640
  %642 = vmatprep.mubr.bf16.mxu0 0
  %643 = vmatmul.mubr.bf16.gmra.mrb[0].mxu0 %v336
  %v644 = vpop.f32.mrb[0].mxu0
  %v645 = vadd.f32 %v523, %v644
  %v646 = vpop.f32.mrb[0].mxu0
  %v647 = vadd.f32 %v527, %v646
  %v648 = vpop.f32.mrb[0].mxu0
  %v649 = vadd.f32 %v523, %v648
  %v650 = vpop.f32.mrb[0].mxu0
  %v651 = vadd.f32 %v527, %v650
  %652 = vdwg.mxu0
  %v653 = vpack.c.bf16 %v579, %v575
  %v654 = vpack.c.bf16 %v581, %v577
  %v655 = vpack.c.bf16 %v589, %v585
  %v656 = vpack.c.bf16 %v591, %v587
  %v657 = vpack.c.bf16 %v599, %v595
  %v658 = vpack.c.bf16 %v601, %v597
  %v659 = vpack.c.bf16 %v609, %v605
  %v660 = vpack.c.bf16 %v611, %v607
  %v661 = vpack.c.bf16 %v619, %v615
  %v662 = vpack.c.bf16 %v621, %v617
  %v663 = vpack.c.bf16 %v629, %v625
  %v664 = vpack.c.bf16 %v631, %v627
  %v665 = vpack.c.bf16 %v639, %v635
  %v666 = vpack.c.bf16 %v641, %v637
  %v667 = vpack.c.bf16 %v649, %v645
  %v668 = vpack.c.bf16 %v651, %v647
  %v685 = vunpack.c.l.b16 %v653
  %v686 = vunpack.c.l.b16 %v654
  %v687 = vunpack.c.h.b16 %v653
  %v688 = vunpack.c.h.b16 %v654
  %v689 = vunpack.c.l.b16 %v655
  %v690 = vunpack.c.l.b16 %v656
  %v691 = vunpack.c.h.b16 %v655
  %v692 = vunpack.c.h.b16 %v656
  %v693 = vunpack.c.l.b16 %v657
  %v694 = vunpack.c.l.b16 %v658
  %v695 = vunpack.c.h.b16 %v657
  %v696 = vunpack.c.h.b16 %v658
  %v697 = vunpack.c.l.b16 %v659
  %v698 = vunpack.c.l.b16 %v660
  %v699 = vunpack.c.h.b16 %v659
  %v700 = vunpack.c.h.b16 %v660
  %v701 = vunpack.c.l.b16 %v661
  %v702 = vunpack.c.l.b16 %v662
  %v703 = vunpack.c.h.b16 %v661
  %v704 = vunpack.c.h.b16 %v662
  %v705 = vunpack.c.l.b16 %v663
  %v706 = vunpack.c.l.b16 %v664
  %v707 = vunpack.c.h.b16 %v663
  %v708 = vunpack.c.h.b16 %v664
  %v709 = vunpack.c.l.b16 %v665
  %v710 = vunpack.c.l.b16 %v666
  %v711 = vunpack.c.h.b16 %v665
  %v712 = vunpack.c.h.b16 %v666
  %v713 = vunpack.c.l.b16 %v667
  %v714 = vunpack.c.l.b16 %v668
  %v715 = vunpack.c.h.b16 %v667
  %v716 = vunpack.c.h.b16 %v668
  %v717 = vpack.c.b16 %v686, %v685
  %v718 = vpack.c.b16 %v688, %v687
  %v719 = vpack.c.b16 %v690, %v689
  %v720 = vpack.c.b16 %v692, %v691
  %v721 = vpack.c.b16 %v694, %v693
  %v722 = vpack.c.b16 %v696, %v695
  %v723 = vpack.c.b16 %v698, %v697
  %v724 = vpack.c.b16 %v700, %v699
  %v725 = vpack.c.b16 %v702, %v701
  %v726 = vpack.c.b16 %v704, %v703
  %v727 = vpack.c.b16 %v706, %v705
  %v728 = vpack.c.b16 %v708, %v707
  %v729 = vpack.c.b16 %v710, %v709
  %v730 = vpack.c.b16 %v712, %v711
  %v731 = vpack.c.b16 %v714, %v713
  %v732 = vpack.c.b16 %v716, %v715
  %749 = vst [vmem:[%s7] sm:$0xff] %v717
  %750 = vst [vmem:[%s7 + $0x8] sm:$0xff] %v718
  %751 = vst [vmem:[%s7 + $0x10] sm:$0xff] %v719
  %752 = vst [vmem:[%s7 + $0x18] sm:$0xff] %v720
  %753 = vst [vmem:[%s7 + $0x20] sm:$0xff] %v721
  %754 = vst [vmem:[%s7 + $0x28] sm:$0xff] %v722
  %755 = vst [vmem:[%s7 + $0x30] sm:$0xff] %v723
  %756 = vst [vmem:[%s7 + $0x38] sm:$0xff] %v724
  %757 = vst [vmem:[%s7 + $0x40] sm:$0xff] %v725
  %758 = vst [vmem:[%s7 + $0x48] sm:$0xff] %v726
  %759 = vst [vmem:[%s7 + $0x50] sm:$0xff] %v727
  %760 = vst [vmem:[%s7 + $0x58] sm:$0xff] %v728
  %761 = vst [vmem:[%s7 + $0x60] sm:$0xff] %v729
  %762 = vst [vmem:[%s7 + $0x68] sm:$0xff] %v730
  %763 = vst [vmem:[%s7 + $0x70] sm:$0xff] %v731
  %764 = vst [vmem:[%s7 + $0x78] sm:$0xff] %v732
  // Predicated region
  $region26: #{outlooker_forward.5} parent=0 // pred_check
    _
  $region27: #{outlooker_forward.5} parent=0 // pred_check_branch
    %766 = sbr.rel (0) target = $region29
  $region28: #{outlooker_forward.5} parent=0 // pred_region
    _
  $region29: #{outlooker_forward.5} parent=0 // pred_fallthru
    _
  // Predicated region
  $region30: #{outlooker_forward.5} parent=0 // pred_check
    _
  $region31: #{outlooker_forward.5} parent=0 // pred_check_branch
    %768 = sbr.rel (0) target = $region33
  $region32: #{outlooker_forward.5} parent=0 // pred_region
    _
  $region33: #{outlooker_forward.5} parent=0 // pred_fallthru
    _
  // Predicated region
  $region34: #{outlooker_forward.5} parent=0 // pred_check
    _
  $region35: #{outlooker_forward.5} parent=0 // pred_check_branch
    %770 = sbr.rel (0) target = $region37
  $region36: #{outlooker_forward.5} parent=0 // pred_region
    _
  $region37: #{outlooker_forward.5} parent=0 // pred_fallthru
    _
  // Predicated region
  $region38: #{outlooker_forward.5} parent=0 // pred_check
    _
  $region39: #{outlooker_forward.5} parent=0 // pred_check_branch
    %772 = sbr.rel (0) target = $region41
  $region40: #{outlooker_forward.5} parent=0 // pred_region
    _
  $region41: #{outlooker_forward.5} parent=0 // pred_fallthru
    _

// kernel: outlooker_forward.8
$region0: #{outlooker_forward.8}
  #allocation0 [shape = 'u32[]', space=smem, size = 0x4, offset = 0x4, fixed_abs, tag = 'smem constant byte address 0x4 - core index']
  #allocation1 [shape = 'u32[144,128]{1,0:T(1,128)}', space=vmem, size = 0x12000, scoped, tag = 'internal scratch']
  %s0 = inlined_call_operand.vmem [shape: f32[128,16], index: 0, kind: input, shape index: {}]
  %s1 = inlined_call_operand.vmem [shape: f32[1,16], index: 1, kind: input, shape index: {}]
  %s2 = inlined_call_operand.vmem [shape: f32[1,16], index: 2, kind: input, shape index: {}]
  %s3 = inlined_call_operand.vmem [shape: bf16[16,128], index: 3, kind: input, shape index: {}]
  %s4 = inlined_call_operand.vmem [shape: f32[1,128], index: 4, kind: input, shape index: {}]
  %s5 = inlined_call_operand.vmem [shape: bf16[128,128], index: 5, kind: output, shape index: {}]
  %s6 = sld [smem:[#allocation0]]
  $region30: #{outlooker_forward.8} parent=0
    _
  %s8 = ssub.s32 1, %s6
  %s9 = scalar_select 0, %s8, %s6
  // Predicated region
  $region2: #{outlooker_forward.8} parent=0 // pred_check
    _
  $region3: #{outlooker_forward.8} parent=0 // pred_check_branch
    %11 = sbr.rel (0) target = $region5
  $region4: #{outlooker_forward.8} parent=0 // pred_region
    _
  $region5: #{outlooker_forward.8} parent=0 // pred_fallthru
    _
  // Predicated region
  $region6: #{outlooker_forward.8} parent=0 // pred_check
    _
  $region7: #{outlooker_forward.8} parent=0 // pred_check_branch
    %13 = sbr.rel (0) target = $region9
  $region8: #{outlooker_forward.8} parent=0 // pred_region
    _
  $region9: #{outlooker_forward.8} parent=0 // pred_fallthru
    _
  // Predicated region
  $region10: #{outlooker_forward.8} parent=0 // pred_check
    _
  $region11: #{outlooker_forward.8} parent=0 // pred_check_branch
    %15 = sbr.rel (0) target = $region13
  $region12: #{outlooker_forward.8} parent=0 // pred_region
    _
  $region13: #{outlooker_forward.8} parent=0 // pred_fallthru
    _
  // Predicated region
  $region14: #{outlooker_forward.8} parent=0 // pred_check
    _
  $region15: #{outlooker_forward.8} parent=0 // pred_check_branch
    %17 = sbr.rel (0) target = $region17
  $region16: #{outlooker_forward.8} parent=0 // pred_region
    _
  $region17: #{outlooker_forward.8} parent=0 // pred_fallthru
    _
  // Predicated region
  $region18: #{outlooker_forward.8} parent=0 // pred_check
    _
  $region19: #{outlooker_forward.8} parent=0 // pred_check_branch
    %19 = sbr.rel (0) target = $region21
  $region20: #{outlooker_forward.8} parent=0 // pred_region
    _
  $region21: #{outlooker_forward.8} parent=0 // pred_fallthru
    _
  %v21 = vld [vmem:[%s0] sm:$0xff]
  %v22 = vld [vmem:[%s0 + $0x8] sm:$0xff]
  %v23 = vld [vmem:[%s0 + $0x10] sm:$0xff]
  %v24 = vld [vmem:[%s0 + $0x18] sm:$0xff]
  %v25 = vld [vmem:[%s0 + $0x20] sm:$0xff]
  %v26 = vld [vmem:[%s0 + $0x28] sm:$0xff]
  %v27 = vld [vmem:[%s0 + $0x30] sm:$0xff]
  %v28 = vld [vmem:[%s0 + $0x38] sm:$0xff]
  %v29 = vld [vmem:[%s0 + $0x40] sm:$0xff]
  %v30 = vld [vmem:[%s0 + $0x48] sm:$0xff]
  %v31 = vld [vmem:[%s0 + $0x50] sm:$0xff]
  %v32 = vld [vmem:[%s0 + $0x58] sm:$0xff]
  %v33 = vld [vmem:[%s0 + $0x60] sm:$0xff]
  %v34 = vld [vmem:[%s0 + $0x68] sm:$0xff]
  %v35 = vld [vmem:[%s0 + $0x70] sm:$0xff]
  %v36 = vld [vmem:[%s0 + $0x78] sm:$0xff]
  %vm37 = vcmask 130048
  %v38 = vsel %vm37, %v21, 0.0
  %39 = vadd.xlane.f32.xlu0 %v38
  %v40 = vpop.xlane.xlu0 %39
  %v41 = vsel %vm37, %v22, 0.0
  %42 = vadd.xlane.f32.xlu0 %v41
  %v43 = vpop.xlane.xlu0 %42
  %v44 = vsel %vm37, %v23, 0.0
  %45 = vadd.xlane.f32.xlu0 %v44
  %v46 = vpop.xlane.xlu0 %45
  %v47 = vsel %vm37, %v24, 0.0
  %48 = vadd.xlane.f32.xlu0 %v47
  %v49 = vpop.xlane.xlu0 %48
  %v50 = vsel %vm37, %v25, 0.0
  %51 = vadd.xlane.f32.xlu0 %v50
  %v52 = vpop.xlane.xlu0 %51
  %v53 = vsel %vm37, %v26, 0.0
  %54 = vadd.xlane.f32.xlu0 %v53
  %v55 = vpop.xlane.xlu0 %54
  %v56 = vsel %vm37, %v27, 0.0
  %57 = vadd.xlane.f32.xlu0 %v56
  %v58 = vpop.xlane.xlu0 %57
  %v59 = vsel %vm37, %v28, 0.0
  %60 = vadd.xlane.f32.xlu0 %v59
  %v61 = vpop.xlane.xlu0 %60
  %v62 = vsel %vm37, %v29, 0.0
  %63 = vadd.xlane.f32.xlu0 %v62
  %v64 = vpop.xlane.xlu0 %63
  %v65 = vsel %vm37, %v30, 0.0
  %66 = vadd.xlane.f32.xlu0 %v65
  %v67 = vpop.xlane.xlu0 %66
  %v68 = vsel %vm37, %v31, 0.0
  %69 = vadd.xlane.f32.xlu0 %v68
  %v70 = vpop.xlane.xlu0 %69
  %v71 = vsel %vm37, %v32, 0.0
  %72 = vadd.xlane.f32.xlu0 %v71
  %v73 = vpop.xlane.xlu0 %72
  %v74 = vsel %vm37, %v33, 0.0
  %75 = vadd.xlane.f32.xlu0 %v74
  %v76 = vpop.xlane.xlu0 %75
  %v77 = vsel %vm37, %v34, 0.0
  %78 = vadd.xlane.f32.xlu0 %v77
  %v79 = vpop.xlane.xlu0 %78
  %v80 = vsel %vm37, %v35, 0.0
  %81 = vadd.xlane.f32.xlu0 %v80
  %v82 = vpop.xlane.xlu0 %81
  %v83 = vsel %vm37, %v36, 0.0
  %84 = vadd.xlane.f32.xlu0 %v83
  %v85 = vpop.xlane.xlu0 %84
  %v86 = vrcp.pop 16.0
  %v87 = vmul.f32 %v40, %v86
  %v88 = vmul.f32 %v43, %v86
  %v89 = vmul.f32 %v46, %v86
  %v90 = vmul.f32 %v49, %v86
  %v91 = vmul.f32 %v52, %v86
  %v92 = vmul.f32 %v55, %v86
  %v93 = vmul.f32 %v58, %v86
  %v94 = vmul.f32 %v61, %v86
  %v95 = vmul.f32 %v64, %v86
  %v96 = vmul.f32 %v67, %v86
  %v97 = vmul.f32 %v70, %v86
  %v98 = vmul.f32 %v73, %v86
  %v99 = vmul.f32 %v76, %v86
  %v100 = vmul.f32 %v79, %v86
  %v101 = vmul.f32 %v82, %v86
  %v102 = vmul.f32 %v85, %v86
  %v103 = vsub.f32 %v21, %v87
  %v104 = vsub.f32 %v22, %v88
  %v105 = vsub.f32 %v23, %v89
  %v106 = vsub.f32 %v24, %v90
  %v107 = vsub.f32 %v25, %v91
  %v108 = vsub.f32 %v26, %v92
  %v109 = vsub.f32 %v27, %v93
  %v110 = vsub.f32 %v28, %v94
  %v111 = vsub.f32 %v29, %v95
  %v112 = vsub.f32 %v30, %v96
  %v113 = vsub.f32 %v31, %v97
  %v114 = vsub.f32 %v32, %v98
  %v115 = vsub.f32 %v33, %v99
  %v116 = vsub.f32 %v34, %v100
  %v117 = vsub.f32 %v35, %v101
  %v118 = vsub.f32 %v36, %v102
  %v119 = vmul.f32 %v103, %v103
  %v120 = vmul.f32 %v104, %v104
  %v121 = vmul.f32 %v105, %v105
  %v122 = vmul.f32 %v106, %v106
  %v123 = vmul.f32 %v107, %v107
  %v124 = vmul.f32 %v108, %v108
  %v125 = vmul.f32 %v109, %v109
  %v126 = vmul.f32 %v110, %v110
  %v127 = vmul.f32 %v111, %v111
  %v128 = vmul.f32 %v112, %v112
  %v129 = vmul.f32 %v113, %v113
  %v130 = vmul.f32 %v114, %v114
  %v131 = vmul.f32 %v115, %v115
  %v132 = vmul.f32 %v116, %v116
  %v133 = vmul.f32 %v117, %v117
  %v134 = vmul.f32 %v118, %v118
  %v135 = vsel %vm37, %v119, 0.0
  %136 = vadd.xlane.f32.xlu0 %v135
  %v137 = vpop.xlane.xlu0 %136
  %v138 = vsel %vm37, %v120, 0.0
  %139 = vadd.xlane.f32.xlu0 %v138
  %v140 = vpop.xlane.xlu0 %139
  %v141 = vsel %vm37, %v121, 0.0
  %142 = vadd.xlane.f32.xlu0 %v141
  %v143 = vpop.xlane.xlu0 %142
  %v144 = vsel %vm37, %v122, 0.0
  %145 = vadd.xlane.f32.xlu0 %v144
  %v146 = vpop.xlane.xlu0 %145
  %v147 = vsel %vm37, %v123, 0.0
  %148 = vadd.xlane.f32.xlu0 %v147
  %v149 = vpop.xlane.xlu0 %148
  %v150 = vsel %vm37, %v124, 0.0
  %151 = vadd.xlane.f32.xlu0 %v150
  %v152 = vpop.xlane.xlu0 %151
  %v153 = vsel %vm37, %v125, 0.0
  %154 = vadd.xlane.f32.xlu0 %v153
  %v155 = vpop.xlane.xlu0 %154
  %v156 = vsel %vm37, %v126, 0.0
  %157 = vadd.xlane.f32.xlu0 %v156
  %v158 = vpop.xlane.xlu0 %157
  %v159 = vsel %vm37, %v127, 0.0
  %160 = vadd.xlane.f32.xlu0 %v159
  %v161 = vpop.xlane.xlu0 %160
  %v162 = vsel %vm37, %v128, 0.0
  %163 = vadd.xlane.f32.xlu0 %v162
  %v164 = vpop.xlane.xlu0 %163
  %v165 = vsel %vm37, %v129, 0.0
  %166 = vadd.xlane.f32.xlu0 %v165
  %v167 = vpop.xlane.xlu0 %166
  %v168 = vsel %vm37, %v130, 0.0
  %169 = vadd.xlane.f32.xlu0 %v168
  %v170 = vpop.xlane.xlu0 %169
  %v171 = vsel %vm37, %v131, 0.0
  %172 = vadd.xlane.f32.xlu0 %v171
  %v173 = vpop.xlane.xlu0 %172
  %v174 = vsel %vm37, %v132, 0.0
  %175 = vadd.xlane.f32.xlu0 %v174
  %v176 = vpop.xlane.xlu0 %175
  %v177 = vsel %vm37, %v133, 0.0
  %178 = vadd.xlane.f32.xlu0 %v177
  %v179 = vpop.xlane.xlu0 %178
  %v180 = vsel %vm37, %v134, 0.0
  %181 = vadd.xlane.f32.xlu0 %v180
  %v182 = vpop.xlane.xlu0 %181
  %v183 = vmul.f32 %v137, %v86
  %v184 = vmul.f32 %v140, %v86
  %v185 = vmul.f32 %v143, %v86
  %v186 = vmul.f32 %v146, %v86
  %v187 = vmul.f32 %v149, %v86
  %v188 = vmul.f32 %v152, %v86
  %v189 = vmul.f32 %v155, %v86
  %v190 = vmul.f32 %v158, %v86
  %v191 = vmul.f32 %v161, %v86
  %v192 = vmul.f32 %v164, %v86
  %v193 = vmul.f32 %v167, %v86
  %v194 = vmul.f32 %v170, %v86
  %v195 = vmul.f32 %v173, %v86
  %v196 = vmul.f32 %v176, %v86
  %v197 = vmul.f32 %v179, %v86
  %v198 = vmul.f32 %v182, %v86
  %v199 = vadd.f32 %v183, 1e-05
  %v200 = vadd.f32 %v184, 1e-05
  %v201 = vadd.f32 %v185, 1e-05
  %v202 = vadd.f32 %v186, 1e-05
  %v203 = vadd.f32 %v187, 1e-05
  %v204 = vadd.f32 %v188, 1e-05
  %v205 = vadd.f32 %v189, 1e-05
  %v206 = vadd.f32 %v190, 1e-05
  %v207 = vadd.f32 %v191, 1e-05
  %v208 = vadd.f32 %v192, 1e-05
  %v209 = vadd.f32 %v193, 1e-05
  %v210 = vadd.f32 %v194, 1e-05
  %v211 = vadd.f32 %v195, 1e-05
  %v212 = vadd.f32 %v196, 1e-05
  %v213 = vadd.f32 %v197, 1e-05
  %v214 = vadd.f32 %v198, 1e-05
  %v215 = vrsqrt.pop %v199
  %v216 = vrsqrt.pop %v200
  %v217 = vrsqrt.pop %v201
  %v218 = vrsqrt.pop %v202
  %v219 = vrsqrt.pop %v203
  %v220 = vrsqrt.pop %v204
  %v221 = vrsqrt.pop %v205
  %v222 = vrsqrt.pop %v206
  %v223 = vrsqrt.pop %v207
  %v224 = vrsqrt.pop %v208
  %v225 = vrsqrt.pop %v209
  %v226 = vrsqrt.pop %v210
  %v227 = vrsqrt.pop %v211
  %v228 = vrsqrt.pop %v212
  %v229 = vrsqrt.pop %v213
  %v230 = vrsqrt.pop %v214
  %v231 = vmul.f32 %v103, %v215
  %v232 = vmul.f32 %v104, %v216
  %v233 = vmul.f32 %v105, %v217
  %v234 = vmul.f32 %v106, %v218
  %v235 = vmul.f32 %v107, %v219
  %v236 = vmul.f32 %v108, %v220
  %v237 = vmul.f32 %v109, %v221
  %v238 = vmul.f32 %v110, %v222
  %v239 = vmul.f32 %v111, %v223
  %v240 = vmul.f32 %v112, %v224
  %v241 = vmul.f32 %v113, %v225
  %v242 = vmul.f32 %v114, %v226
  %v243 = vmul.f32 %v115, %v227
  %v244 = vmul.f32 %v116, %v228
  %v245 = vmul.f32 %v117, %v229
  %v246 = vmul.f32 %v118, %v230
  %v247 = vld [vmem:[%s1] sm:$0x1]
  %v249 = vlaneseq
  %v250 = vshrl.u32 %v249, 7
  %v251 = vsub.s32 0, %v250
  %v252 = vrot.slane %v247, %v251
  %v254 = vmul.f32 %v231, %v252
  %v255 = vmul.f32 %v232, %v252
  %v256 = vmul.f32 %v233, %v252
  %v257 = vmul.f32 %v234, %v252
  %v258 = vmul.f32 %v235, %v252
  %v259 = vmul.f32 %v236, %v252
  %v260 = vmul.f32 %v237, %v252
  %v261 = vmul.f32 %v238, %v252
  %v262 = vmul.f32 %v239, %v252
  %v263 = vmul.f32 %v240, %v252
  %v264 = vmul.f32 %v241, %v252
  %v265 = vmul.f32 %v242, %v252
  %v266 = vmul.f32 %v243, %v252
  %v267 = vmul.f32 %v244, %v252
  %v268 = vmul.f32 %v245, %v252
  %v269 = vmul.f32 %v246, %v252
  %v270 = vld [vmem:[%s2] sm:$0x1]
  %v272 = vlaneseq
  %v273 = vshrl.u32 %v272, 7
  %v274 = vsub.s32 0, %v273
  %v275 = vrot.slane %v270, %v274
  %v277 = vadd.f32 %v254, %v275
  %v278 = vadd.f32 %v255, %v275
  %v279 = vadd.f32 %v256, %v275
  %v280 = vadd.f32 %v257, %v275
  %v281 = vadd.f32 %v258, %v275
  %v282 = vadd.f32 %v259, %v275
  %v283 = vadd.f32 %v260, %v275
  %v284 = vadd.f32 %v261, %v275
  %v285 = vadd.f32 %v262, %v275
  %v286 = vadd.f32 %v263, %v275
  %v287 = vadd.f32 %v264, %v275
  %v288 = vadd.f32 %v265, %v275
  %v289 = vadd.f32 %v266, %v275
  %v290 = vadd.f32 %v267, %v275
  %v291 = vadd.f32 %v268, %v275
  %v292 = vadd.f32 %v269, %v275
  %v293 = vpack.c.bf16 %v278, %v277
  %v294 = vpack.c.bf16 %v280, %v279
  %v295 = vpack.c.bf16 %v282, %v281
  %v296 = vpack.c.bf16 %v284, %v283
  %v297 = vpack.c.bf16 %v286, %v285
  %v298 = vpack.c.bf16 %v288, %v287
  %v299 = vpack.c.bf16 %v290, %v289
  %v300 = vpack.c.bf16 %v292, %v291
  %v301 = vld [vmem:[%s3] sm:$0xf]
  %v302 = vld [vmem:[%s3 + $0x4] sm:$0xf]
  %v303 = vld [vmem:[%s4] sm:$0x1]
  %v305 = vlaneseq
  %v306 = vshrl.u32 %v305, 7
  %v307 = vsub.s32 0, %v306
  %v308 = vrot.slane %v303, %v307
  %v312 = vunpack.c.l.b16 %v301
  %v313 = vunpack.c.l.b16 %v302
  %v314 = vpack.c.b16 %v313, %v312
  %v317 = vsel %vm37, %v293, 0
  %v320 = vsel %vm37, %v294, 0
  %v323 = vsel %vm37, %v295, 0
  %v326 = vsel %vm37, %v296, 0
  %v329 = vsel %vm37, %v297, 0
  %v332 = vsel %vm37, %v298, 0
  %v335 = vsel %vm37, %v299, 0
  %v338 = vsel %vm37, %v300, 0
  %340 = vmatprep.subr.bf16.mxu0 0
  %341 = vmatpush1.bf16.msra.mxu0 %v314
  %342 = vmatprep.subr.bf16.mxu0 0
  %343 = vmatpush1.bf16.msra.mxu0 0
  %344 = vmatprep.subr.bf16.mxu0 0
  %345 = vmatpush1.bf16.msra.mxu0 0
  %346 = vmatprep.subr.bf16.mxu0 0
  %347 = vmatpush1.bf16.msra.mxu0 0
  %348 = vmatprep.subr.bf16.mxu0 0
  %349 = vmatpush1.bf16.msra.mxu0 0
  %350 = vmatprep.subr.bf16.mxu0 0
  %351 = vmatpush1.bf16.msra.mxu0 0
  %352 = vmatprep.subr.bf16.mxu0 0
  %353 = vmatpush1.bf16.msra.mxu0 0
  %354 = vmatprep.subr.bf16.mxu0 0
  %355 = vmatpush1.bf16.msra.mxu0 0
  %356 = vmatprep.subr.bf16.mxu0 0
  %357 = vmatpush1.bf16.msra.mxu0 0
  %358 = vmatprep.subr.bf16.mxu0 0
  %359 = vmatpush1.bf16.msra.mxu0 0
  %360 = vmatprep.subr.bf16.mxu0 0
  %361 = vmatpush1.bf16.msra.mxu0 0
  %362 = vmatprep.subr.bf16.mxu0 0
  %363 = vmatpush1.bf16.msra.mxu0 0
  %364 = vmatprep.subr.bf16.mxu0 0
  %365 = vmatpush1.bf16.msra.mxu0 0
  %366 = vmatprep.subr.bf16.mxu0 0
  %367 = vmatpush1.bf16.msra.mxu0 0
  %368 = vmatprep.subr.bf16.mxu0 0
  %369 = vmatpush1.bf16.msra.mxu0 0
  %370 = vmatprep.subr.bf16.mxu0 0
  %371 = vmatpush1.bf16.msra.mxu0 0
  %372 = vmatprep.mubr.bf16.mxu0 0
  %373 = vmatmul.mubr.bf16.gmra.mrb[0].mxu0 %v317
  %v374 = vpop.f32.mrb[0].mxu0
  %v375 = vadd.f32 %v308, %v374
  %v376 = vpop.f32.mrb[0].mxu0
  %v377 = vpop.f32.mrb[0].mxu0
  %v378 = vadd.f32 %v308, %v377
  %v379 = vpop.f32.mrb[0].mxu0
  %380 = vmatprep.mubr.bf16.mxu0 0
  %381 = vmatmul.mubr.bf16.gmra.mrb[0].mxu0 %v320
  %v382 = vpop.f32.mrb[0].mxu0
  %v383 = vadd.f32 %v308, %v382
  %v384 = vpop.f32.mrb[0].mxu0
  %v385 = vpop.f32.mrb[0].mxu0
  %v386 = vadd.f32 %v308, %v385
  %v387 = vpop.f32.mrb[0].mxu0
  %388 = vmatprep.mubr.bf16.mxu0 0
  %389 = vmatmul.mubr.bf16.gmra.mrb[0].mxu0 %v323
  %v390 = vpop.f32.mrb[0].mxu0
  %v391 = vadd.f32 %v308, %v390
  %v392 = vpop.f32.mrb[0].mxu0
  %v393 = vpop.f32.mrb[0].mxu0
  %v394 = vadd.f32 %v308, %v393
  %v395 = vpop.f32.mrb[0].mxu0
  %396 = vmatprep.mubr.bf16.mxu0 0
  %397 = vmatmul.mubr.bf16.gmra.mrb[0].mxu0 %v326
  %v398 = vpop.f32.mrb[0].mxu0
  %v399 = vadd.f32 %v308, %v398
  %v400 = vpop.f32.mrb[0].mxu0
  %v401 = vpop.f32.mrb[0].mxu0
  %v402 = vadd.f32 %v308, %v401
  %v403 = vpop.f32.mrb[0].mxu0
  %404 = vmatprep.mubr.bf16.mxu0 0
  %405 = vmatmul.mubr.bf16.gmra.mrb[0].mxu0 %v329
  %v406 = vpop.f32.mrb[0].mxu0
  %v407 = vadd.f32 %v308, %v406
  %v408 = vpop.f32.mrb[0].mxu0
  %v409 = vpop.f32.mrb[0].mxu0
  %v410 = vadd.f32 %v308, %v409
  %v411 = vpop.f32.mrb[0].mxu0
  %412 = vmatprep.mubr.bf16.mxu0 0
  %413 = vmatmul.mubr.bf16.gmra.mrb[0].mxu0 %v332
  %v414 = vpop.f32.mrb[0].mxu0
  %v415 = vadd.f32 %v308, %v414
  %v416 = vpop.f32.mrb[0].mxu0
  %v417 = vpop.f32.mrb[0].mxu0
  %v418 = vadd.f32 %v308, %v417
  %v419 = vpop.f32.mrb[0].mxu0
  %420 = vmatprep.mubr.bf16.mxu0 0
  %421 = vmatmul.mubr.bf16.gmra.mrb[0].mxu0 %v335
  %v422 = vpop.f32.mrb[0].mxu0
  %v423 = vadd.f32 %v308, %v422
  %v424 = vpop.f32.mrb[0].mxu0
  %v425 = vpop.f32.mrb[0].mxu0
  %v426 = vadd.f32 %v308, %v425
  %v427 = vpop.f32.mrb[0].mxu0
  %428 = vmatprep.mubr.bf16.mxu0 0
  %429 = vmatmul.mubr.bf16.gmra.mrb[0].mxu0 %v338
  %v430 = vpop.f32.mrb[0].mxu0
  %v431 = vadd.f32 %v308, %v430
  %v432 = vpop.f32.mrb[0].mxu0
  %v433 = vpop.f32.mrb[0].mxu0
  %v434 = vadd.f32 %v308, %v433
  %v435 = vpop.f32.mrb[0].mxu0
  %436 = vdwg.mxu0
  %v437 = vmul.f32 %v375, %v375
  %v438 = vmul.f32 %v378, %v378
  %v439 = vmul.f32 %v383, %v383
  %v440 = vmul.f32 %v386, %v386
  %v441 = vmul.f32 %v391, %v391
  %v442 = vmul.f32 %v394, %v394
  %v443 = vmul.f32 %v399, %v399
  %v444 = vmul.f32 %v402, %v402
  %v445 = vmul.f32 %v407, %v407
  %v446 = vmul.f32 %v410, %v410
  %v447 = vmul.f32 %v415, %v415
  %v448 = vmul.f32 %v418, %v418
  %v449 = vmul.f32 %v423, %v423
  %v450 = vmul.f32 %v426, %v426
  %v451 = vmul.f32 %v431, %v431
  %v452 = vmul.f32 %v434, %v434
  %v453 = vmul.f32 %v375, %v437
  %v454 = vmul.f32 %v378, %v438
  %v455 = vmul.f32 %v383, %v439
  %v456 = vmul.f32 %v386, %v440
  %v457 = vmul.f32 %v391, %v441
  %v458 = vmul.f32 %v394, %v442
  %v459 = vmul.f32 %v399, %v443
  %v460 = vmul.f32 %v402, %v444
  %v461 = vmul.f32 %v407, %v445
  %v462 = vmul.f32 %v410, %v446
  %v463 = vmul.f32 %v415, %v447
  %v464 = vmul.f32 %v418, %v448
  %v465 = vmul.f32 %v423, %v449
  %v466 = vmul.f32 %v426, %v450
  %v467 = vmul.f32 %v431, %v451
  %v468 = vmul.f32 %v434, %v452
  %v469 = vmul.f32 %v453, 0.044715
  %v470 = vmul.f32 %v454, 0.044715
  %v471 = vmul.f32 %v455, 0.044715
  %v472 = vmul.f32 %v456, 0.044715
  %v473 = vmul.f32 %v457, 0.044715
  %v474 = vmul.f32 %v458, 0.044715
  %v475 = vmul.f32 %v459, 0.044715
  %v476 = vmul.f32 %v460, 0.044715
  %v477 = vmul.f32 %v461, 0.044715
  %v478 = vmul.f32 %v462, 0.044715
  %v479 = vmul.f32 %v463, 0.044715
  %v480 = vmul.f32 %v464, 0.044715
  %v481 = vmul.f32 %v465, 0.044715
  %v482 = vmul.f32 %v466, 0.044715
  %v483 = vmul.f32 %v467, 0.044715
  %v484 = vmul.f32 %v468, 0.044715
  %v485 = vadd.f32 %v375, %v469
  %v486 = vadd.f32 %v378, %v470
  %v487 = vadd.f32 %v383, %v471
  %v488 = vadd.f32 %v386, %v472
  %v489 = vadd.f32 %v391, %v473
  %v490 = vadd.f32 %v394, %v474
  %v491 = vadd.f32 %v399, %v475
  %v492 = vadd.f32 %v402, %v476
  %v493 = vadd.f32 %v407, %v477
  %v494 = vadd.f32 %v410, %v478
  %v495 = vadd.f32 %v415, %v479
  %v496 = vadd.f32 %v418, %v480
  %v497 = vadd.f32 %v423, %v481
  %v498 = vadd.f32 %v426, %v482
  %v499 = vadd.f32 %v431, %v483
  %v500 = vadd.f32 %v434, %v484
  %v501 = vmul.f32 %v485, 0.7978846
  %v502 = vmul.f32 %v486, 0.7978846
  %v503 = vmul.f32 %v487, 0.7978846
  %v504 = vmul.f32 %v488, 0.7978846
  %v505 = vmul.f32 %v489, 0.7978846
  %v506 = vmul.f32 %v490, 0.7978846
  %v507 = vmul.f32 %v491, 0.7978846
  %v508 = vmul.f32 %v492, 0.7978846
  %v509 = vmul.f32 %v493, 0.7978846
  %v510 = vmul.f32 %v494, 0.7978846
  %v511 = vmul.f32 %v495, 0.7978846
  %v512 = vmul.f32 %v496, 0.7978846
  %v513 = vmul.f32 %v497, 0.7978846
  %v514 = vmul.f32 %v498, 0.7978846
  %v515 = vmul.f32 %v499, 0.7978846
  %v516 = vmul.f32 %v500, 0.7978846
  %v517 = vtanh.pop %v501
  %v518 = vtanh.pop %v502
  %v519 = vtanh.pop %v503
  %v520 = vtanh.pop %v504
  %v521 = vtanh.pop %v505
  %v522 = vtanh.pop %v506
  %v523 = vtanh.pop %v507
  %v524 = vtanh.pop %v508
  %v525 = vtanh.pop %v509
  %v526 = vtanh.pop %v510
  %v527 = vtanh.pop %v511
  %v528 = vtanh.pop %v512
  %v529 = vtanh.pop %v513
  %v530 = vtanh.pop %v514
  %v531 = vtanh.pop %v515
  %v532 = vtanh.pop %v516
  %v533 = vadd.f32 %v517, 1.0
  %v534 = vadd.f32 %v518, 1.0
  %v535 = vadd.f32 %v519, 1.0
  %v536 = vadd.f32 %v520, 1.0
  %v537 = vadd.f32 %v521, 1.0
  %v538 = vadd.f32 %v522, 1.0
  %v539 = vadd.f32 %v523, 1.0
  %v540 = vadd.f32 %v524, 1.0
  %v541 = vadd.f32 %v525, 1.0
  %v542 = vadd.f32 %v526, 1.0
  %v543 = vadd.f32 %v527, 1.0
  %v544 = vadd.f32 %v528, 1.0
  %v545 = vadd.f32 %v529, 1.0
  %v546 = vadd.f32 %v530, 1.0
  %v547 = vadd.f32 %v531, 1.0
  %v548 = vadd.f32 %v532, 1.0
  %v549 = vmul.f32 %v533, 0.5
  %v550 = vmul.f32 %v534, 0.5
  %v551 = vmul.f32 %v535, 0.5
  %v552 = vmul.f32 %v536, 0.5
  %v553 = vmul.f32 %v537, 0.5
  %v554 = vmul.f32 %v538, 0.5
  %v555 = vmul.f32 %v539, 0.5
  %v556 = vmul.f32 %v540, 0.5
  %v557 = vmul.f32 %v541, 0.5
  %v558 = vmul.f32 %v542, 0.5
  %v559 = vmul.f32 %v543, 0.5
  %v560 = vmul.f32 %v544, 0.5
  %v561 = vmul.f32 %v545, 0.5
  %v562 = vmul.f32 %v546, 0.5
  %v563 = vmul.f32 %v547, 0.5
  %v564 = vmul.f32 %v548, 0.5
  %v565 = vmul.f32 %v375, %v549
  %v566 = vmul.f32 %v378, %v550
  %v567 = vmul.f32 %v383, %v551
  %v568 = vmul.f32 %v386, %v552
  %v569 = vmul.f32 %v391, %v553
  %v570 = vmul.f32 %v394, %v554
  %v571 = vmul.f32 %v399, %v555
  %v572 = vmul.f32 %v402, %v556
  %v573 = vmul.f32 %v407, %v557
  %v574 = vmul.f32 %v410, %v558
  %v575 = vmul.f32 %v415, %v559
  %v576 = vmul.f32 %v418, %v560
  %v577 = vmul.f32 %v423, %v561
  %v578 = vmul.f32 %v426, %v562
  %v579 = vmul.f32 %v431, %v563
  %v580 = vmul.f32 %v434, %v564
  %v581 = vpack.c.bf16 %v566, %v565
  %v582 = vpack.c.bf16 %v568, %v567
  %v583 = vpack.c.bf16 %v570, %v569
  %v584 = vpack.c.bf16 %v572, %v571
  %v585 = vpack.c.bf16 %v574, %v573
  %v586 = vpack.c.bf16 %v576, %v575
  %v587 = vpack.c.bf16 %v578, %v577
  %v588 = vpack.c.bf16 %v580, %v579
  %v597 = vunpack.c.l.b16 %v581
  %v598 = vunpack.c.h.b16 %v581
  %v599 = vunpack.c.l.b16 %v582
  %v600 = vunpack.c.h.b16 %v582
  %v601 = vunpack.c.l.b16 %v583
  %v602 = vunpack.c.h.b16 %v583
  %v603 = vunpack.c.l.b16 %v584
  %v604 = vunpack.c.h.b16 %v584
  %v605 = vunpack.c.l.b16 %v585
  %v606 = vunpack.c.h.b16 %v585
  %v607 = vunpack.c.l.b16 %v586
  %v608 = vunpack.c.h.b16 %v586
  %v609 = vunpack.c.l.b16 %v587
  %v610 = vunpack.c.h.b16 %v587
  %v611 = vunpack.c.l.b16 %v588
  %v612 = vunpack.c.h.b16 %v588
  %v613 = vpack.c.b16 %v597, %v597
  %v614 = vpack.c.b16 %v598, %v598
  %v615 = vpack.c.b16 %v599, %v599
  %v616 = vpack.c.b16 %v600, %v600
  %v617 = vpack.c.b16 %v601, %v601
  %v618 = vpack.c.b16 %v602, %v602
  %v619 = vpack.c.b16 %v603, %v603
  %v620 = vpack.c.b16 %v604, %v604
  %v621 = vpack.c.b16 %v605, %v605
  %v622 = vpack.c.b16 %v606, %v606
  %v623 = vpack.c.b16 %v607, %v607
  %v624 = vpack.c.b16 %v608, %v608
  %v625 = vpack.c.b16 %v609, %v609
  %v626 = vpack.c.b16 %v610, %v610
  %v627 = vpack.c.b16 %v611, %v611
  %v628 = vpack.c.b16 %v612, %v612
  %645 = vst [vmem:[%s5] sm:$0xf] %v613
  %646 = vst [vmem:[%s5 + $0x4] sm:$0xf] %v614
  %647 = vst [vmem:[%s5 + $0x8] sm:$0xf] %v615
  %648 = vst [vmem:[%s5 + $0xc] sm:$0xf] %v616
  %649 = vst [vmem:[%s5 + $0x10] sm:$0xf] %v617
  %650 = vst [vmem:[%s5 + $0x14] sm:$0xf] %v618
  %651 = vst [vmem:[%s5 + $0x18] sm:$0xf] %v619
  %652 = vst [vmem:[%s5 + $0x1c] sm:$0xf] %v620
  %653 = vst [vmem:[%s5 + $0x20] sm:$0xf] %v621
  %654 = vst [vmem:[%s5 + $0x24] sm:$0xf] %v622
  %655 = vst [vmem:[%s5 + $0x28] sm:$0xf] %v623
  %656 = vst [vmem:[%s5 + $0x2c] sm:$0xf] %v624
  %657 = vst [vmem:[%s5 + $0x30] sm:$0xf] %v625
  %658 = vst [vmem:[%s5 + $0x34] sm:$0xf] %v626
  %659 = vst [vmem:[%s5 + $0x38] sm:$0xf] %v627
  %660 = vst [vmem:[%s5 + $0x3c] sm:$0xf] %v628
  // Predicated region
  $region22: #{outlooker_forward.8} parent=0 // pred_check
    _
  $region23: #{outlooker_forward.8} parent=0 // pred_check_branch
    %662 = sbr.rel (0) target = $region25
  $region24: #{outlooker_forward.8} parent=0 // pred_region
    _
  $region25: #{outlooker_forward.8} parent=0 // pred_fallthru
    _
  // Predicated region
  $region26: #{outlooker_forward.8} parent=0 // pred_check
    _
  $region27: #{outlooker_forward.8} parent=0 // pred_check_branch
    %664 = sbr.rel (0) target = $region29
  $region28: #{outlooker_forward.8} parent=0 // pred_region
    _
  $region29: #{outlooker_forward.8} parent=0 // pred_fallthru
    _

// kernel: outlooker_forward.9
$region0: #{outlooker_forward.9}
  #allocation0 [shape = 'u32[]', space=smem, size = 0x4, offset = 0x4, fixed_abs, tag = 'smem constant byte address 0x4 - core index']
  #allocation1 [shape = 'u32[144,128]{1,0:T(1,128)}', space=vmem, size = 0x12000, scoped, tag = 'internal scratch']
  %s0 = inlined_call_operand.vmem [shape: bf16[128,128], index: 0, kind: input, shape index: {}]
  %s1 = inlined_call_operand.vmem [shape: bf16[128,16], index: 1, kind: input, shape index: {}]
  %s2 = inlined_call_operand.vmem [shape: f32[1,16], index: 2, kind: input, shape index: {}]
  %s3 = inlined_call_operand.vmem [shape: f32[128,16], index: 3, kind: input, shape index: {}]
  %s4 = inlined_call_operand.hbm [shape: f32[128,16], index: 4, kind: output, shape index: {}]
  %s5 = sld [smem:[#allocation0]]
  $region26: #{outlooker_forward.9} parent=0
    _
  %s7 = ssub.s32 1, %s5
  %s8 = scalar_select 0, %s7, %s5
  $region1: #{outlooker_forward.9} parent=0
    #allocation2 [shape = 'u8[65536]{0}', space=vmem, size = 0x10000, scoped, tag = 'output window, operand 0, single buffered']
    #allocation3 [shape = 's32[1]{0}', space=sflag, size = 0x4, scoped, tag = 'scoped memory for outlooker_forward.9']
    %9 = vsyncpa [#allocation3], 0
    // Predicated region
    $region2: #{outlooker_forward.9} parent=1 // pred_check
      _
    $region3: #{outlooker_forward.9} parent=1 // pred_check_branch
      %11 = sbr.rel (0) target = $region5
    $region4: #{outlooker_forward.9} parent=1 // pred_region
      _
    $region5: #{outlooker_forward.9} parent=1 // pred_fallthru
      _
    // Predicated region
    $region6: #{outlooker_forward.9} parent=1 // pred_check
      _
    $region7: #{outlooker_forward.9} parent=1 // pred_check_branch
      %13 = sbr.rel (0) target = $region9
    $region8: #{outlooker_forward.9} parent=1 // pred_region
      _
    $region9: #{outlooker_forward.9} parent=1 // pred_fallthru
      _
    // Predicated region
    $region10: #{outlooker_forward.9} parent=1 // pred_check
      _
    $region11: #{outlooker_forward.9} parent=1 // pred_check_branch
      %15 = sbr.rel (0) target = $region13
    $region12: #{outlooker_forward.9} parent=1 // pred_region
      _
    $region13: #{outlooker_forward.9} parent=1 // pred_fallthru
      _
    // Predicated region
    $region14: #{outlooker_forward.9} parent=1 // pred_check
      _
    $region15: #{outlooker_forward.9} parent=1 // pred_check_branch
      %17 = sbr.rel (0) target = $region17
    $region16: #{outlooker_forward.9} parent=1 // pred_region
      _
    $region17: #{outlooker_forward.9} parent=1 // pred_fallthru
      _
    %v19 = vld [vmem:[%s0] sm:$0xf]
    %v20 = vld [vmem:[%s0 + $0x4] sm:$0xf]
    %v21 = vld [vmem:[%s0 + $0x8] sm:$0xf]
    %v22 = vld [vmem:[%s0 + $0xc] sm:$0xf]
    %v23 = vld [vmem:[%s0 + $0x10] sm:$0xf]
    %v24 = vld [vmem:[%s0 + $0x14] sm:$0xf]
    %v25 = vld [vmem:[%s0 + $0x18] sm:$0xf]
    %v26 = vld [vmem:[%s0 + $0x1c] sm:$0xf]
    %v27 = vld [vmem:[%s0 + $0x20] sm:$0xf]
    %v28 = vld [vmem:[%s0 + $0x24] sm:$0xf]
    %v29 = vld [vmem:[%s0 + $0x28] sm:$0xf]
    %v30 = vld [vmem:[%s0 + $0x2c] sm:$0xf]
    %v31 = vld [vmem:[%s0 + $0x30] sm:$0xf]
    %v32 = vld [vmem:[%s0 + $0x34] sm:$0xf]
    %v33 = vld [vmem:[%s0 + $0x38] sm:$0xf]
    %v34 = vld [vmem:[%s0 + $0x3c] sm:$0xf]
    %v35 = vld [vmem:[%s1] sm:$0xf]
    %v36 = vld [vmem:[%s1 + $0x4] sm:$0xf]
    %v37 = vld [vmem:[%s1 + $0x8] sm:$0xf]
    %v38 = vld [vmem:[%s1 + $0xc] sm:$0xf]
    %v39 = vld [vmem:[%s1 + $0x10] sm:$0xf]
    %v40 = vld [vmem:[%s1 + $0x14] sm:$0xf]
    %v41 = vld [vmem:[%s1 + $0x18] sm:$0xf]
    %v42 = vld [vmem:[%s1 + $0x1c] sm:$0xf]
    %v43 = vld [vmem:[%s1 + $0x20] sm:$0xf]
    %v44 = vld [vmem:[%s1 + $0x24] sm:$0xf]
    %v45 = vld [vmem:[%s1 + $0x28] sm:$0xf]
    %v46 = vld [vmem:[%s1 + $0x2c] sm:$0xf]
    %v47 = vld [vmem:[%s1 + $0x30] sm:$0xf]
    %v48 = vld [vmem:[%s1 + $0x34] sm:$0xf]
    %v49 = vld [vmem:[%s1 + $0x38] sm:$0xf]
    %v50 = vld [vmem:[%s1 + $0x3c] sm:$0xf]
    %v51 = vld [vmem:[%s2] sm:$0x1]
    %v53 = vlaneseq
    %v54 = vshrl.u32 %v53, 7
    %v55 = vsub.s32 0, %v54
    %v56 = vrot.slane %v51, %v55
    %v74 = vunpack.c.l.b16 %v19
    %v75 = vunpack.c.l.b16 %v20
    %v76 = vunpack.c.l.b16 %v21
    %v77 = vunpack.c.l.b16 %v22
    %v78 = vunpack.c.l.b16 %v23
    %v79 = vunpack.c.l.b16 %v24
    %v80 = vunpack.c.l.b16 %v25
    %v81 = vunpack.c.l.b16 %v26
    %v82 = vunpack.c.l.b16 %v27
    %v83 = vunpack.c.l.b16 %v28
    %v84 = vunpack.c.l.b16 %v29
    %v85 = vunpack.c.l.b16 %v30
    %v86 = vunpack.c.l.b16 %v31
    %v87 = vunpack.c.l.b16 %v32
    %v88 = vunpack.c.l.b16 %v33
    %v89 = vunpack.c.l.b16 %v34
    %v90 = vpack.c.b16 %v75, %v74
    %v91 = vpack.c.b16 %v77, %v76
    %v92 = vpack.c.b16 %v79, %v78
    %v93 = vpack.c.b16 %v81, %v80
    %v94 = vpack.c.b16 %v83, %v82
    %v95 = vpack.c.b16 %v85, %v84
    %v96 = vpack.c.b16 %v87, %v86
    %v97 = vpack.c.b16 %v89, %v88
    %v122 = vunpack.c.l.b16 %v35
    %v123 = vunpack.c.l.b16 %v36
    %v124 = vunpack.c.l.b16 %v37
    %v125 = vunpack.c.l.b16 %v38
    %v126 = vunpack.c.l.b16 %v39
    %v127 = vunpack.c.l.b16 %v40
    %v128 = vunpack.c.l.b16 %v41
    %v129 = vunpack.c.l.b16 %v42
    %v130 = vunpack.c.l.b16 %v43
    %v131 = vunpack.c.l.b16 %v44
    %v132 = vunpack.c.l.b16 %v45
    %v133 = vunpack.c.l.b16 %v46
    %v134 = vunpack.c.l.b16 %v47
    %v135 = vunpack.c.l.b16 %v48
    %v136 = vunpack.c.l.b16 %v49
    %v137 = vunpack.c.l.b16 %v50
    %v138 = vpack.c.b16 %v123, %v122
    %v139 = vpack.c.b16 %v125, %v124
    %v140 = vpack.c.b16 %v127, %v126
    %v141 = vpack.c.b16 %v129, %v128
    %v142 = vpack.c.b16 %v131, %v130
    %v143 = vpack.c.b16 %v133, %v132
    %v144 = vpack.c.b16 %v135, %v134
    %v145 = vpack.c.b16 %v137, %v136
    %154 = vmatprep.subr.bf16.mxu0 0
    %155 = vmatpush1.bf16.msra.mxu0 %v138
    %156 = vmatprep.subr.bf16.mxu0 0
    %157 = vmatpush1.bf16.msra.mxu0 %v139
    %158 = vmatprep.subr.bf16.mxu0 0
    %159 = vmatpush1.bf16.msra.mxu0 %v140
    %160 = vmatprep.subr.bf16.mxu0 0
    %161 = vmatpush1.bf16.msra.mxu0 %v141
    %162 = vmatprep.subr.bf16.mxu0 0
    %163 = vmatpush1.bf16.msra.mxu0 %v142
    %164 = vmatprep.subr.bf16.mxu0 0
    %165 = vmatpush1.bf16.msra.mxu0 %v143
    %166 = vmatprep.subr.bf16.mxu0 0
    %167 = vmatpush1.bf16.msra.mxu0 %v144
    %168 = vmatprep.subr.bf16.mxu0 0
    %169 = vmatpush1.bf16.msra.mxu0 %v145
    %170 = vmatprep.subr.bf16.mxu0 0
    %171 = vmatpush1.bf16.msra.mxu0 0
    %172 = vmatprep.subr.bf16.mxu0 0
    %173 = vmatpush1.bf16.msra.mxu0 0
    %174 = vmatprep.subr.bf16.mxu0 0
    %175 = vmatpush1.bf16.msra.mxu0 0
    %176 = vmatprep.subr.bf16.mxu0 0
    %177 = vmatpush1.bf16.msra.mxu0 0
    %178 = vmatprep.subr.bf16.mxu0 0
    %179 = vmatpush1.bf16.msra.mxu0 0
    %180 = vmatprep.subr.bf16.mxu0 0
    %181 = vmatpush1.bf16.msra.mxu0 0
    %182 = vmatprep.subr.bf16.mxu0 0
    %183 = vmatpush1.bf16.msra.mxu0 0
    %184 = vmatprep.subr.bf16.mxu0 0
    %185 = vmatpush1.bf16.msra.mxu0 0
    %186 = vmatprep.mubr.bf16.mxu0 0
    %187 = vmatmul.mubr.bf16.gmra.mrb[0].mxu0 %v90
    %v188 = vpop.f32.mrb[0].mxu0
    %v189 = vadd.f32 %v56, %v188
    %v190 = vpop.f32.mrb[0].mxu0
    %v191 = vpop.f32.mrb[0].mxu0
    %v192 = vadd.f32 %v56, %v191
    %v193 = vpop.f32.mrb[0].mxu0
    %194 = vmatprep.mubr.bf16.mxu0 0
    %195 = vmatmul.mubr.bf16.gmra.mrb[0].mxu0 %v91
    %v196 = vpop.f32.mrb[0].mxu0
    %v197 = vadd.f32 %v56, %v196
    %v198 = vpop.f32.mrb[0].mxu0
    %v199 = vpop.f32.mrb[0].mxu0
    %v200 = vadd.f32 %v56, %v199
    %v201 = vpop.f32.mrb[0].mxu0
    %202 = vmatprep.mubr.bf16.mxu0 0
    %203 = vmatmul.mubr.bf16.gmra.mrb[0].mxu0 %v92
    %v204 = vpop.f32.mrb[0].mxu0
    %v205 = vadd.f32 %v56, %v204
    %v206 = vpop.f32.mrb[0].mxu0
    %v207 = vpop.f32.mrb[0].mxu0
    %v208 = vadd.f32 %v56, %v207
    %v209 = vpop.f32.mrb[0].mxu0
    %210 = vmatprep.mubr.bf16.mxu0 0
    %211 = vmatmul.mubr.bf16.gmra.mrb[0].mxu0 %v93
    %v212 = vpop.f32.mrb[0].mxu0
    %v213 = vadd.f32 %v56, %v212
    %v214 = vpop.f32.mrb[0].mxu0
    %v215 = vpop.f32.mrb[0].mxu0
    %v216 = vadd.f32 %v56, %v215
    %v217 = vpop.f32.mrb[0].mxu0
    %218 = vmatprep.mubr.bf16.mxu0 0
    %219 = vmatmul.mubr.bf16.gmra.mrb[0].mxu0 %v94
    %v220 = vpop.f32.mrb[0].mxu0
    %v221 = vadd.f32 %v56, %v220
    %v222 = vpop.f32.mrb[0].mxu0
    %v223 = vpop.f32.mrb[0].mxu0
    %v224 = vadd.f32 %v56, %v223
    %v225 = vpop.f32.mrb[0].mxu0
    %226 = vmatprep.mubr.bf16.mxu0 0
    %227 = vmatmul.mubr.bf16.gmra.mrb[0].mxu0 %v95
    %v228 = vpop.f32.mrb[0].mxu0
    %v229 = vadd.f32 %v56, %v228
    %v230 = vpop.f32.mrb[0].mxu0
    %v231 = vpop.f32.mrb[0].mxu0
    %v232 = vadd.f32 %v56, %v231
    %v233 = vpop.f32.mrb[0].mxu0
    %234 = vmatprep.mubr.bf16.mxu0 0
    %235 = vmatmul.mubr.bf16.gmra.mrb[0].mxu0 %v96
    %v236 = vpop.f32.mrb[0].mxu0
    %v237 = vadd.f32 %v56, %v236
    %v238 = vpop.f32.mrb[0].mxu0
    %v239 = vpop.f32.mrb[0].mxu0
    %v240 = vadd.f32 %v56, %v239
    %v241 = vpop.f32.mrb[0].mxu0
    %242 = vmatprep.mubr.bf16.mxu0 0
    %243 = vmatmul.mubr.bf16.gmra.mrb[0].mxu0 %v97
    %v244 = vpop.f32.mrb[0].mxu0
    %v245 = vadd.f32 %v56, %v244
    %v246 = vpop.f32.mrb[0].mxu0
    %v247 = vpop.f32.mrb[0].mxu0
    %v248 = vadd.f32 %v56, %v247
    %v249 = vpop.f32.mrb[0].mxu0
    %250 = vdwg.mxu0
    %v251 = vld [vmem:[%s3] sm:$0xff]
    %v252 = vld [vmem:[%s3 + $0x8] sm:$0xff]
    %v253 = vld [vmem:[%s3 + $0x10] sm:$0xff]
    %v254 = vld [vmem:[%s3 + $0x18] sm:$0xff]
    %v255 = vld [vmem:[%s3 + $0x20] sm:$0xff]
    %v256 = vld [vmem:[%s3 + $0x28] sm:$0xff]
    %v257 = vld [vmem:[%s3 + $0x30] sm:$0xff]
    %v258 = vld [vmem:[%s3 + $0x38] sm:$0xff]
    %v259 = vld [vmem:[%s3 + $0x40] sm:$0xff]
    %v260 = vld [vmem:[%s3 + $0x48] sm:$0xff]
    %v261 = vld [vmem:[%s3 + $0x50] sm:$0xff]
    %v262 = vld [vmem:[%s3 + $0x58] sm:$0xff]
    %v263 = vld [vmem:[%s3 + $0x60] sm:$0xff]
    %v264 = vld [vmem:[%s3 + $0x68] sm:$0xff]
    %v265 = vld [vmem:[%s3 + $0x70] sm:$0xff]
    %v266 = vld [vmem:[%s3 + $0x78] sm:$0xff]
    %v267 = vadd.f32 %v189, %v251
    %v268 = vadd.f32 %v192, %v252
    %v269 = vadd.f32 %v197, %v253
    %v270 = vadd.f32 %v200, %v254
    %v271 = vadd.f32 %v205, %v255
    %v272 = vadd.f32 %v208, %v256
    %v273 = vadd.f32 %v213, %v257
    %v274 = vadd.f32 %v216, %v258
    %v275 = vadd.f32 %v221, %v259
    %v276 = vadd.f32 %v224, %v260
    %v277 = vadd.f32 %v229, %v261
    %v278 = vadd.f32 %v232, %v262
    %v279 = vadd.f32 %v237, %v263
    %v280 = vadd.f32 %v240, %v264
    %v281 = vadd.f32 %v245, %v265
    %v282 = vadd.f32 %v248, %v266
    %vm283 = vcmask 130048
    %284 = vst.msk [vmem:[#allocation2] sm:$0xff] %vm283, %v267
    %285 = vst.msk [vmem:[#allocation2 + $0x8] sm:$0xff] %vm283, %v268
    %286 = vst.msk [vmem:[#allocation2 + $0x10] sm:$0xff] %vm283, %v269
    %287 = vst.msk [vmem:[#allocation2 + $0x18] sm:$0xff] %vm283, %v270
    %288 = vst.msk [vmem:[#allocation2 + $0x20] sm:$0xff] %vm283, %v271
    %289 = vst.msk [vmem:[#allocation2 + $0x28] sm:$0xff] %vm283, %v272
    %290 = vst.msk [vmem:[#allocation2 + $0x30] sm:$0xff] %vm283, %v273
    %291 = vst.msk [vmem:[#allocation2 + $0x38] sm:$0xff] %vm283, %v274
    %292 = vst.msk [vmem:[#allocation2 + $0x40] sm:$0xff] %vm283, %v275
    %293 = vst.msk [vmem:[#allocation2 + $0x48] sm:$0xff] %vm283, %v276
    %294 = vst.msk [vmem:[#allocation2 + $0x50] sm:$0xff] %vm283, %v277
    %295 = vst.msk [vmem:[#allocation2 + $0x58] sm:$0xff] %vm283, %v278
    %296 = vst.msk [vmem:[#allocation2 + $0x60] sm:$0xff] %vm283, %v279
    %297 = vst.msk [vmem:[#allocation2 + $0x68] sm:$0xff] %vm283, %v280
    %298 = vst.msk [vmem:[#allocation2 + $0x70] sm:$0xff] %vm283, %v281
    %299 = vst.msk [vmem:[#allocation2 + $0x78] sm:$0xff] %vm283, %v282
    // Predicated region
    $region18: #{outlooker_forward.9} parent=1 // pred_check
      _
    $region19: #{outlooker_forward.9} parent=1 // pred_check_branch
      %301 = sbr.rel (0) target = $region21
    $region20: #{outlooker_forward.9} parent=1 // pred_region
      %s303 = ssub.s32 2048, 2048
      %304 = vsyncadd [#allocation3], %s303
      %s305 = sshll.u32 [#allocation2], 4
      %s306 = int_to_ptr.vmem [resolvable:$true] %s305
      %311 = dma.vmem_to_hbm [thread:$0]  %s306, 2048, %s4, [#allocation3], 128, 128, 8
    $region21: #{outlooker_forward.9} parent=1 // pred_fallthru
      _
    // Predicated region
    $region22: #{outlooker_forward.9} parent=1 // pred_check
      _
    $region23: #{outlooker_forward.9} parent=1 // pred_check_branch
      %313 = sbr.rel (0) target = $region25
    $region24: #{outlooker_forward.9} parent=1 // pred_region
      %314 = dma.done [#allocation3], 2048
    $region25: #{outlooker_forward.9} parent=1 // pred_fallthru
      _
    %315 = vsyncpa [#allocation3], 1

// kernel: outlooker_forward.6
$region0: #{outlooker_forward.6}
  #allocation0 [shape = 'u32[]', space=smem, size = 0x4, offset = 0x4, fixed_abs, tag = 'smem constant byte address 0x4 - core index']
  #allocation1 [shape = 'u32[144,128]{1,0:T(1,128)}', space=vmem, size = 0x12000, scoped, tag = 'internal scratch']
  #allocation2 [shape = 'f32[16,256]{1,0:T(8,128)}', space=vmem, size = 0x4000, scoped, tag = 'scratch operand']
  #allocation3 [shape = 'f32[9,8,256]{2,1,0:T(8,128)}', space=vmem, size = 0x12000, scoped, tag = 'scratch operand']
  %s0 = inlined_call_operand.vmem [shape: bf16[2,18,9,64], index: 0, kind: input, shape index: {}]
  %s1 = inlined_call_operand.vmem [shape: bf16[2,16,64], index: 1, kind: input, shape index: {}]
  %s2 = inlined_call_operand.vmem [shape: bf16[2,16,64], index: 2, kind: output, shape index: {}]
  %s3 = sld [smem:[#allocation0]]
  $region41: #{outlooker_forward.6} parent=0
    _
  %s5 = ssub.s32 1, %s3
  %s6 = scalar_select 0, %s5, %s3
  loop: start=0, step=1, limit=4
  $region2: #{outlooker_forward.6} parent=0 // loop_pre_header
    _
  $region3: #{outlooker_forward.6} parent=0 // loop_header
    %s8 = sphi 0, %s12
    %p9 = scmp.ge.s32.totalorder %s8, 4
    %s18 = sphi 0, %s20
    %s21 = sphi 0, %s18
    %s22 = sphi 0, %s21
    %s38 = sphi 0, %s22
    %s44 = sphi 0, %s46
    %s47 = sphi 0, %s44
    %s48 = sphi 0, %s47
    %s64 = sphi 0, %s48
    %s70 = sphi 0, %s72
    %s73 = sphi 0, %s70
    %s74 = sphi 0, %s73
    %s90 = sphi 0, %s74
  $region4: #{outlooker_forward.6} parent=0 // loop_header_branch
    %11 = sbr.rel (%p9) target = $region8
  $region5: #{outlooker_forward.6} parent=0 // loop_body
    %s13 = ssub.s32 %s8, 1
    %s14 = ssub.s32 %s8, 2
    %s15 = sadd.s32 %s8, 1
    %s16 = ssub.s32 %s8, %s15
    %p17 = scmp.eq.s32.totalorder %s16, 0
    %s19 = sadd.s32 %s18, 1
    %s20 = scalar_select %p17, %s18, %s19
    %p23 = pneg %p17
    %p24 = scmp.eq.s32.totalorder %s8, 1
    %p25 = por %p23, %p24
    %p26 = scmp.ne.s32.totalorder %s18, %s21
    %p27 = scmp.eq.s32.totalorder %s8, 0
    %p28 = por %p26, %p27
    %p29 = scmp.ne.s32.totalorder %s18, %s21
    %p30 = scmp.eq.s32.totalorder %s13, 1
    %p31 = por %p29, %p30
    %p32 = scmp.ne.s32.totalorder %s21, %s22
    %p33 = scmp.eq.s32.totalorder %s13, 0
    %p34 = por %p32, %p33
    %p35 = scmp.ne.s32.totalorder %s21, %s22
    %p36 = scmp.eq.s32.totalorder %s14, 1
    %p37 = por %p35, %p36
    %p39 = scmp.ne.s32.totalorder %s22, %s38
    %p40 = scmp.eq.s32.totalorder %s14, 0
    %p41 = por %p39, %p40
    %s42 = ssub.s32 %s8, %s15
    %p43 = scmp.eq.s32.totalorder %s42, 0
    %s45 = sadd.s32 %s44, 1
    %s46 = scalar_select %p43, %s44, %s45
    %p49 = pneg %p43
    %p50 = scmp.eq.s32.totalorder %s8, 1
    %p51 = por %p49, %p50
    %p52 = scmp.ne.s32.totalorder %s44, %s47
    %p53 = scmp.eq.s32.totalorder %s8, 0
    %p54 = por %p52, %p53
    %p55 = scmp.ne.s32.totalorder %s44, %s47
    %p56 = scmp.eq.s32.totalorder %s13, 1
    %p57 = por %p55, %p56
    %p58 = scmp.ne.s32.totalorder %s47, %s48
    %p59 = scmp.eq.s32.totalorder %s13, 0
    %p60 = por %p58, %p59
    %p61 = scmp.ne.s32.totalorder %s47, %s48
    %p62 = scmp.eq.s32.totalorder %s14, 1
    %p63 = por %p61, %p62
    %p65 = scmp.ne.s32.totalorder %s48, %s64
    %p66 = scmp.eq.s32.totalorder %s14, 0
    %p67 = por %p65, %p66
    %s68 = ssub.s32 %s8, %s15
    %p69 = scmp.eq.s32.totalorder %s68, 0
    %s71 = sadd.s32 %s70, 1
    %s72 = scalar_select %p69, %s70, %s71
    %p75 = pneg %p69
    %p76 = scmp.eq.s32.totalorder %s8, 1
    %p77 = por %p75, %p76
    %p78 = scmp.ne.s32.totalorder %s70, %s73
    %p79 = scmp.eq.s32.totalorder %s8, 0
    %p80 = por %p78, %p79
    %p81 = scmp.ne.s32.totalorder %s70, %s73
    %p82 = scmp.eq.s32.totalorder %s13, 1
    %p83 = por %p81, %p82
    %p84 = scmp.ne.s32.totalorder %s73, %s74
    %p85 = scmp.eq.s32.totalorder %s13, 0
    %p86 = por %p84, %p85
    %p87 = scmp.ne.s32.totalorder %s73, %s74
    %p88 = scmp.eq.s32.totalorder %s14, 1
    %p89 = por %p87, %p88
    %p91 = scmp.ne.s32.totalorder %s74, %s90
    %p92 = scmp.eq.s32.totalorder %s14, 0
    %p93 = por %p91, %p92
    %p94 = scmp.le.s32.totalorder 1, %s8
    %p95 = scmp.lt.s32.totalorder %s8, 3
    %p96 = pnand %p94, %p95
    %p97 = pneg %p96
    // Predicated region
    $region9: #{outlooker_forward.6} parent=5 // pred_check
      _
    $region10: #{outlooker_forward.6} parent=5 // pred_check_branch
      %99 = sbr.rel (%p96) target = $region12
    $region11: #{outlooker_forward.6} parent=5 // pred_region
      %s100 = ssub.s32 %s8, 1
    $region12: #{outlooker_forward.6} parent=5 // pred_fallthru
      _
    %p101 = scmp.lt.s32.totalorder %s8, 2
    // Predicated region
    $region13: #{outlooker_forward.6} parent=5 // pred_check
      %p102 = pneg %p101
    $region14: #{outlooker_forward.6} parent=5 // pred_check_branch
      %104 = sbr.rel (%p102) target = $region16
    $region15: #{outlooker_forward.6} parent=5 // pred_region
      // Predicated region
      $region17: #{outlooker_forward.6} parent=15 // pred_check
        %p105 = pneg %p28
      $region18: #{outlooker_forward.6} parent=15 // pred_check_branch
        %107 = sbr.rel (%p105) target = $region20
      $region19: #{outlooker_forward.6} parent=15 // pred_region
        %p108 = scmp.lt.s32.totalorder %s8, 1
        %s109 = scalar_select %p108, %s8, 1
        %s110 = smul.addr %s109, 36
        %s111 = smul.addr %s110, 4
        %s112 = scalar_lea.vmem %s0, %s111
      $region20: #{outlooker_forward.6} parent=15 // pred_fallthru
        _
      // Predicated region
      $region21: #{outlooker_forward.6} parent=15 // pred_check
        %p113 = pneg %p54
      $region22: #{outlooker_forward.6} parent=15 // pred_check_branch
        %115 = sbr.rel (%p113) target = $region24
      $region23: #{outlooker_forward.6} parent=15 // pred_region
        %p116 = scmp.lt.s32.totalorder %s8, 1
        %s117 = scalar_select %p116, %s8, 1
        %s118 = smul.addr %s117, 2
        %s119 = smul.addr %s118, 4
        %s120 = scalar_lea.vmem %s1, %s119
      $region24: #{outlooker_forward.6} parent=15 // pred_fallthru
        _
    $region16: #{outlooker_forward.6} parent=5 // pred_fallthru
      _
    %p121 = scmp.le.s32.totalorder 1, %s8
    %p122 = scmp.lt.s32.totalorder %s8, 3
    %p123 = pnand %p121, %p122
    %p124 = pneg %p123
    // Predicated region
    $region25: #{outlooker_forward.6} parent=5 // pred_check
      _
    $region26: #{outlooker_forward.6} parent=5 // pred_check_branch
      %126 = sbr.rel (%p123) target = $region28
    $region27: #{outlooker_forward.6} parent=5 // pred_region
      %s127 = ssub.s32 %s8, 1
      %p128 = scmp.lt.s32.totalorder %s13, 1
      %s129 = scalar_select %p128, %s13, 1
      %s130 = smul.addr %s129, 36
      %s131 = smul.addr %s130, 4
      %s132 = scalar_lea.vmem %s0, %s131
      %p133 = pneg %p34
      %p134 = pneg %p31
      %p135 = scmp.lt.s32.totalorder %s13, 1
      %s136 = scalar_select %p135, %s13, 1
      %s137 = smul.addr %s136, 2
      %s138 = smul.addr %s137, 4
      %s139 = scalar_lea.vmem %s1, %s138
      %p140 = pneg %p60
      %p141 = pneg %p57
      %p142 = pneg %p86
      %p143 = pneg %p83
      %p144 = scmp.lt.s32.totalorder %s13, 1
      %s145 = scalar_select %p144, %s13, 1
      %s146 = smul.addr %s145, 2
      %s147 = smul.addr %s146, 4
      %s148 = scalar_lea.vmem %s2, %s147
      %p149 = scmp.lt.s32.totalorder %s13, 1
      %s150 = scalar_select %p149, %s13, 1
      %s151 = smul.addr %s150, 36
      %s152 = smul.addr %s151, 4
      %s153 = scalar_lea.vmem %s0, %s152
      %p154 = scmp.lt.s32.totalorder %s13, 1
      %s155 = scalar_select %p154, %s13, 1
      %s156 = smul.addr %s155, 2
      %s157 = smul.addr %s156, 4
      %s158 = scalar_lea.vmem %s1, %s157
      %p159 = scmp.lt.s32.totalorder %s13, 1
      %s160 = scalar_select %p159, %s13, 1
      %s161 = smul.addr %s160, 2
      %s162 = smul.addr %s161, 4
      %s163 = scalar_lea.vmem %s2, %s162
      %164 = vst [vmem:[#allocation2] sm:$0xff] 0.0
      %165 = vst [vmem:[#allocation2 + $0x10] sm:$0xff] 0.0
      %166 = vst [vmem:[#allocation2 + $0x8] sm:$0xff] 0.0
      %167 = vst [vmem:[#allocation2 + $0x18] sm:$0xff] 0.0
      %168 = vst [vmem:[#allocation3] sm:$0xff] 0.0
      %169 = vst [vmem:[#allocation3 + $0x10] sm:$0xff] 0.0
      %170 = vst [vmem:[#allocation3 + $0x20] sm:$0xff] 0.0
      %171 = vst [vmem:[#allocation3 + $0x30] sm:$0xff] 0.0
      %172 = vst [vmem:[#allocation3 + $0x40] sm:$0xff] 0.0
      %173 = vst [vmem:[#allocation3 + $0x50] sm:$0xff] 0.0
      %174 = vst [vmem:[#allocation3 + $0x60] sm:$0xff] 0.0
      %175 = vst [vmem:[#allocation3 + $0x70] sm:$0xff] 0.0
      %176 = vst [vmem:[#allocation3 + $0x80] sm:$0xff] 0.0
      %177 = vst [vmem:[#allocation3 + $0x8] sm:$0xff] 0.0
      %178 = vst [vmem:[#allocation3 + $0x18] sm:$0xff] 0.0
      %179 = vst [vmem:[#allocation3 + $0x28] sm:$0xff] 0.0
      %180 = vst [vmem:[#allocation3 + $0x38] sm:$0xff] 0.0
      %181 = vst [vmem:[#allocation3 + $0x48] sm:$0xff] 0.0
      %182 = vst [vmem:[#allocation3 + $0x58] sm:$0xff] 0.0
      %183 = vst [vmem:[#allocation3 + $0x68] sm:$0xff] 0.0
      %184 = vst [vmem:[#allocation3 + $0x78] sm:$0xff] 0.0
      %185 = vst [vmem:[#allocation3 + $0x88] sm:$0xff] 0.0
      %v186 = vld [vmem:[%s158] sm:$0xf]
      %v187 = vld [vmem:[%s158 + $0x4] sm:$0xf]
      %v188 = vunpack.c.l.bf16 %v186
      %v189 = vunpack.c.l.bf16 %v187
      %vm190 = vcmask 523264
      %191 = vst.msk [vmem:[#allocation2 + $0x8] sm:$0xff] %vm190, %v188
      %192 = vst.msk [vmem:[#allocation2 + $0x18] sm:$0xff] %vm190, %v189
      %v193 = vlaneseq
      %v194 = vand.u32 %v193, 127
      %vm195 = vcmp.lt.s32.totalorder %v194, 0
      %v196 = vsub.s32 0, %v194
      %v197 = vsel %vm195, %v196, %v194
      %v198 = vshrl.u32 %v197, 3
      %v199 = vand.u32 %v197, 7
      %v200 = vsub.s32 0, %v199
      %v201 = vsel %vm195, %v200, %v199
      %vm202 = vcmp.ne.s32.totalorder %v201, 0
      %vm203 = vcmp.lt.s32.totalorder %v201, 0
      %vm204 = vmand %vm203, %vm202
      %v205 = vadd.s32 %v201, 8
      %v206 = vsel %vm204, %v205, %v201
      %v207 = vlaneseq
      %v208 = vshrl.u32 %v207, 7
      %v209 = vadd.s32 %v208, 8
      %vm210 = vcmp.lt.s32.totalorder %v208, 0
      %v211 = vsub.s32 0, %v208
      %v212 = vsel %vm210, %v211, %v208
      %v213 = vmul.u32.u64.compose %v212, 2863311531
      %v214 = vextract.low.u32 %v213
      %v215 = vextract.high.u32 %v213
      %v216 = vshrl.u32 %v215, 1
      %v217 = vmul.u32 %v216, 3
      %v218 = vsub.s32 %v212, %v217
      %v219 = vsub.s32 0, %v218
      %v220 = vsel %vm210, %v219, %v218
      %vm221 = vcmp.lt.s32.totalorder %v209, 0
      %v222 = vsub.s32 0, %v209
      %v223 = vsel %vm221, %v222, %v209
      %v224 = vmul.u32.u64.compose %v223, 2863311531
      %v225 = vextract.low.u32 %v224
      %v226 = vextract.high.u32 %v224
      %v227 = vshrl.u32 %v226, 1
      %v228 = vmul.u32 %v227, 3
      %v229 = vsub.s32 %v223, %v228
      %v230 = vsub.s32 0, %v229
      %v231 = vsel %vm221, %v230, %v229
      %vm232 = vcmp.ne.s32.totalorder %v220, 0
      %vm233 = vcmp.ne.s32.totalorder %v231, 0
      %vm234 = vcmp.lt.s32.totalorder %v220, 0
      %vm235 = vcmp.lt.s32.totalorder %v231, 0
      %vm236 = vmand %vm234, %vm232
      %vm237 = vmand %vm235, %vm233
      %v238 = vadd.s32 %v220, 3
      %v239 = vadd.s32 %v231, 3
      %v240 = vsel %vm236, %v238, %v220
      %v241 = vsel %vm237, %v239, %v231
      %v242 = vsub.s32 %v240, 1
      %v243 = vsub.s32 %v241, 1
      %v244 = vadd.s32 %v206, %v242
      %v245 = vadd.s32 %v206, %v243
      %vm246 = vcmp.ge.s32.totalorder %v244, 0
      %vm247 = vcmp.ge.s32.totalorder %v245, 0
      %vm248 = vcmp.lt.s32.totalorder %v244, 8
      %vm249 = vcmp.lt.s32.totalorder %v245, 8
      %vm250 = vmand %vm246, %vm248
      %vm251 = vmand %vm247, %vm249
      %v252 = vsel %vm250, 1, 0
      %v253 = vsel %vm251, 1, 0
      %v254 = vcvt.s32.f32 %v252
      %v255 = vcvt.s32.f32 %v253
      %v256 = vld [vmem:[%s153] sm:$0xf]
      %v257 = vld [vmem:[%s153 + $0x4] sm:$0x1]
      %v258 = vunpack.c.l.bf16 %v256
      %v259 = vunpack.c.l.bf16 %v257
      %v260 = vsel %vm190, %v258, -inf
      %vm261 = vcmask 516096
      %v262 = vsel %vm261, %v259, -inf
      %v263 = vmax.f32 %v260, %v262
      %v264 = vrot.slane %v263, 4
      %v265 = vmax.f32 %v263, %v264
      %v266 = vrot.slane %v265, 2
      %v267 = vmax.f32 %v265, %v266
      %v268 = vrot.slane %v267, 1
      %v269 = vmax.f32 %v267, %v268
      %v270 = vsub.f32 %v258, %v269
      %v271 = vsub.f32 %v259, %v269
      %v272 = vmul.f32 %v270, 1.442695
      %v273 = vpow.pop %v272
      %v274 = vmul.f32 %v271, 1.442695
      %v275 = vpow.pop %v274
      %v276 = vsel %vm190, %v273, 0.0
      %v277 = vsel %vm261, %v275, 0.0
      %v278 = vadd.f32 %v276, %v277
      %v279 = vrot.slane %v278, 4
      %v280 = vadd.f32 %v278, %v279
      %v281 = vrot.slane %v280, 2
      %v282 = vadd.f32 %v280, %v281
      %v283 = vrot.slane %v282, 1
      %v284 = vadd.f32 %v282, %v283
      %v285 = vrcp.pop %v284
      %v286 = vmul.f32 %v273, %v285
      %v287 = vmul.f32 %v275, %v285
      %v288 = vmul.f32 %v286, %v254
      %v289 = vmul.f32 %v287, %v255
      %v290 = vld [vmem:[#allocation2] sm:$0xff]
      %v291 = vld [vmem:[#allocation2 + $0x8] sm:$0xff]
      %v292 = vlaneseq
      %v293 = vshrl.u32 %v292, 7
      %v294 = vsub.s32 0, %v293
      %v295 = vrot.slane %v288, %v294
      %298 = vrot.lane.b32.xlu0 %v290, 9
      %v299 = vpop.permute.xlu0 %298
      %300 = vrot.lane.b32.xlu0 %v291, 9
      %v301 = vpop.permute.xlu0 %300
      %vm302 = vcmask 72704
      %v303 = vsel %vm302, %v299, %v301
      %v305 = vmul.f32 %v295, %v303
      %v306 = vlaneseq
      %v307 = vshrl.u32 %v306, 7
      %v308 = vsub.s32 1, %v307
      %v309 = vrot.slane %v288, %v308
      %310 = vrot.lane.b32.xlu0 %v290, 8
      %v311 = vpop.permute.xlu0 %310
      %312 = vrot.lane.b32.xlu0 %v291, 8
      %v313 = vpop.permute.xlu0 %312
      %vm314 = vcmask 64512
      %v315 = vsel %vm314, %v311, %v313
      %v317 = vmul.f32 %v309, %v315
      %v318 = vlaneseq
      %v319 = vshrl.u32 %v318, 7
      %v320 = vsub.s32 2, %v319
      %v321 = vrot.slane %v288, %v320
      %322 = vrot.lane.b32.xlu0 %v290, 7
      %v323 = vpop.permute.xlu0 %322
      %324 = vrot.lane.b32.xlu0 %v291, 7
      %v325 = vpop.permute.xlu0 %324
      %vm326 = vcmask 56320
      %v327 = vsel %vm326, %v323, %v325
      %v329 = vmul.f32 %v321, %v327
      %v330 = vlaneseq
      %v331 = vshrl.u32 %v330, 7
      %v332 = vsub.s32 3, %v331
      %v333 = vrot.slane %v288, %v332
      %334 = vrot.lane.b32.xlu0 %v290, 1
      %v335 = vpop.permute.xlu0 %334
      %336 = vrot.lane.b32.xlu0 %v291, 1
      %v337 = vpop.permute.xlu0 %336
      %vm338 = vcmask 7168
      %v339 = vsel %vm338, %v335, %v337
      %v341 = vmul.f32 %v333, %v339
      %v342 = vadd.f32 %v305, %v341
      %v343 = vlaneseq
      %v344 = vshrl.u32 %v343, 7
      %v345 = vsub.s32 4, %v344
      %v346 = vrot.slane %v288, %v345
      %v347 = vmul.f32 %v346, %v291
      %v348 = vadd.f32 %v317, %v347
      %v349 = vlaneseq
      %v350 = vshrl.u32 %v349, 7
      %v351 = vsub.s32 5, %v350
      %v352 = vrot.slane %v288, %v351
      %353 = vrot.lane.b32.xlu0 %v291, 127
      %v354 = vpop.permute.xlu0 %353
      %v356 = vmul.f32 %v352, %v354
      %v357 = vadd.f32 %v329, %v356
      %v358 = vlaneseq
      %v359 = vshrl.u32 %v358, 7
      %v360 = vsub.s32 6, %v359
      %v361 = vrot.slane %v288, %v360
      %362 = vrot.lane.b32.xlu0 %v291, 121
      %v363 = vpop.permute.xlu0 %362
      %v365 = vmul.f32 %v361, %v363
      %v366 = vadd.f32 %v342, %v365
      %v367 = vlaneseq
      %v368 = vshrl.u32 %v367, 7
      %v369 = vsub.s32 7, %v368
      %v370 = vrot.slane %v288, %v369
      %371 = vrot.lane.b32.xlu0 %v291, 120
      %v372 = vpop.permute.xlu0 %371
      %v374 = vmul.f32 %v370, %v372
      %v375 = vadd.f32 %v348, %v374
      %v376 = vlaneseq
      %v377 = vshrl.u32 %v376, 7
      %v378 = vsub.s32 0, %v377
      %v379 = vrot.slane %v289, %v378
      %380 = vrot.lane.b32.xlu0 %v291, 119
      %v381 = vpop.permute.xlu0 %380
      %v383 = vmul.f32 %v379, %v381
      %v384 = vadd.f32 %v357, %v383
      %v385 = vadd.f32 %v366, %v375
      %v386 = vadd.f32 %v385, %v384
      %v387 = vlaneseq
      %v388 = vshrl.u32 %v387, 7
      %v389 = vsub.s32 0, %v388
      %v390 = vrot.slane %v254, %v389
      %v391 = vmul.f32 %v386, %v390
      %392 = vst.msk [vmem:[#allocation3 + $0x8] sm:$0xff] %vm190, %v391
      %s393 = scalar_lea.vmem %s153, 8
      %v394 = vld [vmem:[%s393] sm:$0xf]
      %v395 = vld [vmem:[%s393 + $0x4] sm:$0x1]
      %v396 = vunpack.c.l.bf16 %v394
      %v397 = vunpack.c.l.bf16 %v395
      %v398 = vsel %vm190, %v396, -inf
      %v399 = vsel %vm261, %v397, -inf
      %v400 = vmax.f32 %v398, %v399
      %v401 = vrot.slane %v400, 4
      %v402 = vmax.f32 %v400, %v401
      %v403 = vrot.slane %v402, 2
      %v404 = vmax.f32 %v402, %v403
      %v405 = vrot.slane %v404, 1
      %v406 = vmax.f32 %v404, %v405
      %v407 = vsub.f32 %v396, %v406
      %v408 = vsub.f32 %v397, %v406
      %v409 = vmul.f32 %v407, 1.442695
      %v410 = vpow.pop %v409
      %v411 = vmul.f32 %v408, 1.442695
      %v412 = vpow.pop %v411
      %v413 = vsel %vm190, %v410, 0.0
      %v414 = vsel %vm261, %v412, 0.0
      %v415 = vadd.f32 %v413, %v414
      %v416 = vrot.slane %v415, 4
      %v417 = vadd.f32 %v415, %v416
      %v418 = vrot.slane %v417, 2
      %v419 = vadd.f32 %v417, %v418
      %v420 = vrot.slane %v419, 1
      %v421 = vadd.f32 %v419, %v420
      %v422 = vrcp.pop %v421
      %v423 = vmul.f32 %v410, %v422
      %v424 = vmul.f32 %v412, %v422
      %v425 = vmul.f32 %v423, %v254
      %v426 = vmul.f32 %v424, %v255
      %v427 = vld [vmem:[#allocation2] sm:$0xff]
      %v428 = vld [vmem:[#allocation2 + $0x8] sm:$0xff]
      %v429 = vlaneseq
      %v430 = vshrl.u32 %v429, 7
      %v431 = vsub.s32 0, %v430
      %v432 = vrot.slane %v425, %v431
      %435 = vrot.lane.b32.xlu0 %v427, 9
      %v436 = vpop.permute.xlu0 %435
      %437 = vrot.lane.b32.xlu0 %v428, 9
      %v438 = vpop.permute.xlu0 %437
      %v439 = vsel %vm302, %v436, %v438
      %v441 = vmul.f32 %v432, %v439
      %v442 = vlaneseq
      %v443 = vshrl.u32 %v442, 7
      %v444 = vsub.s32 1, %v443
      %v445 = vrot.slane %v425, %v444
      %446 = vrot.lane.b32.xlu0 %v427, 8
      %v447 = vpop.permute.xlu0 %446
      %448 = vrot.lane.b32.xlu0 %v428, 8
      %v449 = vpop.permute.xlu0 %448
      %v450 = vsel %vm314, %v447, %v449
      %v452 = vmul.f32 %v445, %v450
      %v453 = vlaneseq
      %v454 = vshrl.u32 %v453, 7
      %v455 = vsub.s32 2, %v454
      %v456 = vrot.slane %v425, %v455
      %457 = vrot.lane.b32.xlu0 %v427, 7
      %v458 = vpop.permute.xlu0 %457
      %459 = vrot.lane.b32.xlu0 %v428, 7
      %v460 = vpop.permute.xlu0 %459
      %v461 = vsel %vm326, %v458, %v460
      %v463 = vmul.f32 %v456, %v461
      %v464 = vlaneseq
      %v465 = vshrl.u32 %v464, 7
      %v466 = vsub.s32 3, %v465
      %v467 = vrot.slane %v425, %v466
      %468 = vrot.lane.b32.xlu0 %v427, 1
      %v469 = vpop.permute.xlu0 %468
      %470 = vrot.lane.b32.xlu0 %v428, 1
      %v471 = vpop.permute.xlu0 %470
      %v472 = vsel %vm338, %v469, %v471
      %v474 = vmul.f32 %v467, %v472
      %v475 = vadd.f32 %v441, %v474
      %v476 = vlaneseq
      %v477 = vshrl.u32 %v476, 7
      %v478 = vsub.s32 4, %v477
      %v479 = vrot.slane %v425, %v478
      %v480 = vmul.f32 %v479, %v428
      %v481 = vadd.f32 %v452, %v480
      %v482 = vlaneseq
      %v483 = vshrl.u32 %v482, 7
      %v484 = vsub.s32 5, %v483
      %v485 = vrot.slane %v425, %v484
      %486 = vrot.lane.b32.xlu0 %v428, 127
      %v487 = vpop.permute.xlu0 %486
      %v489 = vmul.f32 %v485, %v487
      %v490 = vadd.f32 %v463, %v489
      %v491 = vlaneseq
      %v492 = vshrl.u32 %v491, 7
      %v493 = vsub.s32 6, %v492
      %v494 = vrot.slane %v425, %v493
      %495 = vrot.lane.b32.xlu0 %v428, 121
      %v496 = vpop.permute.xlu0 %495
      %v498 = vmul.f32 %v494, %v496
      %v499 = vadd.f32 %v475, %v498
      %v500 = vlaneseq
      %v501 = vshrl.u32 %v500, 7
      %v502 = vsub.s32 7, %v501
      %v503 = vrot.slane %v425, %v502
      %504 = vrot.lane.b32.xlu0 %v428, 120
      %v505 = vpop.permute.xlu0 %504
      %v507 = vmul.f32 %v503, %v505
      %v508 = vadd.f32 %v481, %v507
      %v509 = vlaneseq
      %v510 = vshrl.u32 %v509, 7
      %v511 = vsub.s32 0, %v510
      %v512 = vrot.slane %v426, %v511
      %513 = vrot.lane.b32.xlu0 %v428, 119
      %v514 = vpop.permute.xlu0 %513
      %v516 = vmul.f32 %v512, %v514
      %v517 = vadd.f32 %v490, %v516
      %v518 = vadd.f32 %v499, %v508
      %v519 = vadd.f32 %v518, %v517
      %v520 = vlaneseq
      %v521 = vshrl.u32 %v520, 7
      %v522 = vsub.s32 1, %v521
      %v523 = vrot.slane %v254, %v522
      %v524 = vmul.f32 %v519, %v523
      %s525 = scalar_lea.vmem [#allocation3], 16
      %526 = vst.msk [vmem:[%s525 + $0x8] sm:$0xff] %vm190, %v524
      %s527 = scalar_lea.vmem %s153, 16
      %v528 = vld [vmem:[%s527] sm:$0xf]
      %v529 = vld [vmem:[%s527 + $0x4] sm:$0x1]
      %v530 = vunpack.c.l.bf16 %v528
      %v531 = vunpack.c.l.bf16 %v529
      %v532 = vsel %vm190, %v530, -inf
      %v533 = vsel %vm261, %v531, -inf
      %v534 = vmax.f32 %v532, %v533
      %v535 = vrot.slane %v534, 4
      %v536 = vmax.f32 %v534, %v535
      %v537 = vrot.slane %v536, 2
      %v538 = vmax.f32 %v536, %v537
      %v539 = vrot.slane %v538, 1
      %v540 = vmax.f32 %v538, %v539
      %v541 = vsub.f32 %v530, %v540
      %v542 = vsub.f32 %v531, %v540
      %v543 = vmul.f32 %v541, 1.442695
      %v544 = vpow.pop %v543
      %v545 = vmul.f32 %v542, 1.442695
      %v546 = vpow.pop %v545
      %v547 = vsel %vm190, %v544, 0.0
      %v548 = vsel %vm261, %v546, 0.0
      %v549 = vadd.f32 %v547, %v548
      %v550 = vrot.slane %v549, 4
      %v551 = vadd.f32 %v549, %v550
      %v552 = vrot.slane %v551, 2
      %v553 = vadd.f32 %v551, %v552
      %v554 = vrot.slane %v553, 1
      %v555 = vadd.f32 %v553, %v554
      %v556 = vrcp.pop %v555
      %v557 = vmul.f32 %v544, %v556
      %v558 = vmul.f32 %v546, %v556
      %v559 = vmul.f32 %v557, %v254
      %v560 = vmul.f32 %v558, %v255
      %v561 = vld [vmem:[#allocation2] sm:$0xff]
      %v562 = vld [vmem:[#allocation2 + $0x8] sm:$0xff]
      %v563 = vlaneseq
      %v564 = vshrl.u32 %v563, 7
      %v565 = vsub.s32 0, %v564
      %v566 = vrot.slane %v559, %v565
      %569 = vrot.lane.b32.xlu0 %v561, 9
      %v570 = vpop.permute.xlu0 %569
      %571 = vrot.lane.b32.xlu0 %v562, 9
      %v572 = vpop.permute.xlu0 %571
      %v573 = vsel %vm302, %v570, %v572
      %v575 = vmul.f32 %v566, %v573
      %v576 = vlaneseq
      %v577 = vshrl.u32 %v576, 7
      %v578 = vsub.s32 1, %v577
      %v579 = vrot.slane %v559, %v578
      %580 = vrot.lane.b32.xlu0 %v561, 8
      %v581 = vpop.permute.xlu0 %580
      %582 = vrot.lane.b32.xlu0 %v562, 8
      %v583 = vpop.permute.xlu0 %582
      %v584 = vsel %vm314, %v581, %v583
      %v586 = vmul.f32 %v579, %v584
      %v587 = vlaneseq
      %v588 = vshrl.u32 %v587, 7
      %v589 = vsub.s32 2, %v588
      %v590 = vrot.slane %v559, %v589
      %591 = vrot.lane.b32.xlu0 %v561, 7
      %v592 = vpop.permute.xlu0 %591
      %593 = vrot.lane.b32.xlu0 %v562, 7
      %v594 = vpop.permute.xlu0 %593
      %v595 = vsel %vm326, %v592, %v594
      %v597 = vmul.f32 %v590, %v595
      %v598 = vlaneseq
      %v599 = vshrl.u32 %v598, 7
      %v600 = vsub.s32 3, %v599
      %v601 = vrot.slane %v559, %v600
      %602 = vrot.lane.b32.xlu0 %v561, 1
      %v603 = vpop.permute.xlu0 %602
      %604 = vrot.lane.b32.xlu0 %v562, 1
      %v605 = vpop.permute.xlu0 %604
      %v606 = vsel %vm338, %v603, %v605
      %v608 = vmul.f32 %v601, %v606
      %v609 = vadd.f32 %v575, %v608
      %v610 = vlaneseq
      %v611 = vshrl.u32 %v610, 7
      %v612 = vsub.s32 4, %v611
      %v613 = vrot.slane %v559, %v612
      %v614 = vmul.f32 %v613, %v562
      %v615 = vadd.f32 %v586, %v614
      %v616 = vlaneseq
      %v617 = vshrl.u32 %v616, 7
      %v618 = vsub.s32 5, %v617
      %v619 = vrot.slane %v559, %v618
      %620 = vrot.lane.b32.xlu0 %v562, 127
      %v621 = vpop.permute.xlu0 %620
      %v623 = vmul.f32 %v619, %v621
      %v624 = vadd.f32 %v597, %v623
      %v625 = vlaneseq
      %v626 = vshrl.u32 %v625, 7
      %v627 = vsub.s32 6, %v626
      %v628 = vrot.slane %v559, %v627
      %629 = vrot.lane.b32.xlu0 %v562, 121
      %v630 = vpop.permute.xlu0 %629
      %v632 = vmul.f32 %v628, %v630
      %v633 = vadd.f32 %v609, %v632
      %v634 = vlaneseq
      %v635 = vshrl.u32 %v634, 7
      %v636 = vsub.s32 7, %v635
      %v637 = vrot.slane %v559, %v636
      %638 = vrot.lane.b32.xlu0 %v562, 120
      %v639 = vpop.permute.xlu0 %638
      %v641 = vmul.f32 %v637, %v639
      %v642 = vadd.f32 %v615, %v641
      %v643 = vlaneseq
      %v644 = vshrl.u32 %v643, 7
      %v645 = vsub.s32 0, %v644
      %v646 = vrot.slane %v560, %v645
      %647 = vrot.lane.b32.xlu0 %v562, 119
      %v648 = vpop.permute.xlu0 %647
      %v650 = vmul.f32 %v646, %v648
      %v651 = vadd.f32 %v624, %v650
      %v652 = vadd.f32 %v633, %v642
      %v653 = vadd.f32 %v652, %v651
      %v654 = vlaneseq
      %v655 = vshrl.u32 %v654, 7
      %v656 = vsub.s32 2, %v655
      %v657 = vrot.slane %v254, %v656
      %v658 = vmul.f32 %v653, %v657
      %s659 = scalar_lea.vmem [#allocation3], 32
      %660 = vst.msk [vmem:[%s659 + $0x8] sm:$0xff] %vm190, %v658
      %s661 = scalar_lea.vmem %s153, 24
      %v662 = vld [vmem:[%s661] sm:$0xf]
      %v663 = vld [vmem:[%s661 + $0x4] sm:$0x1]
      %v664 = vunpack.c.l.bf16 %v662
      %v665 = vunpack.c.l.bf16 %v663
      %v666 = vsel %vm190, %v664, -inf
      %v667 = vsel %vm261, %v665, -inf
      %v668 = vmax.f32 %v666, %v667
      %v669 = vrot.slane %v668, 4
      %v670 = vmax.f32 %v668, %v669
      %v671 = vrot.slane %v670, 2
      %v672 = vmax.f32 %v670, %v671
      %v673 = vrot.slane %v672, 1
      %v674 = vmax.f32 %v672, %v673
      %v675 = vsub.f32 %v664, %v674
      %v676 = vsub.f32 %v665, %v674
      %v677 = vmul.f32 %v675, 1.442695
      %v678 = vpow.pop %v677
      %v679 = vmul.f32 %v676, 1.442695
      %v680 = vpow.pop %v679
      %v681 = vsel %vm190, %v678, 0.0
      %v682 = vsel %vm261, %v680, 0.0
      %v683 = vadd.f32 %v681, %v682
      %v684 = vrot.slane %v683, 4
      %v685 = vadd.f32 %v683, %v684
      %v686 = vrot.slane %v685, 2
      %v687 = vadd.f32 %v685, %v686
      %v688 = vrot.slane %v687, 1
      %v689 = vadd.f32 %v687, %v688
      %v690 = vrcp.pop %v689
      %v691 = vmul.f32 %v678, %v690
      %v692 = vmul.f32 %v680, %v690
      %v693 = vmul.f32 %v691, %v254
      %v694 = vmul.f32 %v692, %v255
      %v695 = vld [vmem:[#allocation2] sm:$0xff]
      %v696 = vld [vmem:[#allocation2 + $0x8] sm:$0xff]
      %v697 = vlaneseq
      %v698 = vshrl.u32 %v697, 7
      %v699 = vsub.s32 0, %v698
      %v700 = vrot.slane %v693, %v699
      %703 = vrot.lane.b32.xlu0 %v695, 9
      %v704 = vpop.permute.xlu0 %703
      %705 = vrot.lane.b32.xlu0 %v696, 9
      %v706 = vpop.permute.xlu0 %705
      %v707 = vsel %vm302, %v704, %v706
      %v709 = vmul.f32 %v700, %v707
      %v710 = vlaneseq
      %v711 = vshrl.u32 %v710, 7
      %v712 = vsub.s32 1, %v711
      %v713 = vrot.slane %v693, %v712
      %714 = vrot.lane.b32.xlu0 %v695, 8
      %v715 = vpop.permute.xlu0 %714
      %716 = vrot.lane.b32.xlu0 %v696, 8
      %v717 = vpop.permute.xlu0 %716
      %v718 = vsel %vm314, %v715, %v717
      %v720 = vmul.f32 %v713, %v718
      %v721 = vlaneseq
      %v722 = vshrl.u32 %v721, 7
      %v723 = vsub.s32 2, %v722
      %v724 = vrot.slane %v693, %v723
      %725 = vrot.lane.b32.xlu0 %v695, 7
      %v726 = vpop.permute.xlu0 %725
      %727 = vrot.lane.b32.xlu0 %v696, 7
      %v728 = vpop.permute.xlu0 %727
      %v729 = vsel %vm326, %v726, %v728
      %v731 = vmul.f32 %v724, %v729
      %v732 = vlaneseq
      %v733 = vshrl.u32 %v732, 7
      %v734 = vsub.s32 3, %v733
      %v735 = vrot.slane %v693, %v734
      %736 = vrot.lane.b32.xlu0 %v695, 1
      %v737 = vpop.permute.xlu0 %736
      %738 = vrot.lane.b32.xlu0 %v696, 1
      %v739 = vpop.permute.xlu0 %738
      %v740 = vsel %vm338, %v737, %v739
      %v742 = vmul.f32 %v735, %v740
      %v743 = vadd.f32 %v709, %v742
      %v744 = vlaneseq
      %v745 = vshrl.u32 %v744, 7
      %v746 = vsub.s32 4, %v745
      %v747 = vrot.slane %v693, %v746
      %v748 = vmul.f32 %v747, %v696
      %v749 = vadd.f32 %v720, %v748
      %v750 = vlaneseq
      %v751 = vshrl.u32 %v750, 7
      %v752 = vsub.s32 5, %v751
      %v753 = vrot.slane %v693, %v752
      %754 = vrot.lane.b32.xlu0 %v696, 127
      %v755 = vpop.permute.xlu0 %754
      %v757 = vmul.f32 %v753, %v755
      %v758 = vadd.f32 %v731, %v757
      %v759 = vlaneseq
      %v760 = vshrl.u32 %v759, 7
      %v761 = vsub.s32 6, %v760
      %v762 = vrot.slane %v693, %v761
      %763 = vrot.lane.b32.xlu0 %v696, 121
      %v764 = vpop.permute.xlu0 %763
      %v766 = vmul.f32 %v762, %v764
      %v767 = vadd.f32 %v743, %v766
      %v768 = vlaneseq
      %v769 = vshrl.u32 %v768, 7
      %v770 = vsub.s32 7, %v769
      %v771 = vrot.slane %v693, %v770
      %772 = vrot.lane.b32.xlu0 %v696, 120
      %v773 = vpop.permute.xlu0 %772
      %v775 = vmul.f32 %v771, %v773
      %v776 = vadd.f32 %v749, %v775
      %v777 = vlaneseq
      %v778 = vshrl.u32 %v777, 7
      %v779 = vsub.s32 0, %v778
      %v780 = vrot.slane %v694, %v779
      %781 = vrot.lane.b32.xlu0 %v696, 119
      %v782 = vpop.permute.xlu0 %781
      %v784 = vmul.f32 %v780, %v782
      %v785 = vadd.f32 %v758, %v784
      %v786 = vadd.f32 %v767, %v776
      %v787 = vadd.f32 %v786, %v785
      %v788 = vlaneseq
      %v789 = vshrl.u32 %v788, 7
      %v790 = vsub.s32 3, %v789
      %v791 = vrot.slane %v254, %v790
      %v792 = vmul.f32 %v787, %v791
      %s793 = scalar_lea.vmem [#allocation3], 48
      %794 = vst.msk [vmem:[%s793 + $0x8] sm:$0xff] %vm190, %v792
      %s795 = scalar_lea.vmem %s153, 32
      %v796 = vld [vmem:[%s795] sm:$0xf]
      %v797 = vld [vmem:[%s795 + $0x4] sm:$0x1]
      %v798 = vunpack.c.l.bf16 %v796
      %v799 = vunpack.c.l.bf16 %v797
      %v800 = vsel %vm190, %v798, -inf
      %v801 = vsel %vm261, %v799, -inf
      %v802 = vmax.f32 %v800, %v801
      %v803 = vrot.slane %v802, 4
      %v804 = vmax.f32 %v802, %v803
      %v805 = vrot.slane %v804, 2
      %v806 = vmax.f32 %v804, %v805
      %v807 = vrot.slane %v806, 1
      %v808 = vmax.f32 %v806, %v807
      %v809 = vsub.f32 %v798, %v808
      %v810 = vsub.f32 %v799, %v808
      %v811 = vmul.f32 %v809, 1.442695
      %v812 = vpow.pop %v811
      %v813 = vmul.f32 %v810, 1.442695
      %v814 = vpow.pop %v813
      %v815 = vsel %vm190, %v812, 0.0
      %v816 = vsel %vm261, %v814, 0.0
      %v817 = vadd.f32 %v815, %v816
      %v818 = vrot.slane %v817, 4
      %v819 = vadd.f32 %v817, %v818
      %v820 = vrot.slane %v819, 2
      %v821 = vadd.f32 %v819, %v820
      %v822 = vrot.slane %v821, 1
      %v823 = vadd.f32 %v821, %v822
      %v824 = vrcp.pop %v823
      %v825 = vmul.f32 %v812, %v824
      %v826 = vmul.f32 %v814, %v824
      %v827 = vmul.f32 %v825, %v254
      %v828 = vmul.f32 %v826, %v255
      %v829 = vld [vmem:[#allocation2] sm:$0xff]
      %v830 = vld [vmem:[#allocation2 + $0x8] sm:$0xff]
      %v831 = vlaneseq
      %v832 = vshrl.u32 %v831, 7
      %v833 = vsub.s32 0, %v832
      %v834 = vrot.slane %v827, %v833
      %837 = vrot.lane.b32.xlu0 %v829, 9
      %v838 = vpop.permute.xlu0 %837
      %839 = vrot.lane.b32.xlu0 %v830, 9
      %v840 = vpop.permute.xlu0 %839
      %v841 = vsel %vm302, %v838, %v840
      %v843 = vmul.f32 %v834, %v841
      %v844 = vlaneseq
      %v845 = vshrl.u32 %v844, 7
      %v846 = vsub.s32 1, %v845
      %v847 = vrot.slane %v827, %v846
      %848 = vrot.lane.b32.xlu0 %v829, 8
      %v849 = vpop.permute.xlu0 %848
      %850 = vrot.lane.b32.xlu0 %v830, 8
      %v851 = vpop.permute.xlu0 %850
      %v852 = vsel %vm314, %v849, %v851
      %v854 = vmul.f32 %v847, %v852
      %v855 = vlaneseq
      %v856 = vshrl.u32 %v855, 7
      %v857 = vsub.s32 2, %v856
      %v858 = vrot.slane %v827, %v857
      %859 = vrot.lane.b32.xlu0 %v829, 7
      %v860 = vpop.permute.xlu0 %859
      %861 = vrot.lane.b32.xlu0 %v830, 7
      %v862 = vpop.permute.xlu0 %861
      %v863 = vsel %vm326, %v860, %v862
      %v865 = vmul.f32 %v858, %v863
      %v866 = vlaneseq
      %v867 = vshrl.u32 %v866, 7
      %v868 = vsub.s32 3, %v867
      %v869 = vrot.slane %v827, %v868
      %870 = vrot.lane.b32.xlu0 %v829, 1
      %v871 = vpop.permute.xlu0 %870
      %872 = vrot.lane.b32.xlu0 %v830, 1
      %v873 = vpop.permute.xlu0 %872
      %v874 = vsel %vm338, %v871, %v873
      %v876 = vmul.f32 %v869, %v874
      %v877 = vadd.f32 %v843, %v876
      %v878 = vlaneseq
      %v879 = vshrl.u32 %v878, 7
      %v880 = vsub.s32 4, %v879
      %v881 = vrot.slane %v827, %v880
      %v882 = vmul.f32 %v881, %v830
      %v883 = vadd.f32 %v854, %v882
      %v884 = vlaneseq
      %v885 = vshrl.u32 %v884, 7
      %v886 = vsub.s32 5, %v885
      %v887 = vrot.slane %v827, %v886
      %888 = vrot.lane.b32.xlu0 %v830, 127
      %v889 = vpop.permute.xlu0 %888
      %v891 = vmul.f32 %v887, %v889
      %v892 = vadd.f32 %v865, %v891
      %v893 = vlaneseq
      %v894 = vshrl.u32 %v893, 7
      %v895 = vsub.s32 6, %v894
      %v896 = vrot.slane %v827, %v895
      %897 = vrot.lane.b32.xlu0 %v830, 121
      %v898 = vpop.permute.xlu0 %897
      %v900 = vmul.f32 %v896, %v898
      %v901 = vadd.f32 %v877, %v900
      %v902 = vlaneseq
      %v903 = vshrl.u32 %v902, 7
      %v904 = vsub.s32 7, %v903
      %v905 = vrot.slane %v827, %v904
      %906 = vrot.lane.b32.xlu0 %v830, 120
      %v907 = vpop.permute.xlu0 %906
      %v909 = vmul.f32 %v905, %v907
      %v910 = vadd.f32 %v883, %v909
      %v911 = vlaneseq
      %v912 = vshrl.u32 %v911, 7
      %v913 = vsub.s32 0, %v912
      %v914 = vrot.slane %v828, %v913
      %915 = vrot.lane.b32.xlu0 %v830, 119
      %v916 = vpop.permute.xlu0 %915
      %v918 = vmul.f32 %v914, %v916
      %v919 = vadd.f32 %v892, %v918
      %v920 = vadd.f32 %v901, %v910
      %v921 = vadd.f32 %v920, %v919
      %v922 = vlaneseq
      %v923 = vshrl.u32 %v922, 7
      %v924 = vsub.s32 4, %v923
      %v925 = vrot.slane %v254, %v924
      %v926 = vmul.f32 %v921, %v925
      %s927 = scalar_lea.vmem [#allocation3], 64
      %928 = vst.msk [vmem:[%s927 + $0x8] sm:$0xff] %vm190, %v926
      %s929 = scalar_lea.vmem %s153, 40
      %v930 = vld [vmem:[%s929] sm:$0xf]
      %v931 = vld [vmem:[%s929 + $0x4] sm:$0x1]
      %v932 = vunpack.c.l.bf16 %v930
      %v933 = vunpack.c.l.bf16 %v931
      %v934 = vsel %vm190, %v932, -inf
      %v935 = vsel %vm261, %v933, -inf
      %v936 = vmax.f32 %v934, %v935
      %v937 = vrot.slane %v936, 4
      %v938 = vmax.f32 %v936, %v937
      %v939 = vrot.slane %v938, 2
      %v940 = vmax.f32 %v938, %v939
      %v941 = vrot.slane %v940, 1
      %v942 = vmax.f32 %v940, %v941
      %v943 = vsub.f32 %v932, %v942
      %v944 = vsub.f32 %v933, %v942
      %v945 = vmul.f32 %v943, 1.442695
      %v946 = vpow.pop %v945
      %v947 = vmul.f32 %v944, 1.442695
      %v948 = vpow.pop %v947
      %v949 = vsel %vm190, %v946, 0.0
      %v950 = vsel %vm261, %v948, 0.0
      %v951 = vadd.f32 %v949, %v950
      %v952 = vrot.slane %v951, 4
      %v953 = vadd.f32 %v951, %v952
      %v954 = vrot.slane %v953, 2
      %v955 = vadd.f32 %v953, %v954
      %v956 = vrot.slane %v955, 1
      %v957 = vadd.f32 %v955, %v956
      %v958 = vrcp.pop %v957
      %v959 = vmul.f32 %v946, %v958
      %v960 = vmul.f32 %v948, %v958
      %v961 = vmul.f32 %v959, %v254
      %v962 = vmul.f32 %v960, %v255
      %v963 = vld [vmem:[#allocation2] sm:$0xff]
      %v964 = vld [vmem:[#allocation2 + $0x8] sm:$0xff]
      %v965 = vlaneseq
      %v966 = vshrl.u32 %v965, 7
      %v967 = vsub.s32 0, %v966
      %v968 = vrot.slane %v961, %v967
      %971 = vrot.lane.b32.xlu0 %v963, 9
      %v972 = vpop.permute.xlu0 %971
      %973 = vrot.lane.b32.xlu0 %v964, 9
      %v974 = vpop.permute.xlu0 %973
      %v975 = vsel %vm302, %v972, %v974
      %v977 = vmul.f32 %v968, %v975
      %v978 = vlaneseq
      %v979 = vshrl.u32 %v978, 7
      %v980 = vsub.s32 1, %v979
      %v981 = vrot.slane %v961, %v980
      %982 = vrot.lane.b32.xlu0 %v963, 8
      %v983 = vpop.permute.xlu0 %982
      %984 = vrot.lane.b32.xlu0 %v964, 8
      %v985 = vpop.permute.xlu0 %984
      %v986 = vsel %vm314, %v983, %v985
      %v988 = vmul.f32 %v981, %v986
      %v989 = vlaneseq
      %v990 = vshrl.u32 %v989, 7
      %v991 = vsub.s32 2, %v990
      %v992 = vrot.slane %v961, %v991
      %993 = vrot.lane.b32.xlu0 %v963, 7
      %v994 = vpop.permute.xlu0 %993
      %995 = vrot.lane.b32.xlu0 %v964, 7
      %v996 = vpop.permute.xlu0 %995
      %v997 = vsel %vm326, %v994, %v996
      %v999 = vmul.f32 %v992, %v997
      %v1000 = vlaneseq
      %v1001 = vshrl.u32 %v1000, 7
      %v1002 = vsub.s32 3, %v1001
      %v1003 = vrot.slane %v961, %v1002
      %1004 = vrot.lane.b32.xlu0 %v963, 1
      %v1005 = vpop.permute.xlu0 %1004
      %1006 = vrot.lane.b32.xlu0 %v964, 1
      %v1007 = vpop.permute.xlu0 %1006
      %v1008 = vsel %vm338, %v1005, %v1007
      %v1010 = vmul.f32 %v1003, %v1008
      %v1011 = vadd.f32 %v977, %v1010
      %v1012 = vlaneseq
      %v1013 = vshrl.u32 %v1012, 7
      %v1014 = vsub.s32 4, %v1013
      %v1015 = vrot.slane %v961, %v1014
      %v1016 = vmul.f32 %v1015, %v964
      %v1017 = vadd.f32 %v988, %v1016
      %v1018 = vlaneseq
      %v1019 = vshrl.u32 %v1018, 7
      %v1020 = vsub.s32 5, %v1019
      %v1021 = vrot.slane %v961, %v1020
      %1022 = vrot.lane.b32.xlu0 %v964, 127
      %v1023 = vpop.permute.xlu0 %1022
      %v1025 = vmul.f32 %v1021, %v1023
      %v1026 = vadd.f32 %v999, %v1025
      %v1027 = vlaneseq
      %v1028 = vshrl.u32 %v1027, 7
      %v1029 = vsub.s32 6, %v1028
      %v1030 = vrot.slane %v961, %v1029
      %1031 = vrot.lane.b32.xlu0 %v964, 121
      %v1032 = vpop.permute.xlu0 %1031
      %v1034 = vmul.f32 %v1030, %v1032
      %v1035 = vadd.f32 %v1011, %v1034
      %v1036 = vlaneseq
      %v1037 = vshrl.u32 %v1036, 7
      %v1038 = vsub.s32 7, %v1037
      %v1039 = vrot.slane %v961, %v1038
      %1040 = vrot.lane.b32.xlu0 %v964, 120
      %v1041 = vpop.permute.xlu0 %1040
      %v1043 = vmul.f32 %v1039, %v1041
      %v1044 = vadd.f32 %v1017, %v1043
      %v1045 = vlaneseq
      %v1046 = vshrl.u32 %v1045, 7
      %v1047 = vsub.s32 0, %v1046
      %v1048 = vrot.slane %v962, %v1047
      %1049 = vrot.lane.b32.xlu0 %v964, 119
      %v1050 = vpop.permute.xlu0 %1049
      %v1052 = vmul.f32 %v1048, %v1050
      %v1053 = vadd.f32 %v1026, %v1052
      %v1054 = vadd.f32 %v1035, %v1044
      %v1055 = vadd.f32 %v1054, %v1053
      %v1056 = vlaneseq
      %v1057 = vshrl.u32 %v1056, 7
      %v1058 = vsub.s32 5, %v1057
      %v1059 = vrot.slane %v254, %v1058
      %v1060 = vmul.f32 %v1055, %v1059
      %s1061 = scalar_lea.vmem [#allocation3], 80
      %1062 = vst.msk [vmem:[%s1061 + $0x8] sm:$0xff] %vm190, %v1060
      %s1063 = scalar_lea.vmem %s153, 48
      %v1064 = vld [vmem:[%s1063] sm:$0xf]
      %v1065 = vld [vmem:[%s1063 + $0x4] sm:$0x1]
      %v1066 = vunpack.c.l.bf16 %v1064
      %v1067 = vunpack.c.l.bf16 %v1065
      %v1068 = vsel %vm190, %v1066, -inf
      %v1069 = vsel %vm261, %v1067, -inf
      %v1070 = vmax.f32 %v1068, %v1069
      %v1071 = vrot.slane %v1070, 4
      %v1072 = vmax.f32 %v1070, %v1071
      %v1073 = vrot.slane %v1072, 2
      %v1074 = vmax.f32 %v1072, %v1073
      %v1075 = vrot.slane %v1074, 1
      %v1076 = vmax.f32 %v1074, %v1075
      %v1077 = vsub.f32 %v1066, %v1076
      %v1078 = vsub.f32 %v1067, %v1076
      %v1079 = vmul.f32 %v1077, 1.442695
      %v1080 = vpow.pop %v1079
      %v1081 = vmul.f32 %v1078, 1.442695
      %v1082 = vpow.pop %v1081
      %v1083 = vsel %vm190, %v1080, 0.0
      %v1084 = vsel %vm261, %v1082, 0.0
      %v1085 = vadd.f32 %v1083, %v1084
      %v1086 = vrot.slane %v1085, 4
      %v1087 = vadd.f32 %v1085, %v1086
      %v1088 = vrot.slane %v1087, 2
      %v1089 = vadd.f32 %v1087, %v1088
      %v1090 = vrot.slane %v1089, 1
      %v1091 = vadd.f32 %v1089, %v1090
      %v1092 = vrcp.pop %v1091
      %v1093 = vmul.f32 %v1080, %v1092
      %v1094 = vmul.f32 %v1082, %v1092
      %v1095 = vmul.f32 %v1093, %v254
      %v1096 = vmul.f32 %v1094, %v255
      %v1097 = vld [vmem:[#allocation2] sm:$0xff]
      %v1098 = vld [vmem:[#allocation2 + $0x8] sm:$0xff]
      %v1099 = vlaneseq
      %v1100 = vshrl.u32 %v1099, 7
      %v1101 = vsub.s32 0, %v1100
      %v1102 = vrot.slane %v1095, %v1101
      %1105 = vrot.lane.b32.xlu0 %v1097, 9
      %v1106 = vpop.permute.xlu0 %1105
      %1107 = vrot.lane.b32.xlu0 %v1098, 9
      %v1108 = vpop.permute.xlu0 %1107
      %v1109 = vsel %vm302, %v1106, %v1108
      %v1111 = vmul.f32 %v1102, %v1109
      %v1112 = vlaneseq
      %v1113 = vshrl.u32 %v1112, 7
      %v1114 = vsub.s32 1, %v1113
      %v1115 = vrot.slane %v1095, %v1114
      %1116 = vrot.lane.b32.xlu0 %v1097, 8
      %v1117 = vpop.permute.xlu0 %1116
      %1118 = vrot.lane.b32.xlu0 %v1098, 8
      %v1119 = vpop.permute.xlu0 %1118
      %v1120 = vsel %vm314, %v1117, %v1119
      %v1122 = vmul.f32 %v1115, %v1120
      %v1123 = vlaneseq
      %v1124 = vshrl.u32 %v1123, 7
      %v1125 = vsub.s32 2, %v1124
      %v1126 = vrot.slane %v1095, %v1125
      %1127 = vrot.lane.b32.xlu0 %v1097, 7
      %v1128 = vpop.permute.xlu0 %1127
      %1129 = vrot.lane.b32.xlu0 %v1098, 7
      %v1130 = vpop.permute.xlu0 %1129
      %v1131 = vsel %vm326, %v1128, %v1130
      %v1133 = vmul.f32 %v1126, %v1131
      %v1134 = vlaneseq
      %v1135 = vshrl.u32 %v1134, 7
      %v1136 = vsub.s32 3, %v1135
      %v1137 = vrot.slane %v1095, %v1136
      %1138 = vrot.lane.b32.xlu0 %v1097, 1
      %v1139 = vpop.permute.xlu0 %1138
      %1140 = vrot.lane.b32.xlu0 %v1098, 1
      %v1141 = vpop.permute.xlu0 %1140
      %v1142 = vsel %vm338, %v1139, %v1141
      %v1144 = vmul.f32 %v1137, %v1142
      %v1145 = vadd.f32 %v1111, %v1144
      %v1146 = vlaneseq
      %v1147 = vshrl.u32 %v1146, 7
      %v1148 = vsub.s32 4, %v1147
      %v1149 = vrot.slane %v1095, %v1148
      %v1150 = vmul.f32 %v1149, %v1098
      %v1151 = vadd.f32 %v1122, %v1150
      %v1152 = vlaneseq
      %v1153 = vshrl.u32 %v1152, 7
      %v1154 = vsub.s32 5, %v1153
      %v1155 = vrot.slane %v1095, %v1154
      %1156 = vrot.lane.b32.xlu0 %v1098, 127
      %v1157 = vpop.permute.xlu0 %1156
      %v1159 = vmul.f32 %v1155, %v1157
      %v1160 = vadd.f32 %v1133, %v1159
      %v1161 = vlaneseq
      %v1162 = vshrl.u32 %v1161, 7
      %v1163 = vsub.s32 6, %v1162
      %v1164 = vrot.slane %v1095, %v1163
      %1165 = vrot.lane.b32.xlu0 %v1098, 121
      %v1166 = vpop.permute.xlu0 %1165
      %v1168 = vmul.f32 %v1164, %v1166
      %v1169 = vadd.f32 %v1145, %v1168
      %v1170 = vlaneseq
      %v1171 = vshrl.u32 %v1170, 7
      %v1172 = vsub.s32 7, %v1171
      %v1173 = vrot.slane %v1095, %v1172
      %1174 = vrot.lane.b32.xlu0 %v1098, 120
      %v1175 = vpop.permute.xlu0 %1174
      %v1177 = vmul.f32 %v1173, %v1175
      %v1178 = vadd.f32 %v1151, %v1177
      %v1179 = vlaneseq
      %v1180 = vshrl.u32 %v1179, 7
      %v1181 = vsub.s32 0, %v1180
      %v1182 = vrot.slane %v1096, %v1181
      %1183 = vrot.lane.b32.xlu0 %v1098, 119
      %v1184 = vpop.permute.xlu0 %1183
      %v1186 = vmul.f32 %v1182, %v1184
      %v1187 = vadd.f32 %v1160, %v1186
      %v1188 = vadd.f32 %v1169, %v1178
      %v1189 = vadd.f32 %v1188, %v1187
      %v1190 = vlaneseq
      %v1191 = vshrl.u32 %v1190, 7
      %v1192 = vsub.s32 6, %v1191
      %v1193 = vrot.slane %v254, %v1192
      %v1194 = vmul.f32 %v1189, %v1193
      %s1195 = scalar_lea.vmem [#allocation3], 96
      %1196 = vst.msk [vmem:[%s1195 + $0x8] sm:$0xff] %vm190, %v1194
      %s1197 = scalar_lea.vmem %s153, 56
      %v1198 = vld [vmem:[%s1197] sm:$0xf]
      %v1199 = vld [vmem:[%s1197 + $0x4] sm:$0x1]
      %v1200 = vunpack.c.l.bf16 %v1198
      %v1201 = vunpack.c.l.bf16 %v1199
      %v1202 = vsel %vm190, %v1200, -inf
      %v1203 = vsel %vm261, %v1201, -inf
      %v1204 = vmax.f32 %v1202, %v1203
      %v1205 = vrot.slane %v1204, 4
      %v1206 = vmax.f32 %v1204, %v1205
      %v1207 = vrot.slane %v1206, 2
      %v1208 = vmax.f32 %v1206, %v1207
      %v1209 = vrot.slane %v1208, 1
      %v1210 = vmax.f32 %v1208, %v1209
      %v1211 = vsub.f32 %v1200, %v1210
      %v1212 = vsub.f32 %v1201, %v1210
      %v1213 = vmul.f32 %v1211, 1.442695
      %v1214 = vpow.pop %v1213
      %v1215 = vmul.f32 %v1212, 1.442695
      %v1216 = vpow.pop %v1215
      %v1217 = vsel %vm190, %v1214, 0.0
      %v1218 = vsel %vm261, %v1216, 0.0
      %v1219 = vadd.f32 %v1217, %v1218
      %v1220 = vrot.slane %v1219, 4
      %v1221 = vadd.f32 %v1219, %v1220
      %v1222 = vrot.slane %v1221, 2
      %v1223 = vadd.f32 %v1221, %v1222
      %v1224 = vrot.slane %v1223, 1
      %v1225 = vadd.f32 %v1223, %v1224
      %v1226 = vrcp.pop %v1225
      %v1227 = vmul.f32 %v1214, %v1226
      %v1228 = vmul.f32 %v1216, %v1226
      %v1229 = vmul.f32 %v1227, %v254
      %v1230 = vmul.f32 %v1228, %v255
      %v1231 = vld [vmem:[#allocation2] sm:$0xff]
      %v1232 = vld [vmem:[#allocation2 + $0x8] sm:$0xff]
      %v1233 = vlaneseq
      %v1234 = vshrl.u32 %v1233, 7
      %v1235 = vsub.s32 0, %v1234
      %v1236 = vrot.slane %v1229, %v1235
      %1239 = vrot.lane.b32.xlu0 %v1231, 9
      %v1240 = vpop.permute.xlu0 %1239
      %1241 = vrot.lane.b32.xlu0 %v1232, 9
      %v1242 = vpop.permute.xlu0 %1241
      %v1243 = vsel %vm302, %v1240, %v1242
      %v1245 = vmul.f32 %v1236, %v1243
      %v1246 = vlaneseq
      %v1247 = vshrl.u32 %v1246, 7
      %v1248 = vsub.s32 1, %v1247
      %v1249 = vrot.slane %v1229, %v1248
      %1250 = vrot.lane.b32.xlu0 %v1231, 8
      %v1251 = vpop.permute.xlu0 %1250
      %1252 = vrot.lane.b32.xlu0 %v1232, 8
      %v1253 = vpop.permute.xlu0 %1252
      %v1254 = vsel %vm314, %v1251, %v1253
      %v1256 = vmul.f32 %v1249, %v1254
      %v1257 = vlaneseq
      %v1258 = vshrl.u32 %v1257, 7
      %v1259 = vsub.s32 2, %v1258
      %v1260 = vrot.slane %v1229, %v1259
      %1261 = vrot.lane.b32.xlu0 %v1231, 7
      %v1262 = vpop.permute.xlu0 %1261
      %1263 = vrot.lane.b32.xlu0 %v1232, 7
      %v1264 = vpop.permute.xlu0 %1263
      %v1265 = vsel %vm326, %v1262, %v1264
      %v1267 = vmul.f32 %v1260, %v1265
      %v1268 = vlaneseq
      %v1269 = vshrl.u32 %v1268, 7
      %v1270 = vsub.s32 3, %v1269
      %v1271 = vrot.slane %v1229, %v1270
      %1272 = vrot.lane.b32.xlu0 %v1231, 1
      %v1273 = vpop.permute.xlu0 %1272
      %1274 = vrot.lane.b32.xlu0 %v1232, 1
      %v1275 = vpop.permute.xlu0 %1274
      %v1276 = vsel %vm338, %v1273, %v1275
      %v1278 = vmul.f32 %v1271, %v1276
      %v1279 = vadd.f32 %v1245, %v1278
      %v1280 = vlaneseq
      %v1281 = vshrl.u32 %v1280, 7
      %v1282 = vsub.s32 4, %v1281
      %v1283 = vrot.slane %v1229, %v1282
      %v1284 = vmul.f32 %v1283, %v1232
      %v1285 = vadd.f32 %v1256, %v1284
      %v1286 = vlaneseq
      %v1287 = vshrl.u32 %v1286, 7
      %v1288 = vsub.s32 5, %v1287
      %v1289 = vrot.slane %v1229, %v1288
      %1290 = vrot.lane.b32.xlu0 %v1232, 127
      %v1291 = vpop.permute.xlu0 %1290
      %v1293 = vmul.f32 %v1289, %v1291
      %v1294 = vadd.f32 %v1267, %v1293
      %v1295 = vlaneseq
      %v1296 = vshrl.u32 %v1295, 7
      %v1297 = vsub.s32 6, %v1296
      %v1298 = vrot.slane %v1229, %v1297
      %1299 = vrot.lane.b32.xlu0 %v1232, 121
      %v1300 = vpop.permute.xlu0 %1299
      %v1302 = vmul.f32 %v1298, %v1300
      %v1303 = vadd.f32 %v1279, %v1302
      %v1304 = vlaneseq
      %v1305 = vshrl.u32 %v1304, 7
      %v1306 = vsub.s32 7, %v1305
      %v1307 = vrot.slane %v1229, %v1306
      %1308 = vrot.lane.b32.xlu0 %v1232, 120
      %v1309 = vpop.permute.xlu0 %1308
      %v1311 = vmul.f32 %v1307, %v1309
      %v1312 = vadd.f32 %v1285, %v1311
      %v1313 = vlaneseq
      %v1314 = vshrl.u32 %v1313, 7
      %v1315 = vsub.s32 0, %v1314
      %v1316 = vrot.slane %v1230, %v1315
      %1317 = vrot.lane.b32.xlu0 %v1232, 119
      %v1318 = vpop.permute.xlu0 %1317
      %v1320 = vmul.f32 %v1316, %v1318
      %v1321 = vadd.f32 %v1294, %v1320
      %v1322 = vadd.f32 %v1303, %v1312
      %v1323 = vadd.f32 %v1322, %v1321
      %v1324 = vlaneseq
      %v1325 = vshrl.u32 %v1324, 7
      %v1326 = vsub.s32 7, %v1325
      %v1327 = vrot.slane %v254, %v1326
      %v1328 = vmul.f32 %v1323, %v1327
      %s1329 = scalar_lea.vmem [#allocation3], 112
      %1330 = vst.msk [vmem:[%s1329 + $0x8] sm:$0xff] %vm190, %v1328
      %s1331 = scalar_lea.vmem %s153, 64
      %v1332 = vld [vmem:[%s1331] sm:$0xf]
      %v1333 = vld [vmem:[%s1331 + $0x4] sm:$0x1]
      %v1334 = vunpack.c.l.bf16 %v1332
      %v1335 = vunpack.c.l.bf16 %v1333
      %v1336 = vsel %vm190, %v1334, -inf
      %v1337 = vsel %vm261, %v1335, -inf
      %v1338 = vmax.f32 %v1336, %v1337
      %v1339 = vrot.slane %v1338, 4
      %v1340 = vmax.f32 %v1338, %v1339
      %v1341 = vrot.slane %v1340, 2
      %v1342 = vmax.f32 %v1340, %v1341
      %v1343 = vrot.slane %v1342, 1
      %v1344 = vmax.f32 %v1342, %v1343
      %v1345 = vsub.f32 %v1334, %v1344
      %v1346 = vsub.f32 %v1335, %v1344
      %v1347 = vmul.f32 %v1345, 1.442695
      %v1348 = vpow.pop %v1347
      %v1349 = vmul.f32 %v1346, 1.442695
      %v1350 = vpow.pop %v1349
      %v1351 = vsel %vm190, %v1348, 0.0
      %v1352 = vsel %vm261, %v1350, 0.0
      %v1353 = vadd.f32 %v1351, %v1352
      %v1354 = vrot.slane %v1353, 4
      %v1355 = vadd.f32 %v1353, %v1354
      %v1356 = vrot.slane %v1355, 2
      %v1357 = vadd.f32 %v1355, %v1356
      %v1358 = vrot.slane %v1357, 1
      %v1359 = vadd.f32 %v1357, %v1358
      %v1360 = vrcp.pop %v1359
      %v1361 = vmul.f32 %v1348, %v1360
      %v1362 = vmul.f32 %v1350, %v1360
      %v1363 = vmul.f32 %v1361, %v254
      %v1364 = vmul.f32 %v1362, %v255
      %v1365 = vld [vmem:[#allocation2] sm:$0xff]
      %v1366 = vld [vmem:[#allocation2 + $0x8] sm:$0xff]
      %v1367 = vlaneseq
      %v1368 = vshrl.u32 %v1367, 7
      %v1369 = vsub.s32 0, %v1368
      %v1370 = vrot.slane %v1363, %v1369
      %1373 = vrot.lane.b32.xlu0 %v1365, 9
      %v1374 = vpop.permute.xlu0 %1373
      %1375 = vrot.lane.b32.xlu0 %v1366, 9
      %v1376 = vpop.permute.xlu0 %1375
      %v1377 = vsel %vm302, %v1374, %v1376
      %v1379 = vmul.f32 %v1370, %v1377
      %v1380 = vlaneseq
      %v1381 = vshrl.u32 %v1380, 7
      %v1382 = vsub.s32 1, %v1381
      %v1383 = vrot.slane %v1363, %v1382
      %1384 = vrot.lane.b32.xlu0 %v1365, 8
      %v1385 = vpop.permute.xlu0 %1384
      %1386 = vrot.lane.b32.xlu0 %v1366, 8
      %v1387 = vpop.permute.xlu0 %1386
      %v1388 = vsel %vm314, %v1385, %v1387
      %v1390 = vmul.f32 %v1383, %v1388
      %v1391 = vlaneseq
      %v1392 = vshrl.u32 %v1391, 7
      %v1393 = vsub.s32 2, %v1392
      %v1394 = vrot.slane %v1363, %v1393
      %1395 = vrot.lane.b32.xlu0 %v1365, 7
      %v1396 = vpop.permute.xlu0 %1395
      %1397 = vrot.lane.b32.xlu0 %v1366, 7
      %v1398 = vpop.permute.xlu0 %1397
      %v1399 = vsel %vm326, %v1396, %v1398
      %v1401 = vmul.f32 %v1394, %v1399
      %v1402 = vlaneseq
      %v1403 = vshrl.u32 %v1402, 7
      %v1404 = vsub.s32 3, %v1403
      %v1405 = vrot.slane %v1363, %v1404
      %1406 = vrot.lane.b32.xlu0 %v1365, 1
      %v1407 = vpop.permute.xlu0 %1406
      %1408 = vrot.lane.b32.xlu0 %v1366, 1
      %v1409 = vpop.permute.xlu0 %1408
      %v1410 = vsel %vm338, %v1407, %v1409
      %v1412 = vmul.f32 %v1405, %v1410
      %v1413 = vadd.f32 %v1379, %v1412
      %v1414 = vlaneseq
      %v1415 = vshrl.u32 %v1414, 7
      %v1416 = vsub.s32 4, %v1415
      %v1417 = vrot.slane %v1363, %v1416
      %v1418 = vmul.f32 %v1417, %v1366
      %v1419 = vadd.f32 %v1390, %v1418
      %v1420 = vlaneseq
      %v1421 = vshrl.u32 %v1420, 7
      %v1422 = vsub.s32 5, %v1421
      %v1423 = vrot.slane %v1363, %v1422
      %1424 = vrot.lane.b32.xlu0 %v1366, 127
      %v1425 = vpop.permute.xlu0 %1424
      %v1427 = vmul.f32 %v1423, %v1425
      %v1428 = vadd.f32 %v1401, %v1427
      %v1429 = vlaneseq
      %v1430 = vshrl.u32 %v1429, 7
      %v1431 = vsub.s32 6, %v1430
      %v1432 = vrot.slane %v1363, %v1431
      %1433 = vrot.lane.b32.xlu0 %v1366, 121
      %v1434 = vpop.permute.xlu0 %1433
      %v1436 = vmul.f32 %v1432, %v1434
      %v1437 = vadd.f32 %v1413, %v1436
      %v1438 = vlaneseq
      %v1439 = vshrl.u32 %v1438, 7
      %v1440 = vsub.s32 7, %v1439
      %v1441 = vrot.slane %v1363, %v1440
      %1442 = vrot.lane.b32.xlu0 %v1366, 120
      %v1443 = vpop.permute.xlu0 %1442
      %v1445 = vmul.f32 %v1441, %v1443
      %v1446 = vadd.f32 %v1419, %v1445
      %v1447 = vlaneseq
      %v1448 = vshrl.u32 %v1447, 7
      %v1449 = vsub.s32 0, %v1448
      %v1450 = vrot.slane %v1364, %v1449
      %1451 = vrot.lane.b32.xlu0 %v1366, 119
      %v1452 = vpop.permute.xlu0 %1451
      %v1454 = vmul.f32 %v1450, %v1452
      %v1455 = vadd.f32 %v1428, %v1454
      %v1456 = vadd.f32 %v1437, %v1446
      %v1457 = vadd.f32 %v1456, %v1455
      %v1458 = vlaneseq
      %v1459 = vshrl.u32 %v1458, 7
      %v1460 = vsub.s32 0, %v1459
      %v1461 = vrot.slane %v255, %v1460
      %v1462 = vmul.f32 %v1457, %v1461
      %s1463 = scalar_lea.vmem [#allocation3], 128
      %1464 = vst.msk [vmem:[%s1463 + $0x8] sm:$0xff] %vm190, %v1462
      %v1465 = vld [vmem:[#allocation3 + $0x8] sm:$0xff]
      %v1466 = vld [vmem:[%s525 + $0x8] sm:$0xff]
      %v1467 = vld [vmem:[%s659 + $0x8] sm:$0xff]
      %v1468 = vld [vmem:[%s793 + $0x8] sm:$0xff]
      %1470 = vrot.lane.b32.xlu0 %v1468, 8
      %v1471 = vpop.permute.xlu0 %1470
      %v1473 = vadd.f32 %v1465, %v1471
      %v1474 = vld [vmem:[%s927 + $0x8] sm:$0xff]
      %1476 = vrot.lane.b32.xlu0 %v1474, 8
      %v1477 = vpop.permute.xlu0 %1476
      %v1479 = vadd.f32 %v1466, %v1477
      %v1480 = vld [vmem:[%s1061] sm:$0xff]
      %v1481 = vld [vmem:[%s1061 + $0x8] sm:$0xff]
      %1484 = vrot.lane.b32.xlu0 %v1480, 8
      %v1485 = vpop.permute.xlu0 %1484
      %1486 = vrot.lane.b32.xlu0 %v1481, 8
      %v1487 = vpop.permute.xlu0 %1486
      %v1488 = vsel %vm314, %v1485, %v1487
      %v1490 = vadd.f32 %v1467, %v1488
      %v1491 = vld [vmem:[%s1195] sm:$0xff]
      %v1492 = vld [vmem:[%s1195 + $0x8] sm:$0xff]
      %1495 = vrot.lane.b32.xlu0 %v1491, 16
      %v1496 = vpop.permute.xlu0 %1495
      %1497 = vrot.lane.b32.xlu0 %v1492, 16
      %v1498 = vpop.permute.xlu0 %1497
      %vm1499 = vcmask 130048
      %v1500 = vsel %vm1499, %v1496, %v1498
      %v1502 = vadd.f32 %v1473, %v1500
      %v1503 = vld [vmem:[%s1329] sm:$0xff]
      %v1504 = vld [vmem:[%s1329 + $0x8] sm:$0xff]
      %1507 = vrot.lane.b32.xlu0 %v1503, 16
      %v1508 = vpop.permute.xlu0 %1507
      %1509 = vrot.lane.b32.xlu0 %v1504, 16
      %v1510 = vpop.permute.xlu0 %1509
      %v1511 = vsel %vm1499, %v1508, %v1510
      %v1513 = vadd.f32 %v1479, %v1511
      %v1514 = vld [vmem:[%s1463] sm:$0xff]
      %v1515 = vld [vmem:[%s1463 + $0x8] sm:$0xff]
      %1518 = vrot.lane.b32.xlu0 %v1514, 16
      %v1519 = vpop.permute.xlu0 %1518
      %1520 = vrot.lane.b32.xlu0 %v1515, 16
      %v1521 = vpop.permute.xlu0 %1520
      %v1522 = vsel %vm1499, %v1519, %v1521
      %v1524 = vadd.f32 %v1490, %v1522
      %1526 = vrot.lane.b32.xlu0 %v1513, 1
      %v1527 = vpop.permute.xlu0 %1526
      %v1529 = vadd.f32 %v1502, %v1527
      %1531 = vrot.lane.b32.xlu0 %v1524, 2
      %v1532 = vpop.permute.xlu0 %1531
      %v1534 = vadd.f32 %v1529, %v1532
      %v1535 = vpack.c.bf16 %v1534, %v1534
      %v1537 = vunpack.c.l.b16 %v1535
      %v1538 = vpack.c.b16 %v1537, %v1537
      %1539 = vrot.lane.b32.xlu0 %v1538, 119
      %v1540 = vpop.permute.xlu0 %1539
      %vm1542 = vcmask 519168
      %1543 = vst.msk [vmem:[%s163] sm:$0xf] %vm1542, %v1540
      %s1544 = scalar_lea.vmem %s153, 72
      %v1545 = vld [vmem:[%s1544] sm:$0xf]
      %v1546 = vld [vmem:[%s1544 + $0x4] sm:$0x1]
      %v1547 = vunpack.c.l.bf16 %v1545
      %v1548 = vunpack.c.l.bf16 %v1546
      %v1549 = vsel %vm190, %v1547, -inf
      %v1550 = vsel %vm261, %v1548, -inf
      %v1551 = vmax.f32 %v1549, %v1550
      %v1552 = vrot.slane %v1551, 4
      %v1553 = vmax.f32 %v1551, %v1552
      %v1554 = vrot.slane %v1553, 2
      %v1555 = vmax.f32 %v1553, %v1554
      %v1556 = vrot.slane %v1555, 1
      %v1557 = vmax.f32 %v1555, %v1556
      %v1558 = vsub.f32 %v1547, %v1557
      %v1559 = vsub.f32 %v1548, %v1557
      %v1560 = vmul.f32 %v1558, 1.442695
      %v1561 = vpow.pop %v1560
      %v1562 = vmul.f32 %v1559, 1.442695
      %v1563 = vpow.pop %v1562
      %v1564 = vsel %vm190, %v1561, 0.0
      %v1565 = vsel %vm261, %v1563, 0.0
      %v1566 = vadd.f32 %v1564, %v1565
      %v1567 = vrot.slane %v1566, 4
      %v1568 = vadd.f32 %v1566, %v1567
      %v1569 = vrot.slane %v1568, 2
      %v1570 = vadd.f32 %v1568, %v1569
      %v1571 = vrot.slane %v1570, 1
      %v1572 = vadd.f32 %v1570, %v1571
      %v1573 = vrcp.pop %v1572
      %v1574 = vmul.f32 %v1561, %v1573
      %v1575 = vmul.f32 %v1563, %v1573
      %v1576 = vmul.f32 %v1574, %v254
      %v1577 = vmul.f32 %v1575, %v255
      %v1578 = vld [vmem:[#allocation2 + $0x10] sm:$0xff]
      %v1579 = vld [vmem:[#allocation2 + $0x18] sm:$0xff]
      %v1580 = vlaneseq
      %v1581 = vshrl.u32 %v1580, 7
      %v1582 = vsub.s32 0, %v1581
      %v1583 = vrot.slane %v1576, %v1582
      %1586 = vrot.lane.b32.xlu0 %v1578, 9
      %v1587 = vpop.permute.xlu0 %1586
      %1588 = vrot.lane.b32.xlu0 %v1579, 9
      %v1589 = vpop.permute.xlu0 %1588
      %v1590 = vsel %vm302, %v1587, %v1589
      %v1592 = vmul.f32 %v1583, %v1590
      %v1593 = vlaneseq
      %v1594 = vshrl.u32 %v1593, 7
      %v1595 = vsub.s32 1, %v1594
      %v1596 = vrot.slane %v1576, %v1595
      %1597 = vrot.lane.b32.xlu0 %v1578, 8
      %v1598 = vpop.permute.xlu0 %1597
      %1599 = vrot.lane.b32.xlu0 %v1579, 8
      %v1600 = vpop.permute.xlu0 %1599
      %v1601 = vsel %vm314, %v1598, %v1600
      %v1603 = vmul.f32 %v1596, %v1601
      %v1604 = vlaneseq
      %v1605 = vshrl.u32 %v1604, 7
      %v1606 = vsub.s32 2, %v1605
      %v1607 = vrot.slane %v1576, %v1606
      %1608 = vrot.lane.b32.xlu0 %v1578, 7
      %v1609 = vpop.permute.xlu0 %1608
      %1610 = vrot.lane.b32.xlu0 %v1579, 7
      %v1611 = vpop.permute.xlu0 %1610
      %v1612 = vsel %vm326, %v1609, %v1611
      %v1614 = vmul.f32 %v1607, %v1612
      %v1615 = vlaneseq
      %v1616 = vshrl.u32 %v1615, 7
      %v1617 = vsub.s32 3, %v1616
      %v1618 = vrot.slane %v1576, %v1617
      %1619 = vrot.lane.b32.xlu0 %v1578, 1
      %v1620 = vpop.permute.xlu0 %1619
      %1621 = vrot.lane.b32.xlu0 %v1579, 1
      %v1622 = vpop.permute.xlu0 %1621
      %v1623 = vsel %vm338, %v1620, %v1622
      %v1625 = vmul.f32 %v1618, %v1623
      %v1626 = vadd.f32 %v1592, %v1625
      %v1627 = vlaneseq
      %v1628 = vshrl.u32 %v1627, 7
      %v1629 = vsub.s32 4, %v1628
      %v1630 = vrot.slane %v1576, %v1629
      %v1631 = vmul.f32 %v1630, %v1579
      %v1632 = vadd.f32 %v1603, %v1631
      %v1633 = vlaneseq
      %v1634 = vshrl.u32 %v1633, 7
      %v1635 = vsub.s32 5, %v1634
      %v1636 = vrot.slane %v1576, %v1635
      %1637 = vrot.lane.b32.xlu0 %v1579, 127
      %v1638 = vpop.permute.xlu0 %1637
      %v1640 = vmul.f32 %v1636, %v1638
      %v1641 = vadd.f32 %v1614, %v1640
      %v1642 = vlaneseq
      %v1643 = vshrl.u32 %v1642, 7
      %v1644 = vsub.s32 6, %v1643
      %v1645 = vrot.slane %v1576, %v1644
      %1646 = vrot.lane.b32.xlu0 %v1579, 121
      %v1647 = vpop.permute.xlu0 %1646
      %v1649 = vmul.f32 %v1645, %v1647
      %v1650 = vadd.f32 %v1626, %v1649
      %v1651 = vlaneseq
      %v1652 = vshrl.u32 %v1651, 7
      %v1653 = vsub.s32 7, %v1652
      %v1654 = vrot.slane %v1576, %v1653
      %1655 = vrot.lane.b32.xlu0 %v1579, 120
      %v1656 = vpop.permute.xlu0 %1655
      %v1658 = vmul.f32 %v1654, %v1656
      %v1659 = vadd.f32 %v1632, %v1658
      %v1660 = vlaneseq
      %v1661 = vshrl.u32 %v1660, 7
      %v1662 = vsub.s32 0, %v1661
      %v1663 = vrot.slane %v1577, %v1662
      %1664 = vrot.lane.b32.xlu0 %v1579, 119
      %v1665 = vpop.permute.xlu0 %1664
      %v1667 = vmul.f32 %v1663, %v1665
      %v1668 = vadd.f32 %v1641, %v1667
      %v1669 = vadd.f32 %v1650, %v1659
      %v1670 = vadd.f32 %v1669, %v1668
      %v1671 = vmul.f32 %v1670, %v390
      %1672 = vst.msk [vmem:[#allocation3 + $0x8] sm:$0xff] %vm190, %v1671
      %s1673 = scalar_lea.vmem %s153, 80
      %v1674 = vld [vmem:[%s1673] sm:$0xf]
      %v1675 = vld [vmem:[%s1673 + $0x4] sm:$0x1]
      %v1676 = vunpack.c.l.bf16 %v1674
      %v1677 = vunpack.c.l.bf16 %v1675
      %v1678 = vsel %vm190, %v1676, -inf
      %v1679 = vsel %vm261, %v1677, -inf
      %v1680 = vmax.f32 %v1678, %v1679
      %v1681 = vrot.slane %v1680, 4
      %v1682 = vmax.f32 %v1680, %v1681
      %v1683 = vrot.slane %v1682, 2
      %v1684 = vmax.f32 %v1682, %v1683
      %v1685 = vrot.slane %v1684, 1
      %v1686 = vmax.f32 %v1684, %v1685
      %v1687 = vsub.f32 %v1676, %v1686
      %v1688 = vsub.f32 %v1677, %v1686
      %v1689 = vmul.f32 %v1687, 1.442695
      %v1690 = vpow.pop %v1689
      %v1691 = vmul.f32 %v1688, 1.442695
      %v1692 = vpow.pop %v1691
      %v1693 = vsel %vm190, %v1690, 0.0
      %v1694 = vsel %vm261, %v1692, 0.0
      %v1695 = vadd.f32 %v1693, %v1694
      %v1696 = vrot.slane %v1695, 4
      %v1697 = vadd.f32 %v1695, %v1696
      %v1698 = vrot.slane %v1697, 2
      %v1699 = vadd.f32 %v1697, %v1698
      %v1700 = vrot.slane %v1699, 1
      %v1701 = vadd.f32 %v1699, %v1700
      %v1702 = vrcp.pop %v1701
      %v1703 = vmul.f32 %v1690, %v1702
      %v1704 = vmul.f32 %v1692, %v1702
      %v1705 = vmul.f32 %v1703, %v254
      %v1706 = vmul.f32 %v1704, %v255
      %v1707 = vld [vmem:[#allocation2 + $0x10] sm:$0xff]
      %v1708 = vld [vmem:[#allocation2 + $0x18] sm:$0xff]
      %v1709 = vlaneseq
      %v1710 = vshrl.u32 %v1709, 7
      %v1711 = vsub.s32 0, %v1710
      %v1712 = vrot.slane %v1705, %v1711
      %1715 = vrot.lane.b32.xlu0 %v1707, 9
      %v1716 = vpop.permute.xlu0 %1715
      %1717 = vrot.lane.b32.xlu0 %v1708, 9
      %v1718 = vpop.permute.xlu0 %1717
      %v1719 = vsel %vm302, %v1716, %v1718
      %v1721 = vmul.f32 %v1712, %v1719
      %v1722 = vlaneseq
      %v1723 = vshrl.u32 %v1722, 7
      %v1724 = vsub.s32 1, %v1723
      %v1725 = vrot.slane %v1705, %v1724
      %1726 = vrot.lane.b32.xlu0 %v1707, 8
      %v1727 = vpop.permute.xlu0 %1726
      %1728 = vrot.lane.b32.xlu0 %v1708, 8
      %v1729 = vpop.permute.xlu0 %1728
      %v1730 = vsel %vm314, %v1727, %v1729
      %v1732 = vmul.f32 %v1725, %v1730
      %v1733 = vlaneseq
      %v1734 = vshrl.u32 %v1733, 7
      %v1735 = vsub.s32 2, %v1734
      %v1736 = vrot.slane %v1705, %v1735
      %1737 = vrot.lane.b32.xlu0 %v1707, 7
      %v1738 = vpop.permute.xlu0 %1737
      %1739 = vrot.lane.b32.xlu0 %v1708, 7
      %v1740 = vpop.permute.xlu0 %1739
      %v1741 = vsel %vm326, %v1738, %v1740
      %v1743 = vmul.f32 %v1736, %v1741
      %v1744 = vlaneseq
      %v1745 = vshrl.u32 %v1744, 7
      %v1746 = vsub.s32 3, %v1745
      %v1747 = vrot.slane %v1705, %v1746
      %1748 = vrot.lane.b32.xlu0 %v1707, 1
      %v1749 = vpop.permute.xlu0 %1748
      %1750 = vrot.lane.b32.xlu0 %v1708, 1
      %v1751 = vpop.permute.xlu0 %1750
      %v1752 = vsel %vm338, %v1749, %v1751
      %v1754 = vmul.f32 %v1747, %v1752
      %v1755 = vadd.f32 %v1721, %v1754
      %v1756 = vlaneseq
      %v1757 = vshrl.u32 %v1756, 7
      %v1758 = vsub.s32 4, %v1757
      %v1759 = vrot.slane %v1705, %v1758
      %v1760 = vmul.f32 %v1759, %v1708
      %v1761 = vadd.f32 %v1732, %v1760
      %v1762 = vlaneseq
      %v1763 = vshrl.u32 %v1762, 7
      %v1764 = vsub.s32 5, %v1763
      %v1765 = vrot.slane %v1705, %v1764
      %1766 = vrot.lane.b32.xlu0 %v1708, 127
      %v1767 = vpop.permute.xlu0 %1766
      %v1769 = vmul.f32 %v1765, %v1767
      %v1770 = vadd.f32 %v1743, %v1769
      %v1771 = vlaneseq
      %v1772 = vshrl.u32 %v1771, 7
      %v1773 = vsub.s32 6, %v1772
      %v1774 = vrot.slane %v1705, %v1773
      %1775 = vrot.lane.b32.xlu0 %v1708, 121
      %v1776 = vpop.permute.xlu0 %1775
      %v1778 = vmul.f32 %v1774, %v1776
      %v1779 = vadd.f32 %v1755, %v1778
      %v1780 = vlaneseq
      %v1781 = vshrl.u32 %v1780, 7
      %v1782 = vsub.s32 7, %v1781
      %v1783 = vrot.slane %v1705, %v1782
      %1784 = vrot.lane.b32.xlu0 %v1708, 120
      %v1785 = vpop.permute.xlu0 %1784
      %v1787 = vmul.f32 %v1783, %v1785
      %v1788 = vadd.f32 %v1761, %v1787
      %v1789 = vlaneseq
      %v1790 = vshrl.u32 %v1789, 7
      %v1791 = vsub.s32 0, %v1790
      %v1792 = vrot.slane %v1706, %v1791
      %1793 = vrot.lane.b32.xlu0 %v1708, 119
      %v1794 = vpop.permute.xlu0 %1793
      %v1796 = vmul.f32 %v1792, %v1794
      %v1797 = vadd.f32 %v1770, %v1796
      %v1798 = vadd.f32 %v1779, %v1788
      %v1799 = vadd.f32 %v1798, %v1797
      %v1800 = vmul.f32 %v1799, %v523
      %1801 = vst.msk [vmem:[%s525 + $0x8] sm:$0xff] %vm190, %v1800
      %s1802 = scalar_lea.vmem %s153, 88
      %v1803 = vld [vmem:[%s1802] sm:$0xf]
      %v1804 = vld [vmem:[%s1802 + $0x4] sm:$0x1]
      %v1805 = vunpack.c.l.bf16 %v1803
      %v1806 = vunpack.c.l.bf16 %v1804
      %v1807 = vsel %vm190, %v1805, -inf
      %v1808 = vsel %vm261, %v1806, -inf
      %v1809 = vmax.f32 %v1807, %v1808
      %v1810 = vrot.slane %v1809, 4
      %v1811 = vmax.f32 %v1809, %v1810
      %v1812 = vrot.slane %v1811, 2
      %v1813 = vmax.f32 %v1811, %v1812
      %v1814 = vrot.slane %v1813, 1
      %v1815 = vmax.f32 %v1813, %v1814
      %v1816 = vsub.f32 %v1805, %v1815
      %v1817 = vsub.f32 %v1806, %v1815
      %v1818 = vmul.f32 %v1816, 1.442695
      %v1819 = vpow.pop %v1818
      %v1820 = vmul.f32 %v1817, 1.442695
      %v1821 = vpow.pop %v1820
      %v1822 = vsel %vm190, %v1819, 0.0
      %v1823 = vsel %vm261, %v1821, 0.0
      %v1824 = vadd.f32 %v1822, %v1823
      %v1825 = vrot.slane %v1824, 4
      %v1826 = vadd.f32 %v1824, %v1825
      %v1827 = vrot.slane %v1826, 2
      %v1828 = vadd.f32 %v1826, %v1827
      %v1829 = vrot.slane %v1828, 1
      %v1830 = vadd.f32 %v1828, %v1829
      %v1831 = vrcp.pop %v1830
      %v1832 = vmul.f32 %v1819, %v1831
      %v1833 = vmul.f32 %v1821, %v1831
      %v1834 = vmul.f32 %v1832, %v254
      %v1835 = vmul.f32 %v1833, %v255
      %v1836 = vld [vmem:[#allocation2 + $0x10] sm:$0xff]
      %v1837 = vld [vmem:[#allocation2 + $0x18] sm:$0xff]
      %v1838 = vlaneseq
      %v1839 = vshrl.u32 %v1838, 7
      %v1840 = vsub.s32 0, %v1839
      %v1841 = vrot.slane %v1834, %v1840
      %1844 = vrot.lane.b32.xlu0 %v1836, 9
      %v1845 = vpop.permute.xlu0 %1844
      %1846 = vrot.lane.b32.xlu0 %v1837, 9
      %v1847 = vpop.permute.xlu0 %1846
      %v1848 = vsel %vm302, %v1845, %v1847
      %v1850 = vmul.f32 %v1841, %v1848
      %v1851 = vlaneseq
      %v1852 = vshrl.u32 %v1851, 7
      %v1853 = vsub.s32 1, %v1852
      %v1854 = vrot.slane %v1834, %v1853
      %1855 = vrot.lane.b32.xlu0 %v1836, 8
      %v1856 = vpop.permute.xlu0 %1855
      %1857 = vrot.lane.b32.xlu0 %v1837, 8
      %v1858 = vpop.permute.xlu0 %1857
      %v1859 = vsel %vm314, %v1856, %v1858
      %v1861 = vmul.f32 %v1854, %v1859
      %v1862 = vlaneseq
      %v1863 = vshrl.u32 %v1862, 7
      %v1864 = vsub.s32 2, %v1863
      %v1865 = vrot.slane %v1834, %v1864
      %1866 = vrot.lane.b32.xlu0 %v1836, 7
      %v1867 = vpop.permute.xlu0 %1866
      %1868 = vrot.lane.b32.xlu0 %v1837, 7
      %v1869 = vpop.permute.xlu0 %1868
      %v1870 = vsel %vm326, %v1867, %v1869
      %v1872 = vmul.f32 %v1865, %v1870
      %v1873 = vlaneseq
      %v1874 = vshrl.u32 %v1873, 7
      %v1875 = vsub.s32 3, %v1874
      %v1876 = vrot.slane %v1834, %v1875
      %1877 = vrot.lane.b32.xlu0 %v1836, 1
      %v1878 = vpop.permute.xlu0 %1877
      %1879 = vrot.lane.b32.xlu0 %v1837, 1
      %v1880 = vpop.permute.xlu0 %1879
      %v1881 = vsel %vm338, %v1878, %v1880
      %v1883 = vmul.f32 %v1876, %v1881
      %v1884 = vadd.f32 %v1850, %v1883
      %v1885 = vlaneseq
      %v1886 = vshrl.u32 %v1885, 7
      %v1887 = vsub.s32 4, %v1886
      %v1888 = vrot.slane %v1834, %v1887
      %v1889 = vmul.f32 %v1888, %v1837
      %v1890 = vadd.f32 %v1861, %v1889
      %v1891 = vlaneseq
      %v1892 = vshrl.u32 %v1891, 7
      %v1893 = vsub.s32 5, %v1892
      %v1894 = vrot.slane %v1834, %v1893
      %1895 = vrot.lane.b32.xlu0 %v1837, 127
      %v1896 = vpop.permute.xlu0 %1895
      %v1898 = vmul.f32 %v1894, %v1896
      %v1899 = vadd.f32 %v1872, %v1898
      %v1900 = vlaneseq
      %v1901 = vshrl.u32 %v1900, 7
      %v1902 = vsub.s32 6, %v1901
      %v1903 = vrot.slane %v1834, %v1902
      %1904 = vrot.lane.b32.xlu0 %v1837, 121
      %v1905 = vpop.permute.xlu0 %1904
      %v1907 = vmul.f32 %v1903, %v1905
      %v1908 = vadd.f32 %v1884, %v1907
      %v1909 = vlaneseq
      %v1910 = vshrl.u32 %v1909, 7
      %v1911 = vsub.s32 7, %v1910
      %v1912 = vrot.slane %v1834, %v1911
      %1913 = vrot.lane.b32.xlu0 %v1837, 120
      %v1914 = vpop.permute.xlu0 %1913
      %v1916 = vmul.f32 %v1912, %v1914
      %v1917 = vadd.f32 %v1890, %v1916
      %v1918 = vlaneseq
      %v1919 = vshrl.u32 %v1918, 7
      %v1920 = vsub.s32 0, %v1919
      %v1921 = vrot.slane %v1835, %v1920
      %1922 = vrot.lane.b32.xlu0 %v1837, 119
      %v1923 = vpop.permute.xlu0 %1922
      %v1925 = vmul.f32 %v1921, %v1923
      %v1926 = vadd.f32 %v1899, %v1925
      %v1927 = vadd.f32 %v1908, %v1917
      %v1928 = vadd.f32 %v1927, %v1926
      %v1929 = vmul.f32 %v1928, %v657
      %1930 = vst.msk [vmem:[%s659 + $0x8] sm:$0xff] %vm190, %v1929
      %s1931 = scalar_lea.vmem %s153, 96
      %v1932 = vld [vmem:[%s1931] sm:$0xf]
      %v1933 = vld [vmem:[%s1931 + $0x4] sm:$0x1]
      %v1934 = vunpack.c.l.bf16 %v1932
      %v1935 = vunpack.c.l.bf16 %v1933
      %v1936 = vsel %vm190, %v1934, -inf
      %v1937 = vsel %vm261, %v1935, -inf
      %v1938 = vmax.f32 %v1936, %v1937
      %v1939 = vrot.slane %v1938, 4
      %v1940 = vmax.f32 %v1938, %v1939
      %v1941 = vrot.slane %v1940, 2
      %v1942 = vmax.f32 %v1940, %v1941
      %v1943 = vrot.slane %v1942, 1
      %v1944 = vmax.f32 %v1942, %v1943
      %v1945 = vsub.f32 %v1934, %v1944
      %v1946 = vsub.f32 %v1935, %v1944
      %v1947 = vmul.f32 %v1945, 1.442695
      %v1948 = vpow.pop %v1947
      %v1949 = vmul.f32 %v1946, 1.442695
      %v1950 = vpow.pop %v1949
      %v1951 = vsel %vm190, %v1948, 0.0
      %v1952 = vsel %vm261, %v1950, 0.0
      %v1953 = vadd.f32 %v1951, %v1952
      %v1954 = vrot.slane %v1953, 4
      %v1955 = vadd.f32 %v1953, %v1954
      %v1956 = vrot.slane %v1955, 2
      %v1957 = vadd.f32 %v1955, %v1956
      %v1958 = vrot.slane %v1957, 1
      %v1959 = vadd.f32 %v1957, %v1958
      %v1960 = vrcp.pop %v1959
      %v1961 = vmul.f32 %v1948, %v1960
      %v1962 = vmul.f32 %v1950, %v1960
      %v1963 = vmul.f32 %v1961, %v254
      %v1964 = vmul.f32 %v1962, %v255
      %v1965 = vld [vmem:[#allocation2 + $0x10] sm:$0xff]
      %v1966 = vld [vmem:[#allocation2 + $0x18] sm:$0xff]
      %v1967 = vlaneseq
      %v1968 = vshrl.u32 %v1967, 7
      %v1969 = vsub.s32 0, %v1968
      %v1970 = vrot.slane %v1963, %v1969
      %1973 = vrot.lane.b32.xlu0 %v1965, 9
      %v1974 = vpop.permute.xlu0 %1973
      %1975 = vrot.lane.b32.xlu0 %v1966, 9
      %v1976 = vpop.permute.xlu0 %1975
      %v1977 = vsel %vm302, %v1974, %v1976
      %v1979 = vmul.f32 %v1970, %v1977
      %v1980 = vlaneseq
      %v1981 = vshrl.u32 %v1980, 7
      %v1982 = vsub.s32 1, %v1981
      %v1983 = vrot.slane %v1963, %v1982
      %1984 = vrot.lane.b32.xlu0 %v1965, 8
      %v1985 = vpop.permute.xlu0 %1984
      %1986 = vrot.lane.b32.xlu0 %v1966, 8
      %v1987 = vpop.permute.xlu0 %1986
      %v1988 = vsel %vm314, %v1985, %v1987
      %v1990 = vmul.f32 %v1983, %v1988
      %v1991 = vlaneseq
      %v1992 = vshrl.u32 %v1991, 7
      %v1993 = vsub.s32 2, %v1992
      %v1994 = vrot.slane %v1963, %v1993
      %1995 = vrot.lane.b32.xlu0 %v1965, 7
      %v1996 = vpop.permute.xlu0 %1995
      %1997 = vrot.lane.b32.xlu0 %v1966, 7
      %v1998 = vpop.permute.xlu0 %1997
      %v1999 = vsel %vm326, %v1996, %v1998
      %v2001 = vmul.f32 %v1994, %v1999
      %v2002 = vlaneseq
      %v2003 = vshrl.u32 %v2002, 7
      %v2004 = vsub.s32 3, %v2003
      %v2005 = vrot.slane %v1963, %v2004
      %2006 = vrot.lane.b32.xlu0 %v1965, 1
      %v2007 = vpop.permute.xlu0 %2006
      %2008 = vrot.lane.b32.xlu0 %v1966, 1
      %v2009 = vpop.permute.xlu0 %2008
      %v2010 = vsel %vm338, %v2007, %v2009
      %v2012 = vmul.f32 %v2005, %v2010
      %v2013 = vadd.f32 %v1979, %v2012
      %v2014 = vlaneseq
      %v2015 = vshrl.u32 %v2014, 7
      %v2016 = vsub.s32 4, %v2015
      %v2017 = vrot.slane %v1963, %v2016
      %v2018 = vmul.f32 %v2017, %v1966
      %v2019 = vadd.f32 %v1990, %v2018
      %v2020 = vlaneseq
      %v2021 = vshrl.u32 %v2020, 7
      %v2022 = vsub.s32 5, %v2021
      %v2023 = vrot.slane %v1963, %v2022
      %2024 = vrot.lane.b32.xlu0 %v1966, 127
      %v2025 = vpop.permute.xlu0 %2024
      %v2027 = vmul.f32 %v2023, %v2025
      %v2028 = vadd.f32 %v2001, %v2027
      %v2029 = vlaneseq
      %v2030 = vshrl.u32 %v2029, 7
      %v2031 = vsub.s32 6, %v2030
      %v2032 = vrot.slane %v1963, %v2031
      %2033 = vrot.lane.b32.xlu0 %v1966, 121
      %v2034 = vpop.permute.xlu0 %2033
      %v2036 = vmul.f32 %v2032, %v2034
      %v2037 = vadd.f32 %v2013, %v2036
      %v2038 = vlaneseq
      %v2039 = vshrl.u32 %v2038, 7
      %v2040 = vsub.s32 7, %v2039
      %v2041 = vrot.slane %v1963, %v2040
      %2042 = vrot.lane.b32.xlu0 %v1966, 120
      %v2043 = vpop.permute.xlu0 %2042
      %v2045 = vmul.f32 %v2041, %v2043
      %v2046 = vadd.f32 %v2019, %v2045
      %v2047 = vlaneseq
      %v2048 = vshrl.u32 %v2047, 7
      %v2049 = vsub.s32 0, %v2048
      %v2050 = vrot.slane %v1964, %v2049
      %2051 = vrot.lane.b32.xlu0 %v1966, 119
      %v2052 = vpop.permute.xlu0 %2051
      %v2054 = vmul.f32 %v2050, %v2052
      %v2055 = vadd.f32 %v2028, %v2054
      %v2056 = vadd.f32 %v2037, %v2046
      %v2057 = vadd.f32 %v2056, %v2055
      %v2058 = vmul.f32 %v2057, %v791
      %2059 = vst.msk [vmem:[%s793 + $0x8] sm:$0xff] %vm190, %v2058
      %s2060 = scalar_lea.vmem %s153, 104
      %v2061 = vld [vmem:[%s2060] sm:$0xf]
      %v2062 = vld [vmem:[%s2060 + $0x4] sm:$0x1]
      %v2063 = vunpack.c.l.bf16 %v2061
      %v2064 = vunpack.c.l.bf16 %v2062
      %v2065 = vsel %vm190, %v2063, -inf
      %v2066 = vsel %vm261, %v2064, -inf
      %v2067 = vmax.f32 %v2065, %v2066
      %v2068 = vrot.slane %v2067, 4
      %v2069 = vmax.f32 %v2067, %v2068
      %v2070 = vrot.slane %v2069, 2
      %v2071 = vmax.f32 %v2069, %v2070
      %v2072 = vrot.slane %v2071, 1
      %v2073 = vmax.f32 %v2071, %v2072
      %v2074 = vsub.f32 %v2063, %v2073
      %v2075 = vsub.f32 %v2064, %v2073
      %v2076 = vmul.f32 %v2074, 1.442695
      %v2077 = vpow.pop %v2076
      %v2078 = vmul.f32 %v2075, 1.442695
      %v2079 = vpow.pop %v2078
      %v2080 = vsel %vm190, %v2077, 0.0
      %v2081 = vsel %vm261, %v2079, 0.0
      %v2082 = vadd.f32 %v2080, %v2081
      %v2083 = vrot.slane %v2082, 4
      %v2084 = vadd.f32 %v2082, %v2083
      %v2085 = vrot.slane %v2084, 2
      %v2086 = vadd.f32 %v2084, %v2085
      %v2087 = vrot.slane %v2086, 1
      %v2088 = vadd.f32 %v2086, %v2087
      %v2089 = vrcp.pop %v2088
      %v2090 = vmul.f32 %v2077, %v2089
      %v2091 = vmul.f32 %v2079, %v2089
      %v2092 = vmul.f32 %v2090, %v254
      %v2093 = vmul.f32 %v2091, %v255
      %v2094 = vld [vmem:[#allocation2 + $0x10] sm:$0xff]
      %v2095 = vld [vmem:[#allocation2 + $0x18] sm:$0xff]
      %v2096 = vlaneseq
      %v2097 = vshrl.u32 %v2096, 7
      %v2098 = vsub.s32 0, %v2097
      %v2099 = vrot.slane %v2092, %v2098
      %2102 = vrot.lane.b32.xlu0 %v2094, 9
      %v2103 = vpop.permute.xlu0 %2102
      %2104 = vrot.lane.b32.xlu0 %v2095, 9
      %v2105 = vpop.permute.xlu0 %2104
      %v2106 = vsel %vm302, %v2103, %v2105
      %v2108 = vmul.f32 %v2099, %v2106
      %v2109 = vlaneseq
      %v2110 = vshrl.u32 %v2109, 7
      %v2111 = vsub.s32 1, %v2110
      %v2112 = vrot.slane %v2092, %v2111
      %2113 = vrot.lane.b32.xlu0 %v2094, 8
      %v2114 = vpop.permute.xlu0 %2113
      %2115 = vrot.lane.b32.xlu0 %v2095, 8
      %v2116 = vpop.permute.xlu0 %2115
      %v2117 = vsel %vm314, %v2114, %v2116
      %v2119 = vmul.f32 %v2112, %v2117
      %v2120 = vlaneseq
      %v2121 = vshrl.u32 %v2120, 7
      %v2122 = vsub.s32 2, %v2121
      %v2123 = vrot.slane %v2092, %v2122
      %2124 = vrot.lane.b32.xlu0 %v2094, 7
      %v2125 = vpop.permute.xlu0 %2124
      %2126 = vrot.lane.b32.xlu0 %v2095, 7
      %v2127 = vpop.permute.xlu0 %2126
      %v2128 = vsel %vm326, %v2125, %v2127
      %v2130 = vmul.f32 %v2123, %v2128
      %v2131 = vlaneseq
      %v2132 = vshrl.u32 %v2131, 7
      %v2133 = vsub.s32 3, %v2132
      %v2134 = vrot.slane %v2092, %v2133
      %2135 = vrot.lane.b32.xlu0 %v2094, 1
      %v2136 = vpop.permute.xlu0 %2135
      %2137 = vrot.lane.b32.xlu0 %v2095, 1
      %v2138 = vpop.permute.xlu0 %2137
      %v2139 = vsel %vm338, %v2136, %v2138
      %v2141 = vmul.f32 %v2134, %v2139
      %v2142 = vadd.f32 %v2108, %v2141
      %v2143 = vlaneseq
      %v2144 = vshrl.u32 %v2143, 7
      %v2145 = vsub.s32 4, %v2144
      %v2146 = vrot.slane %v2092, %v2145
      %v2147 = vmul.f32 %v2146, %v2095
      %v2148 = vadd.f32 %v2119, %v2147
      %v2149 = vlaneseq
      %v2150 = vshrl.u32 %v2149, 7
      %v2151 = vsub.s32 5, %v2150
      %v2152 = vrot.slane %v2092, %v2151
      %2153 = vrot.lane.b32.xlu0 %v2095, 127
      %v2154 = vpop.permute.xlu0 %2153
      %v2156 = vmul.f32 %v2152, %v2154
      %v2157 = vadd.f32 %v2130, %v2156
      %v2158 = vlaneseq
      %v2159 = vshrl.u32 %v2158, 7
      %v2160 = vsub.s32 6, %v2159
      %v2161 = vrot.slane %v2092, %v2160
      %2162 = vrot.lane.b32.xlu0 %v2095, 121
      %v2163 = vpop.permute.xlu0 %2162
      %v2165 = vmul.f32 %v2161, %v2163
      %v2166 = vadd.f32 %v2142, %v2165
      %v2167 = vlaneseq
      %v2168 = vshrl.u32 %v2167, 7
      %v2169 = vsub.s32 7, %v2168
      %v2170 = vrot.slane %v2092, %v2169
      %2171 = vrot.lane.b32.xlu0 %v2095, 120
      %v2172 = vpop.permute.xlu0 %2171
      %v2174 = vmul.f32 %v2170, %v2172
      %v2175 = vadd.f32 %v2148, %v2174
      %v2176 = vlaneseq
      %v2177 = vshrl.u32 %v2176, 7
      %v2178 = vsub.s32 0, %v2177
      %v2179 = vrot.slane %v2093, %v2178
      %2180 = vrot.lane.b32.xlu0 %v2095, 119
      %v2181 = vpop.permute.xlu0 %2180
      %v2183 = vmul.f32 %v2179, %v2181
      %v2184 = vadd.f32 %v2157, %v2183
      %v2185 = vadd.f32 %v2166, %v2175
      %v2186 = vadd.f32 %v2185, %v2184
      %v2187 = vmul.f32 %v2186, %v925
      %2188 = vst.msk [vmem:[%s927 + $0x8] sm:$0xff] %vm190, %v2187
      %s2189 = scalar_lea.vmem %s153, 112
      %v2190 = vld [vmem:[%s2189] sm:$0xf]
      %v2191 = vld [vmem:[%s2189 + $0x4] sm:$0x1]
      %v2192 = vunpack.c.l.bf16 %v2190
      %v2193 = vunpack.c.l.bf16 %v2191
      %v2194 = vsel %vm190, %v2192, -inf
      %v2195 = vsel %vm261, %v2193, -inf
      %v2196 = vmax.f32 %v2194, %v2195
      %v2197 = vrot.slane %v2196, 4
      %v2198 = vmax.f32 %v2196, %v2197
      %v2199 = vrot.slane %v2198, 2
      %v2200 = vmax.f32 %v2198, %v2199
      %v2201 = vrot.slane %v2200, 1
      %v2202 = vmax.f32 %v2200, %v2201
      %v2203 = vsub.f32 %v2192, %v2202
      %v2204 = vsub.f32 %v2193, %v2202
      %v2205 = vmul.f32 %v2203, 1.442695
      %v2206 = vpow.pop %v2205
      %v2207 = vmul.f32 %v2204, 1.442695
      %v2208 = vpow.pop %v2207
      %v2209 = vsel %vm190, %v2206, 0.0
      %v2210 = vsel %vm261, %v2208, 0.0
      %v2211 = vadd.f32 %v2209, %v2210
      %v2212 = vrot.slane %v2211, 4
      %v2213 = vadd.f32 %v2211, %v2212
      %v2214 = vrot.slane %v2213, 2
      %v2215 = vadd.f32 %v2213, %v2214
      %v2216 = vrot.slane %v2215, 1
      %v2217 = vadd.f32 %v2215, %v2216
      %v2218 = vrcp.pop %v2217
      %v2219 = vmul.f32 %v2206, %v2218
      %v2220 = vmul.f32 %v2208, %v2218
      %v2221 = vmul.f32 %v2219, %v254
      %v2222 = vmul.f32 %v2220, %v255
      %v2223 = vld [vmem:[#allocation2 + $0x10] sm:$0xff]
      %v2224 = vld [vmem:[#allocation2 + $0x18] sm:$0xff]
      %v2225 = vlaneseq
      %v2226 = vshrl.u32 %v2225, 7
      %v2227 = vsub.s32 0, %v2226
      %v2228 = vrot.slane %v2221, %v2227
      %2231 = vrot.lane.b32.xlu0 %v2223, 9
      %v2232 = vpop.permute.xlu0 %2231
      %2233 = vrot.lane.b32.xlu0 %v2224, 9
      %v2234 = vpop.permute.xlu0 %2233
      %v2235 = vsel %vm302, %v2232, %v2234
      %v2237 = vmul.f32 %v2228, %v2235
      %v2238 = vlaneseq
      %v2239 = vshrl.u32 %v2238, 7
      %v2240 = vsub.s32 1, %v2239
      %v2241 = vrot.slane %v2221, %v2240
      %2242 = vrot.lane.b32.xlu0 %v2223, 8
      %v2243 = vpop.permute.xlu0 %2242
      %2244 = vrot.lane.b32.xlu0 %v2224, 8
      %v2245 = vpop.permute.xlu0 %2244
      %v2246 = vsel %vm314, %v2243, %v2245
      %v2248 = vmul.f32 %v2241, %v2246
      %v2249 = vlaneseq
      %v2250 = vshrl.u32 %v2249, 7
      %v2251 = vsub.s32 2, %v2250
      %v2252 = vrot.slane %v2221, %v2251
      %2253 = vrot.lane.b32.xlu0 %v2223, 7
      %v2254 = vpop.permute.xlu0 %2253
      %2255 = vrot.lane.b32.xlu0 %v2224, 7
      %v2256 = vpop.permute.xlu0 %2255
      %v2257 = vsel %vm326, %v2254, %v2256
      %v2259 = vmul.f32 %v2252, %v2257
      %v2260 = vlaneseq
      %v2261 = vshrl.u32 %v2260, 7
      %v2262 = vsub.s32 3, %v2261
      %v2263 = vrot.slane %v2221, %v2262
      %2264 = vrot.lane.b32.xlu0 %v2223, 1
      %v2265 = vpop.permute.xlu0 %2264
      %2266 = vrot.lane.b32.xlu0 %v2224, 1
      %v2267 = vpop.permute.xlu0 %2266
      %v2268 = vsel %vm338, %v2265, %v2267
      %v2270 = vmul.f32 %v2263, %v2268
      %v2271 = vadd.f32 %v2237, %v2270
      %v2272 = vlaneseq
      %v2273 = vshrl.u32 %v2272, 7
      %v2274 = vsub.s32 4, %v2273
      %v2275 = vrot.slane %v2221, %v2274
      %v2276 = vmul.f32 %v2275, %v2224
      %v2277 = vadd.f32 %v2248, %v2276
      %v2278 = vlaneseq
      %v2279 = vshrl.u32 %v2278, 7
      %v2280 = vsub.s32 5, %v2279
      %v2281 = vrot.slane %v2221, %v2280
      %2282 = vrot.lane.b32.xlu0 %v2224, 127
      %v2283 = vpop.permute.xlu0 %2282
      %v2285 = vmul.f32 %v2281, %v2283
      %v2286 = vadd.f32 %v2259, %v2285
      %v2287 = vlaneseq
      %v2288 = vshrl.u32 %v2287, 7
      %v2289 = vsub.s32 6, %v2288
      %v2290 = vrot.slane %v2221, %v2289
      %2291 = vrot.lane.b32.xlu0 %v2224, 121
      %v2292 = vpop.permute.xlu0 %2291
      %v2294 = vmul.f32 %v2290, %v2292
      %v2295 = vadd.f32 %v2271, %v2294
      %v2296 = vlaneseq
      %v2297 = vshrl.u32 %v2296, 7
      %v2298 = vsub.s32 7, %v2297
      %v2299 = vrot.slane %v2221, %v2298
      %2300 = vrot.lane.b32.xlu0 %v2224, 120
      %v2301 = vpop.permute.xlu0 %2300
      %v2303 = vmul.f32 %v2299, %v2301
      %v2304 = vadd.f32 %v2277, %v2303
      %v2305 = vlaneseq
      %v2306 = vshrl.u32 %v2305, 7
      %v2307 = vsub.s32 0, %v2306
      %v2308 = vrot.slane %v2222, %v2307
      %2309 = vrot.lane.b32.xlu0 %v2224, 119
      %v2310 = vpop.permute.xlu0 %2309
      %v2312 = vmul.f32 %v2308, %v2310
      %v2313 = vadd.f32 %v2286, %v2312
      %v2314 = vadd.f32 %v2295, %v2304
      %v2315 = vadd.f32 %v2314, %v2313
      %v2316 = vmul.f32 %v2315, %v1059
      %2317 = vst.msk [vmem:[%s1061 + $0x8] sm:$0xff] %vm190, %v2316
      %s2318 = scalar_lea.vmem %s153, 120
      %v2319 = vld [vmem:[%s2318] sm:$0xf]
      %v2320 = vld [vmem:[%s2318 + $0x4] sm:$0x1]
      %v2321 = vunpack.c.l.bf16 %v2319
      %v2322 = vunpack.c.l.bf16 %v2320
      %v2323 = vsel %vm190, %v2321, -inf
      %v2324 = vsel %vm261, %v2322, -inf
      %v2325 = vmax.f32 %v2323, %v2324
      %v2326 = vrot.slane %v2325, 4
      %v2327 = vmax.f32 %v2325, %v2326
      %v2328 = vrot.slane %v2327, 2
      %v2329 = vmax.f32 %v2327, %v2328
      %v2330 = vrot.slane %v2329, 1
      %v2331 = vmax.f32 %v2329, %v2330
      %v2332 = vsub.f32 %v2321, %v2331
      %v2333 = vsub.f32 %v2322, %v2331
      %v2334 = vmul.f32 %v2332, 1.442695
      %v2335 = vpow.pop %v2334
      %v2336 = vmul.f32 %v2333, 1.442695
      %v2337 = vpow.pop %v2336
      %v2338 = vsel %vm190, %v2335, 0.0
      %v2339 = vsel %vm261, %v2337, 0.0
      %v2340 = vadd.f32 %v2338, %v2339
      %v2341 = vrot.slane %v2340, 4
      %v2342 = vadd.f32 %v2340, %v2341
      %v2343 = vrot.slane %v2342, 2
      %v2344 = vadd.f32 %v2342, %v2343
      %v2345 = vrot.slane %v2344, 1
      %v2346 = vadd.f32 %v2344, %v2345
      %v2347 = vrcp.pop %v2346
      %v2348 = vmul.f32 %v2335, %v2347
      %v2349 = vmul.f32 %v2337, %v2347
      %v2350 = vmul.f32 %v2348, %v254
      %v2351 = vmul.f32 %v2349, %v255
      %v2352 = vld [vmem:[#allocation2 + $0x10] sm:$0xff]
      %v2353 = vld [vmem:[#allocation2 + $0x18] sm:$0xff]
      %v2354 = vlaneseq
      %v2355 = vshrl.u32 %v2354, 7
      %v2356 = vsub.s32 0, %v2355
      %v2357 = vrot.slane %v2350, %v2356
      %2360 = vrot.lane.b32.xlu0 %v2352, 9
      %v2361 = vpop.permute.xlu0 %2360
      %2362 = vrot.lane.b32.xlu0 %v2353, 9
      %v2363 = vpop.permute.xlu0 %2362
      %v2364 = vsel %vm302, %v2361, %v2363
      %v2366 = vmul.f32 %v2357, %v2364
      %v2367 = vlaneseq
      %v2368 = vshrl.u32 %v2367, 7
      %v2369 = vsub.s32 1, %v2368
      %v2370 = vrot.slane %v2350, %v2369
      %2371 = vrot.lane.b32.xlu0 %v2352, 8
      %v2372 = vpop.permute.xlu0 %2371
      %2373 = vrot.lane.b32.xlu0 %v2353, 8
      %v2374 = vpop.permute.xlu0 %2373
      %v2375 = vsel %vm314, %v2372, %v2374
      %v2377 = vmul.f32 %v2370, %v2375
      %v2378 = vlaneseq
      %v2379 = vshrl.u32 %v2378, 7
      %v2380 = vsub.s32 2, %v2379
      %v2381 = vrot.slane %v2350, %v2380
      %2382 = vrot.lane.b32.xlu0 %v2352, 7
      %v2383 = vpop.permute.xlu0 %2382
      %2384 = vrot.lane.b32.xlu0 %v2353, 7
      %v2385 = vpop.permute.xlu0 %2384
      %v2386 = vsel %vm326, %v2383, %v2385
      %v2388 = vmul.f32 %v2381, %v2386
      %v2389 = vlaneseq
      %v2390 = vshrl.u32 %v2389, 7
      %v2391 = vsub.s32 3, %v2390
      %v2392 = vrot.slane %v2350, %v2391
      %2393 = vrot.lane.b32.xlu0 %v2352, 1
      %v2394 = vpop.permute.xlu0 %2393
      %2395 = vrot.lane.b32.xlu0 %v2353, 1
      %v2396 = vpop.permute.xlu0 %2395
      %v2397 = vsel %vm338, %v2394, %v2396
      %v2399 = vmul.f32 %v2392, %v2397
      %v2400 = vadd.f32 %v2366, %v2399
      %v2401 = vlaneseq
      %v2402 = vshrl.u32 %v2401, 7
      %v2403 = vsub.s32 4, %v2402
      %v2404 = vrot.slane %v2350, %v2403
      %v2405 = vmul.f32 %v2404, %v2353
      %v2406 = vadd.f32 %v2377, %v2405
      %v2407 = vlaneseq
      %v2408 = vshrl.u32 %v2407, 7
      %v2409 = vsub.s32 5, %v2408
      %v2410 = vrot.slane %v2350, %v2409
      %2411 = vrot.lane.b32.xlu0 %v2353, 127
      %v2412 = vpop.permute.xlu0 %2411
      %v2414 = vmul.f32 %v2410, %v2412
      %v2415 = vadd.f32 %v2388, %v2414
      %v2416 = vlaneseq
      %v2417 = vshrl.u32 %v2416, 7
      %v2418 = vsub.s32 6, %v2417
      %v2419 = vrot.slane %v2350, %v2418
      %2420 = vrot.lane.b32.xlu0 %v2353, 121
      %v2421 = vpop.permute.xlu0 %2420
      %v2423 = vmul.f32 %v2419, %v2421
      %v2424 = vadd.f32 %v2400, %v2423
      %v2425 = vlaneseq
      %v2426 = vshrl.u32 %v2425, 7
      %v2427 = vsub.s32 7, %v2426
      %v2428 = vrot.slane %v2350, %v2427
      %2429 = vrot.lane.b32.xlu0 %v2353, 120
      %v2430 = vpop.permute.xlu0 %2429
      %v2432 = vmul.f32 %v2428, %v2430
      %v2433 = vadd.f32 %v2406, %v2432
      %v2434 = vlaneseq
      %v2435 = vshrl.u32 %v2434, 7
      %v2436 = vsub.s32 0, %v2435
      %v2437 = vrot.slane %v2351, %v2436
      %2438 = vrot.lane.b32.xlu0 %v2353, 119
      %v2439 = vpop.permute.xlu0 %2438
      %v2441 = vmul.f32 %v2437, %v2439
      %v2442 = vadd.f32 %v2415, %v2441
      %v2443 = vadd.f32 %v2424, %v2433
      %v2444 = vadd.f32 %v2443, %v2442
      %v2445 = vmul.f32 %v2444, %v1193
      %2446 = vst.msk [vmem:[%s1195 + $0x8] sm:$0xff] %vm190, %v2445
      %s2447 = scalar_lea.vmem %s153, 128
      %v2448 = vld [vmem:[%s2447] sm:$0xf]
      %v2449 = vld [vmem:[%s2447 + $0x4] sm:$0x1]
      %v2450 = vunpack.c.l.bf16 %v2448
      %v2451 = vunpack.c.l.bf16 %v2449
      %v2452 = vsel %vm190, %v2450, -inf
      %v2453 = vsel %vm261, %v2451, -inf
      %v2454 = vmax.f32 %v2452, %v2453
      %v2455 = vrot.slane %v2454, 4
      %v2456 = vmax.f32 %v2454, %v2455
      %v2457 = vrot.slane %v2456, 2
      %v2458 = vmax.f32 %v2456, %v2457
      %v2459 = vrot.slane %v2458, 1
      %v2460 = vmax.f32 %v2458, %v2459
      %v2461 = vsub.f32 %v2450, %v2460
      %v2462 = vsub.f32 %v2451, %v2460
      %v2463 = vmul.f32 %v2461, 1.442695
      %v2464 = vpow.pop %v2463
      %v2465 = vmul.f32 %v2462, 1.442695
      %v2466 = vpow.pop %v2465
      %v2467 = vsel %vm190, %v2464, 0.0
      %v2468 = vsel %vm261, %v2466, 0.0
      %v2469 = vadd.f32 %v2467, %v2468
      %v2470 = vrot.slane %v2469, 4
      %v2471 = vadd.f32 %v2469, %v2470
      %v2472 = vrot.slane %v2471, 2
      %v2473 = vadd.f32 %v2471, %v2472
      %v2474 = vrot.slane %v2473, 1
      %v2475 = vadd.f32 %v2473, %v2474
      %v2476 = vrcp.pop %v2475
      %v2477 = vmul.f32 %v2464, %v2476
      %v2478 = vmul.f32 %v2466, %v2476
      %v2479 = vmul.f32 %v2477, %v254
      %v2480 = vmul.f32 %v2478, %v255
      %v2481 = vld [vmem:[#allocation2 + $0x10] sm:$0xff]
      %v2482 = vld [vmem:[#allocation2 + $0x18] sm:$0xff]
      %v2483 = vlaneseq
      %v2484 = vshrl.u32 %v2483, 7
      %v2485 = vsub.s32 0, %v2484
      %v2486 = vrot.slane %v2479, %v2485
      %2489 = vrot.lane.b32.xlu0 %v2481, 9
      %v2490 = vpop.permute.xlu0 %2489
      %2491 = vrot.lane.b32.xlu0 %v2482, 9
      %v2492 = vpop.permute.xlu0 %2491
      %v2493 = vsel %vm302, %v2490, %v2492
      %v2495 = vmul.f32 %v2486, %v2493
      %v2496 = vlaneseq
      %v2497 = vshrl.u32 %v2496, 7
      %v2498 = vsub.s32 1, %v2497
      %v2499 = vrot.slane %v2479, %v2498
      %2500 = vrot.lane.b32.xlu0 %v2481, 8
      %v2501 = vpop.permute.xlu0 %2500
      %2502 = vrot.lane.b32.xlu0 %v2482, 8
      %v2503 = vpop.permute.xlu0 %2502
      %v2504 = vsel %vm314, %v2501, %v2503
      %v2506 = vmul.f32 %v2499, %v2504
      %v2507 = vlaneseq
      %v2508 = vshrl.u32 %v2507, 7
      %v2509 = vsub.s32 2, %v2508
      %v2510 = vrot.slane %v2479, %v2509
      %2511 = vrot.lane.b32.xlu0 %v2481, 7
      %v2512 = vpop.permute.xlu0 %2511
      %2513 = vrot.lane.b32.xlu0 %v2482, 7
      %v2514 = vpop.permute.xlu0 %2513
      %v2515 = vsel %vm326, %v2512, %v2514
      %v2517 = vmul.f32 %v2510, %v2515
      %v2518 = vlaneseq
      %v2519 = vshrl.u32 %v2518, 7
      %v2520 = vsub.s32 3, %v2519
      %v2521 = vrot.slane %v2479, %v2520
      %2522 = vrot.lane.b32.xlu0 %v2481, 1
      %v2523 = vpop.permute.xlu0 %2522
      %2524 = vrot.lane.b32.xlu0 %v2482, 1
      %v2525 = vpop.permute.xlu0 %2524
      %v2526 = vsel %vm338, %v2523, %v2525
      %v2528 = vmul.f32 %v2521, %v2526
      %v2529 = vadd.f32 %v2495, %v2528
      %v2530 = vlaneseq
      %v2531 = vshrl.u32 %v2530, 7
      %v2532 = vsub.s32 4, %v2531
      %v2533 = vrot.slane %v2479, %v2532
      %v2534 = vmul.f32 %v2533, %v2482
      %v2535 = vadd.f32 %v2506, %v2534
      %v2536 = vlaneseq
      %v2537 = vshrl.u32 %v2536, 7
      %v2538 = vsub.s32 5, %v2537
      %v2539 = vrot.slane %v2479, %v2538
      %2540 = vrot.lane.b32.xlu0 %v2482, 127
      %v2541 = vpop.permute.xlu0 %2540
      %v2543 = vmul.f32 %v2539, %v2541
      %v2544 = vadd.f32 %v2517, %v2543
      %v2545 = vlaneseq
      %v2546 = vshrl.u32 %v2545, 7
      %v2547 = vsub.s32 6, %v2546
      %v2548 = vrot.slane %v2479, %v2547
      %2549 = vrot.lane.b32.xlu0 %v2482, 121
      %v2550 = vpop.permute.xlu0 %2549
      %v2552 = vmul.f32 %v2548, %v2550
      %v2553 = vadd.f32 %v2529, %v2552
      %v2554 = vlaneseq
      %v2555 = vshrl.u32 %v2554, 7
      %v2556 = vsub.s32 7, %v2555
      %v2557 = vrot.slane %v2479, %v2556
      %2558 = vrot.lane.b32.xlu0 %v2482, 120
      %v2559 = vpop.permute.xlu0 %2558
      %v2561 = vmul.f32 %v2557, %v2559
      %v2562 = vadd.f32 %v2535, %v2561
      %v2563 = vlaneseq
      %v2564 = vshrl.u32 %v2563, 7
      %v2565 = vsub.s32 0, %v2564
      %v2566 = vrot.slane %v2480, %v2565
      %2567 = vrot.lane.b32.xlu0 %v2482, 119
      %v2568 = vpop.permute.xlu0 %2567
      %v2570 = vmul.f32 %v2566, %v2568
      %v2571 = vadd.f32 %v2544, %v2570
      %v2572 = vadd.f32 %v2553, %v2562
      %v2573 = vadd.f32 %v2572, %v2571
      %v2574 = vmul.f32 %v2573, %v1327
      %2575 = vst.msk [vmem:[%s1329 + $0x8] sm:$0xff] %vm190, %v2574
      %s2576 = scalar_lea.vmem %s153, 136
      %v2577 = vld [vmem:[%s2576] sm:$0xf]
      %v2578 = vld [vmem:[%s2576 + $0x4] sm:$0x1]
      %v2579 = vunpack.c.l.bf16 %v2577
      %v2580 = vunpack.c.l.bf16 %v2578
      %v2581 = vsel %vm190, %v2579, -inf
      %v2582 = vsel %vm261, %v2580, -inf
      %v2583 = vmax.f32 %v2581, %v2582
      %v2584 = vrot.slane %v2583, 4
      %v2585 = vmax.f32 %v2583, %v2584
      %v2586 = vrot.slane %v2585, 2
      %v2587 = vmax.f32 %v2585, %v2586
      %v2588 = vrot.slane %v2587, 1
      %v2589 = vmax.f32 %v2587, %v2588
      %v2590 = vsub.f32 %v2579, %v2589
      %v2591 = vsub.f32 %v2580, %v2589
      %v2592 = vmul.f32 %v2590, 1.442695
      %v2593 = vpow.pop %v2592
      %v2594 = vmul.f32 %v2591, 1.442695
      %v2595 = vpow.pop %v2594
      %v2596 = vsel %vm190, %v2593, 0.0
      %v2597 = vsel %vm261, %v2595, 0.0
      %v2598 = vadd.f32 %v2596, %v2597
      %v2599 = vrot.slane %v2598, 4
      %v2600 = vadd.f32 %v2598, %v2599
      %v2601 = vrot.slane %v2600, 2
      %v2602 = vadd.f32 %v2600, %v2601
      %v2603 = vrot.slane %v2602, 1
      %v2604 = vadd.f32 %v2602, %v2603
      %v2605 = vrcp.pop %v2604
      %v2606 = vmul.f32 %v2593, %v2605
      %v2607 = vmul.f32 %v2595, %v2605
      %v2608 = vmul.f32 %v2606, %v254
      %v2609 = vmul.f32 %v2607, %v255
      %v2610 = vld [vmem:[#allocation2 + $0x10] sm:$0xff]
      %v2611 = vld [vmem:[#allocation2 + $0x18] sm:$0xff]
      %v2612 = vlaneseq
      %v2613 = vshrl.u32 %v2612, 7
      %v2614 = vsub.s32 0, %v2613
      %v2615 = vrot.slane %v2608, %v2614
      %2618 = vrot.lane.b32.xlu0 %v2610, 9
      %v2619 = vpop.permute.xlu0 %2618
      %2620 = vrot.lane.b32.xlu0 %v2611, 9
      %v2621 = vpop.permute.xlu0 %2620
      %v2622 = vsel %vm302, %v2619, %v2621
      %v2624 = vmul.f32 %v2615, %v2622
      %v2625 = vlaneseq
      %v2626 = vshrl.u32 %v2625, 7
      %v2627 = vsub.s32 1, %v2626
      %v2628 = vrot.slane %v2608, %v2627
      %2629 = vrot.lane.b32.xlu0 %v2610, 8
      %v2630 = vpop.permute.xlu0 %2629
      %2631 = vrot.lane.b32.xlu0 %v2611, 8
      %v2632 = vpop.permute.xlu0 %2631
      %v2633 = vsel %vm314, %v2630, %v2632
      %v2635 = vmul.f32 %v2628, %v2633
      %v2636 = vlaneseq
      %v2637 = vshrl.u32 %v2636, 7
      %v2638 = vsub.s32 2, %v2637
      %v2639 = vrot.slane %v2608, %v2638
      %2640 = vrot.lane.b32.xlu0 %v2610, 7
      %v2641 = vpop.permute.xlu0 %2640
      %2642 = vrot.lane.b32.xlu0 %v2611, 7
      %v2643 = vpop.permute.xlu0 %2642
      %v2644 = vsel %vm326, %v2641, %v2643
      %v2646 = vmul.f32 %v2639, %v2644
      %v2647 = vlaneseq
      %v2648 = vshrl.u32 %v2647, 7
      %v2649 = vsub.s32 3, %v2648
      %v2650 = vrot.slane %v2608, %v2649
      %2651 = vrot.lane.b32.xlu0 %v2610, 1
      %v2652 = vpop.permute.xlu0 %2651
      %2653 = vrot.lane.b32.xlu0 %v2611, 1
      %v2654 = vpop.permute.xlu0 %2653
      %v2655 = vsel %vm338, %v2652, %v2654
      %v2657 = vmul.f32 %v2650, %v2655
      %v2658 = vadd.f32 %v2624, %v2657
      %v2659 = vlaneseq
      %v2660 = vshrl.u32 %v2659, 7
      %v2661 = vsub.s32 4, %v2660
      %v2662 = vrot.slane %v2608, %v2661
      %v2663 = vmul.f32 %v2662, %v2611
      %v2664 = vadd.f32 %v2635, %v2663
      %v2665 = vlaneseq
      %v2666 = vshrl.u32 %v2665, 7
      %v2667 = vsub.s32 5, %v2666
      %v2668 = vrot.slane %v2608, %v2667
      %2669 = vrot.lane.b32.xlu0 %v2611, 127
      %v2670 = vpop.permute.xlu0 %2669
      %v2672 = vmul.f32 %v2668, %v2670
      %v2673 = vadd.f32 %v2646, %v2672
      %v2674 = vlaneseq
      %v2675 = vshrl.u32 %v2674, 7
      %v2676 = vsub.s32 6, %v2675
      %v2677 = vrot.slane %v2608, %v2676
      %2678 = vrot.lane.b32.xlu0 %v2611, 121
      %v2679 = vpop.permute.xlu0 %2678
      %v2681 = vmul.f32 %v2677, %v2679
      %v2682 = vadd.f32 %v2658, %v2681
      %v2683 = vlaneseq
      %v2684 = vshrl.u32 %v2683, 7
      %v2685 = vsub.s32 7, %v2684
      %v2686 = vrot.slane %v2608, %v2685
      %2687 = vrot.lane.b32.xlu0 %v2611, 120
      %v2688 = vpop.permute.xlu0 %2687
      %v2690 = vmul.f32 %v2686, %v2688
      %v2691 = vadd.f32 %v2664, %v2690
      %v2692 = vlaneseq
      %v2693 = vshrl.u32 %v2692, 7
      %v2694 = vsub.s32 0, %v2693
      %v2695 = vrot.slane %v2609, %v2694
      %2696 = vrot.lane.b32.xlu0 %v2611, 119
      %v2697 = vpop.permute.xlu0 %2696
      %v2699 = vmul.f32 %v2695, %v2697
      %v2700 = vadd.f32 %v2673, %v2699
      %v2701 = vadd.f32 %v2682, %v2691
      %v2702 = vadd.f32 %v2701, %v2700
      %v2703 = vmul.f32 %v2702, %v1461
      %2704 = vst.msk [vmem:[%s1463 + $0x8] sm:$0xff] %vm190, %v2703
      %v2705 = vld [vmem:[#allocation3 + $0x8] sm:$0xff]
      %v2706 = vld [vmem:[%s525 + $0x8] sm:$0xff]
      %v2707 = vld [vmem:[%s659 + $0x8] sm:$0xff]
      %v2708 = vld [vmem:[%s793 + $0x8] sm:$0xff]
      %2710 = vrot.lane.b32.xlu0 %v2708, 8
      %v2711 = vpop.permute.xlu0 %2710
      %v2713 = vadd.f32 %v2705, %v2711
      %v2714 = vld [vmem:[%s927 + $0x8] sm:$0xff]
      %2716 = vrot.lane.b32.xlu0 %v2714, 8
      %v2717 = vpop.permute.xlu0 %2716
      %v2719 = vadd.f32 %v2706, %v2717
      %v2720 = vld [vmem:[%s1061] sm:$0xff]
      %v2721 = vld [vmem:[%s1061 + $0x8] sm:$0xff]
      %2724 = vrot.lane.b32.xlu0 %v2720, 8
      %v2725 = vpop.permute.xlu0 %2724
      %2726 = vrot.lane.b32.xlu0 %v2721, 8
      %v2727 = vpop.permute.xlu0 %2726
      %v2728 = vsel %vm314, %v2725, %v2727
      %v2730 = vadd.f32 %v2707, %v2728
      %v2731 = vld [vmem:[%s1195] sm:$0xff]
      %v2732 = vld [vmem:[%s1195 + $0x8] sm:$0xff]
      %2735 = vrot.lane.b32.xlu0 %v2731, 16
      %v2736 = vpop.permute.xlu0 %2735
      %2737 = vrot.lane.b32.xlu0 %v2732, 16
      %v2738 = vpop.permute.xlu0 %2737
      %v2739 = vsel %vm1499, %v2736, %v2738
      %v2741 = vadd.f32 %v2713, %v2739
      %v2742 = vld [vmem:[%s1329] sm:$0xff]
      %v2743 = vld [vmem:[%s1329 + $0x8] sm:$0xff]
      %2746 = vrot.lane.b32.xlu0 %v2742, 16
      %v2747 = vpop.permute.xlu0 %2746
      %2748 = vrot.lane.b32.xlu0 %v2743, 16
      %v2749 = vpop.permute.xlu0 %2748
      %v2750 = vsel %vm1499, %v2747, %v2749
      %v2752 = vadd.f32 %v2719, %v2750
      %v2753 = vld [vmem:[%s1463] sm:$0xff]
      %v2754 = vld [vmem:[%s1463 + $0x8] sm:$0xff]
      %2757 = vrot.lane.b32.xlu0 %v2753, 16
      %v2758 = vpop.permute.xlu0 %2757
      %2759 = vrot.lane.b32.xlu0 %v2754, 16
      %v2760 = vpop.permute.xlu0 %2759
      %v2761 = vsel %vm1499, %v2758, %v2760
      %v2763 = vadd.f32 %v2730, %v2761
      %2765 = vrot.lane.b32.xlu0 %v2752, 1
      %v2766 = vpop.permute.xlu0 %2765
      %v2768 = vadd.f32 %v2741, %v2766
      %2770 = vrot.lane.b32.xlu0 %v2763, 2
      %v2771 = vpop.permute.xlu0 %2770
      %v2773 = vadd.f32 %v2768, %v2771
      %v2774 = vpack.c.bf16 %v2773, %v2773
      %v2776 = vunpack.c.l.b16 %v2774
      %v2777 = vpack.c.b16 %v2776, %v2776
      %2778 = vrot.lane.b32.xlu0 %v2777, 119
      %v2779 = vpop.permute.xlu0 %2778
      %2781 = vst.msk [vmem:[%s163 + $0x4] sm:$0xf] %vm1542, %v2779
      %p2782 = scmp.lt.s32.totalorder %s13, 1
      %s2783 = scalar_select %p2782, %s13, 1
      %s2784 = smul.addr %s2783, 2
      %s2785 = smul.addr %s2784, 4
      %s2786 = scalar_lea.vmem %s2, %s2785
      // Predicated region
      $region29: #{outlooker_forward.6} parent=27 // pred_check
        %p2787 = pneg %p83
      $region30: #{outlooker_forward.6} parent=27 // pred_check_branch
        %2789 = sbr.rel (%p2787) target = $region32
      $region31: #{outlooker_forward.6} parent=27 // pred_region
        _
      $region32: #{outlooker_forward.6} parent=27 // pred_fallthru
        _
    $region28: #{outlooker_forward.6} parent=5 // pred_fallthru
      _
    %p2790 = scmp.le.s32.totalorder 2, %s8
    // Predicated region
    $region33: #{outlooker_forward.6} parent=5 // pred_check
      %p2791 = pneg %p2790
    $region34: #{outlooker_forward.6} parent=5 // pred_check_branch
      %2793 = sbr.rel (%p2791) target = $region36
    $region35: #{outlooker_forward.6} parent=5 // pred_region
      %s2794 = ssub.s32 %s8, 2
      // Predicated region
      $region37: #{outlooker_forward.6} parent=35 // pred_check
        %p2795 = pneg %p89
      $region38: #{outlooker_forward.6} parent=35 // pred_check_branch
        %2797 = sbr.rel (%p2795) target = $region40
      $region39: #{outlooker_forward.6} parent=35 // pred_region
        %p2798 = scmp.lt.s32.totalorder %s14, 1
        %s2799 = scalar_select %p2798, %s14, 1
        %s2800 = smul.addr %s2799, 2
        %s2801 = smul.addr %s2800, 4
        %s2802 = scalar_lea.vmem %s2, %s2801
      $region40: #{outlooker_forward.6} parent=35 // pred_fallthru
        _
    $region36: #{outlooker_forward.6} parent=5 // pred_fallthru
      _
  $region6: #{outlooker_forward.6} parent=0 // loop_footer
    %s12 = sadd.s32 1, %s8
  $region7: #{outlooker_forward.6} parent=0 // loop_footer_branch
    %7 = sbr.rel target = $region3
  $region8: #{outlooker_forward.6} parent=0 // loop_exit
    _

</llo_original>
